<compile_context>
chip_gen: v7x
topology: tpu7x:2x2x1
jax: 0.10.0
libtpu: 0.0.40
codegen_flags: <defaults>
</compile_context>

<pallas_src>
import functools

import jax
import jax.numpy as jnp
from jax.experimental import pallas as pl
from jax.experimental.pallas import tpu as pltpu

BN_EPS = 1e-5
LANE = 128          # TPU lane width
SUBLANE_BF16 = 16   # bf16 sublane tile -> channel-padding granularity


def _round_up(x, m):
    return (x + m - 1) // m * m


# ---------------------------------------------------------------------------
# Activation layout
# -----------------
# Every activation is a lane-dense buffer A[n, c, q], q in [0, Lbuf), bf16.
# The zero-padded (Dp, Hp, Wp) volume is flattened row-major and placed at the
# 128-aligned lane offset B; every lane outside it is zero.  With centered
# taps, output voxel lane q needs input lanes q + off, |off| <= HpWp + Wp + 1,
# so the conv output window can start exactly at B (128-aligned) and the
# BN+ELU kernel re-assembles the next layer's input with aligned concats only.
# ---------------------------------------------------------------------------
def convblock_geometry(D, H, W):
    Hp, Wp = H + 2, W + 2
    HpWp = Hp * Wp
    Lvol = (D + 2) * HpWp
    halo = HpWp + Wp + 1                           # max |centered tap offset|
    B = _round_up(halo, LANE)                      # 128-aligned volume base
    last_valid = B + D * HpWp + H * Wp + W         # lane of voxel (D, H, W)
    Lc = _round_up(last_valid + 1 - B, LANE)       # conv output window width
    Lbuf = _round_up(max(B + Lc + halo, B + Lvol), LANE)
    # Tap slice starts, ordered (kd, kh, kw) to match the weight reshape.
    starts = tuple(B + (kd - 1) * HpWp + (kh - 1) * Wp + (kw - 1)
                   for kd in range(3) for kh in range(3) for kw in range(3))
    return Hp, Wp, HpWp, Lvol, B, Lc, Lbuf, starts


def make_valid_mask(D, H, W, Hp, Wp, HpWp, Lc):
    """1.0 on window lanes that are real output voxels, 0.0 on junk/padding."""
    r = jnp.arange(Lc)
    dd = r // HpWp
    hh = (r // Wp) % Hp
    ww = r % Wp
    valid = ((dd >= 1) & (dd <= D) & (hh >= 1) & (hh <= H)
             & (ww >= 1) & (ww <= W))
    return valid.astype(jnp.float32).reshape(1, Lc)


# ---------------------------------------------------------------------------
# Kernel 1: implicit-im2col 3x3x3 conv, one batch element per grid step,
#           single big MXU dot + fused per-batch BN sum / sum-of-squares.
# ---------------------------------------------------------------------------
def conv_stats_kernel(x_ref, w_ref, b_ref, m_ref, out_ref, sum_ref, sq_ref,
                      *, starts, Lc):
    # x_ref: (1, Cin_p, Lbuf) bf16, w_ref: (Cout, 27*Cin_p) bf16
    x = x_ref[0]
    # Implicit im2col: 27 statically lane-shifted views, concatenated along
    # the (sublane-aligned) contraction axis -> one MXU dot, K = 27*Cin_p.
    cols = [x[:, s:s + Lc] for s in starts]
    im2col = jnp.concatenate(cols, axis=0)              # (27*Cin_p, Lc) bf16
    acc = jnp.dot(w_ref[...], im2col,
                  preferred_element_type=jnp.float32)    # (Cout, Lc) f32
    acc = acc + b_ref[...]
    out_ref[0] = acc

    # Per-batch BN statistics (junk lanes masked out); reduced over N in JAX.
    av = acc * m_ref[...]
    sum_ref[0] = jnp.sum(av, axis=1, keepdims=True)
    sq_ref[0] = jnp.sum(av * acc, axis=1, keepdims=True)


def conv3d_with_stats(xflat, wmat, bias, vmask, *, starts, Lc):
    N, Cin_p, Lbuf = xflat.shape
    Cout, K = wmat.shape
    kern = functools.partial(conv_stats_kernel, starts=starts, Lc=Lc)
    flops = 2 * N * Cout * K * Lc
    bytes_accessed = int(N * Cin_p * Lbuf * 2 + Cout * K * 2
                         + N * Cout * Lc * 4 + 2 * N * Cout * 4)
    return pl.pallas_call(
        kern,
        out_shape=(
            jax.ShapeDtypeStruct((N, Cout, Lc), jnp.float32),
            jax.ShapeDtypeStruct((N, Cout, 1), jnp.float32),
            jax.ShapeDtypeStruct((N, Cout, 1), jnp.float32),
        ),
        grid_spec=pltpu.PrefetchScalarGridSpec(
            num_scalar_prefetch=0,
            grid=(N,),
            in_specs=[
                pl.BlockSpec((1, Cin_p, Lbuf), lambda n: (n, 0, 0)),
                pl.BlockSpec((Cout, K), lambda n: (0, 0)),
                pl.BlockSpec((Cout, 1), lambda n: (0, 0)),
                pl.BlockSpec((1, Lc), lambda n: (0, 0)),
            ],
            out_specs=[
                pl.BlockSpec((1, Cout, Lc), lambda n: (n, 0, 0)),
                pl.BlockSpec((1, Cout, 1), lambda n: (n, 0, 0)),
                pl.BlockSpec((1, Cout, 1), lambda n: (n, 0, 0)),
            ],
        ),
        compiler_params=pltpu.CompilerParams(
            dimension_semantics=("parallel",),
            vmem_limit_bytes=32 * 1024 * 1024),
        cost_estimate=pl.CostEstimate(flops=flops, transcendentals=0,
                                      bytes_accessed=bytes_accessed),
    )(xflat, wmat, bias, vmask)


# ---------------------------------------------------------------------------
# Kernel 2: folded BN (y*scale + shift) + ELU, masked to valid voxels, and
#           re-packed directly into the next conv's padded bf16 input layout
#           (aligned concats only; lane-dense full-width store).
# ---------------------------------------------------------------------------
def bn_elu_repack_kernel(x_ref, sc_ref, sh_ref, m_ref, o_ref, *, pad_lo, pad_hi):
    y = x_ref[0] * sc_ref[...] + sh_ref[...]
    y = jnp.where(y > 0, y, jnp.exp(y) - 1.0)           # ELU(alpha=1)
    y = (y * m_ref[...]).astype(o_ref.dtype)            # junk lanes -> padding 0
    cout = y.shape[0]
    z_lo = jnp.zeros((cout, pad_lo), o_ref.dtype)
    z_hi = jnp.zeros((cout, pad_hi), o_ref.dtype)
    o_ref[0] = jnp.concatenate([z_lo, y, z_hi], axis=1)


def bn_elu_repack(conv_out, scale, shift, vmask, *, Lbuf, pad_lo, out_dtype):
    N, Cout, Lc = conv_out.shape
    pad_hi = Lbuf - pad_lo - Lc
    kern = functools.partial(bn_elu_repack_kernel, pad_lo=pad_lo, pad_hi=pad_hi)
    itemsize = jnp.dtype(out_dtype).itemsize
    flops = 5 * N * Cout * Lc
    bytes_accessed = int(N * Cout * Lc * 4 + N * Cout * Lbuf * itemsize)
    return pl.pallas_call(
        kern,
        out_shape=jax.ShapeDtypeStruct((N, Cout, Lbuf), out_dtype),
        grid_spec=pltpu.PrefetchScalarGridSpec(
            num_scalar_prefetch=0,
            grid=(N,),
            in_specs=[
                pl.BlockSpec((1, Cout, Lc), lambda n: (n, 0, 0)),
                pl.BlockSpec((Cout, 1), lambda n: (0, 0)),
                pl.BlockSpec((Cout, 1), lambda n: (0, 0)),
                pl.BlockSpec((1, Lc), lambda n: (0, 0)),
            ],
            out_specs=pl.BlockSpec((1, Cout, Lbuf), lambda n: (n, 0, 0)),
        ),
        compiler_params=pltpu.CompilerParams(
            dimension_semantics=("parallel",),
            vmem_limit_bytes=32 * 1024 * 1024),
        cost_estimate=pl.CostEstimate(flops=flops,
                                      transcendentals=N * Cout * Lc,
                                      bytes_accessed=bytes_accessed),
    )(conv_out, scale, shift, vmask)


# ---------------------------------------------------------------------------
# Glue: encoder = repeated [Conv3d(k=3,s=1,p=1) -> BatchNorm3d(batch) -> ELU]
# ---------------------------------------------------------------------------
def pack_input(x, Cin_p, B, Lvol, Lbuf):
    """Zero-pad, flatten, channel-pad and lane-pad the first layer's input."""
    N, C = x.shape[0], x.shape[1]
    xp = jnp.pad(x, ((0, 0), (0, 0), (1, 1), (1, 1), (1, 1)))
    xp = xp.reshape(N, C, Lvol)
    xp = jnp.pad(xp, ((0, 0), (0, Cin_p - C), (0, 0)))
    xp = jnp.pad(xp, ((0, 0), (0, 0), (B, Lbuf - B - Lvol)))
    return xp.astype(jnp.bfloat16)


@jax.jit
def conv_layers_encoder_forward(x, params_list):
    """x: (N, C, D, H, W) float32."""
    N, C, D, H, W = x.shape
    Hp, Wp, HpWp, Lvol, B, Lc, Lbuf, starts = convblock_geometry(D, H, W)
    vmask = make_valid_mask(D, H, W, Hp, Wp, HpWp, Lc)

    Cin_p0 = _round_up(C, SUBLANE_BF16)
    xflat = pack_input(x, Cin_p0, B, Lvol, Lbuf)

    count = float(N * D * H * W)
    n_layers = len(params_list)

    for li, (w, b, gamma, beta) in enumerate(params_list):
        Cout, Cin = int(w.shape[0]), int(w.shape[1])
        Cin_p = int(xflat.shape[1])
        # (Cout, Cin, kd, kh, kw) -> (Cout, 27*Cin_p), tap-major (matches `starts`)
        wt = jnp.transpose(w, (0, 2, 3, 4, 1))
        wt = jnp.pad(wt, ((0, 0), (0, 0), (0, 0), (0, 0), (0, Cin_p - Cin)))
        wmat = wt.reshape(Cout, 27 * Cin_p).astype(jnp.bfloat16)
        bias = b.reshape(Cout, 1).astype(jnp.float32)

        conv_out, psum, psq = conv3d_with_stats(
            xflat, wmat, bias, vmask, starts=starts, Lc=Lc)

        # Fold training-mode batch statistics into per-channel scale/shift.
        # NOTE: E[x^2]-E[x]^2 in f32; fine at this scale (see review notes).
        mean = jnp.sum(psum, axis=0) / count                        # (Cout, 1)
        var = jnp.maximum(jnp.sum(psq, axis=0) / count - mean * mean, 0.0)
        scale = gamma.reshape(Cout, 1) * jax.lax.rsqrt(var + BN_EPS)
        shift = beta.reshape(Cout, 1) - mean * scale

        last = (li == n_layers - 1)
        out_dtype = jnp.float32 if last else jnp.bfloat16
        xflat = bn_elu_repack(conv_out, scale, shift, vmask,
                              Lbuf=Lbuf, pad_lo=B, out_dtype=out_dtype)

    # Extract the valid voxels from the padded layout -> NCDHW.
    Cout_last = xflat.shape[1]
    Dp = D + 2
    vol = xflat[:, :, B:B + Lvol].reshape(N, Cout_last, Dp, Hp, Wp)
    return vol[:, :, 1:D + 1, 1:H + 1, 1:W + 1]


# ---------------------------------------------------------------------------
# Deterministic parameter init (mirrors __init__ channel schedule)
# ---------------------------------------------------------------------------
def init_params(key, in_channels, num_conv_blocks=2, depth=0):
    params = []
    cin = in_channels
    cout = 32 if depth == 0 else in_channels
    for _ in range(num_conv_blocks):
        key, k1, k2 = jax.random.split(key, 3)
        w = jax.random.normal(k1, (cout, cin, 3, 3, 3), jnp.float32) * 0.1
        b = jax.random.normal(k2, (cout,), jnp.float32) * 0.1
        gamma = jnp.ones((cout,), jnp.float32)
        beta = jnp.zeros((cout,), jnp.float32)
        params.append((w, b, gamma, beta))
        cin = cout
        cout = cout * 2
    return params


# ---------------------------------------------------------------------------
# Pure-JAX reference (same bf16 operand quantization, f32 accumulation)
# ---------------------------------------------------------------------------
def ref_convblock(x, params):
    w, b, gamma, beta = params
    y = jax.lax.conv_general_dilated(
        x.astype(jnp.bfloat16), w.astype(jnp.bfloat16),
        window_strides=(1, 1, 1), padding=[(1, 1)] * 3,
        dimension_numbers=("NCDHW", "OIDHW", "NCDHW"),
        preferred_element_type=jnp.float32)
    y = y + b.reshape(1, -1, 1, 1, 1)
    mean = y.mean(axis=(0, 2, 3, 4), keepdims=True)
    var = y.var(axis=(0, 2, 3, 4), keepdims=True)
    y = (y - mean) / jnp.sqrt(var + BN_EPS)
    y = y * gamma.reshape(1, -1, 1, 1, 1) + beta.reshape(1, -1, 1, 1, 1)
    return jnp.where(y > 0, y, jnp.exp(y) - 1.0)


def ref_forward(x, params_list):
    for p in params_list:
        x = ref_convblock(x, p)
    return x


if __name__ == "__main__":
    key = jax.random.PRNGKey(0)
    kx, kp = jax.random.split(key)

    # depth=0 -> block0: 4->32, block1: 32->64 (module default schedule)
    N, C, D, H, W = 2, 4, 8, 8, 8
    x = jax.random.normal(kx, (N, C, D, H, W), jnp.float32)
    params = init_params(kp, in_channels=C, num_conv_blocks=2, depth=0)

    out = jax.block_until_ready(conv_layers_encoder_forward(x, params))
    ref = jax.block_until_ready(ref_forward(x, params))

    assert out.shape == (N, 64, D, H, W), out.shape
    max_err = float(jnp.max(jnp.abs(out - ref)))
    assert jnp.allclose(out, ref, rtol=1e-2, atol=1e-2), max_err

    print("KERNEL_OK")
</pallas_src>

<mosaic_0001>
module attributes {stable_mosaic.version = 11 : i64} {
  func.func @conv_stats_kernel(%arg0: i32, %arg1: memref<1x16x1152xbf16, #tpu.memory_space<vmem>>, %arg2: memref<32x432xbf16, #tpu.memory_space<vmem>>, %arg3: memref<32x1xf32, #tpu.memory_space<vmem>>, %arg4: memref<1x896xf32, #tpu.memory_space<vmem>>, %arg5: memref<1x32x896xf32, #tpu.memory_space<vmem>>, %arg6: memref<1x32x1xf32, #tpu.memory_space<vmem>>, %arg7: memref<1x32x1xf32, #tpu.memory_space<vmem>>) attributes {dimension_semantics = [#tpu.dimension_semantics<parallel>], iteration_bounds = array<i64: 2>, scalar_prefetch = 0 : i64, scratch_operands = 0 : i64, tpu.core_type = #tpu.core_type<tc>, window_params = [{transform_indices = @transform_0, window_bounds = array<i64: 1, 16, 1152>}, {pipeline_mode = #tpu.pipeline_mode<synchronous>, transform_indices = @transform_1, window_bounds = array<i64: 32, 432>}, {pipeline_mode = #tpu.pipeline_mode<synchronous>, transform_indices = @transform_2, window_bounds = array<i64: 32, 1>}, {pipeline_mode = #tpu.pipeline_mode<synchronous>, transform_indices = @transform_3, window_bounds = array<i64: 1, 896>}, {transform_indices = @transform_4, window_bounds = array<i64: 1, 32, 896>}, {transform_indices = @transform_5, window_bounds = array<i64: 1, 32, 1>}, {transform_indices = @transform_6, window_bounds = array<i64: 1, 32, 1>}]} {
    %c0 = arith.constant 0 : index
    %c0_0 = arith.constant 0 : index
    %c0_1 = arith.constant 0 : index
    %0 = vector.load %arg1[%c0, %c0_0, %c0_1] : memref<1x16x1152xbf16, #tpu.memory_space<vmem>>, vector<1x16x1152xbf16>
    %1 = vector.shape_cast %0 : vector<1x16x1152xbf16> to vector<16x1152xbf16>
    %2 = vector.extract_strided_slice %1 {offsets = [0, 17], sizes = [16, 896], strides = [1, 1]} : vector<16x1152xbf16> to vector<16x896xbf16>
    %3 = vector.extract_strided_slice %1 {offsets = [0, 18], sizes = [16, 896], strides = [1, 1]} : vector<16x1152xbf16> to vector<16x896xbf16>
    %4 = vector.extract_strided_slice %1 {offsets = [0, 19], sizes = [16, 896], strides = [1, 1]} : vector<16x1152xbf16> to vector<16x896xbf16>
    %5 = vector.extract_strided_slice %1 {offsets = [0, 27], sizes = [16, 896], strides = [1, 1]} : vector<16x1152xbf16> to vector<16x896xbf16>
    %6 = vector.extract_strided_slice %1 {offsets = [0, 28], sizes = [16, 896], strides = [1, 1]} : vector<16x1152xbf16> to vector<16x896xbf16>
    %7 = vector.extract_strided_slice %1 {offsets = [0, 29], sizes = [16, 896], strides = [1, 1]} : vector<16x1152xbf16> to vector<16x896xbf16>
    %8 = vector.extract_strided_slice %1 {offsets = [0, 37], sizes = [16, 896], strides = [1, 1]} : vector<16x1152xbf16> to vector<16x896xbf16>
    %9 = vector.extract_strided_slice %1 {offsets = [0, 38], sizes = [16, 896], strides = [1, 1]} : vector<16x1152xbf16> to vector<16x896xbf16>
    %10 = vector.extract_strided_slice %1 {offsets = [0, 39], sizes = [16, 896], strides = [1, 1]} : vector<16x1152xbf16> to vector<16x896xbf16>
    %11 = vector.extract_strided_slice %1 {offsets = [0, 117], sizes = [16, 896], strides = [1, 1]} : vector<16x1152xbf16> to vector<16x896xbf16>
    %12 = vector.extract_strided_slice %1 {offsets = [0, 118], sizes = [16, 896], strides = [1, 1]} : vector<16x1152xbf16> to vector<16x896xbf16>
    %13 = vector.extract_strided_slice %1 {offsets = [0, 119], sizes = [16, 896], strides = [1, 1]} : vector<16x1152xbf16> to vector<16x896xbf16>
    %14 = vector.extract_strided_slice %1 {offsets = [0, 127], sizes = [16, 896], strides = [1, 1]} : vector<16x1152xbf16> to vector<16x896xbf16>
    %15 = vector.extract_strided_slice %1 {offsets = [0, 128], sizes = [16, 896], strides = [1, 1]} : vector<16x1152xbf16> to vector<16x896xbf16>
    %16 = vector.extract_strided_slice %1 {offsets = [0, 129], sizes = [16, 896], strides = [1, 1]} : vector<16x1152xbf16> to vector<16x896xbf16>
    %17 = vector.extract_strided_slice %1 {offsets = [0, 137], sizes = [16, 896], strides = [1, 1]} : vector<16x1152xbf16> to vector<16x896xbf16>
    %18 = vector.extract_strided_slice %1 {offsets = [0, 138], sizes = [16, 896], strides = [1, 1]} : vector<16x1152xbf16> to vector<16x896xbf16>
    %19 = vector.extract_strided_slice %1 {offsets = [0, 139], sizes = [16, 896], strides = [1, 1]} : vector<16x1152xbf16> to vector<16x896xbf16>
    %20 = vector.extract_strided_slice %1 {offsets = [0, 217], sizes = [16, 896], strides = [1, 1]} : vector<16x1152xbf16> to vector<16x896xbf16>
    %21 = vector.extract_strided_slice %1 {offsets = [0, 218], sizes = [16, 896], strides = [1, 1]} : vector<16x1152xbf16> to vector<16x896xbf16>
    %22 = vector.extract_strided_slice %1 {offsets = [0, 219], sizes = [16, 896], strides = [1, 1]} : vector<16x1152xbf16> to vector<16x896xbf16>
    %23 = vector.extract_strided_slice %1 {offsets = [0, 227], sizes = [16, 896], strides = [1, 1]} : vector<16x1152xbf16> to vector<16x896xbf16>
    %24 = vector.extract_strided_slice %1 {offsets = [0, 228], sizes = [16, 896], strides = [1, 1]} : vector<16x1152xbf16> to vector<16x896xbf16>
    %25 = vector.extract_strided_slice %1 {offsets = [0, 229], sizes = [16, 896], strides = [1, 1]} : vector<16x1152xbf16> to vector<16x896xbf16>
    %26 = vector.extract_strided_slice %1 {offsets = [0, 237], sizes = [16, 896], strides = [1, 1]} : vector<16x1152xbf16> to vector<16x896xbf16>
    %27 = vector.extract_strided_slice %1 {offsets = [0, 238], sizes = [16, 896], strides = [1, 1]} : vector<16x1152xbf16> to vector<16x896xbf16>
    %28 = vector.extract_strided_slice %1 {offsets = [0, 239], sizes = [16, 896], strides = [1, 1]} : vector<16x1152xbf16> to vector<16x896xbf16>
    %29 = tpu.concatenate %2, %3, %4, %5, %6, %7, %8, %9, %10, %11, %12, %13, %14, %15, %16, %17 in 0 : vector<16x896xbf16>, vector<16x896xbf16>, vector<16x896xbf16>, vector<16x896xbf16>, vector<16x896xbf16>, vector<16x896xbf16>, vector<16x896xbf16>, vector<16x896xbf16>, vector<16x896xbf16>, vector<16x896xbf16>, vector<16x896xbf16>, vector<16x896xbf16>, vector<16x896xbf16>, vector<16x896xbf16>, vector<16x896xbf16>, vector<16x896xbf16> -> vector<256x896xbf16>
    %30 = tpu.concatenate %18, %19, %20, %21, %22, %23, %24, %25, %26, %27, %28 in 0 : vector<16x896xbf16>, vector<16x896xbf16>, vector<16x896xbf16>, vector<16x896xbf16>, vector<16x896xbf16>, vector<16x896xbf16>, vector<16x896xbf16>, vector<16x896xbf16>, vector<16x896xbf16>, vector<16x896xbf16>, vector<16x896xbf16> -> vector<176x896xbf16>
    %31 = tpu.concatenate %29, %30 in 0 : vector<256x896xbf16>, vector<176x896xbf16> -> vector<432x896xbf16>
    %c0_2 = arith.constant 0 : index
    %c0_3 = arith.constant 0 : index
    %32 = vector.load %arg2[%c0_2, %c0_3] : memref<32x432xbf16, #tpu.memory_space<vmem>>, vector<32x432xbf16>
    %cst = arith.constant dense<0.000000e+00> : vector<32x896xf32>
    %33 = tpu.matmul %32, %31, %cst {dimension_numbers = #tpu.dot_dimension_numbers<[1], [0], [0], [1], [0, 0, 1, 1], [], []>} : vector<32x432xbf16>, vector<432x896xbf16>, vector<32x896xf32> -> vector<32x896xf32>
    %c0_4 = arith.constant 0 : index
    %c0_5 = arith.constant 0 : index
    %34 = vector.load %arg3[%c0_4, %c0_5] : memref<32x1xf32, #tpu.memory_space<vmem>>, vector<32x1xf32>
    %35 = vector.broadcast %34 : vector<32x1xf32> to vector<32x896xf32>
    %36 = arith.addf %33, %35 : vector<32x896xf32>
    %c0_6 = arith.constant 0 : index
    %c0_7 = arith.constant 0 : index
    %c0_8 = arith.constant 0 : index
    %37 = vector.load %arg5[%c0_6, %c0_7, %c0_8] : memref<1x32x896xf32, #tpu.memory_space<vmem>>, vector<1x32x896xf32>
    %38 = vector.shape_cast %37 : vector<1x32x896xf32> to vector<32x896xf32>
    %39 = vector.shape_cast %36 : vector<32x896xf32> to vector<1x32x896xf32>
    tpu.vector_store %arg5[%c0_6, %c0_7, %c0_8], %39 {strides = array<i32>} : memref<1x32x896xf32, #tpu.memory_space<vmem>>, vector<1x32x896xf32>,
    %c0_9 = arith.constant 0 : index
    %c0_10 = arith.constant 0 : index
    %40 = vector.load %arg4[%c0_9, %c0_10] : memref<1x896xf32, #tpu.memory_space<vmem>>, vector<1x896xf32>
    %41 = vector.broadcast %40 : vector<1x896xf32> to vector<32x896xf32>
    %42 = arith.mulf %36, %41 : vector<32x896xf32>
    %cst_11 = arith.constant dense<0.000000e+00> : vector<32xf32>
    %43 = vector.multi_reduction <add>, %42, %cst_11 [1] : vector<32x896xf32> to vector<32xf32>
    %44 = vector.shape_cast %43 : vector<32xf32> to vector<32x1xf32>
    %c0_12 = arith.constant 0 : index
    %c0_13 = arith.constant 0 : index
    %c0_14 = arith.constant 0 : index
    %45 = vector.load %arg6[%c0_12, %c0_13, %c0_14] : memref<1x32x1xf32, #tpu.memory_space<vmem>>, vector<1x32x1xf32>
    %46 = vector.shape_cast %45 : vector<1x32x1xf32> to vector<32x1xf32>
    %47 = vector.shape_cast %44 : vector<32x1xf32> to vector<1x32x1xf32>
    tpu.vector_store %arg6[%c0_12, %c0_13, %c0_14], %47 {strides = array<i32>} : memref<1x32x1xf32, #tpu.memory_space<vmem>>, vector<1x32x1xf32>,
    %48 = arith.mulf %42, %36 : vector<32x896xf32>
    %cst_15 = arith.constant dense<0.000000e+00> : vector<32xf32>
    %49 = vector.multi_reduction <add>, %48, %cst_15 [1] : vector<32x896xf32> to vector<32xf32>
    %50 = vector.shape_cast %49 : vector<32xf32> to vector<32x1xf32>
    %c0_16 = arith.constant 0 : index
    %c0_17 = arith.constant 0 : index
    %c0_18 = arith.constant 0 : index
    %51 = vector.load %arg7[%c0_16, %c0_17, %c0_18] : memref<1x32x1xf32, #tpu.memory_space<vmem>>, vector<1x32x1xf32>
    %52 = vector.shape_cast %51 : vector<1x32x1xf32> to vector<32x1xf32>
    %53 = vector.shape_cast %50 : vector<32x1xf32> to vector<1x32x1xf32>
    tpu.vector_store %arg7[%c0_16, %c0_17, %c0_18], %53 {strides = array<i32>} : memref<1x32x1xf32, #tpu.memory_space<vmem>>, vector<1x32x1xf32>,
    return
  }
  func.func @transform_0(%arg0: i32) -> (i32, i32, i32) {
    %c0_i32 = arith.constant 0 : i32
    %c0_i32_0 = arith.constant 0 : i32
    %c0_i32_1 = arith.constant 0 : i32
    return %arg0, %c0_i32, %c0_i32_0 : i32, i32, i32
  }
  func.func @transform_1(%arg0: i32) -> (i32, i32) {
    %c0_i32 = arith.constant 0 : i32
    %c0_i32_0 = arith.constant 0 : i32
    %c0_i32_1 = arith.constant 0 : i32
    return %c0_i32, %c0_i32_0 : i32, i32
  }
  func.func @transform_2(%arg0: i32) -> (i32, i32) {
    %c0_i32 = arith.constant 0 : i32
    %c0_i32_0 = arith.constant 0 : i32
    %c0_i32_1 = arith.constant 0 : i32
    return %c0_i32, %c0_i32_0 : i32, i32
  }
  func.func @transform_3(%arg0: i32) -> (i32, i32) {
    %c0_i32 = arith.constant 0 : i32
    %c0_i32_0 = arith.constant 0 : i32
    %c0_i32_1 = arith.constant 0 : i32
    return %c0_i32, %c0_i32_0 : i32, i32
  }
  func.func @transform_4(%arg0: i32) -> (i32, i32, i32) {
    %c0_i32 = arith.constant 0 : i32
    %c0_i32_0 = arith.constant 0 : i32
    %c0_i32_1 = arith.constant 0 : i32
    return %arg0, %c0_i32, %c0_i32_0 : i32, i32, i32
  }
  func.func @transform_5(%arg0: i32) -> (i32, i32, i32) {
    %c0_i32 = arith.constant 0 : i32
    %c0_i32_0 = arith.constant 0 : i32
    %c0_i32_1 = arith.constant 0 : i32
    return %arg0, %c0_i32, %c0_i32_0 : i32, i32, i32
  }
  func.func @transform_6(%arg0: i32) -> (i32, i32, i32) {
    %c0_i32 = arith.constant 0 : i32
    %c0_i32_0 = arith.constant 0 : i32
    %c0_i32_1 = arith.constant 0 : i32
    return %arg0, %c0_i32, %c0_i32_0 : i32, i32, i32
  }
}

module attributes {stable_mosaic.version = 11 : i64} {
  func.func @bn_elu_repack_kernel(%arg0: i32, %arg1: memref<1x32x896xf32, #tpu.memory_space<vmem>>, %arg2: memref<32x1xf32, #tpu.memory_space<vmem>>, %arg3: memref<32x1xf32, #tpu.memory_space<vmem>>, %arg4: memref<1x896xf32, #tpu.memory_space<vmem>>, %arg5: memref<1x32x1152xbf16, #tpu.memory_space<vmem>>) attributes {dimension_semantics = [#tpu.dimension_semantics<parallel>], iteration_bounds = array<i64: 2>, scalar_prefetch = 0 : i64, scratch_operands = 0 : i64, tpu.core_type = #tpu.core_type<tc>, window_params = [{transform_indices = @transform_0, window_bounds = array<i64: 1, 32, 896>}, {pipeline_mode = #tpu.pipeline_mode<synchronous>, transform_indices = @transform_1, window_bounds = array<i64: 32, 1>}, {pipeline_mode = #tpu.pipeline_mode<synchronous>, transform_indices = @transform_2, window_bounds = array<i64: 32, 1>}, {pipeline_mode = #tpu.pipeline_mode<synchronous>, transform_indices = @transform_3, window_bounds = array<i64: 1, 896>}, {transform_indices = @transform_4, window_bounds = array<i64: 1, 32, 1152>}]} {
    %c0 = arith.constant 0 : index
    %c0_0 = arith.constant 0 : index
    %c0_1 = arith.constant 0 : index
    %0 = vector.load %arg1[%c0, %c0_0, %c0_1] : memref<1x32x896xf32, #tpu.memory_space<vmem>>, vector<1x32x896xf32>
    %1 = vector.shape_cast %0 : vector<1x32x896xf32> to vector<32x896xf32>
    %c0_2 = arith.constant 0 : index
    %c0_3 = arith.constant 0 : index
    %2 = vector.load %arg2[%c0_2, %c0_3] : memref<32x1xf32, #tpu.memory_space<vmem>>, vector<32x1xf32>
    %3 = vector.broadcast %2 : vector<32x1xf32> to vector<32x896xf32>
    %4 = arith.mulf %1, %3 : vector<32x896xf32>
    %c0_4 = arith.constant 0 : index
    %c0_5 = arith.constant 0 : index
    %5 = vector.load %arg3[%c0_4, %c0_5] : memref<32x1xf32, #tpu.memory_space<vmem>>, vector<32x1xf32>
    %6 = vector.broadcast %5 : vector<32x1xf32> to vector<32x896xf32>
    %7 = arith.addf %4, %6 : vector<32x896xf32>
    %cst = arith.constant 0.000000e+00 : f32
    %8 = vector.broadcast %cst : f32 to vector<32x896xf32>
    %9 = arith.cmpf ogt, %7, %8 : vector<32x896xf32>
    %10 = math.exp %7 : vector<32x896xf32>
    %cst_6 = arith.constant 1.000000e+00 : f32
    %11 = vector.broadcast %cst_6 : f32 to vector<32x896xf32>
    %12 = arith.subf %10, %11 : vector<32x896xf32>
    %13 = arith.select %9, %7, %12 : vector<32x896xi1>, vector<32x896xf32>
    %c0_7 = arith.constant 0 : index
    %c0_8 = arith.constant 0 : index
    %14 = vector.load %arg4[%c0_7, %c0_8] : memref<1x896xf32, #tpu.memory_space<vmem>>, vector<1x896xf32>
    %15 = vector.broadcast %14 : vector<1x896xf32> to vector<32x896xf32>
    %16 = arith.mulf %13, %15 : vector<32x896xf32>
    %17 = arith.truncf %16 : vector<32x896xf32> to vector<32x896xbf16>
    %cst_9 = arith.constant 0.000000e+00 : bf16
    %18 = vector.broadcast %cst_9 : bf16 to vector<32x128xbf16>
    %cst_10 = arith.constant 0.000000e+00 : bf16
    %19 = vector.broadcast %cst_10 : bf16 to vector<32x128xbf16>
    %20 = tpu.concatenate %18, %17, %19 in 1 : vector<32x128xbf16>, vector<32x896xbf16>, vector<32x128xbf16> -> vector<32x1152xbf16>
    %c0_11 = arith.constant 0 : index
    %c0_12 = arith.constant 0 : index
    %c0_13 = arith.constant 0 : index
    %21 = vector.load %arg5[%c0_11, %c0_12, %c0_13] : memref<1x32x1152xbf16, #tpu.memory_space<vmem>>, vector<1x32x1152xbf16>
    %22 = vector.shape_cast %21 : vector<1x32x1152xbf16> to vector<32x1152xbf16>
    %23 = vector.shape_cast %20 : vector<32x1152xbf16> to vector<1x32x1152xbf16>
    tpu.vector_store %arg5[%c0_11, %c0_12, %c0_13], %23 {strides = array<i32>} : memref<1x32x1152xbf16, #tpu.memory_space<vmem>>, vector<1x32x1152xbf16>,
    return
  }
  func.func @transform_0(%arg0: i32) -> (i32, i32, i32) {
    %c0_i32 = arith.constant 0 : i32
    %c0_i32_0 = arith.constant 0 : i32
    %c0_i32_1 = arith.constant 0 : i32
    return %arg0, %c0_i32, %c0_i32_0 : i32, i32, i32
  }
  func.func @transform_1(%arg0: i32) -> (i32, i32) {
    %c0_i32 = arith.constant 0 : i32
    %c0_i32_0 = arith.constant 0 : i32
    %c0_i32_1 = arith.constant 0 : i32
    return %c0_i32, %c0_i32_0 : i32, i32
  }
  func.func @transform_2(%arg0: i32) -> (i32, i32) {
    %c0_i32 = arith.constant 0 : i32
    %c0_i32_0 = arith.constant 0 : i32
    %c0_i32_1 = arith.constant 0 : i32
    return %c0_i32, %c0_i32_0 : i32, i32
  }
  func.func @transform_3(%arg0: i32) -> (i32, i32) {
    %c0_i32 = arith.constant 0 : i32
    %c0_i32_0 = arith.constant 0 : i32
    %c0_i32_1 = arith.constant 0 : i32
    return %c0_i32, %c0_i32_0 : i32, i32
  }
  func.func @transform_4(%arg0: i32) -> (i32, i32, i32) {
    %c0_i32 = arith.constant 0 : i32
    %c0_i32_0 = arith.constant 0 : i32
    %c0_i32_1 = arith.constant 0 : i32
    return %arg0, %c0_i32, %c0_i32_0 : i32, i32, i32
  }
}

module attributes {stable_mosaic.version = 11 : i64} {
  func.func @conv_stats_kernel(%arg0: i32, %arg1: memref<1x32x1152xbf16, #tpu.memory_space<vmem>>, %arg2: memref<64x864xbf16, #tpu.memory_space<vmem>>, %arg3: memref<64x1xf32, #tpu.memory_space<vmem>>, %arg4: memref<1x896xf32, #tpu.memory_space<vmem>>, %arg5: memref<1x64x896xf32, #tpu.memory_space<vmem>>, %arg6: memref<1x64x1xf32, #tpu.memory_space<vmem>>, %arg7: memref<1x64x1xf32, #tpu.memory_space<vmem>>) attributes {dimension_semantics = [#tpu.dimension_semantics<parallel>], iteration_bounds = array<i64: 2>, scalar_prefetch = 0 : i64, scratch_operands = 0 : i64, tpu.core_type = #tpu.core_type<tc>, window_params = [{transform_indices = @transform_0, window_bounds = array<i64: 1, 32, 1152>}, {pipeline_mode = #tpu.pipeline_mode<synchronous>, transform_indices = @transform_1, window_bounds = array<i64: 64, 864>}, {pipeline_mode = #tpu.pipeline_mode<synchronous>, transform_indices = @transform_2, window_bounds = array<i64: 64, 1>}, {pipeline_mode = #tpu.pipeline_mode<synchronous>, transform_indices = @transform_3, window_bounds = array<i64: 1, 896>}, {transform_indices = @transform_4, window_bounds = array<i64: 1, 64, 896>}, {transform_indices = @transform_5, window_bounds = array<i64: 1, 64, 1>}, {transform_indices = @transform_6, window_bounds = array<i64: 1, 64, 1>}]} {
    %c0 = arith.constant 0 : index
    %c0_0 = arith.constant 0 : index
    %c0_1 = arith.constant 0 : index
    %0 = vector.load %arg1[%c0, %c0_0, %c0_1] : memref<1x32x1152xbf16, #tpu.memory_space<vmem>>, vector<1x32x1152xbf16>
    %1 = vector.shape_cast %0 : vector<1x32x1152xbf16> to vector<32x1152xbf16>
    %2 = vector.extract_strided_slice %1 {offsets = [0, 17], sizes = [32, 896], strides = [1, 1]} : vector<32x1152xbf16> to vector<32x896xbf16>
    %3 = vector.extract_strided_slice %1 {offsets = [0, 18], sizes = [32, 896], strides = [1, 1]} : vector<32x1152xbf16> to vector<32x896xbf16>
    %4 = vector.extract_strided_slice %1 {offsets = [0, 19], sizes = [32, 896], strides = [1, 1]} : vector<32x1152xbf16> to vector<32x896xbf16>
    %5 = vector.extract_strided_slice %1 {offsets = [0, 27], sizes = [32, 896], strides = [1, 1]} : vector<32x1152xbf16> to vector<32x896xbf16>
    %6 = vector.extract_strided_slice %1 {offsets = [0, 28], sizes = [32, 896], strides = [1, 1]} : vector<32x1152xbf16> to vector<32x896xbf16>
    %7 = vector.extract_strided_slice %1 {offsets = [0, 29], sizes = [32, 896], strides = [1, 1]} : vector<32x1152xbf16> to vector<32x896xbf16>
    %8 = vector.extract_strided_slice %1 {offsets = [0, 37], sizes = [32, 896], strides = [1, 1]} : vector<32x1152xbf16> to vector<32x896xbf16>
    %9 = vector.extract_strided_slice %1 {offsets = [0, 38], sizes = [32, 896], strides = [1, 1]} : vector<32x1152xbf16> to vector<32x896xbf16>
    %10 = vector.extract_strided_slice %1 {offsets = [0, 39], sizes = [32, 896], strides = [1, 1]} : vector<32x1152xbf16> to vector<32x896xbf16>
    %11 = vector.extract_strided_slice %1 {offsets = [0, 117], sizes = [32, 896], strides = [1, 1]} : vector<32x1152xbf16> to vector<32x896xbf16>
    %12 = vector.extract_strided_slice %1 {offsets = [0, 118], sizes = [32, 896], strides = [1, 1]} : vector<32x1152xbf16> to vector<32x896xbf16>
    %13 = vector.extract_strided_slice %1 {offsets = [0, 119], sizes = [32, 896], strides = [1, 1]} : vector<32x1152xbf16> to vector<32x896xbf16>
    %14 = vector.extract_strided_slice %1 {offsets = [0, 127], sizes = [32, 896], strides = [1, 1]} : vector<32x1152xbf16> to vector<32x896xbf16>
    %15 = vector.extract_strided_slice %1 {offsets = [0, 128], sizes = [32, 896], strides = [1, 1]} : vector<32x1152xbf16> to vector<32x896xbf16>
    %16 = vector.extract_strided_slice %1 {offsets = [0, 129], sizes = [32, 896], strides = [1, 1]} : vector<32x1152xbf16> to vector<32x896xbf16>
    %17 = vector.extract_strided_slice %1 {offsets = [0, 137], sizes = [32, 896], strides = [1, 1]} : vector<32x1152xbf16> to vector<32x896xbf16>
    %18 = vector.extract_strided_slice %1 {offsets = [0, 138], sizes = [32, 896], strides = [1, 1]} : vector<32x1152xbf16> to vector<32x896xbf16>
    %19 = vector.extract_strided_slice %1 {offsets = [0, 139], sizes = [32, 896], strides = [1, 1]} : vector<32x1152xbf16> to vector<32x896xbf16>
    %20 = vector.extract_strided_slice %1 {offsets = [0, 217], sizes = [32, 896], strides = [1, 1]} : vector<32x1152xbf16> to vector<32x896xbf16>
    %21 = vector.extract_strided_slice %1 {offsets = [0, 218], sizes = [32, 896], strides = [1, 1]} : vector<32x1152xbf16> to vector<32x896xbf16>
    %22 = vector.extract_strided_slice %1 {offsets = [0, 219], sizes = [32, 896], strides = [1, 1]} : vector<32x1152xbf16> to vector<32x896xbf16>
    %23 = vector.extract_strided_slice %1 {offsets = [0, 227], sizes = [32, 896], strides = [1, 1]} : vector<32x1152xbf16> to vector<32x896xbf16>
    %24 = vector.extract_strided_slice %1 {offsets = [0, 228], sizes = [32, 896], strides = [1, 1]} : vector<32x1152xbf16> to vector<32x896xbf16>
    %25 = vector.extract_strided_slice %1 {offsets = [0, 229], sizes = [32, 896], strides = [1, 1]} : vector<32x1152xbf16> to vector<32x896xbf16>
    %26 = vector.extract_strided_slice %1 {offsets = [0, 237], sizes = [32, 896], strides = [1, 1]} : vector<32x1152xbf16> to vector<32x896xbf16>
    %27 = vector.extract_strided_slice %1 {offsets = [0, 238], sizes = [32, 896], strides = [1, 1]} : vector<32x1152xbf16> to vector<32x896xbf16>
    %28 = vector.extract_strided_slice %1 {offsets = [0, 239], sizes = [32, 896], strides = [1, 1]} : vector<32x1152xbf16> to vector<32x896xbf16>
    %29 = tpu.concatenate %2, %3, %4, %5, %6, %7, %8, %9, %10, %11, %12, %13, %14, %15, %16, %17 in 0 : vector<32x896xbf16>, vector<32x896xbf16>, vector<32x896xbf16>, vector<32x896xbf16>, vector<32x896xbf16>, vector<32x896xbf16>, vector<32x896xbf16>, vector<32x896xbf16>, vector<32x896xbf16>, vector<32x896xbf16>, vector<32x896xbf16>, vector<32x896xbf16>, vector<32x896xbf16>, vector<32x896xbf16>, vector<32x896xbf16>, vector<32x896xbf16> -> vector<512x896xbf16>
    %30 = tpu.concatenate %18, %19, %20, %21, %22, %23, %24, %25, %26, %27, %28 in 0 : vector<32x896xbf16>, vector<32x896xbf16>, vector<32x896xbf16>, vector<32x896xbf16>, vector<32x896xbf16>, vector<32x896xbf16>, vector<32x896xbf16>, vector<32x896xbf16>, vector<32x896xbf16>, vector<32x896xbf16>, vector<32x896xbf16> -> vector<352x896xbf16>
    %31 = tpu.concatenate %29, %30 in 0 : vector<512x896xbf16>, vector<352x896xbf16> -> vector<864x896xbf16>
    %c0_2 = arith.constant 0 : index
    %c0_3 = arith.constant 0 : index
    %32 = vector.load %arg2[%c0_2, %c0_3] : memref<64x864xbf16, #tpu.memory_space<vmem>>, vector<64x864xbf16>
    %cst = arith.constant dense<0.000000e+00> : vector<64x896xf32>
    %33 = tpu.matmul %32, %31, %cst {dimension_numbers = #tpu.dot_dimension_numbers<[1], [0], [0], [1], [0, 0, 1, 1], [], []>} : vector<64x864xbf16>, vector<864x896xbf16>, vector<64x896xf32> -> vector<64x896xf32>
    %c0_4 = arith.constant 0 : index
    %c0_5 = arith.constant 0 : index
    %34 = vector.load %arg3[%c0_4, %c0_5] : memref<64x1xf32, #tpu.memory_space<vmem>>, vector<64x1xf32>
    %35 = vector.broadcast %34 : vector<64x1xf32> to vector<64x896xf32>
    %36 = arith.addf %33, %35 : vector<64x896xf32>
    %c0_6 = arith.constant 0 : index
    %c0_7 = arith.constant 0 : index
    %c0_8 = arith.constant 0 : index
    %37 = vector.load %arg5[%c0_6, %c0_7, %c0_8] : memref<1x64x896xf32, #tpu.memory_space<vmem>>, vector<1x64x896xf32>
    %38 = vector.shape_cast %37 : vector<1x64x896xf32> to vector<64x896xf32>
    %39 = vector.shape_cast %36 : vector<64x896xf32> to vector<1x64x896xf32>
    tpu.vector_store %arg5[%c0_6, %c0_7, %c0_8], %39 {strides = array<i32>} : memref<1x64x896xf32, #tpu.memory_space<vmem>>, vector<1x64x896xf32>,
    %c0_9 = arith.constant 0 : index
    %c0_10 = arith.constant 0 : index
    %40 = vector.load %arg4[%c0_9, %c0_10] : memref<1x896xf32, #tpu.memory_space<vmem>>, vector<1x896xf32>
    %41 = vector.broadcast %40 : vector<1x896xf32> to vector<64x896xf32>
    %42 = arith.mulf %36, %41 : vector<64x896xf32>
    %cst_11 = arith.constant dense<0.000000e+00> : vector<64xf32>
    %43 = vector.multi_reduction <add>, %42, %cst_11 [1] : vector<64x896xf32> to vector<64xf32>
    %44 = vector.shape_cast %43 : vector<64xf32> to vector<64x1xf32>
    %c0_12 = arith.constant 0 : index
    %c0_13 = arith.constant 0 : index
    %c0_14 = arith.constant 0 : index
    %45 = vector.load %arg6[%c0_12, %c0_13, %c0_14] : memref<1x64x1xf32, #tpu.memory_space<vmem>>, vector<1x64x1xf32>
    %46 = vector.shape_cast %45 : vector<1x64x1xf32> to vector<64x1xf32>
    %47 = vector.shape_cast %44 : vector<64x1xf32> to vector<1x64x1xf32>
    tpu.vector_store %arg6[%c0_12, %c0_13, %c0_14], %47 {strides = array<i32>} : memref<1x64x1xf32, #tpu.memory_space<vmem>>, vector<1x64x1xf32>,
    %48 = arith.mulf %42, %36 : vector<64x896xf32>
    %cst_15 = arith.constant dense<0.000000e+00> : vector<64xf32>
    %49 = vector.multi_reduction <add>, %48, %cst_15 [1] : vector<64x896xf32> to vector<64xf32>
    %50 = vector.shape_cast %49 : vector<64xf32> to vector<64x1xf32>
    %c0_16 = arith.constant 0 : index
    %c0_17 = arith.constant 0 : index
    %c0_18 = arith.constant 0 : index
    %51 = vector.load %arg7[%c0_16, %c0_17, %c0_18] : memref<1x64x1xf32, #tpu.memory_space<vmem>>, vector<1x64x1xf32>
    %52 = vector.shape_cast %51 : vector<1x64x1xf32> to vector<64x1xf32>
    %53 = vector.shape_cast %50 : vector<64x1xf32> to vector<1x64x1xf32>
    tpu.vector_store %arg7[%c0_16, %c0_17, %c0_18], %53 {strides = array<i32>} : memref<1x64x1xf32, #tpu.memory_space<vmem>>, vector<1x64x1xf32>,
    return
  }
  func.func @transform_0(%arg0: i32) -> (i32, i32, i32) {
    %c0_i32 = arith.constant 0 : i32
    %c0_i32_0 = arith.constant 0 : i32
    %c0_i32_1 = arith.constant 0 : i32
    return %arg0, %c0_i32, %c0_i32_0 : i32, i32, i32
  }
  func.func @transform_1(%arg0: i32) -> (i32, i32) {
    %c0_i32 = arith.constant 0 : i32
    %c0_i32_0 = arith.constant 0 : i32
    %c0_i32_1 = arith.constant 0 : i32
    return %c0_i32, %c0_i32_0 : i32, i32
  }
  func.func @transform_2(%arg0: i32) -> (i32, i32) {
    %c0_i32 = arith.constant 0 : i32
    %c0_i32_0 = arith.constant 0 : i32
    %c0_i32_1 = arith.constant 0 : i32
    return %c0_i32, %c0_i32_0 : i32, i32
  }
  func.func @transform_3(%arg0: i32) -> (i32, i32) {
    %c0_i32 = arith.constant 0 : i32
    %c0_i32_0 = arith.constant 0 : i32
    %c0_i32_1 = arith.constant 0 : i32
    return %c0_i32, %c0_i32_0 : i32, i32
  }
  func.func @transform_4(%arg0: i32) -> (i32, i32, i32) {
    %c0_i32 = arith.constant 0 : i32
    %c0_i32_0 = arith.constant 0 : i32
    %c0_i32_1 = arith.constant 0 : i32
    return %arg0, %c0_i32, %c0_i32_0 : i32, i32, i32
  }
  func.func @transform_5(%arg0: i32) -> (i32, i32, i32) {
    %c0_i32 = arith.constant 0 : i32
    %c0_i32_0 = arith.constant 0 : i32
    %c0_i32_1 = arith.constant 0 : i32
    return %arg0, %c0_i32, %c0_i32_0 : i32, i32, i32
  }
  func.func @transform_6(%arg0: i32) -> (i32, i32, i32) {
    %c0_i32 = arith.constant 0 : i32
    %c0_i32_0 = arith.constant 0 : i32
    %c0_i32_1 = arith.constant 0 : i32
    return %arg0, %c0_i32, %c0_i32_0 : i32, i32, i32
  }
}

module attributes {stable_mosaic.version = 11 : i64} {
  func.func @bn_elu_repack_kernel(%arg0: i32, %arg1: memref<1x64x896xf32, #tpu.memory_space<vmem>>, %arg2: memref<64x1xf32, #tpu.memory_space<vmem>>, %arg3: memref<64x1xf32, #tpu.memory_space<vmem>>, %arg4: memref<1x896xf32, #tpu.memory_space<vmem>>, %arg5: memref<1x64x1152xf32, #tpu.memory_space<vmem>>) attributes {dimension_semantics = [#tpu.dimension_semantics<parallel>], iteration_bounds = array<i64: 2>, scalar_prefetch = 0 : i64, scratch_operands = 0 : i64, tpu.core_type = #tpu.core_type<tc>, window_params = [{transform_indices = @transform_0, window_bounds = array<i64: 1, 64, 896>}, {pipeline_mode = #tpu.pipeline_mode<synchronous>, transform_indices = @transform_1, window_bounds = array<i64: 64, 1>}, {pipeline_mode = #tpu.pipeline_mode<synchronous>, transform_indices = @transform_2, window_bounds = array<i64: 64, 1>}, {pipeline_mode = #tpu.pipeline_mode<synchronous>, transform_indices = @transform_3, window_bounds = array<i64: 1, 896>}, {transform_indices = @transform_4, window_bounds = array<i64: 1, 64, 1152>}]} {
    %c0 = arith.constant 0 : index
    %c0_0 = arith.constant 0 : index
    %c0_1 = arith.constant 0 : index
    %0 = vector.load %arg1[%c0, %c0_0, %c0_1] : memref<1x64x896xf32, #tpu.memory_space<vmem>>, vector<1x64x896xf32>
    %1 = vector.shape_cast %0 : vector<1x64x896xf32> to vector<64x896xf32>
    %c0_2 = arith.constant 0 : index
    %c0_3 = arith.constant 0 : index
    %2 = vector.load %arg2[%c0_2, %c0_3] : memref<64x1xf32, #tpu.memory_space<vmem>>, vector<64x1xf32>
    %3 = vector.broadcast %2 : vector<64x1xf32> to vector<64x896xf32>
    %4 = arith.mulf %1, %3 : vector<64x896xf32>
    %c0_4 = arith.constant 0 : index
    %c0_5 = arith.constant 0 : index
    %5 = vector.load %arg3[%c0_4, %c0_5] : memref<64x1xf32, #tpu.memory_space<vmem>>, vector<64x1xf32>
    %6 = vector.broadcast %5 : vector<64x1xf32> to vector<64x896xf32>
    %7 = arith.addf %4, %6 : vector<64x896xf32>
    %cst = arith.constant 0.000000e+00 : f32
    %8 = vector.broadcast %cst : f32 to vector<64x896xf32>
    %9 = arith.cmpf ogt, %7, %8 : vector<64x896xf32>
    %10 = math.exp %7 : vector<64x896xf32>
    %cst_6 = arith.constant 1.000000e+00 : f32
    %11 = vector.broadcast %cst_6 : f32 to vector<64x896xf32>
    %12 = arith.subf %10, %11 : vector<64x896xf32>
    %13 = arith.select %9, %7, %12 : vector<64x896xi1>, vector<64x896xf32>
    %c0_7 = arith.constant 0 : index
    %c0_8 = arith.constant 0 : index
    %14 = vector.load %arg4[%c0_7, %c0_8] : memref<1x896xf32, #tpu.memory_space<vmem>>, vector<1x896xf32>
    %15 = vector.broadcast %14 : vector<1x896xf32> to vector<64x896xf32>
    %16 = arith.mulf %13, %15 : vector<64x896xf32>
    %cst_9 = arith.constant 0.000000e+00 : f32
    %17 = vector.broadcast %cst_9 : f32 to vector<64x128xf32>
    %cst_10 = arith.constant 0.000000e+00 : f32
    %18 = vector.broadcast %cst_10 : f32 to vector<64x128xf32>
    %19 = tpu.concatenate %17, %16, %18 in 1 : vector<64x128xf32>, vector<64x896xf32>, vector<64x128xf32> -> vector<64x1152xf32>
    %c0_11 = arith.constant 0 : index
    %c0_12 = arith.constant 0 : index
    %c0_13 = arith.constant 0 : index
    %20 = vector.load %arg5[%c0_11, %c0_12, %c0_13] : memref<1x64x1152xf32, #tpu.memory_space<vmem>>, vector<1x64x1152xf32>
    %21 = vector.shape_cast %20 : vector<1x64x1152xf32> to vector<64x1152xf32>
    %22 = vector.shape_cast %19 : vector<64x1152xf32> to vector<1x64x1152xf32>
    tpu.vector_store %arg5[%c0_11, %c0_12, %c0_13], %22 {strides = array<i32>} : memref<1x64x1152xf32, #tpu.memory_space<vmem>>, vector<1x64x1152xf32>,
    return
  }
  func.func @transform_0(%arg0: i32) -> (i32, i32, i32) {
    %c0_i32 = arith.constant 0 : i32
    %c0_i32_0 = arith.constant 0 : i32
    %c0_i32_1 = arith.constant 0 : i32
    return %arg0, %c0_i32, %c0_i32_0 : i32, i32, i32
  }
  func.func @transform_1(%arg0: i32) -> (i32, i32) {
    %c0_i32 = arith.constant 0 : i32
    %c0_i32_0 = arith.constant 0 : i32
    %c0_i32_1 = arith.constant 0 : i32
    return %c0_i32, %c0_i32_0 : i32, i32
  }
  func.func @transform_2(%arg0: i32) -> (i32, i32) {
    %c0_i32 = arith.constant 0 : i32
    %c0_i32_0 = arith.constant 0 : i32
    %c0_i32_1 = arith.constant 0 : i32
    return %c0_i32, %c0_i32_0 : i32, i32
  }
  func.func @transform_3(%arg0: i32) -> (i32, i32) {
    %c0_i32 = arith.constant 0 : i32
    %c0_i32_0 = arith.constant 0 : i32
    %c0_i32_1 = arith.constant 0 : i32
    return %c0_i32, %c0_i32_0 : i32, i32
  }
  func.func @transform_4(%arg0: i32) -> (i32, i32, i32) {
    %c0_i32 = arith.constant 0 : i32
    %c0_i32_0 = arith.constant 0 : i32
    %c0_i32_1 = arith.constant 0 : i32
    return %arg0, %c0_i32, %c0_i32_0 : i32, i32, i32
  }
}

</mosaic_0001>

<llo_original>
// kernel: conv_layers_encoder_forward.5
$region0: #{conv_layers_encoder_forward.5}
  #allocation0 [shape = 'u32[]', space=smem, size = 0x4, offset = 0x4, fixed_abs, tag = 'smem constant byte address 0x4 - core index']
  #allocation1 [shape = 'u32[144,128]{1,0:T(1,128)}', space=vmem, size = 0x12000, scoped, tag = 'internal scratch']
  %s0 = inlined_call_operand.vmem [shape: f32[2,32,896], index: 0, kind: input, shape index: {}]
  %s1 = inlined_call_operand.vmem [shape: f32[32,1], index: 1, kind: input, shape index: {}]
  %s2 = inlined_call_operand.vmem [shape: f32[32,1], index: 2, kind: input, shape index: {}]
  %s3 = inlined_call_operand.vmem [shape: f32[1,896], index: 3, kind: input, shape index: {}]
  %s4 = inlined_call_operand.vmem [shape: bf16[2,32,1152], index: 4, kind: output, shape index: {}]
  %s5 = sld [smem:[#allocation0]]
  $region49: #{conv_layers_encoder_forward.5} parent=0
    _
  %s7 = ssub.s32 1, %s5
  %s8 = scalar_select 0, %s7, %s5
  loop: start=0, step=1, limit=4
  $region2: #{conv_layers_encoder_forward.5} parent=0 // loop_pre_header
    _
  $region3: #{conv_layers_encoder_forward.5} parent=0 // loop_header
    %s10 = sphi 0, %s14
    %p11 = scmp.ge.s32.totalorder %s10, 4
    %s20 = sphi 0, %s22
    %s23 = sphi 0, %s20
    %s24 = sphi 0, %s23
    %s40 = sphi 0, %s24
    %s44 = sphi 0, %s44
    %s46 = sphi 0, %s44
    %s47 = sphi 0, %s46
    %s61 = sphi 0, %s47
    %s65 = sphi 0, %s65
    %s67 = sphi 0, %s65
    %s68 = sphi 0, %s67
    %s82 = sphi 0, %s68
    %s86 = sphi 0, %s86
    %s88 = sphi 0, %s86
    %s89 = sphi 0, %s88
    %s103 = sphi 0, %s89
    %s109 = sphi 0, %s111
    %s112 = sphi 0, %s109
    %s113 = sphi 0, %s112
    %s129 = sphi 0, %s113
  $region4: #{conv_layers_encoder_forward.5} parent=0 // loop_header_branch
    %13 = sbr.rel (%p11) target = $region8
  $region5: #{conv_layers_encoder_forward.5} parent=0 // loop_body
    %s15 = ssub.s32 %s10, 1
    %s16 = ssub.s32 %s10, 2
    %s17 = sadd.s32 %s10, 1
    %s18 = ssub.s32 %s10, %s17
    %p19 = scmp.eq.s32.totalorder %s18, 0
    %s21 = sadd.s32 %s20, 1
    %s22 = scalar_select %p19, %s20, %s21
    %p25 = pneg %p19
    %p26 = scmp.eq.s32.totalorder %s10, 1
    %p27 = por %p25, %p26
    %p28 = scmp.ne.s32.totalorder %s20, %s23
    %p29 = scmp.eq.s32.totalorder %s10, 0
    %p30 = por %p28, %p29
    %p31 = scmp.ne.s32.totalorder %s20, %s23
    %p32 = scmp.eq.s32.totalorder %s15, 1
    %p33 = por %p31, %p32
    %p34 = scmp.ne.s32.totalorder %s23, %s24
    %p35 = scmp.eq.s32.totalorder %s15, 0
    %p36 = por %p34, %p35
    %p37 = scmp.ne.s32.totalorder %s23, %s24
    %p38 = scmp.eq.s32.totalorder %s16, 1
    %p39 = por %p37, %p38
    %p41 = scmp.ne.s32.totalorder %s24, %s40
    %p42 = scmp.eq.s32.totalorder %s16, 0
    %p43 = por %p41, %p42
    %s45 = sadd.s32 %s44, 1
    %p48 = scmp.eq.s32.totalorder %s10, 1
    %p49 = scmp.ne.s32.totalorder %s44, %s46
    %p50 = scmp.eq.s32.totalorder %s10, 0
    %p51 = por %p49, %p50
    %p52 = scmp.ne.s32.totalorder %s44, %s46
    %p53 = scmp.eq.s32.totalorder %s15, 1
    %p54 = por %p52, %p53
    %p55 = scmp.ne.s32.totalorder %s46, %s47
    %p56 = scmp.eq.s32.totalorder %s15, 0
    %p57 = por %p55, %p56
    %p58 = scmp.ne.s32.totalorder %s46, %s47
    %p59 = scmp.eq.s32.totalorder %s16, 1
    %p60 = por %p58, %p59
    %p62 = scmp.ne.s32.totalorder %s47, %s61
    %p63 = scmp.eq.s32.totalorder %s16, 0
    %p64 = por %p62, %p63
    %s66 = sadd.s32 %s65, 1
    %p69 = scmp.eq.s32.totalorder %s10, 1
    %p70 = scmp.ne.s32.totalorder %s65, %s67
    %p71 = scmp.eq.s32.totalorder %s10, 0
    %p72 = por %p70, %p71
    %p73 = scmp.ne.s32.totalorder %s65, %s67
    %p74 = scmp.eq.s32.totalorder %s15, 1
    %p75 = por %p73, %p74
    %p76 = scmp.ne.s32.totalorder %s67, %s68
    %p77 = scmp.eq.s32.totalorder %s15, 0
    %p78 = por %p76, %p77
    %p79 = scmp.ne.s32.totalorder %s67, %s68
    %p80 = scmp.eq.s32.totalorder %s16, 1
    %p81 = por %p79, %p80
    %p83 = scmp.ne.s32.totalorder %s68, %s82
    %p84 = scmp.eq.s32.totalorder %s16, 0
    %p85 = por %p83, %p84
    %s87 = sadd.s32 %s86, 1
    %p90 = scmp.eq.s32.totalorder %s10, 1
    %p91 = scmp.ne.s32.totalorder %s86, %s88
    %p92 = scmp.eq.s32.totalorder %s10, 0
    %p93 = por %p91, %p92
    %p94 = scmp.ne.s32.totalorder %s86, %s88
    %p95 = scmp.eq.s32.totalorder %s15, 1
    %p96 = por %p94, %p95
    %p97 = scmp.ne.s32.totalorder %s88, %s89
    %p98 = scmp.eq.s32.totalorder %s15, 0
    %p99 = por %p97, %p98
    %p100 = scmp.ne.s32.totalorder %s88, %s89
    %p101 = scmp.eq.s32.totalorder %s16, 1
    %p102 = por %p100, %p101
    %p104 = scmp.ne.s32.totalorder %s89, %s103
    %p105 = scmp.eq.s32.totalorder %s16, 0
    %p106 = por %p104, %p105
    %s107 = ssub.s32 %s10, %s17
    %p108 = scmp.eq.s32.totalorder %s107, 0
    %s110 = sadd.s32 %s109, 1
    %s111 = scalar_select %p108, %s109, %s110
    %p114 = pneg %p108
    %p115 = scmp.eq.s32.totalorder %s10, 1
    %p116 = por %p114, %p115
    %p117 = scmp.ne.s32.totalorder %s109, %s112
    %p118 = scmp.eq.s32.totalorder %s10, 0
    %p119 = por %p117, %p118
    %p120 = scmp.ne.s32.totalorder %s109, %s112
    %p121 = scmp.eq.s32.totalorder %s15, 1
    %p122 = por %p120, %p121
    %p123 = scmp.ne.s32.totalorder %s112, %s113
    %p124 = scmp.eq.s32.totalorder %s15, 0
    %p125 = por %p123, %p124
    %p126 = scmp.ne.s32.totalorder %s112, %s113
    %p127 = scmp.eq.s32.totalorder %s16, 1
    %p128 = por %p126, %p127
    %p130 = scmp.ne.s32.totalorder %s113, %s129
    %p131 = scmp.eq.s32.totalorder %s16, 0
    %p132 = por %p130, %p131
    %p133 = scmp.le.s32.totalorder 1, %s10
    %p134 = scmp.lt.s32.totalorder %s10, 3
    %p135 = pnand %p133, %p134
    %p136 = pneg %p135
    // Predicated region
    $region9: #{conv_layers_encoder_forward.5} parent=5 // pred_check
      _
    $region10: #{conv_layers_encoder_forward.5} parent=5 // pred_check_branch
      %138 = sbr.rel (%p135) target = $region12
    $region11: #{conv_layers_encoder_forward.5} parent=5 // pred_region
      %s139 = ssub.s32 %s10, 1
      // Predicated region
      $region13: #{conv_layers_encoder_forward.5} parent=11 // pred_check
        %p140 = pneg %p57
      $region14: #{conv_layers_encoder_forward.5} parent=11 // pred_check_branch
        %142 = sbr.rel (%p140) target = $region16
      $region15: #{conv_layers_encoder_forward.5} parent=11 // pred_region
        _
      $region16: #{conv_layers_encoder_forward.5} parent=11 // pred_fallthru
        _
      // Predicated region
      $region17: #{conv_layers_encoder_forward.5} parent=11 // pred_check
        %p143 = pneg %p78
      $region18: #{conv_layers_encoder_forward.5} parent=11 // pred_check_branch
        %145 = sbr.rel (%p143) target = $region20
      $region19: #{conv_layers_encoder_forward.5} parent=11 // pred_region
        _
      $region20: #{conv_layers_encoder_forward.5} parent=11 // pred_fallthru
        _
      // Predicated region
      $region21: #{conv_layers_encoder_forward.5} parent=11 // pred_check
        %p146 = pneg %p99
      $region22: #{conv_layers_encoder_forward.5} parent=11 // pred_check_branch
        %148 = sbr.rel (%p146) target = $region24
      $region23: #{conv_layers_encoder_forward.5} parent=11 // pred_region
        _
      $region24: #{conv_layers_encoder_forward.5} parent=11 // pred_fallthru
        _
    $region12: #{conv_layers_encoder_forward.5} parent=5 // pred_fallthru
      _
    %p149 = scmp.lt.s32.totalorder %s10, 2
    // Predicated region
    $region25: #{conv_layers_encoder_forward.5} parent=5 // pred_check
      %p150 = pneg %p149
    $region26: #{conv_layers_encoder_forward.5} parent=5 // pred_check_branch
      %152 = sbr.rel (%p150) target = $region28
    $region27: #{conv_layers_encoder_forward.5} parent=5 // pred_region
      // Predicated region
      $region29: #{conv_layers_encoder_forward.5} parent=27 // pred_check
        %p153 = pneg %p30
      $region30: #{conv_layers_encoder_forward.5} parent=27 // pred_check_branch
        %155 = sbr.rel (%p153) target = $region32
      $region31: #{conv_layers_encoder_forward.5} parent=27 // pred_region
        %p156 = scmp.lt.s32.totalorder %s10, 1
        %s157 = scalar_select %p156, %s10, 1
        %s158 = smul.addr %s157, 28
        %s159 = smul.addr %s158, 8
        %s160 = scalar_lea.vmem %s0, %s159
      $region32: #{conv_layers_encoder_forward.5} parent=27 // pred_fallthru
        _
    $region28: #{conv_layers_encoder_forward.5} parent=5 // pred_fallthru
      _
    %p161 = scmp.le.s32.totalorder 1, %s10
    %p162 = scmp.lt.s32.totalorder %s10, 3
    %p163 = pnand %p161, %p162
    %p164 = pneg %p163
    // Predicated region
    $region33: #{conv_layers_encoder_forward.5} parent=5 // pred_check
      _
    $region34: #{conv_layers_encoder_forward.5} parent=5 // pred_check_branch
      %166 = sbr.rel (%p163) target = $region36
    $region35: #{conv_layers_encoder_forward.5} parent=5 // pred_region
      %s167 = ssub.s32 %s10, 1
      %p168 = scmp.lt.s32.totalorder %s15, 1
      %s169 = scalar_select %p168, %s15, 1
      %s170 = smul.addr %s169, 28
      %s171 = smul.addr %s170, 8
      %s172 = scalar_lea.vmem %s0, %s171
      %p173 = pneg %p36
      %p174 = pneg %p33
      %p175 = pneg %p57
      %p176 = pneg %p54
      %p177 = pneg %p78
      %p178 = pneg %p75
      %p179 = pneg %p99
      %p180 = pneg %p96
      %p181 = pneg %p125
      %p182 = pneg %p122
      %p183 = scmp.lt.s32.totalorder %s15, 1
      %s184 = scalar_select %p183, %s15, 1
      %s185 = smul.addr %s184, 36
      %s186 = smul.addr %s185, 4
      %s187 = scalar_lea.vmem %s4, %s186
      %p188 = scmp.lt.s32.totalorder %s15, 1
      %s189 = scalar_select %p188, %s15, 1
      %s190 = smul.addr %s189, 28
      %s191 = smul.addr %s190, 8
      %s192 = scalar_lea.vmem %s0, %s191
      %p193 = scmp.lt.s32.totalorder %s15, 1
      %s194 = scalar_select %p193, %s15, 1
      %s195 = smul.addr %s194, 36
      %s196 = smul.addr %s195, 4
      %s197 = scalar_lea.vmem %s4, %s196
      %v199 = vld [vmem:[%s192] sm:$0xff]
      %v200 = vld [vmem:[%s192 + $0x8] sm:$0xff]
      %v201 = vld [vmem:[%s192 + $0x10] sm:$0xff]
      %v202 = vld [vmem:[%s192 + $0x18] sm:$0xff]
      %v203 = vld [vmem:[%s192 + $0x20] sm:$0xff]
      %v204 = vld [vmem:[%s192 + $0x28] sm:$0xff]
      %v205 = vld [vmem:[%s192 + $0x30] sm:$0xff]
      %v206 = vld [vmem:[%s192 + $0x38] sm:$0xff]
      %v207 = vld [vmem:[%s192 + $0x40] sm:$0xff]
      %v208 = vld [vmem:[%s192 + $0x48] sm:$0xff]
      %v209 = vld [vmem:[%s192 + $0x50] sm:$0xff]
      %v210 = vld [vmem:[%s192 + $0x58] sm:$0xff]
      %v211 = vld [vmem:[%s192 + $0x60] sm:$0xff]
      %v212 = vld [vmem:[%s192 + $0x68] sm:$0xff]
      %v213 = vld [vmem:[%s192 + $0x70] sm:$0xff]
      %v214 = vld [vmem:[%s192 + $0x78] sm:$0xff]
      %v215 = vld [vmem:[%s192 + $0x80] sm:$0xff]
      %v216 = vld [vmem:[%s192 + $0x88] sm:$0xff]
      %v217 = vld [vmem:[%s192 + $0x90] sm:$0xff]
      %v218 = vld [vmem:[%s192 + $0x98] sm:$0xff]
      %v219 = vld [vmem:[%s192 + $0xa0] sm:$0xff]
      %v220 = vld [vmem:[%s192 + $0xa8] sm:$0xff]
      %v221 = vld [vmem:[%s192 + $0xb0] sm:$0xff]
      %v222 = vld [vmem:[%s192 + $0xb8] sm:$0xff]
      %v223 = vld [vmem:[%s192 + $0xc0] sm:$0xff]
      %v224 = vld [vmem:[%s192 + $0xc8] sm:$0xff]
      %v225 = vld [vmem:[%s192 + $0xd0] sm:$0xff]
      %v226 = vld [vmem:[%s192 + $0xd8] sm:$0xff]
      %v227 = vld [vmem:[%s1] sm:$0xff]
      %v228 = vld [vmem:[%s1 + $0x8] sm:$0xff]
      %v229 = vld [vmem:[%s1 + $0x10] sm:$0xff]
      %v230 = vld [vmem:[%s1 + $0x18] sm:$0xff]
      %232 = vset.pattern.permute.xlu0 0
      %233 = vperm.xlu0 %232, %v227
      %v234 = vpop.permute.xlu0 %233
      %237 = vset.pattern.permute.xlu0 0
      %238 = vperm.xlu0 %237, %v228
      %v239 = vpop.permute.xlu0 %238
      %242 = vset.pattern.permute.xlu0 0
      %243 = vperm.xlu0 %242, %v229
      %v244 = vpop.permute.xlu0 %243
      %247 = vset.pattern.permute.xlu0 0
      %248 = vperm.xlu0 %247, %v230
      %v249 = vpop.permute.xlu0 %248
      %v251 = vmul.f32 %v199, %v234
      %v252 = vmul.f32 %v200, %v234
      %v253 = vmul.f32 %v201, %v234
      %v254 = vmul.f32 %v202, %v234
      %v255 = vmul.f32 %v203, %v234
      %v256 = vmul.f32 %v204, %v234
      %v257 = vmul.f32 %v205, %v234
      %v258 = vmul.f32 %v206, %v239
      %v259 = vmul.f32 %v207, %v239
      %v260 = vmul.f32 %v208, %v239
      %v261 = vmul.f32 %v209, %v239
      %v262 = vmul.f32 %v210, %v239
      %v263 = vmul.f32 %v211, %v239
      %v264 = vmul.f32 %v212, %v239
      %v265 = vmul.f32 %v213, %v244
      %v266 = vmul.f32 %v214, %v244
      %v267 = vmul.f32 %v215, %v244
      %v268 = vmul.f32 %v216, %v244
      %v269 = vmul.f32 %v217, %v244
      %v270 = vmul.f32 %v218, %v244
      %v271 = vmul.f32 %v219, %v244
      %v272 = vmul.f32 %v220, %v249
      %v273 = vmul.f32 %v221, %v249
      %v274 = vmul.f32 %v222, %v249
      %v275 = vmul.f32 %v223, %v249
      %v276 = vmul.f32 %v224, %v249
      %v277 = vmul.f32 %v225, %v249
      %v278 = vmul.f32 %v226, %v249
      %v279 = vld [vmem:[%s2] sm:$0xff]
      %v280 = vld [vmem:[%s2 + $0x8] sm:$0xff]
      %v281 = vld [vmem:[%s2 + $0x10] sm:$0xff]
      %v282 = vld [vmem:[%s2 + $0x18] sm:$0xff]
      %284 = vset.pattern.permute.xlu0 0
      %285 = vperm.xlu0 %284, %v279
      %v286 = vpop.permute.xlu0 %285
      %289 = vset.pattern.permute.xlu0 0
      %290 = vperm.xlu0 %289, %v280
      %v291 = vpop.permute.xlu0 %290
      %294 = vset.pattern.permute.xlu0 0
      %295 = vperm.xlu0 %294, %v281
      %v296 = vpop.permute.xlu0 %295
      %299 = vset.pattern.permute.xlu0 0
      %300 = vperm.xlu0 %299, %v282
      %v301 = vpop.permute.xlu0 %300
      %v303 = vadd.f32 %v251, %v286
      %v304 = vadd.f32 %v252, %v286
      %v305 = vadd.f32 %v253, %v286
      %v306 = vadd.f32 %v254, %v286
      %v307 = vadd.f32 %v255, %v286
      %v308 = vadd.f32 %v256, %v286
      %v309 = vadd.f32 %v257, %v286
      %v310 = vadd.f32 %v258, %v291
      %v311 = vadd.f32 %v259, %v291
      %v312 = vadd.f32 %v260, %v291
      %v313 = vadd.f32 %v261, %v291
      %v314 = vadd.f32 %v262, %v291
      %v315 = vadd.f32 %v263, %v291
      %v316 = vadd.f32 %v264, %v291
      %v317 = vadd.f32 %v265, %v296
      %v318 = vadd.f32 %v266, %v296
      %v319 = vadd.f32 %v267, %v296
      %v320 = vadd.f32 %v268, %v296
      %v321 = vadd.f32 %v269, %v296
      %v322 = vadd.f32 %v270, %v296
      %v323 = vadd.f32 %v271, %v296
      %v324 = vadd.f32 %v272, %v301
      %v325 = vadd.f32 %v273, %v301
      %v326 = vadd.f32 %v274, %v301
      %v327 = vadd.f32 %v275, %v301
      %v328 = vadd.f32 %v276, %v301
      %v329 = vadd.f32 %v277, %v301
      %v330 = vadd.f32 %v278, %v301
      %vm331 = vcmp.gt.f32.partialorder %v303, 0.0
      %vm332 = vcmp.gt.f32.partialorder %v304, 0.0
      %vm333 = vcmp.gt.f32.partialorder %v305, 0.0
      %vm334 = vcmp.gt.f32.partialorder %v306, 0.0
      %vm335 = vcmp.gt.f32.partialorder %v307, 0.0
      %vm336 = vcmp.gt.f32.partialorder %v308, 0.0
      %vm337 = vcmp.gt.f32.partialorder %v309, 0.0
      %vm338 = vcmp.gt.f32.partialorder %v310, 0.0
      %vm339 = vcmp.gt.f32.partialorder %v311, 0.0
      %vm340 = vcmp.gt.f32.partialorder %v312, 0.0
      %vm341 = vcmp.gt.f32.partialorder %v313, 0.0
      %vm342 = vcmp.gt.f32.partialorder %v314, 0.0
      %vm343 = vcmp.gt.f32.partialorder %v315, 0.0
      %vm344 = vcmp.gt.f32.partialorder %v316, 0.0
      %vm345 = vcmp.gt.f32.partialorder %v317, 0.0
      %vm346 = vcmp.gt.f32.partialorder %v318, 0.0
      %vm347 = vcmp.gt.f32.partialorder %v319, 0.0
      %vm348 = vcmp.gt.f32.partialorder %v320, 0.0
      %vm349 = vcmp.gt.f32.partialorder %v321, 0.0
      %vm350 = vcmp.gt.f32.partialorder %v322, 0.0
      %vm351 = vcmp.gt.f32.partialorder %v323, 0.0
      %vm352 = vcmp.gt.f32.partialorder %v324, 0.0
      %vm353 = vcmp.gt.f32.partialorder %v325, 0.0
      %vm354 = vcmp.gt.f32.partialorder %v326, 0.0
      %vm355 = vcmp.gt.f32.partialorder %v327, 0.0
      %vm356 = vcmp.gt.f32.partialorder %v328, 0.0
      %vm357 = vcmp.gt.f32.partialorder %v329, 0.0
      %vm358 = vcmp.gt.f32.partialorder %v330, 0.0
      %v359 = vmul.f32 %v303, 1.442695
      %v360 = vpow.pop %v359
      %v361 = vmul.f32 %v304, 1.442695
      %v362 = vpow.pop %v361
      %v363 = vmul.f32 %v305, 1.442695
      %v364 = vpow.pop %v363
      %v365 = vmul.f32 %v306, 1.442695
      %v366 = vpow.pop %v365
      %v367 = vmul.f32 %v307, 1.442695
      %v368 = vpow.pop %v367
      %v369 = vmul.f32 %v308, 1.442695
      %v370 = vpow.pop %v369
      %v371 = vmul.f32 %v309, 1.442695
      %v372 = vpow.pop %v371
      %v373 = vmul.f32 %v310, 1.442695
      %v374 = vpow.pop %v373
      %v375 = vmul.f32 %v311, 1.442695
      %v376 = vpow.pop %v375
      %v377 = vmul.f32 %v312, 1.442695
      %v378 = vpow.pop %v377
      %v379 = vmul.f32 %v313, 1.442695
      %v380 = vpow.pop %v379
      %v381 = vmul.f32 %v314, 1.442695
      %v382 = vpow.pop %v381
      %v383 = vmul.f32 %v315, 1.442695
      %v384 = vpow.pop %v383
      %v385 = vmul.f32 %v316, 1.442695
      %v386 = vpow.pop %v385
      %v387 = vmul.f32 %v317, 1.442695
      %v388 = vpow.pop %v387
      %v389 = vmul.f32 %v318, 1.442695
      %v390 = vpow.pop %v389
      %v391 = vmul.f32 %v319, 1.442695
      %v392 = vpow.pop %v391
      %v393 = vmul.f32 %v320, 1.442695
      %v394 = vpow.pop %v393
      %v395 = vmul.f32 %v321, 1.442695
      %v396 = vpow.pop %v395
      %v397 = vmul.f32 %v322, 1.442695
      %v398 = vpow.pop %v397
      %v399 = vmul.f32 %v323, 1.442695
      %v400 = vpow.pop %v399
      %v401 = vmul.f32 %v324, 1.442695
      %v402 = vpow.pop %v401
      %v403 = vmul.f32 %v325, 1.442695
      %v404 = vpow.pop %v403
      %v405 = vmul.f32 %v326, 1.442695
      %v406 = vpow.pop %v405
      %v407 = vmul.f32 %v327, 1.442695
      %v408 = vpow.pop %v407
      %v409 = vmul.f32 %v328, 1.442695
      %v410 = vpow.pop %v409
      %v411 = vmul.f32 %v329, 1.442695
      %v412 = vpow.pop %v411
      %v413 = vmul.f32 %v330, 1.442695
      %v414 = vpow.pop %v413
      %v415 = vsub.f32 %v360, 1.0
      %v416 = vsub.f32 %v362, 1.0
      %v417 = vsub.f32 %v364, 1.0
      %v418 = vsub.f32 %v366, 1.0
      %v419 = vsub.f32 %v368, 1.0
      %v420 = vsub.f32 %v370, 1.0
      %v421 = vsub.f32 %v372, 1.0
      %v422 = vsub.f32 %v374, 1.0
      %v423 = vsub.f32 %v376, 1.0
      %v424 = vsub.f32 %v378, 1.0
      %v425 = vsub.f32 %v380, 1.0
      %v426 = vsub.f32 %v382, 1.0
      %v427 = vsub.f32 %v384, 1.0
      %v428 = vsub.f32 %v386, 1.0
      %v429 = vsub.f32 %v388, 1.0
      %v430 = vsub.f32 %v390, 1.0
      %v431 = vsub.f32 %v392, 1.0
      %v432 = vsub.f32 %v394, 1.0
      %v433 = vsub.f32 %v396, 1.0
      %v434 = vsub.f32 %v398, 1.0
      %v435 = vsub.f32 %v400, 1.0
      %v436 = vsub.f32 %v402, 1.0
      %v437 = vsub.f32 %v404, 1.0
      %v438 = vsub.f32 %v406, 1.0
      %v439 = vsub.f32 %v408, 1.0
      %v440 = vsub.f32 %v410, 1.0
      %v441 = vsub.f32 %v412, 1.0
      %v442 = vsub.f32 %v414, 1.0
      %v443 = vsel %vm331, %v303, %v415
      %v444 = vsel %vm332, %v304, %v416
      %v445 = vsel %vm333, %v305, %v417
      %v446 = vsel %vm334, %v306, %v418
      %v447 = vsel %vm335, %v307, %v419
      %v448 = vsel %vm336, %v308, %v420
      %v449 = vsel %vm337, %v309, %v421
      %v450 = vsel %vm338, %v310, %v422
      %v451 = vsel %vm339, %v311, %v423
      %v452 = vsel %vm340, %v312, %v424
      %v453 = vsel %vm341, %v313, %v425
      %v454 = vsel %vm342, %v314, %v426
      %v455 = vsel %vm343, %v315, %v427
      %v456 = vsel %vm344, %v316, %v428
      %v457 = vsel %vm345, %v317, %v429
      %v458 = vsel %vm346, %v318, %v430
      %v459 = vsel %vm347, %v319, %v431
      %v460 = vsel %vm348, %v320, %v432
      %v461 = vsel %vm349, %v321, %v433
      %v462 = vsel %vm350, %v322, %v434
      %v463 = vsel %vm351, %v323, %v435
      %v464 = vsel %vm352, %v324, %v436
      %v465 = vsel %vm353, %v325, %v437
      %v466 = vsel %vm354, %v326, %v438
      %v467 = vsel %vm355, %v327, %v439
      %v468 = vsel %vm356, %v328, %v440
      %v469 = vsel %vm357, %v329, %v441
      %v470 = vsel %vm358, %v330, %v442
      %v471 = vld [vmem:[%s3] sm:$0xff]
      %v473 = vlaneseq
      %v474 = vshrl.u32 %v473, 7
      %v475 = vsub.s32 0, %v474
      %v476 = vrot.slane %v471, %v475
      %v477 = vlaneseq
      %v478 = vshrl.u32 %v477, 7
      %v479 = vsub.s32 1, %v478
      %v480 = vrot.slane %v471, %v479
      %v481 = vlaneseq
      %v482 = vshrl.u32 %v481, 7
      %v483 = vsub.s32 2, %v482
      %v484 = vrot.slane %v471, %v483
      %v485 = vlaneseq
      %v486 = vshrl.u32 %v485, 7
      %v487 = vsub.s32 3, %v486
      %v488 = vrot.slane %v471, %v487
      %v489 = vlaneseq
      %v490 = vshrl.u32 %v489, 7
      %v491 = vsub.s32 4, %v490
      %v492 = vrot.slane %v471, %v491
      %v493 = vlaneseq
      %v494 = vshrl.u32 %v493, 7
      %v495 = vsub.s32 5, %v494
      %v496 = vrot.slane %v471, %v495
      %v497 = vlaneseq
      %v498 = vshrl.u32 %v497, 7
      %v499 = vsub.s32 6, %v498
      %v500 = vrot.slane %v471, %v499
      %v508 = vmul.f32 %v443, %v476
      %v509 = vmul.f32 %v444, %v480
      %v510 = vmul.f32 %v445, %v484
      %v511 = vmul.f32 %v446, %v488
      %v512 = vmul.f32 %v447, %v492
      %v513 = vmul.f32 %v448, %v496
      %v514 = vmul.f32 %v449, %v500
      %v515 = vmul.f32 %v450, %v476
      %v516 = vmul.f32 %v451, %v480
      %v517 = vmul.f32 %v452, %v484
      %v518 = vmul.f32 %v453, %v488
      %v519 = vmul.f32 %v454, %v492
      %v520 = vmul.f32 %v455, %v496
      %v521 = vmul.f32 %v456, %v500
      %v522 = vmul.f32 %v457, %v476
      %v523 = vmul.f32 %v458, %v480
      %v524 = vmul.f32 %v459, %v484
      %v525 = vmul.f32 %v460, %v488
      %v526 = vmul.f32 %v461, %v492
      %v527 = vmul.f32 %v462, %v496
      %v528 = vmul.f32 %v463, %v500
      %v529 = vmul.f32 %v464, %v476
      %v530 = vmul.f32 %v465, %v480
      %v531 = vmul.f32 %v466, %v484
      %v532 = vmul.f32 %v467, %v488
      %v533 = vmul.f32 %v468, %v492
      %v534 = vmul.f32 %v469, %v496
      %v535 = vmul.f32 %v470, %v500
      %v536 = vpack.c.bf16 %v515, %v508
      %v537 = vpack.c.bf16 %v516, %v509
      %v538 = vpack.c.bf16 %v517, %v510
      %v539 = vpack.c.bf16 %v518, %v511
      %v540 = vpack.c.bf16 %v519, %v512
      %v541 = vpack.c.bf16 %v520, %v513
      %v542 = vpack.c.bf16 %v521, %v514
      %v543 = vpack.c.bf16 %v529, %v522
      %v544 = vpack.c.bf16 %v530, %v523
      %v545 = vpack.c.bf16 %v531, %v524
      %v546 = vpack.c.bf16 %v532, %v525
      %v547 = vpack.c.bf16 %v533, %v526
      %v548 = vpack.c.bf16 %v534, %v527
      %v549 = vpack.c.bf16 %v535, %v528
      %v565 = vunpack.c.l.b16 0
      %v566 = vunpack.c.l.b16 %v536
      %v567 = vunpack.c.l.b16 %v537
      %v568 = vunpack.c.l.b16 %v538
      %v569 = vunpack.c.l.b16 %v539
      %v570 = vunpack.c.l.b16 %v540
      %v571 = vunpack.c.l.b16 %v541
      %v572 = vunpack.c.l.b16 %v542
      %v573 = vunpack.c.h.b16 0
      %v574 = vunpack.c.h.b16 %v536
      %v575 = vunpack.c.h.b16 %v537
      %v576 = vunpack.c.h.b16 %v538
      %v577 = vunpack.c.h.b16 %v539
      %v578 = vunpack.c.h.b16 %v540
      %v579 = vunpack.c.h.b16 %v541
      %v580 = vunpack.c.h.b16 %v542
      %v581 = vunpack.c.l.b16 %v543
      %v582 = vunpack.c.l.b16 %v544
      %v583 = vunpack.c.l.b16 %v545
      %v584 = vunpack.c.l.b16 %v546
      %v585 = vunpack.c.l.b16 %v547
      %v586 = vunpack.c.l.b16 %v548
      %v587 = vunpack.c.l.b16 %v549
      %v588 = vunpack.c.h.b16 %v543
      %v589 = vunpack.c.h.b16 %v544
      %v590 = vunpack.c.h.b16 %v545
      %v591 = vunpack.c.h.b16 %v546
      %v592 = vunpack.c.h.b16 %v547
      %v593 = vunpack.c.h.b16 %v548
      %v594 = vunpack.c.h.b16 %v549
      %v595 = vpack.c.b16 %v566, %v565
      %v596 = vpack.c.b16 %v568, %v567
      %v597 = vpack.c.b16 %v570, %v569
      %v598 = vpack.c.b16 %v572, %v571
      %v599 = vpack.c.b16 %v565, %v565
      %v600 = vpack.c.b16 %v574, %v573
      %v601 = vpack.c.b16 %v576, %v575
      %v602 = vpack.c.b16 %v578, %v577
      %v603 = vpack.c.b16 %v580, %v579
      %v604 = vpack.c.b16 %v573, %v573
      %v605 = vpack.c.b16 %v581, %v565
      %v606 = vpack.c.b16 %v583, %v582
      %v607 = vpack.c.b16 %v585, %v584
      %v608 = vpack.c.b16 %v587, %v586
      %v609 = vpack.c.b16 %v588, %v573
      %v610 = vpack.c.b16 %v590, %v589
      %v611 = vpack.c.b16 %v592, %v591
      %v612 = vpack.c.b16 %v594, %v593
      %631 = vst [vmem:[%s197] sm:$0xff] %v595
      %632 = vst [vmem:[%s197 + $0x8] sm:$0xff] %v596
      %633 = vst [vmem:[%s197 + $0x10] sm:$0xff] %v597
      %634 = vst [vmem:[%s197 + $0x18] sm:$0xff] %v598
      %635 = vst [vmem:[%s197 + $0x20] sm:$0xf] %v599
      %636 = vst [vmem:[%s197 + $0x24] sm:$0xff] %v600
      %637 = vst [vmem:[%s197 + $0x2c] sm:$0xff] %v601
      %638 = vst [vmem:[%s197 + $0x34] sm:$0xff] %v602
      %639 = vst [vmem:[%s197 + $0x3c] sm:$0xff] %v603
      %640 = vst [vmem:[%s197 + $0x44] sm:$0xf] %v604
      %641 = vst [vmem:[%s197 + $0x48] sm:$0xff] %v605
      %642 = vst [vmem:[%s197 + $0x50] sm:$0xff] %v606
      %643 = vst [vmem:[%s197 + $0x58] sm:$0xff] %v607
      %644 = vst [vmem:[%s197 + $0x60] sm:$0xff] %v608
      %645 = vst [vmem:[%s197 + $0x68] sm:$0xf] %v599
      %646 = vst [vmem:[%s197 + $0x6c] sm:$0xff] %v609
      %647 = vst [vmem:[%s197 + $0x74] sm:$0xff] %v610
      %648 = vst [vmem:[%s197 + $0x7c] sm:$0xff] %v611
      %649 = vst [vmem:[%s197 + $0x84] sm:$0xff] %v612
      %650 = vst [vmem:[%s197 + $0x8c] sm:$0xf] %v604
      %p651 = scmp.lt.s32.totalorder %s15, 1
      %s652 = scalar_select %p651, %s15, 1
      %s653 = smul.addr %s652, 36
      %s654 = smul.addr %s653, 4
      %s655 = scalar_lea.vmem %s4, %s654
      // Predicated region
      $region37: #{conv_layers_encoder_forward.5} parent=35 // pred_check
        %p656 = pneg %p122
      $region38: #{conv_layers_encoder_forward.5} parent=35 // pred_check_branch
        %658 = sbr.rel (%p656) target = $region40
      $region39: #{conv_layers_encoder_forward.5} parent=35 // pred_region
        _
      $region40: #{conv_layers_encoder_forward.5} parent=35 // pred_fallthru
        _
    $region36: #{conv_layers_encoder_forward.5} parent=5 // pred_fallthru
      _
    %p659 = scmp.le.s32.totalorder 2, %s10
    // Predicated region
    $region41: #{conv_layers_encoder_forward.5} parent=5 // pred_check
      %p660 = pneg %p659
    $region42: #{conv_layers_encoder_forward.5} parent=5 // pred_check_branch
      %662 = sbr.rel (%p660) target = $region44
    $region43: #{conv_layers_encoder_forward.5} parent=5 // pred_region
      %s663 = ssub.s32 %s10, 2
      // Predicated region
      $region45: #{conv_layers_encoder_forward.5} parent=43 // pred_check
        %p664 = pneg %p128
      $region46: #{conv_layers_encoder_forward.5} parent=43 // pred_check_branch
        %666 = sbr.rel (%p664) target = $region48
      $region47: #{conv_layers_encoder_forward.5} parent=43 // pred_region
        %p667 = scmp.lt.s32.totalorder %s16, 1
        %s668 = scalar_select %p667, %s16, 1
        %s669 = smul.addr %s668, 36
        %s670 = smul.addr %s669, 4
        %s671 = scalar_lea.vmem %s4, %s670
      $region48: #{conv_layers_encoder_forward.5} parent=43 // pred_fallthru
        _
    $region44: #{conv_layers_encoder_forward.5} parent=5 // pred_fallthru
      _
  $region6: #{conv_layers_encoder_forward.5} parent=0 // loop_footer
    %s14 = sadd.s32 1, %s10
  $region7: #{conv_layers_encoder_forward.5} parent=0 // loop_footer_branch
    %9 = sbr.rel target = $region3
  $region8: #{conv_layers_encoder_forward.5} parent=0 // loop_exit
    _

// kernel: conv_layers_encoder_forward.4
$region0: #{conv_layers_encoder_forward.4}
  #allocation0 [shape = 'u32[]', space=smem, size = 0x4, offset = 0x4, fixed_abs, tag = 'smem constant byte address 0x4 - core index']
  #allocation1 [shape = 'u32[144,128]{1,0:T(1,128)}', space=vmem, size = 0x12000, scoped, tag = 'internal scratch']
  %s0 = inlined_call_operand.vmem [shape: bf16[2,16,1152], index: 0, kind: input, shape index: {}]
  %s1 = inlined_call_operand.vmem [shape: bf16[32,432], index: 1, kind: input, shape index: {}]
  %s2 = inlined_call_operand.vmem [shape: f32[32,1], index: 2, kind: input, shape index: {}]
  %s3 = inlined_call_operand.vmem [shape: f32[1,896], index: 3, kind: input, shape index: {}]
  %s4 = inlined_call_operand.vmem [shape: f32[2,32,896], index: 4, kind: output, shape index: {0}]
  %s5 = inlined_call_operand.vmem [shape: f32[2,32,1], index: 5, kind: output, shape index: {1}]
  %s6 = inlined_call_operand.vmem [shape: f32[2,32,1], index: 6, kind: output, shape index: {2}]
  %7 = xla_tuple %s4, %s5, %s6
  %s8 = sld [smem:[#allocation0]]
  $region65: #{conv_layers_encoder_forward.4} parent=0
    _
  %s10 = ssub.s32 1, %s8
  %s11 = scalar_select 0, %s10, %s8
  loop: start=0, step=1, limit=4
  $region2: #{conv_layers_encoder_forward.4} parent=0 // loop_pre_header
    _
  $region3: #{conv_layers_encoder_forward.4} parent=0 // loop_header
    %s13 = sphi 0, %s17
    %p14 = scmp.ge.s32.totalorder %s13, 4
    %s23 = sphi 0, %s25
    %s26 = sphi 0, %s23
    %s27 = sphi 0, %s26
    %s43 = sphi 0, %s27
    %s47 = sphi 0, %s47
    %s49 = sphi 0, %s47
    %s50 = sphi 0, %s49
    %s64 = sphi 0, %s50
    %s68 = sphi 0, %s68
    %s70 = sphi 0, %s68
    %s71 = sphi 0, %s70
    %s85 = sphi 0, %s71
    %s89 = sphi 0, %s89
    %s91 = sphi 0, %s89
    %s92 = sphi 0, %s91
    %s106 = sphi 0, %s92
    %s112 = sphi 0, %s114
    %s115 = sphi 0, %s112
    %s116 = sphi 0, %s115
    %s132 = sphi 0, %s116
    %s138 = sphi 0, %s140
    %s141 = sphi 0, %s138
    %s142 = sphi 0, %s141
    %s158 = sphi 0, %s142
    %s164 = sphi 0, %s166
    %s167 = sphi 0, %s164
    %s168 = sphi 0, %s167
    %s184 = sphi 0, %s168
  $region4: #{conv_layers_encoder_forward.4} parent=0 // loop_header_branch
    %16 = sbr.rel (%p14) target = $region8
  $region5: #{conv_layers_encoder_forward.4} parent=0 // loop_body
    %s18 = ssub.s32 %s13, 1
    %s19 = ssub.s32 %s13, 2
    %s20 = sadd.s32 %s13, 1
    %s21 = ssub.s32 %s13, %s20
    %p22 = scmp.eq.s32.totalorder %s21, 0
    %s24 = sadd.s32 %s23, 1
    %s25 = scalar_select %p22, %s23, %s24
    %p28 = pneg %p22
    %p29 = scmp.eq.s32.totalorder %s13, 1
    %p30 = por %p28, %p29
    %p31 = scmp.ne.s32.totalorder %s23, %s26
    %p32 = scmp.eq.s32.totalorder %s13, 0
    %p33 = por %p31, %p32
    %p34 = scmp.ne.s32.totalorder %s23, %s26
    %p35 = scmp.eq.s32.totalorder %s18, 1
    %p36 = por %p34, %p35
    %p37 = scmp.ne.s32.totalorder %s26, %s27
    %p38 = scmp.eq.s32.totalorder %s18, 0
    %p39 = por %p37, %p38
    %p40 = scmp.ne.s32.totalorder %s26, %s27
    %p41 = scmp.eq.s32.totalorder %s19, 1
    %p42 = por %p40, %p41
    %p44 = scmp.ne.s32.totalorder %s27, %s43
    %p45 = scmp.eq.s32.totalorder %s19, 0
    %p46 = por %p44, %p45
    %s48 = sadd.s32 %s47, 1
    %p51 = scmp.eq.s32.totalorder %s13, 1
    %p52 = scmp.ne.s32.totalorder %s47, %s49
    %p53 = scmp.eq.s32.totalorder %s13, 0
    %p54 = por %p52, %p53
    %p55 = scmp.ne.s32.totalorder %s47, %s49
    %p56 = scmp.eq.s32.totalorder %s18, 1
    %p57 = por %p55, %p56
    %p58 = scmp.ne.s32.totalorder %s49, %s50
    %p59 = scmp.eq.s32.totalorder %s18, 0
    %p60 = por %p58, %p59
    %p61 = scmp.ne.s32.totalorder %s49, %s50
    %p62 = scmp.eq.s32.totalorder %s19, 1
    %p63 = por %p61, %p62
    %p65 = scmp.ne.s32.totalorder %s50, %s64
    %p66 = scmp.eq.s32.totalorder %s19, 0
    %p67 = por %p65, %p66
    %s69 = sadd.s32 %s68, 1
    %p72 = scmp.eq.s32.totalorder %s13, 1
    %p73 = scmp.ne.s32.totalorder %s68, %s70
    %p74 = scmp.eq.s32.totalorder %s13, 0
    %p75 = por %p73, %p74
    %p76 = scmp.ne.s32.totalorder %s68, %s70
    %p77 = scmp.eq.s32.totalorder %s18, 1
    %p78 = por %p76, %p77
    %p79 = scmp.ne.s32.totalorder %s70, %s71
    %p80 = scmp.eq.s32.totalorder %s18, 0
    %p81 = por %p79, %p80
    %p82 = scmp.ne.s32.totalorder %s70, %s71
    %p83 = scmp.eq.s32.totalorder %s19, 1
    %p84 = por %p82, %p83
    %p86 = scmp.ne.s32.totalorder %s71, %s85
    %p87 = scmp.eq.s32.totalorder %s19, 0
    %p88 = por %p86, %p87
    %s90 = sadd.s32 %s89, 1
    %p93 = scmp.eq.s32.totalorder %s13, 1
    %p94 = scmp.ne.s32.totalorder %s89, %s91
    %p95 = scmp.eq.s32.totalorder %s13, 0
    %p96 = por %p94, %p95
    %p97 = scmp.ne.s32.totalorder %s89, %s91
    %p98 = scmp.eq.s32.totalorder %s18, 1
    %p99 = por %p97, %p98
    %p100 = scmp.ne.s32.totalorder %s91, %s92
    %p101 = scmp.eq.s32.totalorder %s18, 0
    %p102 = por %p100, %p101
    %p103 = scmp.ne.s32.totalorder %s91, %s92
    %p104 = scmp.eq.s32.totalorder %s19, 1
    %p105 = por %p103, %p104
    %p107 = scmp.ne.s32.totalorder %s92, %s106
    %p108 = scmp.eq.s32.totalorder %s19, 0
    %p109 = por %p107, %p108
    %s110 = ssub.s32 %s13, %s20
    %p111 = scmp.eq.s32.totalorder %s110, 0
    %s113 = sadd.s32 %s112, 1
    %s114 = scalar_select %p111, %s112, %s113
    %p117 = pneg %p111
    %p118 = scmp.eq.s32.totalorder %s13, 1
    %p119 = por %p117, %p118
    %p120 = scmp.ne.s32.totalorder %s112, %s115
    %p121 = scmp.eq.s32.totalorder %s13, 0
    %p122 = por %p120, %p121
    %p123 = scmp.ne.s32.totalorder %s112, %s115
    %p124 = scmp.eq.s32.totalorder %s18, 1
    %p125 = por %p123, %p124
    %p126 = scmp.ne.s32.totalorder %s115, %s116
    %p127 = scmp.eq.s32.totalorder %s18, 0
    %p128 = por %p126, %p127
    %p129 = scmp.ne.s32.totalorder %s115, %s116
    %p130 = scmp.eq.s32.totalorder %s19, 1
    %p131 = por %p129, %p130
    %p133 = scmp.ne.s32.totalorder %s116, %s132
    %p134 = scmp.eq.s32.totalorder %s19, 0
    %p135 = por %p133, %p134
    %s136 = ssub.s32 %s13, %s20
    %p137 = scmp.eq.s32.totalorder %s136, 0
    %s139 = sadd.s32 %s138, 1
    %s140 = scalar_select %p137, %s138, %s139
    %p143 = pneg %p137
    %p144 = scmp.eq.s32.totalorder %s13, 1
    %p145 = por %p143, %p144
    %p146 = scmp.ne.s32.totalorder %s138, %s141
    %p147 = scmp.eq.s32.totalorder %s13, 0
    %p148 = por %p146, %p147
    %p149 = scmp.ne.s32.totalorder %s138, %s141
    %p150 = scmp.eq.s32.totalorder %s18, 1
    %p151 = por %p149, %p150
    %p152 = scmp.ne.s32.totalorder %s141, %s142
    %p153 = scmp.eq.s32.totalorder %s18, 0
    %p154 = por %p152, %p153
    %p155 = scmp.ne.s32.totalorder %s141, %s142
    %p156 = scmp.eq.s32.totalorder %s19, 1
    %p157 = por %p155, %p156
    %p159 = scmp.ne.s32.totalorder %s142, %s158
    %p160 = scmp.eq.s32.totalorder %s19, 0
    %p161 = por %p159, %p160
    %s162 = ssub.s32 %s13, %s20
    %p163 = scmp.eq.s32.totalorder %s162, 0
    %s165 = sadd.s32 %s164, 1
    %s166 = scalar_select %p163, %s164, %s165
    %p169 = pneg %p163
    %p170 = scmp.eq.s32.totalorder %s13, 1
    %p171 = por %p169, %p170
    %p172 = scmp.ne.s32.totalorder %s164, %s167
    %p173 = scmp.eq.s32.totalorder %s13, 0
    %p174 = por %p172, %p173
    %p175 = scmp.ne.s32.totalorder %s164, %s167
    %p176 = scmp.eq.s32.totalorder %s18, 1
    %p177 = por %p175, %p176
    %p178 = scmp.ne.s32.totalorder %s167, %s168
    %p179 = scmp.eq.s32.totalorder %s18, 0
    %p180 = por %p178, %p179
    %p181 = scmp.ne.s32.totalorder %s167, %s168
    %p182 = scmp.eq.s32.totalorder %s19, 1
    %p183 = por %p181, %p182
    %p185 = scmp.ne.s32.totalorder %s168, %s184
    %p186 = scmp.eq.s32.totalorder %s19, 0
    %p187 = por %p185, %p186
    %p188 = scmp.le.s32.totalorder 1, %s13
    %p189 = scmp.lt.s32.totalorder %s13, 3
    %p190 = pnand %p188, %p189
    %p191 = pneg %p190
    // Predicated region
    $region9: #{conv_layers_encoder_forward.4} parent=5 // pred_check
      _
    $region10: #{conv_layers_encoder_forward.4} parent=5 // pred_check_branch
      %193 = sbr.rel (%p190) target = $region12
    $region11: #{conv_layers_encoder_forward.4} parent=5 // pred_region
      %s194 = ssub.s32 %s13, 1
      // Predicated region
      $region13: #{conv_layers_encoder_forward.4} parent=11 // pred_check
        %p195 = pneg %p60
      $region14: #{conv_layers_encoder_forward.4} parent=11 // pred_check_branch
        %197 = sbr.rel (%p195) target = $region16
      $region15: #{conv_layers_encoder_forward.4} parent=11 // pred_region
        _
      $region16: #{conv_layers_encoder_forward.4} parent=11 // pred_fallthru
        _
      // Predicated region
      $region17: #{conv_layers_encoder_forward.4} parent=11 // pred_check
        %p198 = pneg %p81
      $region18: #{conv_layers_encoder_forward.4} parent=11 // pred_check_branch
        %200 = sbr.rel (%p198) target = $region20
      $region19: #{conv_layers_encoder_forward.4} parent=11 // pred_region
        _
      $region20: #{conv_layers_encoder_forward.4} parent=11 // pred_fallthru
        _
      // Predicated region
      $region21: #{conv_layers_encoder_forward.4} parent=11 // pred_check
        %p201 = pneg %p102
      $region22: #{conv_layers_encoder_forward.4} parent=11 // pred_check_branch
        %203 = sbr.rel (%p201) target = $region24
      $region23: #{conv_layers_encoder_forward.4} parent=11 // pred_region
        _
      $region24: #{conv_layers_encoder_forward.4} parent=11 // pred_fallthru
        _
    $region12: #{conv_layers_encoder_forward.4} parent=5 // pred_fallthru
      _
    %p204 = scmp.lt.s32.totalorder %s13, 2
    // Predicated region
    $region25: #{conv_layers_encoder_forward.4} parent=5 // pred_check
      %p205 = pneg %p204
    $region26: #{conv_layers_encoder_forward.4} parent=5 // pred_check_branch
      %207 = sbr.rel (%p205) target = $region28
    $region27: #{conv_layers_encoder_forward.4} parent=5 // pred_region
      // Predicated region
      $region29: #{conv_layers_encoder_forward.4} parent=27 // pred_check
        %p208 = pneg %p33
      $region30: #{conv_layers_encoder_forward.4} parent=27 // pred_check_branch
        %210 = sbr.rel (%p208) target = $region32
      $region31: #{conv_layers_encoder_forward.4} parent=27 // pred_region
        %p211 = scmp.lt.s32.totalorder %s13, 1
        %s212 = scalar_select %p211, %s13, 1
        %s213 = smul.addr %s212, 18
        %s214 = smul.addr %s213, 4
        %s215 = scalar_lea.vmem %s0, %s214
      $region32: #{conv_layers_encoder_forward.4} parent=27 // pred_fallthru
        _
    $region28: #{conv_layers_encoder_forward.4} parent=5 // pred_fallthru
      _
    %p216 = scmp.le.s32.totalorder 1, %s13
    %p217 = scmp.lt.s32.totalorder %s13, 3
    %p218 = pnand %p216, %p217
    %p219 = pneg %p218
    // Predicated region
    $region33: #{conv_layers_encoder_forward.4} parent=5 // pred_check
      _
    $region34: #{conv_layers_encoder_forward.4} parent=5 // pred_check_branch
      %221 = sbr.rel (%p218) target = $region36
    $region35: #{conv_layers_encoder_forward.4} parent=5 // pred_region
      %s222 = ssub.s32 %s13, 1
      %p223 = scmp.lt.s32.totalorder %s18, 1
      %s224 = scalar_select %p223, %s18, 1
      %s225 = smul.addr %s224, 18
      %s226 = smul.addr %s225, 4
      %s227 = scalar_lea.vmem %s0, %s226
      %p228 = pneg %p39
      %p229 = pneg %p36
      %p230 = pneg %p60
      %p231 = pneg %p57
      %p232 = pneg %p81
      %p233 = pneg %p78
      %p234 = pneg %p102
      %p235 = pneg %p99
      %p236 = pneg %p128
      %p237 = pneg %p125
      %p238 = scmp.lt.s32.totalorder %s18, 1
      %s239 = scalar_select %p238, %s18, 1
      %s240 = smul.addr %s239, 28
      %s241 = smul.addr %s240, 8
      %s242 = scalar_lea.vmem %s4, %s241
      %p243 = pneg %p154
      %p244 = pneg %p151
      %p245 = scmp.lt.s32.totalorder %s18, 1
      %s246 = scalar_select %p245, %s18, 1
      %s247 = smul.addr %s246, 4
      %s248 = smul.addr %s247, 8
      %s249 = scalar_lea.vmem %s5, %s248
      %p250 = pneg %p180
      %p251 = pneg %p177
      %p252 = scmp.lt.s32.totalorder %s18, 1
      %s253 = scalar_select %p252, %s18, 1
      %s254 = smul.addr %s253, 4
      %s255 = smul.addr %s254, 8
      %s256 = scalar_lea.vmem %s6, %s255
      %p257 = scmp.lt.s32.totalorder %s18, 1
      %s258 = scalar_select %p257, %s18, 1
      %s259 = smul.addr %s258, 18
      %s260 = smul.addr %s259, 4
      %s261 = scalar_lea.vmem %s0, %s260
      %p262 = scmp.lt.s32.totalorder %s18, 1
      %s263 = scalar_select %p262, %s18, 1
      %s264 = smul.addr %s263, 28
      %s265 = smul.addr %s264, 8
      %s266 = scalar_lea.vmem %s4, %s265
      %p267 = scmp.lt.s32.totalorder %s18, 1
      %s268 = scalar_select %p267, %s18, 1
      %s269 = smul.addr %s268, 4
      %s270 = smul.addr %s269, 8
      %s271 = scalar_lea.vmem %s5, %s270
      %p272 = scmp.lt.s32.totalorder %s18, 1
      %s273 = scalar_select %p272, %s18, 1
      %s274 = smul.addr %s273, 4
      %s275 = smul.addr %s274, 8
      %s276 = scalar_lea.vmem %s6, %s275
      %v278 = vld [vmem:[%s261] sm:$0xff]
      %v279 = vld [vmem:[%s261 + $0x8] sm:$0xff]
      %v280 = vld [vmem:[%s261 + $0x10] sm:$0xff]
      %v281 = vld [vmem:[%s261 + $0x18] sm:$0xff]
      %v282 = vld [vmem:[%s261 + $0x20] sm:$0xf]
      %v283 = vld [vmem:[%s261 + $0x24] sm:$0xff]
      %v284 = vld [vmem:[%s261 + $0x2c] sm:$0xff]
      %v285 = vld [vmem:[%s261 + $0x34] sm:$0xff]
      %v286 = vld [vmem:[%s261 + $0x3c] sm:$0xff]
      %v287 = vld [vmem:[%s261 + $0x44] sm:$0xf]
      %v296 = vunpack.c.l.b16 %v278
      %v297 = vunpack.c.h.b16 %v278
      %v298 = vunpack.c.l.b16 %v279
      %v299 = vunpack.c.h.b16 %v279
      %v300 = vunpack.c.l.b16 %v280
      %v301 = vunpack.c.h.b16 %v280
      %v302 = vunpack.c.l.b16 %v281
      %v303 = vunpack.c.h.b16 %v281
      %v304 = vunpack.c.l.b16 %v283
      %v305 = vunpack.c.h.b16 %v283
      %v306 = vunpack.c.l.b16 %v284
      %v307 = vunpack.c.h.b16 %v284
      %v308 = vunpack.c.l.b16 %v285
      %v309 = vunpack.c.h.b16 %v285
      %v310 = vunpack.c.l.b16 %v286
      %v311 = vunpack.c.h.b16 %v286
      %v312 = vpack.c.b16 %v304, %v296
      %v313 = vpack.c.b16 %v305, %v297
      %v314 = vpack.c.b16 %v306, %v298
      %v315 = vpack.c.b16 %v307, %v299
      %v316 = vpack.c.b16 %v308, %v300
      %v317 = vpack.c.b16 %v309, %v301
      %v318 = vpack.c.b16 %v310, %v302
      %v319 = vpack.c.b16 %v311, %v303
      %320 = vrot.lane.b32.xlu0 %v312, 127
      %v321 = vpop.permute.xlu0 %320
      %322 = vrot.lane.b32.xlu0 %v313, 127
      %v323 = vpop.permute.xlu0 %322
      %324 = vrot.lane.b32.xlu0 %v314, 127
      %v325 = vpop.permute.xlu0 %324
      %326 = vrot.lane.b32.xlu0 %v315, 127
      %v327 = vpop.permute.xlu0 %326
      %328 = vrot.lane.b32.xlu0 %v316, 127
      %v329 = vpop.permute.xlu0 %328
      %330 = vrot.lane.b32.xlu0 %v317, 127
      %v331 = vpop.permute.xlu0 %330
      %332 = vrot.lane.b32.xlu0 %v318, 127
      %v333 = vpop.permute.xlu0 %332
      %334 = vrot.lane.b32.xlu0 %v319, 127
      %v335 = vpop.permute.xlu0 %334
      %vm336 = vcmask 1039360
      %v337 = vsel %vm336, %v321, %v323
      %v338 = vsel %vm336, %v323, %v325
      %v339 = vsel %vm336, %v325, %v327
      %v340 = vsel %vm336, %v327, %v329
      %v341 = vsel %vm336, %v329, %v331
      %v342 = vsel %vm336, %v331, %v333
      %v343 = vsel %vm336, %v333, %v335
      %344 = vrot.lane.b32.xlu0 %v312, 126
      %v345 = vpop.permute.xlu0 %344
      %346 = vrot.lane.b32.xlu0 %v313, 126
      %v347 = vpop.permute.xlu0 %346
      %348 = vrot.lane.b32.xlu0 %v314, 126
      %v349 = vpop.permute.xlu0 %348
      %350 = vrot.lane.b32.xlu0 %v315, 126
      %v351 = vpop.permute.xlu0 %350
      %352 = vrot.lane.b32.xlu0 %v316, 126
      %v353 = vpop.permute.xlu0 %352
      %354 = vrot.lane.b32.xlu0 %v317, 126
      %v355 = vpop.permute.xlu0 %354
      %356 = vrot.lane.b32.xlu0 %v318, 126
      %v357 = vpop.permute.xlu0 %356
      %358 = vrot.lane.b32.xlu0 %v319, 126
      %v359 = vpop.permute.xlu0 %358
      %vm360 = vcmask 1031168
      %v361 = vsel %vm360, %v345, %v347
      %v362 = vsel %vm360, %v347, %v349
      %v363 = vsel %vm360, %v349, %v351
      %v364 = vsel %vm360, %v351, %v353
      %v365 = vsel %vm360, %v353, %v355
      %v366 = vsel %vm360, %v355, %v357
      %v367 = vsel %vm360, %v357, %v359
      %368 = vrot.lane.b32.xlu0 %v312, 118
      %v369 = vpop.permute.xlu0 %368
      %370 = vrot.lane.b32.xlu0 %v313, 118
      %v371 = vpop.permute.xlu0 %370
      %372 = vrot.lane.b32.xlu0 %v314, 118
      %v373 = vpop.permute.xlu0 %372
      %374 = vrot.lane.b32.xlu0 %v315, 118
      %v375 = vpop.permute.xlu0 %374
      %376 = vrot.lane.b32.xlu0 %v316, 118
      %v377 = vpop.permute.xlu0 %376
      %378 = vrot.lane.b32.xlu0 %v317, 118
      %v379 = vpop.permute.xlu0 %378
      %380 = vrot.lane.b32.xlu0 %v318, 118
      %v381 = vpop.permute.xlu0 %380
      %382 = vrot.lane.b32.xlu0 %v319, 118
      %v383 = vpop.permute.xlu0 %382
      %vm384 = vcmask 965632
      %v385 = vsel %vm384, %v369, %v371
      %v386 = vsel %vm384, %v371, %v373
      %v387 = vsel %vm384, %v373, %v375
      %v388 = vsel %vm384, %v375, %v377
      %v389 = vsel %vm384, %v377, %v379
      %v390 = vsel %vm384, %v379, %v381
      %v391 = vsel %vm384, %v381, %v383
      %392 = vrot.lane.b32.xlu0 %v312, 117
      %v393 = vpop.permute.xlu0 %392
      %394 = vrot.lane.b32.xlu0 %v313, 117
      %v395 = vpop.permute.xlu0 %394
      %396 = vrot.lane.b32.xlu0 %v314, 117
      %v397 = vpop.permute.xlu0 %396
      %398 = vrot.lane.b32.xlu0 %v315, 117
      %v399 = vpop.permute.xlu0 %398
      %400 = vrot.lane.b32.xlu0 %v316, 117
      %v401 = vpop.permute.xlu0 %400
      %402 = vrot.lane.b32.xlu0 %v317, 117
      %v403 = vpop.permute.xlu0 %402
      %404 = vrot.lane.b32.xlu0 %v318, 117
      %v405 = vpop.permute.xlu0 %404
      %406 = vrot.lane.b32.xlu0 %v319, 117
      %v407 = vpop.permute.xlu0 %406
      %vm408 = vcmask 957440
      %v409 = vsel %vm408, %v393, %v395
      %v410 = vsel %vm408, %v395, %v397
      %v411 = vsel %vm408, %v397, %v399
      %v412 = vsel %vm408, %v399, %v401
      %v413 = vsel %vm408, %v401, %v403
      %v414 = vsel %vm408, %v403, %v405
      %v415 = vsel %vm408, %v405, %v407
      %416 = vrot.lane.b32.xlu0 %v312, 116
      %v417 = vpop.permute.xlu0 %416
      %418 = vrot.lane.b32.xlu0 %v313, 116
      %v419 = vpop.permute.xlu0 %418
      %420 = vrot.lane.b32.xlu0 %v314, 116
      %v421 = vpop.permute.xlu0 %420
      %422 = vrot.lane.b32.xlu0 %v315, 116
      %v423 = vpop.permute.xlu0 %422
      %424 = vrot.lane.b32.xlu0 %v316, 116
      %v425 = vpop.permute.xlu0 %424
      %426 = vrot.lane.b32.xlu0 %v317, 116
      %v427 = vpop.permute.xlu0 %426
      %428 = vrot.lane.b32.xlu0 %v318, 116
      %v429 = vpop.permute.xlu0 %428
      %430 = vrot.lane.b32.xlu0 %v319, 116
      %v431 = vpop.permute.xlu0 %430
      %vm432 = vcmask 949248
      %v433 = vsel %vm432, %v417, %v419
      %v434 = vsel %vm432, %v419, %v421
      %v435 = vsel %vm432, %v421, %v423
      %v436 = vsel %vm432, %v423, %v425
      %v437 = vsel %vm432, %v425, %v427
      %v438 = vsel %vm432, %v427, %v429
      %v439 = vsel %vm432, %v429, %v431
      %440 = vrot.lane.b32.xlu0 %v312, 108
      %v441 = vpop.permute.xlu0 %440
      %442 = vrot.lane.b32.xlu0 %v313, 108
      %v443 = vpop.permute.xlu0 %442
      %444 = vrot.lane.b32.xlu0 %v314, 108
      %v445 = vpop.permute.xlu0 %444
      %446 = vrot.lane.b32.xlu0 %v315, 108
      %v447 = vpop.permute.xlu0 %446
      %448 = vrot.lane.b32.xlu0 %v316, 108
      %v449 = vpop.permute.xlu0 %448
      %450 = vrot.lane.b32.xlu0 %v317, 108
      %v451 = vpop.permute.xlu0 %450
      %452 = vrot.lane.b32.xlu0 %v318, 108
      %v453 = vpop.permute.xlu0 %452
      %454 = vrot.lane.b32.xlu0 %v319, 108
      %v455 = vpop.permute.xlu0 %454
      %vm456 = vcmask 883712
      %v457 = vsel %vm456, %v441, %v443
      %v458 = vsel %vm456, %v443, %v445
      %v459 = vsel %vm456, %v445, %v447
      %v460 = vsel %vm456, %v447, %v449
      %v461 = vsel %vm456, %v449, %v451
      %v462 = vsel %vm456, %v451, %v453
      %v463 = vsel %vm456, %v453, %v455
      %464 = vrot.lane.b32.xlu0 %v312, 107
      %v465 = vpop.permute.xlu0 %464
      %466 = vrot.lane.b32.xlu0 %v313, 107
      %v467 = vpop.permute.xlu0 %466
      %468 = vrot.lane.b32.xlu0 %v314, 107
      %v469 = vpop.permute.xlu0 %468
      %470 = vrot.lane.b32.xlu0 %v315, 107
      %v471 = vpop.permute.xlu0 %470
      %472 = vrot.lane.b32.xlu0 %v316, 107
      %v473 = vpop.permute.xlu0 %472
      %474 = vrot.lane.b32.xlu0 %v317, 107
      %v475 = vpop.permute.xlu0 %474
      %476 = vrot.lane.b32.xlu0 %v318, 107
      %v477 = vpop.permute.xlu0 %476
      %478 = vrot.lane.b32.xlu0 %v319, 107
      %v479 = vpop.permute.xlu0 %478
      %vm480 = vcmask 875520
      %v481 = vsel %vm480, %v465, %v467
      %v482 = vsel %vm480, %v467, %v469
      %v483 = vsel %vm480, %v469, %v471
      %v484 = vsel %vm480, %v471, %v473
      %v485 = vsel %vm480, %v473, %v475
      %v486 = vsel %vm480, %v475, %v477
      %v487 = vsel %vm480, %v477, %v479
      %488 = vrot.lane.b32.xlu0 %v312, 106
      %v489 = vpop.permute.xlu0 %488
      %490 = vrot.lane.b32.xlu0 %v313, 106
      %v491 = vpop.permute.xlu0 %490
      %492 = vrot.lane.b32.xlu0 %v314, 106
      %v493 = vpop.permute.xlu0 %492
      %494 = vrot.lane.b32.xlu0 %v315, 106
      %v495 = vpop.permute.xlu0 %494
      %496 = vrot.lane.b32.xlu0 %v316, 106
      %v497 = vpop.permute.xlu0 %496
      %498 = vrot.lane.b32.xlu0 %v317, 106
      %v499 = vpop.permute.xlu0 %498
      %500 = vrot.lane.b32.xlu0 %v318, 106
      %v501 = vpop.permute.xlu0 %500
      %502 = vrot.lane.b32.xlu0 %v319, 106
      %v503 = vpop.permute.xlu0 %502
      %vm504 = vcmask 867328
      %v505 = vsel %vm504, %v489, %v491
      %v506 = vsel %vm504, %v491, %v493
      %v507 = vsel %vm504, %v493, %v495
      %v508 = vsel %vm504, %v495, %v497
      %v509 = vsel %vm504, %v497, %v499
      %v510 = vsel %vm504, %v499, %v501
      %v511 = vsel %vm504, %v501, %v503
      %512 = vrot.lane.b32.xlu0 %v312, 28
      %v513 = vpop.permute.xlu0 %512
      %514 = vrot.lane.b32.xlu0 %v313, 28
      %v515 = vpop.permute.xlu0 %514
      %516 = vrot.lane.b32.xlu0 %v314, 28
      %v517 = vpop.permute.xlu0 %516
      %518 = vrot.lane.b32.xlu0 %v315, 28
      %v519 = vpop.permute.xlu0 %518
      %520 = vrot.lane.b32.xlu0 %v316, 28
      %v521 = vpop.permute.xlu0 %520
      %522 = vrot.lane.b32.xlu0 %v317, 28
      %v523 = vpop.permute.xlu0 %522
      %524 = vrot.lane.b32.xlu0 %v318, 28
      %v525 = vpop.permute.xlu0 %524
      %526 = vrot.lane.b32.xlu0 %v319, 28
      %v527 = vpop.permute.xlu0 %526
      %vm528 = vcmask 228352
      %v529 = vsel %vm528, %v513, %v515
      %v530 = vsel %vm528, %v515, %v517
      %v531 = vsel %vm528, %v517, %v519
      %v532 = vsel %vm528, %v519, %v521
      %v533 = vsel %vm528, %v521, %v523
      %v534 = vsel %vm528, %v523, %v525
      %v535 = vsel %vm528, %v525, %v527
      %536 = vrot.lane.b32.xlu0 %v312, 27
      %v537 = vpop.permute.xlu0 %536
      %538 = vrot.lane.b32.xlu0 %v313, 27
      %v539 = vpop.permute.xlu0 %538
      %540 = vrot.lane.b32.xlu0 %v314, 27
      %v541 = vpop.permute.xlu0 %540
      %542 = vrot.lane.b32.xlu0 %v315, 27
      %v543 = vpop.permute.xlu0 %542
      %544 = vrot.lane.b32.xlu0 %v316, 27
      %v545 = vpop.permute.xlu0 %544
      %546 = vrot.lane.b32.xlu0 %v317, 27
      %v547 = vpop.permute.xlu0 %546
      %548 = vrot.lane.b32.xlu0 %v318, 27
      %v549 = vpop.permute.xlu0 %548
      %550 = vrot.lane.b32.xlu0 %v319, 27
      %v551 = vpop.permute.xlu0 %550
      %vm552 = vcmask 220160
      %v553 = vsel %vm552, %v537, %v539
      %v554 = vsel %vm552, %v539, %v541
      %v555 = vsel %vm552, %v541, %v543
      %v556 = vsel %vm552, %v543, %v545
      %v557 = vsel %vm552, %v545, %v547
      %v558 = vsel %vm552, %v547, %v549
      %v559 = vsel %vm552, %v549, %v551
      %560 = vrot.lane.b32.xlu0 %v312, 26
      %v561 = vpop.permute.xlu0 %560
      %562 = vrot.lane.b32.xlu0 %v313, 26
      %v563 = vpop.permute.xlu0 %562
      %564 = vrot.lane.b32.xlu0 %v314, 26
      %v565 = vpop.permute.xlu0 %564
      %566 = vrot.lane.b32.xlu0 %v315, 26
      %v567 = vpop.permute.xlu0 %566
      %568 = vrot.lane.b32.xlu0 %v316, 26
      %v569 = vpop.permute.xlu0 %568
      %570 = vrot.lane.b32.xlu0 %v317, 26
      %v571 = vpop.permute.xlu0 %570
      %572 = vrot.lane.b32.xlu0 %v318, 26
      %v573 = vpop.permute.xlu0 %572
      %574 = vrot.lane.b32.xlu0 %v319, 26
      %v575 = vpop.permute.xlu0 %574
      %vm576 = vcmask 211968
      %v577 = vsel %vm576, %v561, %v563
      %v578 = vsel %vm576, %v563, %v565
      %v579 = vsel %vm576, %v565, %v567
      %v580 = vsel %vm576, %v567, %v569
      %v581 = vsel %vm576, %v569, %v571
      %v582 = vsel %vm576, %v571, %v573
      %v583 = vsel %vm576, %v573, %v575
      %584 = vrot.lane.b32.xlu0 %v312, 18
      %v585 = vpop.permute.xlu0 %584
      %586 = vrot.lane.b32.xlu0 %v313, 18
      %v587 = vpop.permute.xlu0 %586
      %588 = vrot.lane.b32.xlu0 %v314, 18
      %v589 = vpop.permute.xlu0 %588
      %590 = vrot.lane.b32.xlu0 %v315, 18
      %v591 = vpop.permute.xlu0 %590
      %592 = vrot.lane.b32.xlu0 %v316, 18
      %v593 = vpop.permute.xlu0 %592
      %594 = vrot.lane.b32.xlu0 %v317, 18
      %v595 = vpop.permute.xlu0 %594
      %596 = vrot.lane.b32.xlu0 %v318, 18
      %v597 = vpop.permute.xlu0 %596
      %598 = vrot.lane.b32.xlu0 %v319, 18
      %v599 = vpop.permute.xlu0 %598
      %vm600 = vcmask 146432
      %v601 = vsel %vm600, %v585, %v587
      %v602 = vsel %vm600, %v587, %v589
      %v603 = vsel %vm600, %v589, %v591
      %v604 = vsel %vm600, %v591, %v593
      %v605 = vsel %vm600, %v593, %v595
      %v606 = vsel %vm600, %v595, %v597
      %v607 = vsel %vm600, %v597, %v599
      %608 = vrot.lane.b32.xlu0 %v313, 17
      %v609 = vpop.permute.xlu0 %608
      %610 = vrot.lane.b32.xlu0 %v314, 17
      %v611 = vpop.permute.xlu0 %610
      %612 = vrot.lane.b32.xlu0 %v315, 17
      %v613 = vpop.permute.xlu0 %612
      %614 = vrot.lane.b32.xlu0 %v316, 17
      %v615 = vpop.permute.xlu0 %614
      %616 = vrot.lane.b32.xlu0 %v317, 17
      %v617 = vpop.permute.xlu0 %616
      %618 = vrot.lane.b32.xlu0 %v318, 17
      %v619 = vpop.permute.xlu0 %618
      %620 = vrot.lane.b32.xlu0 %v319, 17
      %v621 = vpop.permute.xlu0 %620
      %vm622 = vcmask 138240
      %v623 = vsel %vm622, %v609, %v611
      %v624 = vsel %vm622, %v611, %v613
      %v625 = vsel %vm622, %v613, %v615
      %v626 = vsel %vm622, %v615, %v617
      %v627 = vsel %vm622, %v617, %v619
      %v628 = vsel %vm622, %v619, %v621
      %v631 = vunpack.c.l.b16 %v282
      %v632 = vunpack.c.l.b16 %v287
      %v633 = vpack.c.b16 %v632, %v631
      %634 = vrot.lane.b32.xlu0 %v313, 16
      %v635 = vpop.permute.xlu0 %634
      %636 = vrot.lane.b32.xlu0 %v314, 16
      %v637 = vpop.permute.xlu0 %636
      %638 = vrot.lane.b32.xlu0 %v315, 16
      %v639 = vpop.permute.xlu0 %638
      %640 = vrot.lane.b32.xlu0 %v316, 16
      %v641 = vpop.permute.xlu0 %640
      %642 = vrot.lane.b32.xlu0 %v317, 16
      %v643 = vpop.permute.xlu0 %642
      %644 = vrot.lane.b32.xlu0 %v318, 16
      %v645 = vpop.permute.xlu0 %644
      %646 = vrot.lane.b32.xlu0 %v319, 16
      %v647 = vpop.permute.xlu0 %646
      %648 = vrot.lane.b32.xlu0 %v633, 16
      %v649 = vpop.permute.xlu0 %648
      %vm650 = vcmask 130048
      %v651 = vsel %vm650, %v635, %v637
      %v652 = vsel %vm650, %v637, %v639
      %v653 = vsel %vm650, %v639, %v641
      %v654 = vsel %vm650, %v641, %v643
      %v655 = vsel %vm650, %v643, %v645
      %v656 = vsel %vm650, %v645, %v647
      %v657 = vsel %vm650, %v647, %v649
      %658 = vrot.lane.b32.xlu0 %v313, 8
      %v659 = vpop.permute.xlu0 %658
      %660 = vrot.lane.b32.xlu0 %v314, 8
      %v661 = vpop.permute.xlu0 %660
      %662 = vrot.lane.b32.xlu0 %v315, 8
      %v663 = vpop.permute.xlu0 %662
      %664 = vrot.lane.b32.xlu0 %v316, 8
      %v665 = vpop.permute.xlu0 %664
      %666 = vrot.lane.b32.xlu0 %v317, 8
      %v667 = vpop.permute.xlu0 %666
      %668 = vrot.lane.b32.xlu0 %v318, 8
      %v669 = vpop.permute.xlu0 %668
      %670 = vrot.lane.b32.xlu0 %v319, 8
      %v671 = vpop.permute.xlu0 %670
      %672 = vrot.lane.b32.xlu0 %v633, 8
      %v673 = vpop.permute.xlu0 %672
      %vm674 = vcmask 64512
      %v675 = vsel %vm674, %v659, %v661
      %v676 = vsel %vm674, %v661, %v663
      %v677 = vsel %vm674, %v663, %v665
      %v678 = vsel %vm674, %v665, %v667
      %v679 = vsel %vm674, %v667, %v669
      %v680 = vsel %vm674, %v669, %v671
      %v681 = vsel %vm674, %v671, %v673
      %682 = vrot.lane.b32.xlu0 %v633, 118
      %v683 = vpop.permute.xlu0 %682
      %v684 = vsel %vm384, %v383, %v683
      %685 = vrot.lane.b32.xlu0 %v633, 117
      %v686 = vpop.permute.xlu0 %685
      %v687 = vsel %vm408, %v407, %v686
      %688 = vrot.lane.b32.xlu0 %v313, 39
      %v689 = vpop.permute.xlu0 %688
      %690 = vrot.lane.b32.xlu0 %v314, 39
      %v691 = vpop.permute.xlu0 %690
      %692 = vrot.lane.b32.xlu0 %v315, 39
      %v693 = vpop.permute.xlu0 %692
      %694 = vrot.lane.b32.xlu0 %v316, 39
      %v695 = vpop.permute.xlu0 %694
      %696 = vrot.lane.b32.xlu0 %v317, 39
      %v697 = vpop.permute.xlu0 %696
      %698 = vrot.lane.b32.xlu0 %v318, 39
      %v699 = vpop.permute.xlu0 %698
      %700 = vrot.lane.b32.xlu0 %v319, 39
      %v701 = vpop.permute.xlu0 %700
      %702 = vrot.lane.b32.xlu0 %v633, 39
      %v703 = vpop.permute.xlu0 %702
      %vm704 = vcmask 318464
      %v705 = vsel %vm704, %v689, %v691
      %v706 = vsel %vm704, %v691, %v693
      %v707 = vsel %vm704, %v693, %v695
      %v708 = vsel %vm704, %v695, %v697
      %v709 = vsel %vm704, %v697, %v699
      %v710 = vsel %vm704, %v699, %v701
      %v711 = vsel %vm704, %v701, %v703
      %712 = vrot.lane.b32.xlu0 %v313, 38
      %v713 = vpop.permute.xlu0 %712
      %714 = vrot.lane.b32.xlu0 %v314, 38
      %v715 = vpop.permute.xlu0 %714
      %716 = vrot.lane.b32.xlu0 %v315, 38
      %v717 = vpop.permute.xlu0 %716
      %718 = vrot.lane.b32.xlu0 %v316, 38
      %v719 = vpop.permute.xlu0 %718
      %720 = vrot.lane.b32.xlu0 %v317, 38
      %v721 = vpop.permute.xlu0 %720
      %722 = vrot.lane.b32.xlu0 %v318, 38
      %v723 = vpop.permute.xlu0 %722
      %724 = vrot.lane.b32.xlu0 %v319, 38
      %v725 = vpop.permute.xlu0 %724
      %726 = vrot.lane.b32.xlu0 %v633, 38
      %v727 = vpop.permute.xlu0 %726
      %vm728 = vcmask 310272
      %v729 = vsel %vm728, %v713, %v715
      %v730 = vsel %vm728, %v715, %v717
      %v731 = vsel %vm728, %v717, %v719
      %v732 = vsel %vm728, %v719, %v721
      %v733 = vsel %vm728, %v721, %v723
      %v734 = vsel %vm728, %v723, %v725
      %v735 = vsel %vm728, %v725, %v727
      %736 = vrot.lane.b32.xlu0 %v313, 37
      %v737 = vpop.permute.xlu0 %736
      %738 = vrot.lane.b32.xlu0 %v314, 37
      %v739 = vpop.permute.xlu0 %738
      %740 = vrot.lane.b32.xlu0 %v315, 37
      %v741 = vpop.permute.xlu0 %740
      %742 = vrot.lane.b32.xlu0 %v316, 37
      %v743 = vpop.permute.xlu0 %742
      %744 = vrot.lane.b32.xlu0 %v317, 37
      %v745 = vpop.permute.xlu0 %744
      %746 = vrot.lane.b32.xlu0 %v318, 37
      %v747 = vpop.permute.xlu0 %746
      %748 = vrot.lane.b32.xlu0 %v319, 37
      %v749 = vpop.permute.xlu0 %748
      %750 = vrot.lane.b32.xlu0 %v633, 37
      %v751 = vpop.permute.xlu0 %750
      %vm752 = vcmask 302080
      %v753 = vsel %vm752, %v737, %v739
      %v754 = vsel %vm752, %v739, %v741
      %v755 = vsel %vm752, %v741, %v743
      %v756 = vsel %vm752, %v743, %v745
      %v757 = vsel %vm752, %v745, %v747
      %v758 = vsel %vm752, %v747, %v749
      %v759 = vsel %vm752, %v749, %v751
      %760 = vrot.lane.b32.xlu0 %v313, 29
      %v761 = vpop.permute.xlu0 %760
      %762 = vrot.lane.b32.xlu0 %v314, 29
      %v763 = vpop.permute.xlu0 %762
      %764 = vrot.lane.b32.xlu0 %v315, 29
      %v765 = vpop.permute.xlu0 %764
      %766 = vrot.lane.b32.xlu0 %v316, 29
      %v767 = vpop.permute.xlu0 %766
      %768 = vrot.lane.b32.xlu0 %v317, 29
      %v769 = vpop.permute.xlu0 %768
      %770 = vrot.lane.b32.xlu0 %v318, 29
      %v771 = vpop.permute.xlu0 %770
      %772 = vrot.lane.b32.xlu0 %v319, 29
      %v773 = vpop.permute.xlu0 %772
      %774 = vrot.lane.b32.xlu0 %v633, 29
      %v775 = vpop.permute.xlu0 %774
      %vm776 = vcmask 236544
      %v777 = vsel %vm776, %v761, %v763
      %v778 = vsel %vm776, %v763, %v765
      %v779 = vsel %vm776, %v765, %v767
      %v780 = vsel %vm776, %v767, %v769
      %v781 = vsel %vm776, %v769, %v771
      %v782 = vsel %vm776, %v771, %v773
      %v783 = vsel %vm776, %v773, %v775
      %784 = vrot.lane.b32.xlu0 %v633, 28
      %v785 = vpop.permute.xlu0 %784
      %v786 = vsel %vm528, %v527, %v785
      %787 = vrot.lane.b32.xlu0 %v633, 27
      %v788 = vpop.permute.xlu0 %787
      %v789 = vsel %vm552, %v551, %v788
      %790 = vrot.lane.b32.xlu0 %v313, 19
      %v791 = vpop.permute.xlu0 %790
      %792 = vrot.lane.b32.xlu0 %v314, 19
      %v793 = vpop.permute.xlu0 %792
      %794 = vrot.lane.b32.xlu0 %v315, 19
      %v795 = vpop.permute.xlu0 %794
      %796 = vrot.lane.b32.xlu0 %v316, 19
      %v797 = vpop.permute.xlu0 %796
      %798 = vrot.lane.b32.xlu0 %v317, 19
      %v799 = vpop.permute.xlu0 %798
      %800 = vrot.lane.b32.xlu0 %v318, 19
      %v801 = vpop.permute.xlu0 %800
      %802 = vrot.lane.b32.xlu0 %v319, 19
      %v803 = vpop.permute.xlu0 %802
      %804 = vrot.lane.b32.xlu0 %v633, 19
      %v805 = vpop.permute.xlu0 %804
      %vm806 = vcmask 154624
      %v807 = vsel %vm806, %v791, %v793
      %v808 = vsel %vm806, %v793, %v795
      %v809 = vsel %vm806, %v795, %v797
      %v810 = vsel %vm806, %v797, %v799
      %v811 = vsel %vm806, %v799, %v801
      %v812 = vsel %vm806, %v801, %v803
      %v813 = vsel %vm806, %v803, %v805
      %814 = vrot.lane.b32.xlu0 %v633, 18
      %v815 = vpop.permute.xlu0 %814
      %v816 = vsel %vm600, %v599, %v815
      %817 = vrot.lane.b32.xlu0 %v633, 17
      %v818 = vpop.permute.xlu0 %817
      %v819 = vsel %vm622, %v621, %v818
      %820 = vrot.lane.b32.xlu0 %v386, 17
      %v821 = vpop.permute.xlu0 %820
      %822 = vrot.lane.b32.xlu0 %v387, 17
      %v823 = vpop.permute.xlu0 %822
      %824 = vrot.lane.b32.xlu0 %v388, 17
      %v825 = vpop.permute.xlu0 %824
      %826 = vrot.lane.b32.xlu0 %v389, 17
      %v827 = vpop.permute.xlu0 %826
      %828 = vrot.lane.b32.xlu0 %v390, 17
      %v829 = vpop.permute.xlu0 %828
      %830 = vrot.lane.b32.xlu0 %v391, 17
      %v831 = vpop.permute.xlu0 %830
      %832 = vrot.lane.b32.xlu0 %v684, 17
      %v833 = vpop.permute.xlu0 %832
      %834 = vrot.lane.b32.xlu0 %v410, 17
      %v835 = vpop.permute.xlu0 %834
      %836 = vrot.lane.b32.xlu0 %v411, 17
      %v837 = vpop.permute.xlu0 %836
      %838 = vrot.lane.b32.xlu0 %v412, 17
      %v839 = vpop.permute.xlu0 %838
      %840 = vrot.lane.b32.xlu0 %v413, 17
      %v841 = vpop.permute.xlu0 %840
      %842 = vrot.lane.b32.xlu0 %v414, 17
      %v843 = vpop.permute.xlu0 %842
      %844 = vrot.lane.b32.xlu0 %v415, 17
      %v845 = vpop.permute.xlu0 %844
      %846 = vrot.lane.b32.xlu0 %v687, 17
      %v847 = vpop.permute.xlu0 %846
      %848 = vrot.lane.b32.xlu0 %v705, 17
      %v849 = vpop.permute.xlu0 %848
      %850 = vrot.lane.b32.xlu0 %v706, 17
      %v851 = vpop.permute.xlu0 %850
      %852 = vrot.lane.b32.xlu0 %v707, 17
      %v853 = vpop.permute.xlu0 %852
      %854 = vrot.lane.b32.xlu0 %v708, 17
      %v855 = vpop.permute.xlu0 %854
      %856 = vrot.lane.b32.xlu0 %v709, 17
      %v857 = vpop.permute.xlu0 %856
      %858 = vrot.lane.b32.xlu0 %v710, 17
      %v859 = vpop.permute.xlu0 %858
      %860 = vrot.lane.b32.xlu0 %v711, 17
      %v861 = vpop.permute.xlu0 %860
      %862 = vrot.lane.b32.xlu0 %v729, 17
      %v863 = vpop.permute.xlu0 %862
      %864 = vrot.lane.b32.xlu0 %v730, 17
      %v865 = vpop.permute.xlu0 %864
      %866 = vrot.lane.b32.xlu0 %v731, 17
      %v867 = vpop.permute.xlu0 %866
      %868 = vrot.lane.b32.xlu0 %v732, 17
      %v869 = vpop.permute.xlu0 %868
      %870 = vrot.lane.b32.xlu0 %v733, 17
      %v871 = vpop.permute.xlu0 %870
      %872 = vrot.lane.b32.xlu0 %v734, 17
      %v873 = vpop.permute.xlu0 %872
      %874 = vrot.lane.b32.xlu0 %v735, 17
      %v875 = vpop.permute.xlu0 %874
      %876 = vrot.lane.b32.xlu0 %v753, 17
      %v877 = vpop.permute.xlu0 %876
      %878 = vrot.lane.b32.xlu0 %v754, 17
      %v879 = vpop.permute.xlu0 %878
      %880 = vrot.lane.b32.xlu0 %v755, 17
      %v881 = vpop.permute.xlu0 %880
      %882 = vrot.lane.b32.xlu0 %v756, 17
      %v883 = vpop.permute.xlu0 %882
      %884 = vrot.lane.b32.xlu0 %v757, 17
      %v885 = vpop.permute.xlu0 %884
      %886 = vrot.lane.b32.xlu0 %v758, 17
      %v887 = vpop.permute.xlu0 %886
      %888 = vrot.lane.b32.xlu0 %v759, 17
      %v889 = vpop.permute.xlu0 %888
      %890 = vrot.lane.b32.xlu0 %v777, 17
      %v891 = vpop.permute.xlu0 %890
      %892 = vrot.lane.b32.xlu0 %v778, 17
      %v893 = vpop.permute.xlu0 %892
      %894 = vrot.lane.b32.xlu0 %v779, 17
      %v895 = vpop.permute.xlu0 %894
      %896 = vrot.lane.b32.xlu0 %v780, 17
      %v897 = vpop.permute.xlu0 %896
      %898 = vrot.lane.b32.xlu0 %v781, 17
      %v899 = vpop.permute.xlu0 %898
      %900 = vrot.lane.b32.xlu0 %v782, 17
      %v901 = vpop.permute.xlu0 %900
      %902 = vrot.lane.b32.xlu0 %v783, 17
      %v903 = vpop.permute.xlu0 %902
      %904 = vrot.lane.b32.xlu0 %v530, 17
      %v905 = vpop.permute.xlu0 %904
      %906 = vrot.lane.b32.xlu0 %v531, 17
      %v907 = vpop.permute.xlu0 %906
      %908 = vrot.lane.b32.xlu0 %v532, 17
      %v909 = vpop.permute.xlu0 %908
      %910 = vrot.lane.b32.xlu0 %v533, 17
      %v911 = vpop.permute.xlu0 %910
      %912 = vrot.lane.b32.xlu0 %v534, 17
      %v913 = vpop.permute.xlu0 %912
      %914 = vrot.lane.b32.xlu0 %v535, 17
      %v915 = vpop.permute.xlu0 %914
      %916 = vrot.lane.b32.xlu0 %v786, 17
      %v917 = vpop.permute.xlu0 %916
      %918 = vrot.lane.b32.xlu0 %v554, 17
      %v919 = vpop.permute.xlu0 %918
      %920 = vrot.lane.b32.xlu0 %v555, 17
      %v921 = vpop.permute.xlu0 %920
      %922 = vrot.lane.b32.xlu0 %v556, 17
      %v923 = vpop.permute.xlu0 %922
      %924 = vrot.lane.b32.xlu0 %v557, 17
      %v925 = vpop.permute.xlu0 %924
      %926 = vrot.lane.b32.xlu0 %v558, 17
      %v927 = vpop.permute.xlu0 %926
      %928 = vrot.lane.b32.xlu0 %v559, 17
      %v929 = vpop.permute.xlu0 %928
      %930 = vrot.lane.b32.xlu0 %v789, 17
      %v931 = vpop.permute.xlu0 %930
      %932 = vrot.lane.b32.xlu0 %v807, 17
      %v933 = vpop.permute.xlu0 %932
      %934 = vrot.lane.b32.xlu0 %v808, 17
      %v935 = vpop.permute.xlu0 %934
      %936 = vrot.lane.b32.xlu0 %v809, 17
      %v937 = vpop.permute.xlu0 %936
      %938 = vrot.lane.b32.xlu0 %v810, 17
      %v939 = vpop.permute.xlu0 %938
      %940 = vrot.lane.b32.xlu0 %v811, 17
      %v941 = vpop.permute.xlu0 %940
      %942 = vrot.lane.b32.xlu0 %v812, 17
      %v943 = vpop.permute.xlu0 %942
      %944 = vrot.lane.b32.xlu0 %v813, 17
      %v945 = vpop.permute.xlu0 %944
      %946 = vrot.lane.b32.xlu0 %v602, 17
      %v947 = vpop.permute.xlu0 %946
      %948 = vrot.lane.b32.xlu0 %v603, 17
      %v949 = vpop.permute.xlu0 %948
      %950 = vrot.lane.b32.xlu0 %v604, 17
      %v951 = vpop.permute.xlu0 %950
      %952 = vrot.lane.b32.xlu0 %v605, 17
      %v953 = vpop.permute.xlu0 %952
      %954 = vrot.lane.b32.xlu0 %v606, 17
      %v955 = vpop.permute.xlu0 %954
      %956 = vrot.lane.b32.xlu0 %v607, 17
      %v957 = vpop.permute.xlu0 %956
      %958 = vrot.lane.b32.xlu0 %v816, 17
      %v959 = vpop.permute.xlu0 %958
      %960 = vrot.lane.b32.xlu0 %v623, 17
      %v961 = vpop.permute.xlu0 %960
      %962 = vrot.lane.b32.xlu0 %v624, 17
      %v963 = vpop.permute.xlu0 %962
      %964 = vrot.lane.b32.xlu0 %v625, 17
      %v965 = vpop.permute.xlu0 %964
      %966 = vrot.lane.b32.xlu0 %v626, 17
      %v967 = vpop.permute.xlu0 %966
      %968 = vrot.lane.b32.xlu0 %v627, 17
      %v969 = vpop.permute.xlu0 %968
      %970 = vrot.lane.b32.xlu0 %v628, 17
      %v971 = vpop.permute.xlu0 %970
      %972 = vrot.lane.b32.xlu0 %v819, 17
      %v973 = vpop.permute.xlu0 %972
      %v974 = vsel %vm622, %v821, %v823
      %v975 = vsel %vm622, %v823, %v825
      %v976 = vsel %vm622, %v825, %v827
      %v977 = vsel %vm622, %v827, %v829
      %v978 = vsel %vm622, %v829, %v831
      %v979 = vsel %vm622, %v831, %v833
      %v980 = vsel %vm622, %v835, %v837
      %v981 = vsel %vm622, %v837, %v839
      %v982 = vsel %vm622, %v839, %v841
      %v983 = vsel %vm622, %v841, %v843
      %v984 = vsel %vm622, %v843, %v845
      %v985 = vsel %vm622, %v845, %v847
      %v986 = vsel %vm622, %v849, %v851
      %v987 = vsel %vm622, %v851, %v853
      %v988 = vsel %vm622, %v853, %v855
      %v989 = vsel %vm622, %v855, %v857
      %v990 = vsel %vm622, %v857, %v859
      %v991 = vsel %vm622, %v859, %v861
      %v992 = vsel %vm622, %v863, %v865
      %v993 = vsel %vm622, %v865, %v867
      %v994 = vsel %vm622, %v867, %v869
      %v995 = vsel %vm622, %v869, %v871
      %v996 = vsel %vm622, %v871, %v873
      %v997 = vsel %vm622, %v873, %v875
      %v998 = vsel %vm622, %v877, %v879
      %v999 = vsel %vm622, %v879, %v881
      %v1000 = vsel %vm622, %v881, %v883
      %v1001 = vsel %vm622, %v883, %v885
      %v1002 = vsel %vm622, %v885, %v887
      %v1003 = vsel %vm622, %v887, %v889
      %v1004 = vsel %vm622, %v891, %v893
      %v1005 = vsel %vm622, %v893, %v895
      %v1006 = vsel %vm622, %v895, %v897
      %v1007 = vsel %vm622, %v897, %v899
      %v1008 = vsel %vm622, %v899, %v901
      %v1009 = vsel %vm622, %v901, %v903
      %v1010 = vsel %vm622, %v905, %v907
      %v1011 = vsel %vm622, %v907, %v909
      %v1012 = vsel %vm622, %v909, %v911
      %v1013 = vsel %vm622, %v911, %v913
      %v1014 = vsel %vm622, %v913, %v915
      %v1015 = vsel %vm622, %v915, %v917
      %v1016 = vsel %vm622, %v919, %v921
      %v1017 = vsel %vm622, %v921, %v923
      %v1018 = vsel %vm622, %v923, %v925
      %v1019 = vsel %vm622, %v925, %v927
      %v1020 = vsel %vm622, %v927, %v929
      %v1021 = vsel %vm622, %v929, %v931
      %v1022 = vsel %vm622, %v933, %v935
      %v1023 = vsel %vm622, %v935, %v937
      %v1024 = vsel %vm622, %v937, %v939
      %v1025 = vsel %vm622, %v939, %v941
      %v1026 = vsel %vm622, %v941, %v943
      %v1027 = vsel %vm622, %v943, %v945
      %v1028 = vsel %vm622, %v947, %v949
      %v1029 = vsel %vm622, %v949, %v951
      %v1030 = vsel %vm622, %v951, %v953
      %v1031 = vsel %vm622, %v953, %v955
      %v1032 = vsel %vm622, %v955, %v957
      %v1033 = vsel %vm622, %v957, %v959
      %v1034 = vsel %vm622, %v961, %v963
      %v1035 = vsel %vm622, %v963, %v965
      %v1036 = vsel %vm622, %v965, %v967
      %v1037 = vsel %vm622, %v967, %v969
      %v1038 = vsel %vm622, %v969, %v971
      %v1039 = vsel %vm622, %v971, %v973
      %v1040 = vld [vmem:[%s1] sm:$0xff]
      %v1041 = vld [vmem:[%s1 + $0x8] sm:$0xff]
      %v1042 = vld [vmem:[%s1 + $0x10] sm:$0xff]
      %v1043 = vld [vmem:[%s1 + $0x18] sm:$0xff]
      %v1044 = vld [vmem:[%s1 + $0x20] sm:$0xff]
      %v1045 = vld [vmem:[%s1 + $0x28] sm:$0xff]
      %v1046 = vld [vmem:[%s1 + $0x30] sm:$0xff]
      %v1047 = vld [vmem:[%s1 + $0x38] sm:$0xff]
      %v1048 = vld [vmem:[%s2] sm:$0xff]
      %v1049 = vld [vmem:[%s2 + $0x8] sm:$0xff]
      %v1050 = vld [vmem:[%s2 + $0x10] sm:$0xff]
      %v1051 = vld [vmem:[%s2 + $0x18] sm:$0xff]
      %1053 = vset.pattern.permute.xlu0 0
      %1054 = vperm.xlu0 %1053, %v1048
      %v1055 = vpop.permute.xlu0 %1054
      %1058 = vset.pattern.permute.xlu0 0
      %1059 = vperm.xlu0 %1058, %v1049
      %v1060 = vpop.permute.xlu0 %1059
      %1063 = vset.pattern.permute.xlu0 0
      %1064 = vperm.xlu0 %1063, %v1050
      %v1065 = vpop.permute.xlu0 %1064
      %1068 = vset.pattern.permute.xlu0 0
      %1069 = vperm.xlu0 %1068, %v1051
      %v1070 = vpop.permute.xlu0 %1069
      %v1080 = vunpack.c.l.b16 %v1040
      %v1081 = vunpack.c.h.b16 %v1040
      %v1082 = vunpack.c.l.b16 %v1041
      %v1083 = vunpack.c.h.b16 %v1041
      %v1084 = vunpack.c.l.b16 %v1042
      %v1085 = vunpack.c.h.b16 %v1042
      %v1086 = vunpack.c.l.b16 %v1043
      %v1087 = vunpack.c.h.b16 %v1043
      %v1088 = vunpack.c.l.b16 %v1044
      %v1089 = vunpack.c.h.b16 %v1044
      %v1090 = vunpack.c.l.b16 %v1045
      %v1091 = vunpack.c.h.b16 %v1045
      %v1092 = vunpack.c.l.b16 %v1046
      %v1093 = vunpack.c.h.b16 %v1046
      %v1094 = vunpack.c.l.b16 %v1047
      %v1095 = vunpack.c.h.b16 %v1047
      %v1096 = vpack.c.b16 %v1084, %v1080
      %v1097 = vpack.c.b16 %v1085, %v1081
      %v1098 = vpack.c.b16 %v1086, %v1082
      %v1099 = vpack.c.b16 %v1087, %v1083
      %v1100 = vpack.c.b16 %v1092, %v1088
      %v1101 = vpack.c.b16 %v1093, %v1089
      %v1102 = vpack.c.b16 %v1094, %v1090
      %v1103 = vpack.c.b16 %v1095, %v1091
      %1110 = vrot.lane.b32.xlu0 %v312, 111
      %v1111 = vpop.permute.xlu0 %1110
      %1112 = vrot.lane.b32.xlu0 %v313, 111
      %v1113 = vpop.permute.xlu0 %1112
      %1114 = vrot.lane.b32.xlu0 %v314, 111
      %v1115 = vpop.permute.xlu0 %1114
      %1116 = vrot.lane.b32.xlu0 %v315, 111
      %v1117 = vpop.permute.xlu0 %1116
      %1118 = vrot.lane.b32.xlu0 %v316, 111
      %v1119 = vpop.permute.xlu0 %1118
      %1120 = vrot.lane.b32.xlu0 %v317, 111
      %v1121 = vpop.permute.xlu0 %1120
      %1122 = vrot.lane.b32.xlu0 %v318, 111
      %v1123 = vpop.permute.xlu0 %1122
      %1124 = vrot.lane.b32.xlu0 %v319, 111
      %v1125 = vpop.permute.xlu0 %1124
      %1126 = vrot.lane.b32.xlu0 %v337, 111
      %v1127 = vpop.permute.xlu0 %1126
      %1128 = vrot.lane.b32.xlu0 %v338, 111
      %v1129 = vpop.permute.xlu0 %1128
      %1130 = vrot.lane.b32.xlu0 %v339, 111
      %v1131 = vpop.permute.xlu0 %1130
      %1132 = vrot.lane.b32.xlu0 %v340, 111
      %v1133 = vpop.permute.xlu0 %1132
      %1134 = vrot.lane.b32.xlu0 %v341, 111
      %v1135 = vpop.permute.xlu0 %1134
      %1136 = vrot.lane.b32.xlu0 %v342, 111
      %v1137 = vpop.permute.xlu0 %1136
      %1138 = vrot.lane.b32.xlu0 %v343, 111
      %v1139 = vpop.permute.xlu0 %1138
      %1140 = vrot.lane.b32.xlu0 %v335, 111
      %v1141 = vpop.permute.xlu0 %1140
      %1142 = vrot.lane.b32.xlu0 %v361, 111
      %v1143 = vpop.permute.xlu0 %1142
      %1144 = vrot.lane.b32.xlu0 %v362, 111
      %v1145 = vpop.permute.xlu0 %1144
      %1146 = vrot.lane.b32.xlu0 %v363, 111
      %v1147 = vpop.permute.xlu0 %1146
      %1148 = vrot.lane.b32.xlu0 %v364, 111
      %v1149 = vpop.permute.xlu0 %1148
      %1150 = vrot.lane.b32.xlu0 %v365, 111
      %v1151 = vpop.permute.xlu0 %1150
      %1152 = vrot.lane.b32.xlu0 %v366, 111
      %v1153 = vpop.permute.xlu0 %1152
      %1154 = vrot.lane.b32.xlu0 %v367, 111
      %v1155 = vpop.permute.xlu0 %1154
      %1156 = vrot.lane.b32.xlu0 %v359, 111
      %v1157 = vpop.permute.xlu0 %1156
      %1158 = vrot.lane.b32.xlu0 %v385, 111
      %v1159 = vpop.permute.xlu0 %1158
      %1160 = vrot.lane.b32.xlu0 %v386, 111
      %v1161 = vpop.permute.xlu0 %1160
      %1162 = vrot.lane.b32.xlu0 %v387, 111
      %v1163 = vpop.permute.xlu0 %1162
      %1164 = vrot.lane.b32.xlu0 %v388, 111
      %v1165 = vpop.permute.xlu0 %1164
      %1166 = vrot.lane.b32.xlu0 %v389, 111
      %v1167 = vpop.permute.xlu0 %1166
      %1168 = vrot.lane.b32.xlu0 %v390, 111
      %v1169 = vpop.permute.xlu0 %1168
      %1170 = vrot.lane.b32.xlu0 %v391, 111
      %v1171 = vpop.permute.xlu0 %1170
      %1172 = vrot.lane.b32.xlu0 %v383, 111
      %v1173 = vpop.permute.xlu0 %1172
      %1174 = vrot.lane.b32.xlu0 %v409, 111
      %v1175 = vpop.permute.xlu0 %1174
      %1176 = vrot.lane.b32.xlu0 %v410, 111
      %v1177 = vpop.permute.xlu0 %1176
      %1178 = vrot.lane.b32.xlu0 %v411, 111
      %v1179 = vpop.permute.xlu0 %1178
      %1180 = vrot.lane.b32.xlu0 %v412, 111
      %v1181 = vpop.permute.xlu0 %1180
      %1182 = vrot.lane.b32.xlu0 %v413, 111
      %v1183 = vpop.permute.xlu0 %1182
      %1184 = vrot.lane.b32.xlu0 %v414, 111
      %v1185 = vpop.permute.xlu0 %1184
      %1186 = vrot.lane.b32.xlu0 %v415, 111
      %v1187 = vpop.permute.xlu0 %1186
      %1188 = vrot.lane.b32.xlu0 %v407, 111
      %v1189 = vpop.permute.xlu0 %1188
      %1190 = vrot.lane.b32.xlu0 %v433, 111
      %v1191 = vpop.permute.xlu0 %1190
      %1192 = vrot.lane.b32.xlu0 %v434, 111
      %v1193 = vpop.permute.xlu0 %1192
      %1194 = vrot.lane.b32.xlu0 %v435, 111
      %v1195 = vpop.permute.xlu0 %1194
      %1196 = vrot.lane.b32.xlu0 %v436, 111
      %v1197 = vpop.permute.xlu0 %1196
      %1198 = vrot.lane.b32.xlu0 %v437, 111
      %v1199 = vpop.permute.xlu0 %1198
      %1200 = vrot.lane.b32.xlu0 %v438, 111
      %v1201 = vpop.permute.xlu0 %1200
      %1202 = vrot.lane.b32.xlu0 %v439, 111
      %v1203 = vpop.permute.xlu0 %1202
      %1204 = vrot.lane.b32.xlu0 %v431, 111
      %v1205 = vpop.permute.xlu0 %1204
      %1206 = vrot.lane.b32.xlu0 %v457, 111
      %v1207 = vpop.permute.xlu0 %1206
      %1208 = vrot.lane.b32.xlu0 %v458, 111
      %v1209 = vpop.permute.xlu0 %1208
      %1210 = vrot.lane.b32.xlu0 %v459, 111
      %v1211 = vpop.permute.xlu0 %1210
      %1212 = vrot.lane.b32.xlu0 %v460, 111
      %v1213 = vpop.permute.xlu0 %1212
      %1214 = vrot.lane.b32.xlu0 %v461, 111
      %v1215 = vpop.permute.xlu0 %1214
      %1216 = vrot.lane.b32.xlu0 %v462, 111
      %v1217 = vpop.permute.xlu0 %1216
      %1218 = vrot.lane.b32.xlu0 %v463, 111
      %v1219 = vpop.permute.xlu0 %1218
      %1220 = vrot.lane.b32.xlu0 %v455, 111
      %v1221 = vpop.permute.xlu0 %1220
      %1222 = vrot.lane.b32.xlu0 %v481, 111
      %v1223 = vpop.permute.xlu0 %1222
      %1224 = vrot.lane.b32.xlu0 %v482, 111
      %v1225 = vpop.permute.xlu0 %1224
      %1226 = vrot.lane.b32.xlu0 %v483, 111
      %v1227 = vpop.permute.xlu0 %1226
      %1228 = vrot.lane.b32.xlu0 %v484, 111
      %v1229 = vpop.permute.xlu0 %1228
      %1230 = vrot.lane.b32.xlu0 %v485, 111
      %v1231 = vpop.permute.xlu0 %1230
      %1232 = vrot.lane.b32.xlu0 %v486, 111
      %v1233 = vpop.permute.xlu0 %1232
      %1234 = vrot.lane.b32.xlu0 %v487, 111
      %v1235 = vpop.permute.xlu0 %1234
      %1236 = vrot.lane.b32.xlu0 %v479, 111
      %v1237 = vpop.permute.xlu0 %1236
      %1238 = vrot.lane.b32.xlu0 %v505, 111
      %v1239 = vpop.permute.xlu0 %1238
      %1240 = vrot.lane.b32.xlu0 %v506, 111
      %v1241 = vpop.permute.xlu0 %1240
      %1242 = vrot.lane.b32.xlu0 %v507, 111
      %v1243 = vpop.permute.xlu0 %1242
      %1244 = vrot.lane.b32.xlu0 %v508, 111
      %v1245 = vpop.permute.xlu0 %1244
      %1246 = vrot.lane.b32.xlu0 %v509, 111
      %v1247 = vpop.permute.xlu0 %1246
      %1248 = vrot.lane.b32.xlu0 %v510, 111
      %v1249 = vpop.permute.xlu0 %1248
      %1250 = vrot.lane.b32.xlu0 %v511, 111
      %v1251 = vpop.permute.xlu0 %1250
      %1252 = vrot.lane.b32.xlu0 %v503, 111
      %v1253 = vpop.permute.xlu0 %1252
      %1254 = vrot.lane.b32.xlu0 %v529, 111
      %v1255 = vpop.permute.xlu0 %1254
      %1256 = vrot.lane.b32.xlu0 %v530, 111
      %v1257 = vpop.permute.xlu0 %1256
      %1258 = vrot.lane.b32.xlu0 %v531, 111
      %v1259 = vpop.permute.xlu0 %1258
      %1260 = vrot.lane.b32.xlu0 %v532, 111
      %v1261 = vpop.permute.xlu0 %1260
      %1262 = vrot.lane.b32.xlu0 %v533, 111
      %v1263 = vpop.permute.xlu0 %1262
      %1264 = vrot.lane.b32.xlu0 %v534, 111
      %v1265 = vpop.permute.xlu0 %1264
      %1266 = vrot.lane.b32.xlu0 %v535, 111
      %v1267 = vpop.permute.xlu0 %1266
      %1268 = vrot.lane.b32.xlu0 %v527, 111
      %v1269 = vpop.permute.xlu0 %1268
      %1270 = vrot.lane.b32.xlu0 %v553, 111
      %v1271 = vpop.permute.xlu0 %1270
      %1272 = vrot.lane.b32.xlu0 %v554, 111
      %v1273 = vpop.permute.xlu0 %1272
      %1274 = vrot.lane.b32.xlu0 %v555, 111
      %v1275 = vpop.permute.xlu0 %1274
      %1276 = vrot.lane.b32.xlu0 %v556, 111
      %v1277 = vpop.permute.xlu0 %1276
      %1278 = vrot.lane.b32.xlu0 %v557, 111
      %v1279 = vpop.permute.xlu0 %1278
      %1280 = vrot.lane.b32.xlu0 %v558, 111
      %v1281 = vpop.permute.xlu0 %1280
      %1282 = vrot.lane.b32.xlu0 %v559, 111
      %v1283 = vpop.permute.xlu0 %1282
      %1284 = vrot.lane.b32.xlu0 %v551, 111
      %v1285 = vpop.permute.xlu0 %1284
      %1286 = vrot.lane.b32.xlu0 %v577, 111
      %v1287 = vpop.permute.xlu0 %1286
      %1288 = vrot.lane.b32.xlu0 %v578, 111
      %v1289 = vpop.permute.xlu0 %1288
      %1290 = vrot.lane.b32.xlu0 %v579, 111
      %v1291 = vpop.permute.xlu0 %1290
      %1292 = vrot.lane.b32.xlu0 %v580, 111
      %v1293 = vpop.permute.xlu0 %1292
      %1294 = vrot.lane.b32.xlu0 %v581, 111
      %v1295 = vpop.permute.xlu0 %1294
      %1296 = vrot.lane.b32.xlu0 %v582, 111
      %v1297 = vpop.permute.xlu0 %1296
      %1298 = vrot.lane.b32.xlu0 %v583, 111
      %v1299 = vpop.permute.xlu0 %1298
      %1300 = vrot.lane.b32.xlu0 %v575, 111
      %v1301 = vpop.permute.xlu0 %1300
      %1302 = vrot.lane.b32.xlu0 %v601, 111
      %v1303 = vpop.permute.xlu0 %1302
      %1304 = vrot.lane.b32.xlu0 %v602, 111
      %v1305 = vpop.permute.xlu0 %1304
      %1306 = vrot.lane.b32.xlu0 %v603, 111
      %v1307 = vpop.permute.xlu0 %1306
      %1308 = vrot.lane.b32.xlu0 %v604, 111
      %v1309 = vpop.permute.xlu0 %1308
      %1310 = vrot.lane.b32.xlu0 %v605, 111
      %v1311 = vpop.permute.xlu0 %1310
      %1312 = vrot.lane.b32.xlu0 %v606, 111
      %v1313 = vpop.permute.xlu0 %1312
      %1314 = vrot.lane.b32.xlu0 %v607, 111
      %v1315 = vpop.permute.xlu0 %1314
      %1316 = vrot.lane.b32.xlu0 %v599, 111
      %v1317 = vpop.permute.xlu0 %1316
      %1318 = vrot.lane.b32.xlu0 %v609, 111
      %v1319 = vpop.permute.xlu0 %1318
      %1320 = vrot.lane.b32.xlu0 %v623, 111
      %v1321 = vpop.permute.xlu0 %1320
      %1322 = vrot.lane.b32.xlu0 %v624, 111
      %v1323 = vpop.permute.xlu0 %1322
      %1324 = vrot.lane.b32.xlu0 %v625, 111
      %v1325 = vpop.permute.xlu0 %1324
      %1326 = vrot.lane.b32.xlu0 %v626, 111
      %v1327 = vpop.permute.xlu0 %1326
      %1328 = vrot.lane.b32.xlu0 %v627, 111
      %v1329 = vpop.permute.xlu0 %1328
      %1330 = vrot.lane.b32.xlu0 %v628, 111
      %v1331 = vpop.permute.xlu0 %1330
      %1332 = vrot.lane.b32.xlu0 %v621, 111
      %v1333 = vpop.permute.xlu0 %1332
      %1334 = vrot.lane.b32.xlu0 %v635, 111
      %v1335 = vpop.permute.xlu0 %1334
      %1336 = vrot.lane.b32.xlu0 %v651, 111
      %v1337 = vpop.permute.xlu0 %1336
      %1338 = vrot.lane.b32.xlu0 %v652, 111
      %v1339 = vpop.permute.xlu0 %1338
      %1340 = vrot.lane.b32.xlu0 %v653, 111
      %v1341 = vpop.permute.xlu0 %1340
      %1342 = vrot.lane.b32.xlu0 %v654, 111
      %v1343 = vpop.permute.xlu0 %1342
      %1344 = vrot.lane.b32.xlu0 %v655, 111
      %v1345 = vpop.permute.xlu0 %1344
      %1346 = vrot.lane.b32.xlu0 %v656, 111
      %v1347 = vpop.permute.xlu0 %1346
      %1348 = vrot.lane.b32.xlu0 %v657, 111
      %v1349 = vpop.permute.xlu0 %1348
      %1350 = vrot.lane.b32.xlu0 %v659, 111
      %v1351 = vpop.permute.xlu0 %1350
      %1352 = vrot.lane.b32.xlu0 %v675, 111
      %v1353 = vpop.permute.xlu0 %1352
      %1354 = vrot.lane.b32.xlu0 %v676, 111
      %v1355 = vpop.permute.xlu0 %1354
      %1356 = vrot.lane.b32.xlu0 %v677, 111
      %v1357 = vpop.permute.xlu0 %1356
      %1358 = vrot.lane.b32.xlu0 %v678, 111
      %v1359 = vpop.permute.xlu0 %1358
      %1360 = vrot.lane.b32.xlu0 %v679, 111
      %v1361 = vpop.permute.xlu0 %1360
      %1362 = vrot.lane.b32.xlu0 %v680, 111
      %v1363 = vpop.permute.xlu0 %1362
      %1364 = vrot.lane.b32.xlu0 %v681, 111
      %v1365 = vpop.permute.xlu0 %1364
      %1366 = vrot.lane.b32.xlu0 %v821, 111
      %v1367 = vpop.permute.xlu0 %1366
      %1368 = vrot.lane.b32.xlu0 %v974, 111
      %v1369 = vpop.permute.xlu0 %1368
      %1370 = vrot.lane.b32.xlu0 %v975, 111
      %v1371 = vpop.permute.xlu0 %1370
      %1372 = vrot.lane.b32.xlu0 %v976, 111
      %v1373 = vpop.permute.xlu0 %1372
      %1374 = vrot.lane.b32.xlu0 %v977, 111
      %v1375 = vpop.permute.xlu0 %1374
      %1376 = vrot.lane.b32.xlu0 %v978, 111
      %v1377 = vpop.permute.xlu0 %1376
      %1378 = vrot.lane.b32.xlu0 %v979, 111
      %v1379 = vpop.permute.xlu0 %1378
      %1380 = vrot.lane.b32.xlu0 %v833, 111
      %v1381 = vpop.permute.xlu0 %1380
      %1382 = vrot.lane.b32.xlu0 %v835, 111
      %v1383 = vpop.permute.xlu0 %1382
      %1384 = vrot.lane.b32.xlu0 %v980, 111
      %v1385 = vpop.permute.xlu0 %1384
      %1386 = vrot.lane.b32.xlu0 %v981, 111
      %v1387 = vpop.permute.xlu0 %1386
      %1388 = vrot.lane.b32.xlu0 %v982, 111
      %v1389 = vpop.permute.xlu0 %1388
      %1390 = vrot.lane.b32.xlu0 %v983, 111
      %v1391 = vpop.permute.xlu0 %1390
      %1392 = vrot.lane.b32.xlu0 %v984, 111
      %v1393 = vpop.permute.xlu0 %1392
      %1394 = vrot.lane.b32.xlu0 %v985, 111
      %v1395 = vpop.permute.xlu0 %1394
      %1396 = vrot.lane.b32.xlu0 %v847, 111
      %v1397 = vpop.permute.xlu0 %1396
      %1398 = vrot.lane.b32.xlu0 %v849, 111
      %v1399 = vpop.permute.xlu0 %1398
      %1400 = vrot.lane.b32.xlu0 %v986, 111
      %v1401 = vpop.permute.xlu0 %1400
      %1402 = vrot.lane.b32.xlu0 %v987, 111
      %v1403 = vpop.permute.xlu0 %1402
      %1404 = vrot.lane.b32.xlu0 %v988, 111
      %v1405 = vpop.permute.xlu0 %1404
      %1406 = vrot.lane.b32.xlu0 %v989, 111
      %v1407 = vpop.permute.xlu0 %1406
      %1408 = vrot.lane.b32.xlu0 %v990, 111
      %v1409 = vpop.permute.xlu0 %1408
      %1410 = vrot.lane.b32.xlu0 %v991, 111
      %v1411 = vpop.permute.xlu0 %1410
      %1412 = vrot.lane.b32.xlu0 %v861, 111
      %v1413 = vpop.permute.xlu0 %1412
      %1414 = vrot.lane.b32.xlu0 %v863, 111
      %v1415 = vpop.permute.xlu0 %1414
      %1416 = vrot.lane.b32.xlu0 %v992, 111
      %v1417 = vpop.permute.xlu0 %1416
      %1418 = vrot.lane.b32.xlu0 %v993, 111
      %v1419 = vpop.permute.xlu0 %1418
      %1420 = vrot.lane.b32.xlu0 %v994, 111
      %v1421 = vpop.permute.xlu0 %1420
      %1422 = vrot.lane.b32.xlu0 %v995, 111
      %v1423 = vpop.permute.xlu0 %1422
      %1424 = vrot.lane.b32.xlu0 %v996, 111
      %v1425 = vpop.permute.xlu0 %1424
      %1426 = vrot.lane.b32.xlu0 %v997, 111
      %v1427 = vpop.permute.xlu0 %1426
      %1428 = vrot.lane.b32.xlu0 %v875, 111
      %v1429 = vpop.permute.xlu0 %1428
      %1430 = vrot.lane.b32.xlu0 %v877, 111
      %v1431 = vpop.permute.xlu0 %1430
      %1432 = vrot.lane.b32.xlu0 %v998, 111
      %v1433 = vpop.permute.xlu0 %1432
      %1434 = vrot.lane.b32.xlu0 %v999, 111
      %v1435 = vpop.permute.xlu0 %1434
      %1436 = vrot.lane.b32.xlu0 %v1000, 111
      %v1437 = vpop.permute.xlu0 %1436
      %1438 = vrot.lane.b32.xlu0 %v1001, 111
      %v1439 = vpop.permute.xlu0 %1438
      %1440 = vrot.lane.b32.xlu0 %v1002, 111
      %v1441 = vpop.permute.xlu0 %1440
      %1442 = vrot.lane.b32.xlu0 %v1003, 111
      %v1443 = vpop.permute.xlu0 %1442
      %1444 = vrot.lane.b32.xlu0 %v889, 111
      %v1445 = vpop.permute.xlu0 %1444
      %1446 = vrot.lane.b32.xlu0 %v891, 111
      %v1447 = vpop.permute.xlu0 %1446
      %1448 = vrot.lane.b32.xlu0 %v1004, 111
      %v1449 = vpop.permute.xlu0 %1448
      %1450 = vrot.lane.b32.xlu0 %v1005, 111
      %v1451 = vpop.permute.xlu0 %1450
      %1452 = vrot.lane.b32.xlu0 %v1006, 111
      %v1453 = vpop.permute.xlu0 %1452
      %1454 = vrot.lane.b32.xlu0 %v1007, 111
      %v1455 = vpop.permute.xlu0 %1454
      %1456 = vrot.lane.b32.xlu0 %v1008, 111
      %v1457 = vpop.permute.xlu0 %1456
      %1458 = vrot.lane.b32.xlu0 %v1009, 111
      %v1459 = vpop.permute.xlu0 %1458
      %1460 = vrot.lane.b32.xlu0 %v903, 111
      %v1461 = vpop.permute.xlu0 %1460
      %1462 = vrot.lane.b32.xlu0 %v905, 111
      %v1463 = vpop.permute.xlu0 %1462
      %1464 = vrot.lane.b32.xlu0 %v1010, 111
      %v1465 = vpop.permute.xlu0 %1464
      %1466 = vrot.lane.b32.xlu0 %v1011, 111
      %v1467 = vpop.permute.xlu0 %1466
      %1468 = vrot.lane.b32.xlu0 %v1012, 111
      %v1469 = vpop.permute.xlu0 %1468
      %1470 = vrot.lane.b32.xlu0 %v1013, 111
      %v1471 = vpop.permute.xlu0 %1470
      %1472 = vrot.lane.b32.xlu0 %v1014, 111
      %v1473 = vpop.permute.xlu0 %1472
      %1474 = vrot.lane.b32.xlu0 %v1015, 111
      %v1475 = vpop.permute.xlu0 %1474
      %1476 = vrot.lane.b32.xlu0 %v917, 111
      %v1477 = vpop.permute.xlu0 %1476
      %1478 = vrot.lane.b32.xlu0 %v919, 111
      %v1479 = vpop.permute.xlu0 %1478
      %1480 = vrot.lane.b32.xlu0 %v1016, 111
      %v1481 = vpop.permute.xlu0 %1480
      %1482 = vrot.lane.b32.xlu0 %v1017, 111
      %v1483 = vpop.permute.xlu0 %1482
      %1484 = vrot.lane.b32.xlu0 %v1018, 111
      %v1485 = vpop.permute.xlu0 %1484
      %1486 = vrot.lane.b32.xlu0 %v1019, 111
      %v1487 = vpop.permute.xlu0 %1486
      %1488 = vrot.lane.b32.xlu0 %v1020, 111
      %v1489 = vpop.permute.xlu0 %1488
      %1490 = vrot.lane.b32.xlu0 %v1021, 111
      %v1491 = vpop.permute.xlu0 %1490
      %1492 = vrot.lane.b32.xlu0 %v931, 111
      %v1493 = vpop.permute.xlu0 %1492
      %1494 = vrot.lane.b32.xlu0 %v933, 111
      %v1495 = vpop.permute.xlu0 %1494
      %1496 = vrot.lane.b32.xlu0 %v1022, 111
      %v1497 = vpop.permute.xlu0 %1496
      %1498 = vrot.lane.b32.xlu0 %v1023, 111
      %v1499 = vpop.permute.xlu0 %1498
      %1500 = vrot.lane.b32.xlu0 %v1024, 111
      %v1501 = vpop.permute.xlu0 %1500
      %1502 = vrot.lane.b32.xlu0 %v1025, 111
      %v1503 = vpop.permute.xlu0 %1502
      %1504 = vrot.lane.b32.xlu0 %v1026, 111
      %v1505 = vpop.permute.xlu0 %1504
      %1506 = vrot.lane.b32.xlu0 %v1027, 111
      %v1507 = vpop.permute.xlu0 %1506
      %1508 = vrot.lane.b32.xlu0 %v945, 111
      %v1509 = vpop.permute.xlu0 %1508
      %1510 = vrot.lane.b32.xlu0 %v947, 111
      %v1511 = vpop.permute.xlu0 %1510
      %1512 = vrot.lane.b32.xlu0 %v1028, 111
      %v1513 = vpop.permute.xlu0 %1512
      %1514 = vrot.lane.b32.xlu0 %v1029, 111
      %v1515 = vpop.permute.xlu0 %1514
      %1516 = vrot.lane.b32.xlu0 %v1030, 111
      %v1517 = vpop.permute.xlu0 %1516
      %1518 = vrot.lane.b32.xlu0 %v1031, 111
      %v1519 = vpop.permute.xlu0 %1518
      %1520 = vrot.lane.b32.xlu0 %v1032, 111
      %v1521 = vpop.permute.xlu0 %1520
      %1522 = vrot.lane.b32.xlu0 %v1033, 111
      %v1523 = vpop.permute.xlu0 %1522
      %1524 = vrot.lane.b32.xlu0 %v959, 111
      %v1525 = vpop.permute.xlu0 %1524
      %1526 = vrot.lane.b32.xlu0 %v961, 111
      %v1527 = vpop.permute.xlu0 %1526
      %1528 = vrot.lane.b32.xlu0 %v1034, 111
      %v1529 = vpop.permute.xlu0 %1528
      %1530 = vrot.lane.b32.xlu0 %v1035, 111
      %v1531 = vpop.permute.xlu0 %1530
      %1532 = vrot.lane.b32.xlu0 %v1036, 111
      %v1533 = vpop.permute.xlu0 %1532
      %1534 = vrot.lane.b32.xlu0 %v1037, 111
      %v1535 = vpop.permute.xlu0 %1534
      %1536 = vrot.lane.b32.xlu0 %v1038, 111
      %v1537 = vpop.permute.xlu0 %1536
      %1538 = vrot.lane.b32.xlu0 %v1039, 111
      %v1539 = vpop.permute.xlu0 %1538
      %1540 = vrot.lane.b32.xlu0 %v973, 111
      %v1541 = vpop.permute.xlu0 %1540
      %vm1542 = vcmask 908288
      %v1543 = vsel %vm1542, %v1111, %v1113
      %v1544 = vsel %vm1542, %v1113, %v1115
      %v1545 = vsel %vm1542, %v1115, %v1117
      %v1546 = vsel %vm1542, %v1117, %v1119
      %v1547 = vsel %vm1542, %v1119, %v1121
      %v1548 = vsel %vm1542, %v1121, %v1123
      %v1549 = vsel %vm1542, %v1123, %v1125
      %v1550 = vsel %vm1542, %v1127, %v1129
      %v1551 = vsel %vm1542, %v1129, %v1131
      %v1552 = vsel %vm1542, %v1131, %v1133
      %v1553 = vsel %vm1542, %v1133, %v1135
      %v1554 = vsel %vm1542, %v1135, %v1137
      %v1555 = vsel %vm1542, %v1137, %v1139
      %v1556 = vsel %vm1542, %v1139, %v1141
      %v1557 = vsel %vm1542, %v1143, %v1145
      %v1558 = vsel %vm1542, %v1145, %v1147
      %v1559 = vsel %vm1542, %v1147, %v1149
      %v1560 = vsel %vm1542, %v1149, %v1151
      %v1561 = vsel %vm1542, %v1151, %v1153
      %v1562 = vsel %vm1542, %v1153, %v1155
      %v1563 = vsel %vm1542, %v1155, %v1157
      %v1564 = vsel %vm1542, %v1159, %v1161
      %v1565 = vsel %vm1542, %v1161, %v1163
      %v1566 = vsel %vm1542, %v1163, %v1165
      %v1567 = vsel %vm1542, %v1165, %v1167
      %v1568 = vsel %vm1542, %v1167, %v1169
      %v1569 = vsel %vm1542, %v1169, %v1171
      %v1570 = vsel %vm1542, %v1171, %v1173
      %v1571 = vsel %vm1542, %v1175, %v1177
      %v1572 = vsel %vm1542, %v1177, %v1179
      %v1573 = vsel %vm1542, %v1179, %v1181
      %v1574 = vsel %vm1542, %v1181, %v1183
      %v1575 = vsel %vm1542, %v1183, %v1185
      %v1576 = vsel %vm1542, %v1185, %v1187
      %v1577 = vsel %vm1542, %v1187, %v1189
      %v1578 = vsel %vm1542, %v1191, %v1193
      %v1579 = vsel %vm1542, %v1193, %v1195
      %v1580 = vsel %vm1542, %v1195, %v1197
      %v1581 = vsel %vm1542, %v1197, %v1199
      %v1582 = vsel %vm1542, %v1199, %v1201
      %v1583 = vsel %vm1542, %v1201, %v1203
      %v1584 = vsel %vm1542, %v1203, %v1205
      %v1585 = vsel %vm1542, %v1207, %v1209
      %v1586 = vsel %vm1542, %v1209, %v1211
      %v1587 = vsel %vm1542, %v1211, %v1213
      %v1588 = vsel %vm1542, %v1213, %v1215
      %v1589 = vsel %vm1542, %v1215, %v1217
      %v1590 = vsel %vm1542, %v1217, %v1219
      %v1591 = vsel %vm1542, %v1219, %v1221
      %v1592 = vsel %vm1542, %v1223, %v1225
      %v1593 = vsel %vm1542, %v1225, %v1227
      %v1594 = vsel %vm1542, %v1227, %v1229
      %v1595 = vsel %vm1542, %v1229, %v1231
      %v1596 = vsel %vm1542, %v1231, %v1233
      %v1597 = vsel %vm1542, %v1233, %v1235
      %v1598 = vsel %vm1542, %v1235, %v1237
      %v1599 = vsel %vm1542, %v1239, %v1241
      %v1600 = vsel %vm1542, %v1241, %v1243
      %v1601 = vsel %vm1542, %v1243, %v1245
      %v1602 = vsel %vm1542, %v1245, %v1247
      %v1603 = vsel %vm1542, %v1247, %v1249
      %v1604 = vsel %vm1542, %v1249, %v1251
      %v1605 = vsel %vm1542, %v1251, %v1253
      %v1606 = vsel %vm1542, %v1255, %v1257
      %v1607 = vsel %vm1542, %v1257, %v1259
      %v1608 = vsel %vm1542, %v1259, %v1261
      %v1609 = vsel %vm1542, %v1261, %v1263
      %v1610 = vsel %vm1542, %v1263, %v1265
      %v1611 = vsel %vm1542, %v1265, %v1267
      %v1612 = vsel %vm1542, %v1267, %v1269
      %v1613 = vsel %vm1542, %v1271, %v1273
      %v1614 = vsel %vm1542, %v1273, %v1275
      %v1615 = vsel %vm1542, %v1275, %v1277
      %v1616 = vsel %vm1542, %v1277, %v1279
      %v1617 = vsel %vm1542, %v1279, %v1281
      %v1618 = vsel %vm1542, %v1281, %v1283
      %v1619 = vsel %vm1542, %v1283, %v1285
      %v1620 = vsel %vm1542, %v1287, %v1289
      %v1621 = vsel %vm1542, %v1289, %v1291
      %v1622 = vsel %vm1542, %v1291, %v1293
      %v1623 = vsel %vm1542, %v1293, %v1295
      %v1624 = vsel %vm1542, %v1295, %v1297
      %v1625 = vsel %vm1542, %v1297, %v1299
      %v1626 = vsel %vm1542, %v1299, %v1301
      %v1627 = vsel %vm1542, %v1303, %v1305
      %v1628 = vsel %vm1542, %v1305, %v1307
      %v1629 = vsel %vm1542, %v1307, %v1309
      %v1630 = vsel %vm1542, %v1309, %v1311
      %v1631 = vsel %vm1542, %v1311, %v1313
      %v1632 = vsel %vm1542, %v1313, %v1315
      %v1633 = vsel %vm1542, %v1315, %v1317
      %v1634 = vsel %vm1542, %v1319, %v1321
      %v1635 = vsel %vm1542, %v1321, %v1323
      %v1636 = vsel %vm1542, %v1323, %v1325
      %v1637 = vsel %vm1542, %v1325, %v1327
      %v1638 = vsel %vm1542, %v1327, %v1329
      %v1639 = vsel %vm1542, %v1329, %v1331
      %v1640 = vsel %vm1542, %v1331, %v1333
      %v1641 = vsel %vm1542, %v1335, %v1337
      %v1642 = vsel %vm1542, %v1337, %v1339
      %v1643 = vsel %vm1542, %v1339, %v1341
      %v1644 = vsel %vm1542, %v1341, %v1343
      %v1645 = vsel %vm1542, %v1343, %v1345
      %v1646 = vsel %vm1542, %v1345, %v1347
      %v1647 = vsel %vm1542, %v1347, %v1349
      %v1648 = vsel %vm1542, %v1351, %v1353
      %v1649 = vsel %vm1542, %v1353, %v1355
      %v1650 = vsel %vm1542, %v1355, %v1357
      %v1651 = vsel %vm1542, %v1357, %v1359
      %v1652 = vsel %vm1542, %v1359, %v1361
      %v1653 = vsel %vm1542, %v1361, %v1363
      %v1654 = vsel %vm1542, %v1363, %v1365
      %v1655 = vsel %vm1542, %v1367, %v1369
      %v1656 = vsel %vm1542, %v1369, %v1371
      %v1657 = vsel %vm1542, %v1371, %v1373
      %v1658 = vsel %vm1542, %v1373, %v1375
      %v1659 = vsel %vm1542, %v1375, %v1377
      %v1660 = vsel %vm1542, %v1377, %v1379
      %v1661 = vsel %vm1542, %v1379, %v1381
      %v1662 = vsel %vm1542, %v1383, %v1385
      %v1663 = vsel %vm1542, %v1385, %v1387
      %v1664 = vsel %vm1542, %v1387, %v1389
      %v1665 = vsel %vm1542, %v1389, %v1391
      %v1666 = vsel %vm1542, %v1391, %v1393
      %v1667 = vsel %vm1542, %v1393, %v1395
      %v1668 = vsel %vm1542, %v1395, %v1397
      %v1669 = vsel %vm1542, %v1399, %v1401
      %v1670 = vsel %vm1542, %v1401, %v1403
      %v1671 = vsel %vm1542, %v1403, %v1405
      %v1672 = vsel %vm1542, %v1405, %v1407
      %v1673 = vsel %vm1542, %v1407, %v1409
      %v1674 = vsel %vm1542, %v1409, %v1411
      %v1675 = vsel %vm1542, %v1411, %v1413
      %v1676 = vsel %vm1542, %v1415, %v1417
      %v1677 = vsel %vm1542, %v1417, %v1419
      %v1678 = vsel %vm1542, %v1419, %v1421
      %v1679 = vsel %vm1542, %v1421, %v1423
      %v1680 = vsel %vm1542, %v1423, %v1425
      %v1681 = vsel %vm1542, %v1425, %v1427
      %v1682 = vsel %vm1542, %v1427, %v1429
      %v1683 = vsel %vm1542, %v1431, %v1433
      %v1684 = vsel %vm1542, %v1433, %v1435
      %v1685 = vsel %vm1542, %v1435, %v1437
      %v1686 = vsel %vm1542, %v1437, %v1439
      %v1687 = vsel %vm1542, %v1439, %v1441
      %v1688 = vsel %vm1542, %v1441, %v1443
      %v1689 = vsel %vm1542, %v1443, %v1445
      %v1690 = vsel %vm1542, %v1447, %v1449
      %v1691 = vsel %vm1542, %v1449, %v1451
      %v1692 = vsel %vm1542, %v1451, %v1453
      %v1693 = vsel %vm1542, %v1453, %v1455
      %v1694 = vsel %vm1542, %v1455, %v1457
      %v1695 = vsel %vm1542, %v1457, %v1459
      %v1696 = vsel %vm1542, %v1459, %v1461
      %v1697 = vsel %vm1542, %v1463, %v1465
      %v1698 = vsel %vm1542, %v1465, %v1467
      %v1699 = vsel %vm1542, %v1467, %v1469
      %v1700 = vsel %vm1542, %v1469, %v1471
      %v1701 = vsel %vm1542, %v1471, %v1473
      %v1702 = vsel %vm1542, %v1473, %v1475
      %v1703 = vsel %vm1542, %v1475, %v1477
      %v1704 = vsel %vm1542, %v1479, %v1481
      %v1705 = vsel %vm1542, %v1481, %v1483
      %v1706 = vsel %vm1542, %v1483, %v1485
      %v1707 = vsel %vm1542, %v1485, %v1487
      %v1708 = vsel %vm1542, %v1487, %v1489
      %v1709 = vsel %vm1542, %v1489, %v1491
      %v1710 = vsel %vm1542, %v1491, %v1493
      %v1711 = vsel %vm1542, %v1495, %v1497
      %v1712 = vsel %vm1542, %v1497, %v1499
      %v1713 = vsel %vm1542, %v1499, %v1501
      %v1714 = vsel %vm1542, %v1501, %v1503
      %v1715 = vsel %vm1542, %v1503, %v1505
      %v1716 = vsel %vm1542, %v1505, %v1507
      %v1717 = vsel %vm1542, %v1507, %v1509
      %v1718 = vsel %vm1542, %v1511, %v1513
      %v1719 = vsel %vm1542, %v1513, %v1515
      %v1720 = vsel %vm1542, %v1515, %v1517
      %v1721 = vsel %vm1542, %v1517, %v1519
      %v1722 = vsel %vm1542, %v1519, %v1521
      %v1723 = vsel %vm1542, %v1521, %v1523
      %v1724 = vsel %vm1542, %v1523, %v1525
      %v1725 = vsel %vm1542, %v1527, %v1529
      %v1726 = vsel %vm1542, %v1529, %v1531
      %v1727 = vsel %vm1542, %v1531, %v1533
      %v1728 = vsel %vm1542, %v1533, %v1535
      %v1729 = vsel %vm1542, %v1535, %v1537
      %v1730 = vsel %vm1542, %v1537, %v1539
      %v1731 = vsel %vm1542, %v1539, %v1541
      %vm1921 = vcmask 392192
      %v1923 = vsel %vm1921, %v1099, 0
      %v1926 = vsel %vm1921, %v1103, 0
      %1928 = vmatprep.subr.bf16.mxu0 %v1544
      %1929 = vmatpush1.bf16.msra.mxu0 %v1543
      %1930 = vmatprep.subr.bf16.mxu0 %v1551
      %1931 = vmatpush1.bf16.msra.mxu0 %v1550
      %1932 = vmatprep.subr.bf16.mxu0 %v1558
      %1933 = vmatpush1.bf16.msra.mxu0 %v1557
      %1934 = vmatprep.subr.bf16.mxu0 %v1565
      %1935 = vmatpush1.bf16.msra.mxu0 %v1564
      %1936 = vmatprep.subr.bf16.mxu0 %v1572
      %1937 = vmatpush1.bf16.msra.mxu0 %v1571
      %1938 = vmatprep.subr.bf16.mxu0 %v1579
      %1939 = vmatpush1.bf16.msra.mxu0 %v1578
      %1940 = vmatprep.subr.bf16.mxu0 %v1586
      %1941 = vmatpush1.bf16.msra.mxu0 %v1585
      %1942 = vmatprep.subr.bf16.mxu0 %v1593
      %1943 = vmatpush1.bf16.msra.mxu0 %v1592
      %1944 = vmatprep.subr.bf16.mxu0 %v1600
      %1945 = vmatpush1.bf16.msra.mxu0 %v1599
      %1946 = vmatprep.subr.bf16.mxu0 %v1607
      %1947 = vmatpush1.bf16.msra.mxu0 %v1606
      %1948 = vmatprep.subr.bf16.mxu0 %v1614
      %1949 = vmatpush1.bf16.msra.mxu0 %v1613
      %1950 = vmatprep.subr.bf16.mxu0 %v1621
      %1951 = vmatpush1.bf16.msra.mxu0 %v1620
      %1952 = vmatprep.subr.bf16.mxu0 %v1628
      %1953 = vmatpush1.bf16.msra.mxu0 %v1627
      %1954 = vmatprep.subr.bf16.mxu0 %v1635
      %1955 = vmatpush1.bf16.msra.mxu0 %v1634
      %1956 = vmatprep.subr.bf16.mxu0 %v1642
      %1957 = vmatpush1.bf16.msra.mxu0 %v1641
      %1958 = vmatprep.subr.bf16.mxu0 %v1649
      %1959 = vmatpush1.bf16.msra.mxu0 %v1648
      %1960 = vmatprep.mubr.bf16.mxu0 %v1097
      %1961 = vmatmul.mubr.bf16.gmra.mrb[0].mxu0 %v1096
      %v1962 = vpop.f32.mrb[0].mxu0
      %v1963 = vadd.f32 %v1055, %v1962
      %v1964 = vpop.f32.mrb[0].mxu0
      %v1965 = vadd.f32 %v1055, %v1964
      %v1966 = vpop.f32.mrb[0].mxu0
      %v1967 = vadd.f32 %v1060, %v1966
      %v1968 = vpop.f32.mrb[0].mxu0
      %v1969 = vadd.f32 %v1060, %v1968
      %1970 = vmatprep.mubr.bf16.mxu0 %v1101
      %1971 = vmatmul.mubr.bf16.gmra.mrb[0].mxu0 %v1100
      %v1972 = vpop.f32.mrb[0].mxu0
      %v1973 = vadd.f32 %v1065, %v1972
      %v1974 = vpop.f32.mrb[0].mxu0
      %v1975 = vadd.f32 %v1065, %v1974
      %v1976 = vpop.f32.mrb[0].mxu0
      %v1977 = vadd.f32 %v1070, %v1976
      %v1978 = vpop.f32.mrb[0].mxu0
      %v1979 = vadd.f32 %v1070, %v1978
      %1980 = vdwg.mxu0
      %1981 = vmatprep.subr.bf16.mxu0 %v1656
      %1982 = vmatpush1.bf16.msra.mxu0 %v1655
      %1983 = vmatprep.subr.bf16.mxu0 %v1663
      %1984 = vmatpush1.bf16.msra.mxu0 %v1662
      %1985 = vmatprep.subr.bf16.mxu0 %v1670
      %1986 = vmatpush1.bf16.msra.mxu0 %v1669
      %1987 = vmatprep.subr.bf16.mxu0 %v1677
      %1988 = vmatpush1.bf16.msra.mxu0 %v1676
      %1989 = vmatprep.subr.bf16.mxu0 %v1684
      %1990 = vmatpush1.bf16.msra.mxu0 %v1683
      %1991 = vmatprep.subr.bf16.mxu0 %v1691
      %1992 = vmatpush1.bf16.msra.mxu0 %v1690
      %1993 = vmatprep.subr.bf16.mxu0 %v1698
      %1994 = vmatpush1.bf16.msra.mxu0 %v1697
      %1995 = vmatprep.subr.bf16.mxu0 %v1705
      %1996 = vmatpush1.bf16.msra.mxu0 %v1704
      %1997 = vmatprep.subr.bf16.mxu0 %v1712
      %1998 = vmatpush1.bf16.msra.mxu0 %v1711
      %1999 = vmatprep.subr.bf16.mxu0 %v1719
      %2000 = vmatpush1.bf16.msra.mxu0 %v1718
      %2001 = vmatprep.subr.bf16.mxu0 %v1726
      %2002 = vmatpush1.bf16.msra.mxu0 %v1725
      %2003 = vmatprep.subr.bf16.mxu0 0
      %2004 = vmatpush1.bf16.msra.mxu0 0
      %2005 = vmatprep.subr.bf16.mxu0 0
      %2006 = vmatpush1.bf16.msra.mxu0 0
      %2007 = vmatprep.subr.bf16.mxu0 0
      %2008 = vmatpush1.bf16.msra.mxu0 0
      %2009 = vmatprep.subr.bf16.mxu0 0
      %2010 = vmatpush1.bf16.msra.mxu0 0
      %2011 = vmatprep.subr.bf16.mxu0 0
      %2012 = vmatpush1.bf16.msra.mxu0 0
      %2013 = vmatprep.mubr.bf16.mxu0 %v1923
      %2014 = vmatmul.mubr.bf16.gmra.mrb[0].mxu0 %v1098
      %v2015 = vpop.f32.mrb[0].mxu0
      %v2016 = vadd.f32 %v1963, %v2015
      %v2017 = vpop.f32.mrb[0].mxu0
      %v2018 = vadd.f32 %v1965, %v2017
      %v2019 = vpop.f32.mrb[0].mxu0
      %v2020 = vadd.f32 %v1967, %v2019
      %v2021 = vpop.f32.mrb[0].mxu0
      %v2022 = vadd.f32 %v1969, %v2021
      %2023 = vmatprep.mubr.bf16.mxu0 %v1926
      %2024 = vmatmul.mubr.bf16.gmra.mrb[0].mxu0 %v1102
      %v2025 = vpop.f32.mrb[0].mxu0
      %v2026 = vadd.f32 %v1973, %v2025
      %v2027 = vpop.f32.mrb[0].mxu0
      %v2028 = vadd.f32 %v1975, %v2027
      %v2029 = vpop.f32.mrb[0].mxu0
      %v2030 = vadd.f32 %v1977, %v2029
      %v2031 = vpop.f32.mrb[0].mxu0
      %v2032 = vadd.f32 %v1979, %v2031
      %2033 = vdwg.mxu0
      %2034 = vmatprep.subr.bf16.mxu0 %v1546
      %2035 = vmatpush1.bf16.msra.mxu0 %v1545
      %2036 = vmatprep.subr.bf16.mxu0 %v1553
      %2037 = vmatpush1.bf16.msra.mxu0 %v1552
      %2038 = vmatprep.subr.bf16.mxu0 %v1560
      %2039 = vmatpush1.bf16.msra.mxu0 %v1559
      %2040 = vmatprep.subr.bf16.mxu0 %v1567
      %2041 = vmatpush1.bf16.msra.mxu0 %v1566
      %2042 = vmatprep.subr.bf16.mxu0 %v1574
      %2043 = vmatpush1.bf16.msra.mxu0 %v1573
      %2044 = vmatprep.subr.bf16.mxu0 %v1581
      %2045 = vmatpush1.bf16.msra.mxu0 %v1580
      %2046 = vmatprep.subr.bf16.mxu0 %v1588
      %2047 = vmatpush1.bf16.msra.mxu0 %v1587
      %2048 = vmatprep.subr.bf16.mxu0 %v1595
      %2049 = vmatpush1.bf16.msra.mxu0 %v1594
      %2050 = vmatprep.subr.bf16.mxu0 %v1602
      %2051 = vmatpush1.bf16.msra.mxu0 %v1601
      %2052 = vmatprep.subr.bf16.mxu0 %v1609
      %2053 = vmatpush1.bf16.msra.mxu0 %v1608
      %2054 = vmatprep.subr.bf16.mxu0 %v1616
      %2055 = vmatpush1.bf16.msra.mxu0 %v1615
      %2056 = vmatprep.subr.bf16.mxu0 %v1623
      %2057 = vmatpush1.bf16.msra.mxu0 %v1622
      %2058 = vmatprep.subr.bf16.mxu0 %v1630
      %2059 = vmatpush1.bf16.msra.mxu0 %v1629
      %2060 = vmatprep.subr.bf16.mxu0 %v1637
      %2061 = vmatpush1.bf16.msra.mxu0 %v1636
      %2062 = vmatprep.subr.bf16.mxu0 %v1644
      %2063 = vmatpush1.bf16.msra.mxu0 %v1643
      %2064 = vmatprep.subr.bf16.mxu0 %v1651
      %2065 = vmatpush1.bf16.msra.mxu0 %v1650
      %2066 = vmatprep.mubr.bf16.mxu0 %v1097
      %2067 = vmatmul.mubr.bf16.gmra.mrb[0].mxu0 %v1096
      %v2068 = vpop.f32.mrb[0].mxu0
      %v2069 = vadd.f32 %v1055, %v2068
      %v2070 = vpop.f32.mrb[0].mxu0
      %v2071 = vadd.f32 %v1055, %v2070
      %v2072 = vpop.f32.mrb[0].mxu0
      %v2073 = vadd.f32 %v1060, %v2072
      %v2074 = vpop.f32.mrb[0].mxu0
      %v2075 = vadd.f32 %v1060, %v2074
      %2076 = vmatprep.mubr.bf16.mxu0 %v1101
      %2077 = vmatmul.mubr.bf16.gmra.mrb[0].mxu0 %v1100
      %v2078 = vpop.f32.mrb[0].mxu0
      %v2079 = vadd.f32 %v1065, %v2078
      %v2080 = vpop.f32.mrb[0].mxu0
      %v2081 = vadd.f32 %v1065, %v2080
      %v2082 = vpop.f32.mrb[0].mxu0
      %v2083 = vadd.f32 %v1070, %v2082
      %v2084 = vpop.f32.mrb[0].mxu0
      %v2085 = vadd.f32 %v1070, %v2084
      %2086 = vdwg.mxu0
      %2087 = vmatprep.subr.bf16.mxu0 %v1658
      %2088 = vmatpush1.bf16.msra.mxu0 %v1657
      %2089 = vmatprep.subr.bf16.mxu0 %v1665
      %2090 = vmatpush1.bf16.msra.mxu0 %v1664
      %2091 = vmatprep.subr.bf16.mxu0 %v1672
      %2092 = vmatpush1.bf16.msra.mxu0 %v1671
      %2093 = vmatprep.subr.bf16.mxu0 %v1679
      %2094 = vmatpush1.bf16.msra.mxu0 %v1678
      %2095 = vmatprep.subr.bf16.mxu0 %v1686
      %2096 = vmatpush1.bf16.msra.mxu0 %v1685
      %2097 = vmatprep.subr.bf16.mxu0 %v1693
      %2098 = vmatpush1.bf16.msra.mxu0 %v1692
      %2099 = vmatprep.subr.bf16.mxu0 %v1700
      %2100 = vmatpush1.bf16.msra.mxu0 %v1699
      %2101 = vmatprep.subr.bf16.mxu0 %v1707
      %2102 = vmatpush1.bf16.msra.mxu0 %v1706
      %2103 = vmatprep.subr.bf16.mxu0 %v1714
      %2104 = vmatpush1.bf16.msra.mxu0 %v1713
      %2105 = vmatprep.subr.bf16.mxu0 %v1721
      %2106 = vmatpush1.bf16.msra.mxu0 %v1720
      %2107 = vmatprep.subr.bf16.mxu0 %v1728
      %2108 = vmatpush1.bf16.msra.mxu0 %v1727
      %2109 = vmatprep.subr.bf16.mxu0 0
      %2110 = vmatpush1.bf16.msra.mxu0 0
      %2111 = vmatprep.subr.bf16.mxu0 0
      %2112 = vmatpush1.bf16.msra.mxu0 0
      %2113 = vmatprep.subr.bf16.mxu0 0
      %2114 = vmatpush1.bf16.msra.mxu0 0
      %2115 = vmatprep.subr.bf16.mxu0 0
      %2116 = vmatpush1.bf16.msra.mxu0 0
      %2117 = vmatprep.subr.bf16.mxu0 0
      %2118 = vmatpush1.bf16.msra.mxu0 0
      %2119 = vmatprep.mubr.bf16.mxu0 %v1923
      %2120 = vmatmul.mubr.bf16.gmra.mrb[0].mxu0 %v1098
      %v2121 = vpop.f32.mrb[0].mxu0
      %v2122 = vadd.f32 %v2069, %v2121
      %v2123 = vpop.f32.mrb[0].mxu0
      %v2124 = vadd.f32 %v2071, %v2123
      %v2125 = vpop.f32.mrb[0].mxu0
      %v2126 = vadd.f32 %v2073, %v2125
      %v2127 = vpop.f32.mrb[0].mxu0
      %v2128 = vadd.f32 %v2075, %v2127
      %2129 = vmatprep.mubr.bf16.mxu0 %v1926
      %2130 = vmatmul.mubr.bf16.gmra.mrb[0].mxu0 %v1102
      %v2131 = vpop.f32.mrb[0].mxu0
      %v2132 = vadd.f32 %v2079, %v2131
      %v2133 = vpop.f32.mrb[0].mxu0
      %v2134 = vadd.f32 %v2081, %v2133
      %v2135 = vpop.f32.mrb[0].mxu0
      %v2136 = vadd.f32 %v2083, %v2135
      %v2137 = vpop.f32.mrb[0].mxu0
      %v2138 = vadd.f32 %v2085, %v2137
      %2139 = vdwg.mxu0
      %2140 = vmatprep.subr.bf16.mxu0 %v1548
      %2141 = vmatpush1.bf16.msra.mxu0 %v1547
      %2142 = vmatprep.subr.bf16.mxu0 %v1555
      %2143 = vmatpush1.bf16.msra.mxu0 %v1554
      %2144 = vmatprep.subr.bf16.mxu0 %v1562
      %2145 = vmatpush1.bf16.msra.mxu0 %v1561
      %2146 = vmatprep.subr.bf16.mxu0 %v1569
      %2147 = vmatpush1.bf16.msra.mxu0 %v1568
      %2148 = vmatprep.subr.bf16.mxu0 %v1576
      %2149 = vmatpush1.bf16.msra.mxu0 %v1575
      %2150 = vmatprep.subr.bf16.mxu0 %v1583
      %2151 = vmatpush1.bf16.msra.mxu0 %v1582
      %2152 = vmatprep.subr.bf16.mxu0 %v1590
      %2153 = vmatpush1.bf16.msra.mxu0 %v1589
      %2154 = vmatprep.subr.bf16.mxu0 %v1597
      %2155 = vmatpush1.bf16.msra.mxu0 %v1596
      %2156 = vmatprep.subr.bf16.mxu0 %v1604
      %2157 = vmatpush1.bf16.msra.mxu0 %v1603
      %2158 = vmatprep.subr.bf16.mxu0 %v1611
      %2159 = vmatpush1.bf16.msra.mxu0 %v1610
      %2160 = vmatprep.subr.bf16.mxu0 %v1618
      %2161 = vmatpush1.bf16.msra.mxu0 %v1617
      %2162 = vmatprep.subr.bf16.mxu0 %v1625
      %2163 = vmatpush1.bf16.msra.mxu0 %v1624
      %2164 = vmatprep.subr.bf16.mxu0 %v1632
      %2165 = vmatpush1.bf16.msra.mxu0 %v1631
      %2166 = vmatprep.subr.bf16.mxu0 %v1639
      %2167 = vmatpush1.bf16.msra.mxu0 %v1638
      %2168 = vmatprep.subr.bf16.mxu0 %v1646
      %2169 = vmatpush1.bf16.msra.mxu0 %v1645
      %2170 = vmatprep.subr.bf16.mxu0 %v1653
      %2171 = vmatpush1.bf16.msra.mxu0 %v1652
      %2172 = vmatprep.mubr.bf16.mxu0 %v1097
      %2173 = vmatmul.mubr.bf16.gmra.mrb[0].mxu0 %v1096
      %v2174 = vpop.f32.mrb[0].mxu0
      %v2175 = vadd.f32 %v1055, %v2174
      %v2176 = vpop.f32.mrb[0].mxu0
      %v2177 = vadd.f32 %v1055, %v2176
      %v2178 = vpop.f32.mrb[0].mxu0
      %v2179 = vadd.f32 %v1060, %v2178
      %v2180 = vpop.f32.mrb[0].mxu0
      %v2181 = vadd.f32 %v1060, %v2180
      %2182 = vmatprep.mubr.bf16.mxu0 %v1101
      %2183 = vmatmul.mubr.bf16.gmra.mrb[0].mxu0 %v1100
      %v2184 = vpop.f32.mrb[0].mxu0
      %v2185 = vadd.f32 %v1065, %v2184
      %v2186 = vpop.f32.mrb[0].mxu0
      %v2187 = vadd.f32 %v1065, %v2186
      %v2188 = vpop.f32.mrb[0].mxu0
      %v2189 = vadd.f32 %v1070, %v2188
      %v2190 = vpop.f32.mrb[0].mxu0
      %v2191 = vadd.f32 %v1070, %v2190
      %2192 = vdwg.mxu0
      %2193 = vmatprep.subr.bf16.mxu0 %v1660
      %2194 = vmatpush1.bf16.msra.mxu0 %v1659
      %2195 = vmatprep.subr.bf16.mxu0 %v1667
      %2196 = vmatpush1.bf16.msra.mxu0 %v1666
      %2197 = vmatprep.subr.bf16.mxu0 %v1674
      %2198 = vmatpush1.bf16.msra.mxu0 %v1673
      %2199 = vmatprep.subr.bf16.mxu0 %v1681
      %2200 = vmatpush1.bf16.msra.mxu0 %v1680
      %2201 = vmatprep.subr.bf16.mxu0 %v1688
      %2202 = vmatpush1.bf16.msra.mxu0 %v1687
      %2203 = vmatprep.subr.bf16.mxu0 %v1695
      %2204 = vmatpush1.bf16.msra.mxu0 %v1694
      %2205 = vmatprep.subr.bf16.mxu0 %v1702
      %2206 = vmatpush1.bf16.msra.mxu0 %v1701
      %2207 = vmatprep.subr.bf16.mxu0 %v1709
      %2208 = vmatpush1.bf16.msra.mxu0 %v1708
      %2209 = vmatprep.subr.bf16.mxu0 %v1716
      %2210 = vmatpush1.bf16.msra.mxu0 %v1715
      %2211 = vmatprep.subr.bf16.mxu0 %v1723
      %2212 = vmatpush1.bf16.msra.mxu0 %v1722
      %2213 = vmatprep.subr.bf16.mxu0 %v1730
      %2214 = vmatpush1.bf16.msra.mxu0 %v1729
      %2215 = vmatprep.subr.bf16.mxu0 0
      %2216 = vmatpush1.bf16.msra.mxu0 0
      %2217 = vmatprep.subr.bf16.mxu0 0
      %2218 = vmatpush1.bf16.msra.mxu0 0
      %2219 = vmatprep.subr.bf16.mxu0 0
      %2220 = vmatpush1.bf16.msra.mxu0 0
      %2221 = vmatprep.subr.bf16.mxu0 0
      %2222 = vmatpush1.bf16.msra.mxu0 0
      %2223 = vmatprep.subr.bf16.mxu0 0
      %2224 = vmatpush1.bf16.msra.mxu0 0
      %2225 = vmatprep.mubr.bf16.mxu0 %v1923
      %2226 = vmatmul.mubr.bf16.gmra.mrb[0].mxu0 %v1098
      %v2227 = vpop.f32.mrb[0].mxu0
      %v2228 = vadd.f32 %v2175, %v2227
      %v2229 = vpop.f32.mrb[0].mxu0
      %v2230 = vadd.f32 %v2177, %v2229
      %v2231 = vpop.f32.mrb[0].mxu0
      %v2232 = vadd.f32 %v2179, %v2231
      %v2233 = vpop.f32.mrb[0].mxu0
      %v2234 = vadd.f32 %v2181, %v2233
      %2235 = vmatprep.mubr.bf16.mxu0 %v1926
      %2236 = vmatmul.mubr.bf16.gmra.mrb[0].mxu0 %v1102
      %v2237 = vpop.f32.mrb[0].mxu0
      %v2238 = vadd.f32 %v2185, %v2237
      %v2239 = vpop.f32.mrb[0].mxu0
      %v2240 = vadd.f32 %v2187, %v2239
      %v2241 = vpop.f32.mrb[0].mxu0
      %v2242 = vadd.f32 %v2189, %v2241
      %v2243 = vpop.f32.mrb[0].mxu0
      %v2244 = vadd.f32 %v2191, %v2243
      %2245 = vdwg.mxu0
      %2246 = vmatprep.subr.bf16.mxu0 0
      %2247 = vmatpush1.bf16.msra.mxu0 %v1549
      %2248 = vmatprep.subr.bf16.mxu0 0
      %2249 = vmatpush1.bf16.msra.mxu0 %v1556
      %2250 = vmatprep.subr.bf16.mxu0 0
      %2251 = vmatpush1.bf16.msra.mxu0 %v1563
      %2252 = vmatprep.subr.bf16.mxu0 0
      %2253 = vmatpush1.bf16.msra.mxu0 %v1570
      %2254 = vmatprep.subr.bf16.mxu0 0
      %2255 = vmatpush1.bf16.msra.mxu0 %v1577
      %2256 = vmatprep.subr.bf16.mxu0 0
      %2257 = vmatpush1.bf16.msra.mxu0 %v1584
      %2258 = vmatprep.subr.bf16.mxu0 0
      %2259 = vmatpush1.bf16.msra.mxu0 %v1591
      %2260 = vmatprep.subr.bf16.mxu0 0
      %2261 = vmatpush1.bf16.msra.mxu0 %v1598
      %2262 = vmatprep.subr.bf16.mxu0 0
      %2263 = vmatpush1.bf16.msra.mxu0 %v1605
      %2264 = vmatprep.subr.bf16.mxu0 0
      %2265 = vmatpush1.bf16.msra.mxu0 %v1612
      %2266 = vmatprep.subr.bf16.mxu0 0
      %2267 = vmatpush1.bf16.msra.mxu0 %v1619
      %2268 = vmatprep.subr.bf16.mxu0 0
      %2269 = vmatpush1.bf16.msra.mxu0 %v1626
      %2270 = vmatprep.subr.bf16.mxu0 0
      %2271 = vmatpush1.bf16.msra.mxu0 %v1633
      %2272 = vmatprep.subr.bf16.mxu0 0
      %2273 = vmatpush1.bf16.msra.mxu0 %v1640
      %2274 = vmatprep.subr.bf16.mxu0 0
      %2275 = vmatpush1.bf16.msra.mxu0 %v1647
      %2276 = vmatprep.subr.bf16.mxu0 0
      %2277 = vmatpush1.bf16.msra.mxu0 %v1654
      %2278 = vmatprep.mubr.bf16.mxu0 %v1097
      %2279 = vmatmul.mubr.bf16.gmra.mrb[0].mxu0 %v1096
      %v2280 = vpop.f32.mrb[0].mxu0
      %v2281 = vadd.f32 %v1055, %v2280
      %v2282 = vpop.f32.mrb[0].mxu0
      %v2283 = vpop.f32.mrb[0].mxu0
      %v2284 = vadd.f32 %v1060, %v2283
      %v2285 = vpop.f32.mrb[0].mxu0
      %2286 = vmatprep.mubr.bf16.mxu0 %v1101
      %2287 = vmatmul.mubr.bf16.gmra.mrb[0].mxu0 %v1100
      %v2288 = vpop.f32.mrb[0].mxu0
      %v2289 = vadd.f32 %v1065, %v2288
      %v2290 = vpop.f32.mrb[0].mxu0
      %v2291 = vpop.f32.mrb[0].mxu0
      %v2292 = vadd.f32 %v1070, %v2291
      %v2293 = vpop.f32.mrb[0].mxu0
      %2294 = vdwg.mxu0
      %2295 = vmatprep.subr.bf16.mxu0 0
      %2296 = vmatpush1.bf16.msra.mxu0 %v1661
      %2297 = vmatprep.subr.bf16.mxu0 0
      %2298 = vmatpush1.bf16.msra.mxu0 %v1668
      %2299 = vmatprep.subr.bf16.mxu0 0
      %2300 = vmatpush1.bf16.msra.mxu0 %v1675
      %2301 = vmatprep.subr.bf16.mxu0 0
      %2302 = vmatpush1.bf16.msra.mxu0 %v1682
      %2303 = vmatprep.subr.bf16.mxu0 0
      %2304 = vmatpush1.bf16.msra.mxu0 %v1689
      %2305 = vmatprep.subr.bf16.mxu0 0
      %2306 = vmatpush1.bf16.msra.mxu0 %v1696
      %2307 = vmatprep.subr.bf16.mxu0 0
      %2308 = vmatpush1.bf16.msra.mxu0 %v1703
      %2309 = vmatprep.subr.bf16.mxu0 0
      %2310 = vmatpush1.bf16.msra.mxu0 %v1710
      %2311 = vmatprep.subr.bf16.mxu0 0
      %2312 = vmatpush1.bf16.msra.mxu0 %v1717
      %2313 = vmatprep.subr.bf16.mxu0 0
      %2314 = vmatpush1.bf16.msra.mxu0 %v1724
      %2315 = vmatprep.subr.bf16.mxu0 0
      %2316 = vmatpush1.bf16.msra.mxu0 %v1731
      %2317 = vmatprep.subr.bf16.mxu0 0
      %2318 = vmatpush1.bf16.msra.mxu0 0
      %2319 = vmatprep.subr.bf16.mxu0 0
      %2320 = vmatpush1.bf16.msra.mxu0 0
      %2321 = vmatprep.subr.bf16.mxu0 0
      %2322 = vmatpush1.bf16.msra.mxu0 0
      %2323 = vmatprep.subr.bf16.mxu0 0
      %2324 = vmatpush1.bf16.msra.mxu0 0
      %2325 = vmatprep.subr.bf16.mxu0 0
      %2326 = vmatpush1.bf16.msra.mxu0 0
      %2327 = vmatprep.mubr.bf16.mxu0 %v1923
      %2328 = vmatmul.mubr.bf16.gmra.mrb[0].mxu0 %v1098
      %v2329 = vpop.f32.mrb[0].mxu0
      %v2330 = vadd.f32 %v2281, %v2329
      %v2331 = vpop.f32.mrb[0].mxu0
      %v2332 = vpop.f32.mrb[0].mxu0
      %v2333 = vadd.f32 %v2284, %v2332
      %v2334 = vpop.f32.mrb[0].mxu0
      %2335 = vmatprep.mubr.bf16.mxu0 %v1926
      %2336 = vmatmul.mubr.bf16.gmra.mrb[0].mxu0 %v1102
      %v2337 = vpop.f32.mrb[0].mxu0
      %v2338 = vadd.f32 %v2289, %v2337
      %v2339 = vpop.f32.mrb[0].mxu0
      %v2340 = vpop.f32.mrb[0].mxu0
      %v2341 = vadd.f32 %v2292, %v2340
      %v2342 = vpop.f32.mrb[0].mxu0
      %2343 = vdwg.mxu0
      %2344 = vst [vmem:[%s266] sm:$0xff] %v2016
      %2345 = vst [vmem:[%s266 + $0x8] sm:$0xff] %v2018
      %2346 = vst [vmem:[%s266 + $0x10] sm:$0xff] %v2122
      %2347 = vst [vmem:[%s266 + $0x18] sm:$0xff] %v2124
      %2348 = vst [vmem:[%s266 + $0x20] sm:$0xff] %v2228
      %2349 = vst [vmem:[%s266 + $0x28] sm:$0xff] %v2230
      %2350 = vst [vmem:[%s266 + $0x30] sm:$0xff] %v2330
      %2351 = vst [vmem:[%s266 + $0x38] sm:$0xff] %v2020
      %2352 = vst [vmem:[%s266 + $0x40] sm:$0xff] %v2022
      %2353 = vst [vmem:[%s266 + $0x48] sm:$0xff] %v2126
      %2354 = vst [vmem:[%s266 + $0x50] sm:$0xff] %v2128
      %2355 = vst [vmem:[%s266 + $0x58] sm:$0xff] %v2232
      %2356 = vst [vmem:[%s266 + $0x60] sm:$0xff] %v2234
      %2357 = vst [vmem:[%s266 + $0x68] sm:$0xff] %v2333
      %2358 = vst [vmem:[%s266 + $0x70] sm:$0xff] %v2026
      %2359 = vst [vmem:[%s266 + $0x78] sm:$0xff] %v2028
      %2360 = vst [vmem:[%s266 + $0x80] sm:$0xff] %v2132
      %2361 = vst [vmem:[%s266 + $0x88] sm:$0xff] %v2134
      %2362 = vst [vmem:[%s266 + $0x90] sm:$0xff] %v2238
      %2363 = vst [vmem:[%s266 + $0x98] sm:$0xff] %v2240
      %2364 = vst [vmem:[%s266 + $0xa0] sm:$0xff] %v2338
      %2365 = vst [vmem:[%s266 + $0xa8] sm:$0xff] %v2030
      %2366 = vst [vmem:[%s266 + $0xb0] sm:$0xff] %v2032
      %2367 = vst [vmem:[%s266 + $0xb8] sm:$0xff] %v2136
      %2368 = vst [vmem:[%s266 + $0xc0] sm:$0xff] %v2138
      %2369 = vst [vmem:[%s266 + $0xc8] sm:$0xff] %v2242
      %2370 = vst [vmem:[%s266 + $0xd0] sm:$0xff] %v2244
      %2371 = vst [vmem:[%s266 + $0xd8] sm:$0xff] %v2341
      %v2372 = vld [vmem:[%s3] sm:$0xff]
      %v2374 = vlaneseq
      %v2375 = vshrl.u32 %v2374, 7
      %v2376 = vsub.s32 0, %v2375
      %v2377 = vrot.slane %v2372, %v2376
      %v2378 = vlaneseq
      %v2379 = vshrl.u32 %v2378, 7
      %v2380 = vsub.s32 1, %v2379
      %v2381 = vrot.slane %v2372, %v2380
      %v2382 = vlaneseq
      %v2383 = vshrl.u32 %v2382, 7
      %v2384 = vsub.s32 2, %v2383
      %v2385 = vrot.slane %v2372, %v2384
      %v2386 = vlaneseq
      %v2387 = vshrl.u32 %v2386, 7
      %v2388 = vsub.s32 3, %v2387
      %v2389 = vrot.slane %v2372, %v2388
      %v2390 = vlaneseq
      %v2391 = vshrl.u32 %v2390, 7
      %v2392 = vsub.s32 4, %v2391
      %v2393 = vrot.slane %v2372, %v2392
      %v2394 = vlaneseq
      %v2395 = vshrl.u32 %v2394, 7
      %v2396 = vsub.s32 5, %v2395
      %v2397 = vrot.slane %v2372, %v2396
      %v2398 = vlaneseq
      %v2399 = vshrl.u32 %v2398, 7
      %v2400 = vsub.s32 6, %v2399
      %v2401 = vrot.slane %v2372, %v2400
      %v2409 = vmul.f32 %v2016, %v2377
      %v2410 = vmul.f32 %v2018, %v2381
      %v2411 = vmul.f32 %v2122, %v2385
      %v2412 = vmul.f32 %v2124, %v2389
      %v2413 = vmul.f32 %v2228, %v2393
      %v2414 = vmul.f32 %v2230, %v2397
      %v2415 = vmul.f32 %v2330, %v2401
      %v2416 = vmul.f32 %v2020, %v2377
      %v2417 = vmul.f32 %v2022, %v2381
      %v2418 = vmul.f32 %v2126, %v2385
      %v2419 = vmul.f32 %v2128, %v2389
      %v2420 = vmul.f32 %v2232, %v2393
      %v2421 = vmul.f32 %v2234, %v2397
      %v2422 = vmul.f32 %v2333, %v2401
      %v2423 = vmul.f32 %v2026, %v2377
      %v2424 = vmul.f32 %v2028, %v2381
      %v2425 = vmul.f32 %v2132, %v2385
      %v2426 = vmul.f32 %v2134, %v2389
      %v2427 = vmul.f32 %v2238, %v2393
      %v2428 = vmul.f32 %v2240, %v2397
      %v2429 = vmul.f32 %v2338, %v2401
      %v2430 = vmul.f32 %v2030, %v2377
      %v2431 = vmul.f32 %v2032, %v2381
      %v2432 = vmul.f32 %v2136, %v2385
      %v2433 = vmul.f32 %v2138, %v2389
      %v2434 = vmul.f32 %v2242, %v2393
      %v2435 = vmul.f32 %v2244, %v2397
      %v2436 = vmul.f32 %v2341, %v2401
      %v2437 = vadd.f32 %v2409, %v2410
      %v2438 = vadd.f32 %v2437, %v2411
      %v2439 = vadd.f32 %v2438, %v2412
      %v2440 = vadd.f32 %v2439, %v2413
      %v2441 = vadd.f32 %v2440, %v2414
      %v2442 = vadd.f32 %v2441, %v2415
      %2443 = vadd.xlane.f32.xlu0 %v2442
      %v2444 = vpop.xlane.xlu0 %2443
      %v2445 = vadd.f32 %v2416, %v2417
      %v2446 = vadd.f32 %v2445, %v2418
      %v2447 = vadd.f32 %v2446, %v2419
      %v2448 = vadd.f32 %v2447, %v2420
      %v2449 = vadd.f32 %v2448, %v2421
      %v2450 = vadd.f32 %v2449, %v2422
      %2451 = vadd.xlane.f32.xlu0 %v2450
      %v2452 = vpop.xlane.xlu0 %2451
      %v2453 = vadd.f32 %v2423, %v2424
      %v2454 = vadd.f32 %v2453, %v2425
      %v2455 = vadd.f32 %v2454, %v2426
      %v2456 = vadd.f32 %v2455, %v2427
      %v2457 = vadd.f32 %v2456, %v2428
      %v2458 = vadd.f32 %v2457, %v2429
      %2459 = vadd.xlane.f32.xlu0 %v2458
      %v2460 = vpop.xlane.xlu0 %2459
      %v2461 = vadd.f32 %v2430, %v2431
      %v2462 = vadd.f32 %v2461, %v2432
      %v2463 = vadd.f32 %v2462, %v2433
      %v2464 = vadd.f32 %v2463, %v2434
      %v2465 = vadd.f32 %v2464, %v2435
      %v2466 = vadd.f32 %v2465, %v2436
      %2467 = vadd.xlane.f32.xlu0 %v2466
      %v2468 = vpop.xlane.xlu0 %2467
      %vm2469 = vcmask 7168
      %2470 = vst.msk [vmem:[%s271] sm:$0xff] %vm2469, %v2444
      %2471 = vst.msk [vmem:[%s271 + $0x8] sm:$0xff] %vm2469, %v2452
      %2472 = vst.msk [vmem:[%s271 + $0x10] sm:$0xff] %vm2469, %v2460
      %2473 = vst.msk [vmem:[%s271 + $0x18] sm:$0xff] %vm2469, %v2468
      %v2474 = vmul.f32 %v2409, %v2016
      %v2475 = vmul.f32 %v2410, %v2018
      %v2476 = vmul.f32 %v2411, %v2122
      %v2477 = vmul.f32 %v2412, %v2124
      %v2478 = vmul.f32 %v2413, %v2228
      %v2479 = vmul.f32 %v2414, %v2230
      %v2480 = vmul.f32 %v2415, %v2330
      %v2481 = vmul.f32 %v2416, %v2020
      %v2482 = vmul.f32 %v2417, %v2022
      %v2483 = vmul.f32 %v2418, %v2126
      %v2484 = vmul.f32 %v2419, %v2128
      %v2485 = vmul.f32 %v2420, %v2232
      %v2486 = vmul.f32 %v2421, %v2234
      %v2487 = vmul.f32 %v2422, %v2333
      %v2488 = vmul.f32 %v2423, %v2026
      %v2489 = vmul.f32 %v2424, %v2028
      %v2490 = vmul.f32 %v2425, %v2132
      %v2491 = vmul.f32 %v2426, %v2134
      %v2492 = vmul.f32 %v2427, %v2238
      %v2493 = vmul.f32 %v2428, %v2240
      %v2494 = vmul.f32 %v2429, %v2338
      %v2495 = vmul.f32 %v2430, %v2030
      %v2496 = vmul.f32 %v2431, %v2032
      %v2497 = vmul.f32 %v2432, %v2136
      %v2498 = vmul.f32 %v2433, %v2138
      %v2499 = vmul.f32 %v2434, %v2242
      %v2500 = vmul.f32 %v2435, %v2244
      %v2501 = vmul.f32 %v2436, %v2341
      %v2502 = vadd.f32 %v2474, %v2475
      %v2503 = vadd.f32 %v2502, %v2476
      %v2504 = vadd.f32 %v2503, %v2477
      %v2505 = vadd.f32 %v2504, %v2478
      %v2506 = vadd.f32 %v2505, %v2479
      %v2507 = vadd.f32 %v2506, %v2480
      %2508 = vadd.xlane.f32.xlu0 %v2507
      %v2509 = vpop.xlane.xlu0 %2508
      %v2510 = vadd.f32 %v2481, %v2482
      %v2511 = vadd.f32 %v2510, %v2483
      %v2512 = vadd.f32 %v2511, %v2484
      %v2513 = vadd.f32 %v2512, %v2485
      %v2514 = vadd.f32 %v2513, %v2486
      %v2515 = vadd.f32 %v2514, %v2487
      %2516 = vadd.xlane.f32.xlu0 %v2515
      %v2517 = vpop.xlane.xlu0 %2516
      %v2518 = vadd.f32 %v2488, %v2489
      %v2519 = vadd.f32 %v2518, %v2490
      %v2520 = vadd.f32 %v2519, %v2491
      %v2521 = vadd.f32 %v2520, %v2492
      %v2522 = vadd.f32 %v2521, %v2493
      %v2523 = vadd.f32 %v2522, %v2494
      %2524 = vadd.xlane.f32.xlu0 %v2523
      %v2525 = vpop.xlane.xlu0 %2524
      %v2526 = vadd.f32 %v2495, %v2496
      %v2527 = vadd.f32 %v2526, %v2497
      %v2528 = vadd.f32 %v2527, %v2498
      %v2529 = vadd.f32 %v2528, %v2499
      %v2530 = vadd.f32 %v2529, %v2500
      %v2531 = vadd.f32 %v2530, %v2501
      %2532 = vadd.xlane.f32.xlu0 %v2531
      %v2533 = vpop.xlane.xlu0 %2532
      %2534 = vst.msk [vmem:[%s276] sm:$0xff] %vm2469, %v2509
      %2535 = vst.msk [vmem:[%s276 + $0x8] sm:$0xff] %vm2469, %v2517
      %2536 = vst.msk [vmem:[%s276 + $0x10] sm:$0xff] %vm2469, %v2525
      %2537 = vst.msk [vmem:[%s276 + $0x18] sm:$0xff] %vm2469, %v2533
      %p2538 = scmp.lt.s32.totalorder %s18, 1
      %s2539 = scalar_select %p2538, %s18, 1
      %s2540 = smul.addr %s2539, 28
      %s2541 = smul.addr %s2540, 8
      %s2542 = scalar_lea.vmem %s4, %s2541
      %p2543 = scmp.lt.s32.totalorder %s18, 1
      %s2544 = scalar_select %p2543, %s18, 1
      %s2545 = smul.addr %s2544, 4
      %s2546 = smul.addr %s2545, 8
      %s2547 = scalar_lea.vmem %s5, %s2546
      %p2548 = scmp.lt.s32.totalorder %s18, 1
      %s2549 = scalar_select %p2548, %s18, 1
      %s2550 = smul.addr %s2549, 4
      %s2551 = smul.addr %s2550, 8
      %s2552 = scalar_lea.vmem %s6, %s2551
      // Predicated region
      $region37: #{conv_layers_encoder_forward.4} parent=35 // pred_check
        %p2553 = pneg %p125
      $region38: #{conv_layers_encoder_forward.4} parent=35 // pred_check_branch
        %2555 = sbr.rel (%p2553) target = $region40
      $region39: #{conv_layers_encoder_forward.4} parent=35 // pred_region
        _
      $region40: #{conv_layers_encoder_forward.4} parent=35 // pred_fallthru
        _
      // Predicated region
      $region41: #{conv_layers_encoder_forward.4} parent=35 // pred_check
        %p2556 = pneg %p151
      $region42: #{conv_layers_encoder_forward.4} parent=35 // pred_check_branch
        %2558 = sbr.rel (%p2556) target = $region44
      $region43: #{conv_layers_encoder_forward.4} parent=35 // pred_region
        _
      $region44: #{conv_layers_encoder_forward.4} parent=35 // pred_fallthru
        _
      // Predicated region
      $region45: #{conv_layers_encoder_forward.4} parent=35 // pred_check
        %p2559 = pneg %p177
      $region46: #{conv_layers_encoder_forward.4} parent=35 // pred_check_branch
        %2561 = sbr.rel (%p2559) target = $region48
      $region47: #{conv_layers_encoder_forward.4} parent=35 // pred_region
        _
      $region48: #{conv_layers_encoder_forward.4} parent=35 // pred_fallthru
        _
    $region36: #{conv_layers_encoder_forward.4} parent=5 // pred_fallthru
      _
    %p2562 = scmp.le.s32.totalorder 2, %s13
    // Predicated region
    $region49: #{conv_layers_encoder_forward.4} parent=5 // pred_check
      %p2563 = pneg %p2562
    $region50: #{conv_layers_encoder_forward.4} parent=5 // pred_check_branch
      %2565 = sbr.rel (%p2563) target = $region52
    $region51: #{conv_layers_encoder_forward.4} parent=5 // pred_region
      %s2566 = ssub.s32 %s13, 2
      // Predicated region
      $region53: #{conv_layers_encoder_forward.4} parent=51 // pred_check
        %p2567 = pneg %p131
      $region54: #{conv_layers_encoder_forward.4} parent=51 // pred_check_branch
        %2569 = sbr.rel (%p2567) target = $region56
      $region55: #{conv_layers_encoder_forward.4} parent=51 // pred_region
        %p2570 = scmp.lt.s32.totalorder %s19, 1
        %s2571 = scalar_select %p2570, %s19, 1
        %s2572 = smul.addr %s2571, 28
        %s2573 = smul.addr %s2572, 8
        %s2574 = scalar_lea.vmem %s4, %s2573
      $region56: #{conv_layers_encoder_forward.4} parent=51 // pred_fallthru
        _
      // Predicated region
      $region57: #{conv_layers_encoder_forward.4} parent=51 // pred_check
        %p2575 = pneg %p157
      $region58: #{conv_layers_encoder_forward.4} parent=51 // pred_check_branch
        %2577 = sbr.rel (%p2575) target = $region60
      $region59: #{conv_layers_encoder_forward.4} parent=51 // pred_region
        %p2578 = scmp.lt.s32.totalorder %s19, 1
        %s2579 = scalar_select %p2578, %s19, 1
        %s2580 = smul.addr %s2579, 4
        %s2581 = smul.addr %s2580, 8
        %s2582 = scalar_lea.vmem %s5, %s2581
      $region60: #{conv_layers_encoder_forward.4} parent=51 // pred_fallthru
        _
      // Predicated region
      $region61: #{conv_layers_encoder_forward.4} parent=51 // pred_check
        %p2583 = pneg %p183
      $region62: #{conv_layers_encoder_forward.4} parent=51 // pred_check_branch
        %2585 = sbr.rel (%p2583) target = $region64
      $region63: #{conv_layers_encoder_forward.4} parent=51 // pred_region
        %p2586 = scmp.lt.s32.totalorder %s19, 1
        %s2587 = scalar_select %p2586, %s19, 1
        %s2588 = smul.addr %s2587, 4
        %s2589 = smul.addr %s2588, 8
        %s2590 = scalar_lea.vmem %s6, %s2589
      $region64: #{conv_layers_encoder_forward.4} parent=51 // pred_fallthru
        _
    $region52: #{conv_layers_encoder_forward.4} parent=5 // pred_fallthru
      _
  $region6: #{conv_layers_encoder_forward.4} parent=0 // loop_footer
    %s17 = sadd.s32 1, %s13
  $region7: #{conv_layers_encoder_forward.4} parent=0 // loop_footer_branch
    %12 = sbr.rel target = $region3
  $region8: #{conv_layers_encoder_forward.4} parent=0 // loop_exit
    _

// kernel: conv_layers_encoder_forward.7
$region0: #{conv_layers_encoder_forward.7}
  #allocation0 [shape = 'u32[]', space=smem, size = 0x4, offset = 0x4, fixed_abs, tag = 'smem constant byte address 0x4 - core index']
  #allocation1 [shape = 'u32[144,128]{1,0:T(1,128)}', space=vmem, size = 0x12000, scoped, tag = 'internal scratch']
  %s0 = inlined_call_operand.vmem [shape: f32[2,64,896], index: 0, kind: input, shape index: {}]
  %s1 = inlined_call_operand.vmem [shape: f32[64,1], index: 1, kind: input, shape index: {}]
  %s2 = inlined_call_operand.vmem [shape: f32[64,1], index: 2, kind: input, shape index: {}]
  %s3 = inlined_call_operand.vmem [shape: f32[1,896], index: 3, kind: input, shape index: {}]
  %s4 = inlined_call_operand.vmem [shape: f32[2,64,1152], index: 4, kind: output, shape index: {}]
  %s5 = sld [smem:[#allocation0]]
  $region49: #{conv_layers_encoder_forward.7} parent=0
    _
  %s7 = ssub.s32 1, %s5
  %s8 = scalar_select 0, %s7, %s5
  loop: start=0, step=1, limit=4
  $region2: #{conv_layers_encoder_forward.7} parent=0 // loop_pre_header
    _
  $region3: #{conv_layers_encoder_forward.7} parent=0 // loop_header
    %s10 = sphi 0, %s14
    %p11 = scmp.ge.s32.totalorder %s10, 4
    %s20 = sphi 0, %s22
    %s23 = sphi 0, %s20
    %s24 = sphi 0, %s23
    %s40 = sphi 0, %s24
    %s44 = sphi 0, %s44
    %s46 = sphi 0, %s44
    %s47 = sphi 0, %s46
    %s61 = sphi 0, %s47
    %s65 = sphi 0, %s65
    %s67 = sphi 0, %s65
    %s68 = sphi 0, %s67
    %s82 = sphi 0, %s68
    %s86 = sphi 0, %s86
    %s88 = sphi 0, %s86
    %s89 = sphi 0, %s88
    %s103 = sphi 0, %s89
    %s109 = sphi 0, %s111
    %s112 = sphi 0, %s109
    %s113 = sphi 0, %s112
    %s129 = sphi 0, %s113
  $region4: #{conv_layers_encoder_forward.7} parent=0 // loop_header_branch
    %13 = sbr.rel (%p11) target = $region8
  $region5: #{conv_layers_encoder_forward.7} parent=0 // loop_body
    %s15 = ssub.s32 %s10, 1
    %s16 = ssub.s32 %s10, 2
    %s17 = sadd.s32 %s10, 1
    %s18 = ssub.s32 %s10, %s17
    %p19 = scmp.eq.s32.totalorder %s18, 0
    %s21 = sadd.s32 %s20, 1
    %s22 = scalar_select %p19, %s20, %s21
    %p25 = pneg %p19
    %p26 = scmp.eq.s32.totalorder %s10, 1
    %p27 = por %p25, %p26
    %p28 = scmp.ne.s32.totalorder %s20, %s23
    %p29 = scmp.eq.s32.totalorder %s10, 0
    %p30 = por %p28, %p29
    %p31 = scmp.ne.s32.totalorder %s20, %s23
    %p32 = scmp.eq.s32.totalorder %s15, 1
    %p33 = por %p31, %p32
    %p34 = scmp.ne.s32.totalorder %s23, %s24
    %p35 = scmp.eq.s32.totalorder %s15, 0
    %p36 = por %p34, %p35
    %p37 = scmp.ne.s32.totalorder %s23, %s24
    %p38 = scmp.eq.s32.totalorder %s16, 1
    %p39 = por %p37, %p38
    %p41 = scmp.ne.s32.totalorder %s24, %s40
    %p42 = scmp.eq.s32.totalorder %s16, 0
    %p43 = por %p41, %p42
    %s45 = sadd.s32 %s44, 1
    %p48 = scmp.eq.s32.totalorder %s10, 1
    %p49 = scmp.ne.s32.totalorder %s44, %s46
    %p50 = scmp.eq.s32.totalorder %s10, 0
    %p51 = por %p49, %p50
    %p52 = scmp.ne.s32.totalorder %s44, %s46
    %p53 = scmp.eq.s32.totalorder %s15, 1
    %p54 = por %p52, %p53
    %p55 = scmp.ne.s32.totalorder %s46, %s47
    %p56 = scmp.eq.s32.totalorder %s15, 0
    %p57 = por %p55, %p56
    %p58 = scmp.ne.s32.totalorder %s46, %s47
    %p59 = scmp.eq.s32.totalorder %s16, 1
    %p60 = por %p58, %p59
    %p62 = scmp.ne.s32.totalorder %s47, %s61
    %p63 = scmp.eq.s32.totalorder %s16, 0
    %p64 = por %p62, %p63
    %s66 = sadd.s32 %s65, 1
    %p69 = scmp.eq.s32.totalorder %s10, 1
    %p70 = scmp.ne.s32.totalorder %s65, %s67
    %p71 = scmp.eq.s32.totalorder %s10, 0
    %p72 = por %p70, %p71
    %p73 = scmp.ne.s32.totalorder %s65, %s67
    %p74 = scmp.eq.s32.totalorder %s15, 1
    %p75 = por %p73, %p74
    %p76 = scmp.ne.s32.totalorder %s67, %s68
    %p77 = scmp.eq.s32.totalorder %s15, 0
    %p78 = por %p76, %p77
    %p79 = scmp.ne.s32.totalorder %s67, %s68
    %p80 = scmp.eq.s32.totalorder %s16, 1
    %p81 = por %p79, %p80
    %p83 = scmp.ne.s32.totalorder %s68, %s82
    %p84 = scmp.eq.s32.totalorder %s16, 0
    %p85 = por %p83, %p84
    %s87 = sadd.s32 %s86, 1
    %p90 = scmp.eq.s32.totalorder %s10, 1
    %p91 = scmp.ne.s32.totalorder %s86, %s88
    %p92 = scmp.eq.s32.totalorder %s10, 0
    %p93 = por %p91, %p92
    %p94 = scmp.ne.s32.totalorder %s86, %s88
    %p95 = scmp.eq.s32.totalorder %s15, 1
    %p96 = por %p94, %p95
    %p97 = scmp.ne.s32.totalorder %s88, %s89
    %p98 = scmp.eq.s32.totalorder %s15, 0
    %p99 = por %p97, %p98
    %p100 = scmp.ne.s32.totalorder %s88, %s89
    %p101 = scmp.eq.s32.totalorder %s16, 1
    %p102 = por %p100, %p101
    %p104 = scmp.ne.s32.totalorder %s89, %s103
    %p105 = scmp.eq.s32.totalorder %s16, 0
    %p106 = por %p104, %p105
    %s107 = ssub.s32 %s10, %s17
    %p108 = scmp.eq.s32.totalorder %s107, 0
    %s110 = sadd.s32 %s109, 1
    %s111 = scalar_select %p108, %s109, %s110
    %p114 = pneg %p108
    %p115 = scmp.eq.s32.totalorder %s10, 1
    %p116 = por %p114, %p115
    %p117 = scmp.ne.s32.totalorder %s109, %s112
    %p118 = scmp.eq.s32.totalorder %s10, 0
    %p119 = por %p117, %p118
    %p120 = scmp.ne.s32.totalorder %s109, %s112
    %p121 = scmp.eq.s32.totalorder %s15, 1
    %p122 = por %p120, %p121
    %p123 = scmp.ne.s32.totalorder %s112, %s113
    %p124 = scmp.eq.s32.totalorder %s15, 0
    %p125 = por %p123, %p124
    %p126 = scmp.ne.s32.totalorder %s112, %s113
    %p127 = scmp.eq.s32.totalorder %s16, 1
    %p128 = por %p126, %p127
    %p130 = scmp.ne.s32.totalorder %s113, %s129
    %p131 = scmp.eq.s32.totalorder %s16, 0
    %p132 = por %p130, %p131
    %p133 = scmp.le.s32.totalorder 1, %s10
    %p134 = scmp.lt.s32.totalorder %s10, 3
    %p135 = pnand %p133, %p134
    %p136 = pneg %p135
    // Predicated region
    $region9: #{conv_layers_encoder_forward.7} parent=5 // pred_check
      _
    $region10: #{conv_layers_encoder_forward.7} parent=5 // pred_check_branch
      %138 = sbr.rel (%p135) target = $region12
    $region11: #{conv_layers_encoder_forward.7} parent=5 // pred_region
      %s139 = ssub.s32 %s10, 1
      // Predicated region
      $region13: #{conv_layers_encoder_forward.7} parent=11 // pred_check
        %p140 = pneg %p57
      $region14: #{conv_layers_encoder_forward.7} parent=11 // pred_check_branch
        %142 = sbr.rel (%p140) target = $region16
      $region15: #{conv_layers_encoder_forward.7} parent=11 // pred_region
        _
      $region16: #{conv_layers_encoder_forward.7} parent=11 // pred_fallthru
        _
      // Predicated region
      $region17: #{conv_layers_encoder_forward.7} parent=11 // pred_check
        %p143 = pneg %p78
      $region18: #{conv_layers_encoder_forward.7} parent=11 // pred_check_branch
        %145 = sbr.rel (%p143) target = $region20
      $region19: #{conv_layers_encoder_forward.7} parent=11 // pred_region
        _
      $region20: #{conv_layers_encoder_forward.7} parent=11 // pred_fallthru
        _
      // Predicated region
      $region21: #{conv_layers_encoder_forward.7} parent=11 // pred_check
        %p146 = pneg %p99
      $region22: #{conv_layers_encoder_forward.7} parent=11 // pred_check_branch
        %148 = sbr.rel (%p146) target = $region24
      $region23: #{conv_layers_encoder_forward.7} parent=11 // pred_region
        _
      $region24: #{conv_layers_encoder_forward.7} parent=11 // pred_fallthru
        _
    $region12: #{conv_layers_encoder_forward.7} parent=5 // pred_fallthru
      _
    %p149 = scmp.lt.s32.totalorder %s10, 2
    // Predicated region
    $region25: #{conv_layers_encoder_forward.7} parent=5 // pred_check
      %p150 = pneg %p149
    $region26: #{conv_layers_encoder_forward.7} parent=5 // pred_check_branch
      %152 = sbr.rel (%p150) target = $region28
    $region27: #{conv_layers_encoder_forward.7} parent=5 // pred_region
      // Predicated region
      $region29: #{conv_layers_encoder_forward.7} parent=27 // pred_check
        %p153 = pneg %p30
      $region30: #{conv_layers_encoder_forward.7} parent=27 // pred_check_branch
        %155 = sbr.rel (%p153) target = $region32
      $region31: #{conv_layers_encoder_forward.7} parent=27 // pred_region
        %p156 = scmp.lt.s32.totalorder %s10, 1
        %s157 = scalar_select %p156, %s10, 1
        %s158 = smul.addr %s157, 56
        %s159 = smul.addr %s158, 8
        %s160 = scalar_lea.vmem %s0, %s159
      $region32: #{conv_layers_encoder_forward.7} parent=27 // pred_fallthru
        _
    $region28: #{conv_layers_encoder_forward.7} parent=5 // pred_fallthru
      _
    %p161 = scmp.le.s32.totalorder 1, %s10
    %p162 = scmp.lt.s32.totalorder %s10, 3
    %p163 = pnand %p161, %p162
    %p164 = pneg %p163
    // Predicated region
    $region33: #{conv_layers_encoder_forward.7} parent=5 // pred_check
      _
    $region34: #{conv_layers_encoder_forward.7} parent=5 // pred_check_branch
      %166 = sbr.rel (%p163) target = $region36
    $region35: #{conv_layers_encoder_forward.7} parent=5 // pred_region
      %s167 = ssub.s32 %s10, 1
      %p168 = scmp.lt.s32.totalorder %s15, 1
      %s169 = scalar_select %p168, %s15, 1
      %s170 = smul.addr %s169, 56
      %s171 = smul.addr %s170, 8
      %s172 = scalar_lea.vmem %s0, %s171
      %p173 = pneg %p36
      %p174 = pneg %p33
      %p175 = pneg %p57
      %p176 = pneg %p54
      %p177 = pneg %p78
      %p178 = pneg %p75
      %p179 = pneg %p99
      %p180 = pneg %p96
      %p181 = pneg %p125
      %p182 = pneg %p122
      %p183 = scmp.lt.s32.totalorder %s15, 1
      %s184 = scalar_select %p183, %s15, 1
      %s185 = smul.addr %s184, 72
      %s186 = smul.addr %s185, 8
      %s187 = scalar_lea.vmem %s4, %s186
      %p188 = scmp.lt.s32.totalorder %s15, 1
      %s189 = scalar_select %p188, %s15, 1
      %s190 = smul.addr %s189, 56
      %s191 = smul.addr %s190, 8
      %s192 = scalar_lea.vmem %s0, %s191
      %p193 = scmp.lt.s32.totalorder %s15, 1
      %s194 = scalar_select %p193, %s15, 1
      %s195 = smul.addr %s194, 72
      %s196 = smul.addr %s195, 8
      %s197 = scalar_lea.vmem %s4, %s196
      %v198 = vld [vmem:[%s192] sm:$0xff]
      %v199 = vld [vmem:[%s192 + $0x8] sm:$0xff]
      %v200 = vld [vmem:[%s192 + $0x10] sm:$0xff]
      %v201 = vld [vmem:[%s192 + $0x18] sm:$0xff]
      %v202 = vld [vmem:[%s192 + $0x20] sm:$0xff]
      %v203 = vld [vmem:[%s192 + $0x28] sm:$0xff]
      %v204 = vld [vmem:[%s192 + $0x30] sm:$0xff]
      %v205 = vld [vmem:[%s192 + $0x38] sm:$0xff]
      %v206 = vld [vmem:[%s192 + $0x40] sm:$0xff]
      %v207 = vld [vmem:[%s192 + $0x48] sm:$0xff]
      %v208 = vld [vmem:[%s192 + $0x50] sm:$0xff]
      %v209 = vld [vmem:[%s192 + $0x58] sm:$0xff]
      %v210 = vld [vmem:[%s192 + $0x60] sm:$0xff]
      %v211 = vld [vmem:[%s192 + $0x68] sm:$0xff]
      %v212 = vld [vmem:[%s192 + $0x70] sm:$0xff]
      %v213 = vld [vmem:[%s192 + $0x78] sm:$0xff]
      %v214 = vld [vmem:[%s192 + $0x80] sm:$0xff]
      %v215 = vld [vmem:[%s192 + $0x88] sm:$0xff]
      %v216 = vld [vmem:[%s192 + $0x90] sm:$0xff]
      %v217 = vld [vmem:[%s192 + $0x98] sm:$0xff]
      %v218 = vld [vmem:[%s192 + $0xa0] sm:$0xff]
      %v219 = vld [vmem:[%s192 + $0xa8] sm:$0xff]
      %v220 = vld [vmem:[%s192 + $0xb0] sm:$0xff]
      %v221 = vld [vmem:[%s192 + $0xb8] sm:$0xff]
      %v222 = vld [vmem:[%s192 + $0xc0] sm:$0xff]
      %v223 = vld [vmem:[%s192 + $0xc8] sm:$0xff]
      %v224 = vld [vmem:[%s192 + $0xd0] sm:$0xff]
      %v225 = vld [vmem:[%s192 + $0xd8] sm:$0xff]
      %v226 = vld [vmem:[%s192 + $0xe0] sm:$0xff]
      %v227 = vld [vmem:[%s192 + $0xe8] sm:$0xff]
      %v228 = vld [vmem:[%s192 + $0xf0] sm:$0xff]
      %v229 = vld [vmem:[%s192 + $0xf8] sm:$0xff]
      %v230 = vld [vmem:[%s192 + $0x100] sm:$0xff]
      %v231 = vld [vmem:[%s192 + $0x108] sm:$0xff]
      %v232 = vld [vmem:[%s192 + $0x110] sm:$0xff]
      %v233 = vld [vmem:[%s192 + $0x118] sm:$0xff]
      %v234 = vld [vmem:[%s192 + $0x120] sm:$0xff]
      %v235 = vld [vmem:[%s192 + $0x128] sm:$0xff]
      %v236 = vld [vmem:[%s192 + $0x130] sm:$0xff]
      %v237 = vld [vmem:[%s192 + $0x138] sm:$0xff]
      %v238 = vld [vmem:[%s192 + $0x140] sm:$0xff]
      %v239 = vld [vmem:[%s192 + $0x148] sm:$0xff]
      %v240 = vld [vmem:[%s192 + $0x150] sm:$0xff]
      %v241 = vld [vmem:[%s192 + $0x158] sm:$0xff]
      %v242 = vld [vmem:[%s192 + $0x160] sm:$0xff]
      %v243 = vld [vmem:[%s192 + $0x168] sm:$0xff]
      %v244 = vld [vmem:[%s192 + $0x170] sm:$0xff]
      %v245 = vld [vmem:[%s192 + $0x178] sm:$0xff]
      %v246 = vld [vmem:[%s192 + $0x180] sm:$0xff]
      %v247 = vld [vmem:[%s192 + $0x188] sm:$0xff]
      %v248 = vld [vmem:[%s192 + $0x190] sm:$0xff]
      %v249 = vld [vmem:[%s192 + $0x198] sm:$0xff]
      %v250 = vld [vmem:[%s192 + $0x1a0] sm:$0xff]
      %v251 = vld [vmem:[%s192 + $0x1a8] sm:$0xff]
      %v252 = vld [vmem:[%s192 + $0x1b0] sm:$0xff]
      %v253 = vld [vmem:[%s192 + $0x1b8] sm:$0xff]
      %v254 = vld [vmem:[%s1] sm:$0xff]
      %v255 = vld [vmem:[%s1 + $0x8] sm:$0xff]
      %v256 = vld [vmem:[%s1 + $0x10] sm:$0xff]
      %v257 = vld [vmem:[%s1 + $0x18] sm:$0xff]
      %v258 = vld [vmem:[%s1 + $0x20] sm:$0xff]
      %v259 = vld [vmem:[%s1 + $0x28] sm:$0xff]
      %v260 = vld [vmem:[%s1 + $0x30] sm:$0xff]
      %v261 = vld [vmem:[%s1 + $0x38] sm:$0xff]
      %263 = vset.pattern.permute.xlu0 0
      %264 = vperm.xlu0 %263, %v254
      %v265 = vpop.permute.xlu0 %264
      %268 = vset.pattern.permute.xlu0 0
      %269 = vperm.xlu0 %268, %v255
      %v270 = vpop.permute.xlu0 %269
      %273 = vset.pattern.permute.xlu0 0
      %274 = vperm.xlu0 %273, %v256
      %v275 = vpop.permute.xlu0 %274
      %278 = vset.pattern.permute.xlu0 0
      %279 = vperm.xlu0 %278, %v257
      %v280 = vpop.permute.xlu0 %279
      %283 = vset.pattern.permute.xlu0 0
      %284 = vperm.xlu0 %283, %v258
      %v285 = vpop.permute.xlu0 %284
      %288 = vset.pattern.permute.xlu0 0
      %289 = vperm.xlu0 %288, %v259
      %v290 = vpop.permute.xlu0 %289
      %293 = vset.pattern.permute.xlu0 0
      %294 = vperm.xlu0 %293, %v260
      %v295 = vpop.permute.xlu0 %294
      %298 = vset.pattern.permute.xlu0 0
      %299 = vperm.xlu0 %298, %v261
      %v300 = vpop.permute.xlu0 %299
      %v302 = vmul.f32 %v198, %v265
      %v303 = vmul.f32 %v199, %v265
      %v304 = vmul.f32 %v200, %v265
      %v305 = vmul.f32 %v201, %v265
      %v306 = vmul.f32 %v202, %v265
      %v307 = vmul.f32 %v203, %v265
      %v308 = vmul.f32 %v204, %v265
      %v309 = vmul.f32 %v205, %v270
      %v310 = vmul.f32 %v206, %v270
      %v311 = vmul.f32 %v207, %v270
      %v312 = vmul.f32 %v208, %v270
      %v313 = vmul.f32 %v209, %v270
      %v314 = vmul.f32 %v210, %v270
      %v315 = vmul.f32 %v211, %v270
      %v316 = vmul.f32 %v212, %v275
      %v317 = vmul.f32 %v213, %v275
      %v318 = vmul.f32 %v214, %v275
      %v319 = vmul.f32 %v215, %v275
      %v320 = vmul.f32 %v216, %v275
      %v321 = vmul.f32 %v217, %v275
      %v322 = vmul.f32 %v218, %v275
      %v323 = vmul.f32 %v219, %v280
      %v324 = vmul.f32 %v220, %v280
      %v325 = vmul.f32 %v221, %v280
      %v326 = vmul.f32 %v222, %v280
      %v327 = vmul.f32 %v223, %v280
      %v328 = vmul.f32 %v224, %v280
      %v329 = vmul.f32 %v225, %v280
      %v330 = vmul.f32 %v226, %v285
      %v331 = vmul.f32 %v227, %v285
      %v332 = vmul.f32 %v228, %v285
      %v333 = vmul.f32 %v229, %v285
      %v334 = vmul.f32 %v230, %v285
      %v335 = vmul.f32 %v231, %v285
      %v336 = vmul.f32 %v232, %v285
      %v337 = vmul.f32 %v233, %v290
      %v338 = vmul.f32 %v234, %v290
      %v339 = vmul.f32 %v235, %v290
      %v340 = vmul.f32 %v236, %v290
      %v341 = vmul.f32 %v237, %v290
      %v342 = vmul.f32 %v238, %v290
      %v343 = vmul.f32 %v239, %v290
      %v344 = vmul.f32 %v240, %v295
      %v345 = vmul.f32 %v241, %v295
      %v346 = vmul.f32 %v242, %v295
      %v347 = vmul.f32 %v243, %v295
      %v348 = vmul.f32 %v244, %v295
      %v349 = vmul.f32 %v245, %v295
      %v350 = vmul.f32 %v246, %v295
      %v351 = vmul.f32 %v247, %v300
      %v352 = vmul.f32 %v248, %v300
      %v353 = vmul.f32 %v249, %v300
      %v354 = vmul.f32 %v250, %v300
      %v355 = vmul.f32 %v251, %v300
      %v356 = vmul.f32 %v252, %v300
      %v357 = vmul.f32 %v253, %v300
      %v358 = vld [vmem:[%s2] sm:$0xff]
      %v359 = vld [vmem:[%s2 + $0x8] sm:$0xff]
      %v360 = vld [vmem:[%s2 + $0x10] sm:$0xff]
      %v361 = vld [vmem:[%s2 + $0x18] sm:$0xff]
      %v362 = vld [vmem:[%s2 + $0x20] sm:$0xff]
      %v363 = vld [vmem:[%s2 + $0x28] sm:$0xff]
      %v364 = vld [vmem:[%s2 + $0x30] sm:$0xff]
      %v365 = vld [vmem:[%s2 + $0x38] sm:$0xff]
      %367 = vset.pattern.permute.xlu0 0
      %368 = vperm.xlu0 %367, %v358
      %v369 = vpop.permute.xlu0 %368
      %372 = vset.pattern.permute.xlu0 0
      %373 = vperm.xlu0 %372, %v359
      %v374 = vpop.permute.xlu0 %373
      %377 = vset.pattern.permute.xlu0 0
      %378 = vperm.xlu0 %377, %v360
      %v379 = vpop.permute.xlu0 %378
      %382 = vset.pattern.permute.xlu0 0
      %383 = vperm.xlu0 %382, %v361
      %v384 = vpop.permute.xlu0 %383
      %387 = vset.pattern.permute.xlu0 0
      %388 = vperm.xlu0 %387, %v362
      %v389 = vpop.permute.xlu0 %388
      %392 = vset.pattern.permute.xlu0 0
      %393 = vperm.xlu0 %392, %v363
      %v394 = vpop.permute.xlu0 %393
      %397 = vset.pattern.permute.xlu0 0
      %398 = vperm.xlu0 %397, %v364
      %v399 = vpop.permute.xlu0 %398
      %402 = vset.pattern.permute.xlu0 0
      %403 = vperm.xlu0 %402, %v365
      %v404 = vpop.permute.xlu0 %403
      %v406 = vadd.f32 %v302, %v369
      %v407 = vadd.f32 %v303, %v369
      %v408 = vadd.f32 %v304, %v369
      %v409 = vadd.f32 %v305, %v369
      %v410 = vadd.f32 %v306, %v369
      %v411 = vadd.f32 %v307, %v369
      %v412 = vadd.f32 %v308, %v369
      %v413 = vadd.f32 %v309, %v374
      %v414 = vadd.f32 %v310, %v374
      %v415 = vadd.f32 %v311, %v374
      %v416 = vadd.f32 %v312, %v374
      %v417 = vadd.f32 %v313, %v374
      %v418 = vadd.f32 %v314, %v374
      %v419 = vadd.f32 %v315, %v374
      %v420 = vadd.f32 %v316, %v379
      %v421 = vadd.f32 %v317, %v379
      %v422 = vadd.f32 %v318, %v379
      %v423 = vadd.f32 %v319, %v379
      %v424 = vadd.f32 %v320, %v379
      %v425 = vadd.f32 %v321, %v379
      %v426 = vadd.f32 %v322, %v379
      %v427 = vadd.f32 %v323, %v384
      %v428 = vadd.f32 %v324, %v384
      %v429 = vadd.f32 %v325, %v384
      %v430 = vadd.f32 %v326, %v384
      %v431 = vadd.f32 %v327, %v384
      %v432 = vadd.f32 %v328, %v384
      %v433 = vadd.f32 %v329, %v384
      %v434 = vadd.f32 %v330, %v389
      %v435 = vadd.f32 %v331, %v389
      %v436 = vadd.f32 %v332, %v389
      %v437 = vadd.f32 %v333, %v389
      %v438 = vadd.f32 %v334, %v389
      %v439 = vadd.f32 %v335, %v389
      %v440 = vadd.f32 %v336, %v389
      %v441 = vadd.f32 %v337, %v394
      %v442 = vadd.f32 %v338, %v394
      %v443 = vadd.f32 %v339, %v394
      %v444 = vadd.f32 %v340, %v394
      %v445 = vadd.f32 %v341, %v394
      %v446 = vadd.f32 %v342, %v394
      %v447 = vadd.f32 %v343, %v394
      %v448 = vadd.f32 %v344, %v399
      %v449 = vadd.f32 %v345, %v399
      %v450 = vadd.f32 %v346, %v399
      %v451 = vadd.f32 %v347, %v399
      %v452 = vadd.f32 %v348, %v399
      %v453 = vadd.f32 %v349, %v399
      %v454 = vadd.f32 %v350, %v399
      %v455 = vadd.f32 %v351, %v404
      %v456 = vadd.f32 %v352, %v404
      %v457 = vadd.f32 %v353, %v404
      %v458 = vadd.f32 %v354, %v404
      %v459 = vadd.f32 %v355, %v404
      %v460 = vadd.f32 %v356, %v404
      %v461 = vadd.f32 %v357, %v404
      %vm462 = vcmp.gt.f32.partialorder %v406, 0.0
      %vm463 = vcmp.gt.f32.partialorder %v407, 0.0
      %vm464 = vcmp.gt.f32.partialorder %v408, 0.0
      %vm465 = vcmp.gt.f32.partialorder %v409, 0.0
      %vm466 = vcmp.gt.f32.partialorder %v410, 0.0
      %vm467 = vcmp.gt.f32.partialorder %v411, 0.0
      %vm468 = vcmp.gt.f32.partialorder %v412, 0.0
      %vm469 = vcmp.gt.f32.partialorder %v413, 0.0
      %vm470 = vcmp.gt.f32.partialorder %v414, 0.0
      %vm471 = vcmp.gt.f32.partialorder %v415, 0.0
      %vm472 = vcmp.gt.f32.partialorder %v416, 0.0
      %vm473 = vcmp.gt.f32.partialorder %v417, 0.0
      %vm474 = vcmp.gt.f32.partialorder %v418, 0.0
      %vm475 = vcmp.gt.f32.partialorder %v419, 0.0
      %vm476 = vcmp.gt.f32.partialorder %v420, 0.0
      %vm477 = vcmp.gt.f32.partialorder %v421, 0.0
      %vm478 = vcmp.gt.f32.partialorder %v422, 0.0
      %vm479 = vcmp.gt.f32.partialorder %v423, 0.0
      %vm480 = vcmp.gt.f32.partialorder %v424, 0.0
      %vm481 = vcmp.gt.f32.partialorder %v425, 0.0
      %vm482 = vcmp.gt.f32.partialorder %v426, 0.0
      %vm483 = vcmp.gt.f32.partialorder %v427, 0.0
      %vm484 = vcmp.gt.f32.partialorder %v428, 0.0
      %vm485 = vcmp.gt.f32.partialorder %v429, 0.0
      %vm486 = vcmp.gt.f32.partialorder %v430, 0.0
      %vm487 = vcmp.gt.f32.partialorder %v431, 0.0
      %vm488 = vcmp.gt.f32.partialorder %v432, 0.0
      %vm489 = vcmp.gt.f32.partialorder %v433, 0.0
      %vm490 = vcmp.gt.f32.partialorder %v434, 0.0
      %vm491 = vcmp.gt.f32.partialorder %v435, 0.0
      %vm492 = vcmp.gt.f32.partialorder %v436, 0.0
      %vm493 = vcmp.gt.f32.partialorder %v437, 0.0
      %vm494 = vcmp.gt.f32.partialorder %v438, 0.0
      %vm495 = vcmp.gt.f32.partialorder %v439, 0.0
      %vm496 = vcmp.gt.f32.partialorder %v440, 0.0
      %vm497 = vcmp.gt.f32.partialorder %v441, 0.0
      %vm498 = vcmp.gt.f32.partialorder %v442, 0.0
      %vm499 = vcmp.gt.f32.partialorder %v443, 0.0
      %vm500 = vcmp.gt.f32.partialorder %v444, 0.0
      %vm501 = vcmp.gt.f32.partialorder %v445, 0.0
      %vm502 = vcmp.gt.f32.partialorder %v446, 0.0
      %vm503 = vcmp.gt.f32.partialorder %v447, 0.0
      %vm504 = vcmp.gt.f32.partialorder %v448, 0.0
      %vm505 = vcmp.gt.f32.partialorder %v449, 0.0
      %vm506 = vcmp.gt.f32.partialorder %v450, 0.0
      %vm507 = vcmp.gt.f32.partialorder %v451, 0.0
      %vm508 = vcmp.gt.f32.partialorder %v452, 0.0
      %vm509 = vcmp.gt.f32.partialorder %v453, 0.0
      %vm510 = vcmp.gt.f32.partialorder %v454, 0.0
      %vm511 = vcmp.gt.f32.partialorder %v455, 0.0
      %vm512 = vcmp.gt.f32.partialorder %v456, 0.0
      %vm513 = vcmp.gt.f32.partialorder %v457, 0.0
      %vm514 = vcmp.gt.f32.partialorder %v458, 0.0
      %vm515 = vcmp.gt.f32.partialorder %v459, 0.0
      %vm516 = vcmp.gt.f32.partialorder %v460, 0.0
      %vm517 = vcmp.gt.f32.partialorder %v461, 0.0
      %v518 = vmul.f32 %v406, 1.442695
      %v519 = vpow.pop %v518
      %v520 = vmul.f32 %v407, 1.442695
      %v521 = vpow.pop %v520
      %v522 = vmul.f32 %v408, 1.442695
      %v523 = vpow.pop %v522
      %v524 = vmul.f32 %v409, 1.442695
      %v525 = vpow.pop %v524
      %v526 = vmul.f32 %v410, 1.442695
      %v527 = vpow.pop %v526
      %v528 = vmul.f32 %v411, 1.442695
      %v529 = vpow.pop %v528
      %v530 = vmul.f32 %v412, 1.442695
      %v531 = vpow.pop %v530
      %v532 = vmul.f32 %v413, 1.442695
      %v533 = vpow.pop %v532
      %v534 = vmul.f32 %v414, 1.442695
      %v535 = vpow.pop %v534
      %v536 = vmul.f32 %v415, 1.442695
      %v537 = vpow.pop %v536
      %v538 = vmul.f32 %v416, 1.442695
      %v539 = vpow.pop %v538
      %v540 = vmul.f32 %v417, 1.442695
      %v541 = vpow.pop %v540
      %v542 = vmul.f32 %v418, 1.442695
      %v543 = vpow.pop %v542
      %v544 = vmul.f32 %v419, 1.442695
      %v545 = vpow.pop %v544
      %v546 = vmul.f32 %v420, 1.442695
      %v547 = vpow.pop %v546
      %v548 = vmul.f32 %v421, 1.442695
      %v549 = vpow.pop %v548
      %v550 = vmul.f32 %v422, 1.442695
      %v551 = vpow.pop %v550
      %v552 = vmul.f32 %v423, 1.442695
      %v553 = vpow.pop %v552
      %v554 = vmul.f32 %v424, 1.442695
      %v555 = vpow.pop %v554
      %v556 = vmul.f32 %v425, 1.442695
      %v557 = vpow.pop %v556
      %v558 = vmul.f32 %v426, 1.442695
      %v559 = vpow.pop %v558
      %v560 = vmul.f32 %v427, 1.442695
      %v561 = vpow.pop %v560
      %v562 = vmul.f32 %v428, 1.442695
      %v563 = vpow.pop %v562
      %v564 = vmul.f32 %v429, 1.442695
      %v565 = vpow.pop %v564
      %v566 = vmul.f32 %v430, 1.442695
      %v567 = vpow.pop %v566
      %v568 = vmul.f32 %v431, 1.442695
      %v569 = vpow.pop %v568
      %v570 = vmul.f32 %v432, 1.442695
      %v571 = vpow.pop %v570
      %v572 = vmul.f32 %v433, 1.442695
      %v573 = vpow.pop %v572
      %v574 = vmul.f32 %v434, 1.442695
      %v575 = vpow.pop %v574
      %v576 = vmul.f32 %v435, 1.442695
      %v577 = vpow.pop %v576
      %v578 = vmul.f32 %v436, 1.442695
      %v579 = vpow.pop %v578
      %v580 = vmul.f32 %v437, 1.442695
      %v581 = vpow.pop %v580
      %v582 = vmul.f32 %v438, 1.442695
      %v583 = vpow.pop %v582
      %v584 = vmul.f32 %v439, 1.442695
      %v585 = vpow.pop %v584
      %v586 = vmul.f32 %v440, 1.442695
      %v587 = vpow.pop %v586
      %v588 = vmul.f32 %v441, 1.442695
      %v589 = vpow.pop %v588
      %v590 = vmul.f32 %v442, 1.442695
      %v591 = vpow.pop %v590
      %v592 = vmul.f32 %v443, 1.442695
      %v593 = vpow.pop %v592
      %v594 = vmul.f32 %v444, 1.442695
      %v595 = vpow.pop %v594
      %v596 = vmul.f32 %v445, 1.442695
      %v597 = vpow.pop %v596
      %v598 = vmul.f32 %v446, 1.442695
      %v599 = vpow.pop %v598
      %v600 = vmul.f32 %v447, 1.442695
      %v601 = vpow.pop %v600
      %v602 = vmul.f32 %v448, 1.442695
      %v603 = vpow.pop %v602
      %v604 = vmul.f32 %v449, 1.442695
      %v605 = vpow.pop %v604
      %v606 = vmul.f32 %v450, 1.442695
      %v607 = vpow.pop %v606
      %v608 = vmul.f32 %v451, 1.442695
      %v609 = vpow.pop %v608
      %v610 = vmul.f32 %v452, 1.442695
      %v611 = vpow.pop %v610
      %v612 = vmul.f32 %v453, 1.442695
      %v613 = vpow.pop %v612
      %v614 = vmul.f32 %v454, 1.442695
      %v615 = vpow.pop %v614
      %v616 = vmul.f32 %v455, 1.442695
      %v617 = vpow.pop %v616
      %v618 = vmul.f32 %v456, 1.442695
      %v619 = vpow.pop %v618
      %v620 = vmul.f32 %v457, 1.442695
      %v621 = vpow.pop %v620
      %v622 = vmul.f32 %v458, 1.442695
      %v623 = vpow.pop %v622
      %v624 = vmul.f32 %v459, 1.442695
      %v625 = vpow.pop %v624
      %v626 = vmul.f32 %v460, 1.442695
      %v627 = vpow.pop %v626
      %v628 = vmul.f32 %v461, 1.442695
      %v629 = vpow.pop %v628
      %v630 = vsub.f32 %v519, 1.0
      %v631 = vsub.f32 %v521, 1.0
      %v632 = vsub.f32 %v523, 1.0
      %v633 = vsub.f32 %v525, 1.0
      %v634 = vsub.f32 %v527, 1.0
      %v635 = vsub.f32 %v529, 1.0
      %v636 = vsub.f32 %v531, 1.0
      %v637 = vsub.f32 %v533, 1.0
      %v638 = vsub.f32 %v535, 1.0
      %v639 = vsub.f32 %v537, 1.0
      %v640 = vsub.f32 %v539, 1.0
      %v641 = vsub.f32 %v541, 1.0
      %v642 = vsub.f32 %v543, 1.0
      %v643 = vsub.f32 %v545, 1.0
      %v644 = vsub.f32 %v547, 1.0
      %v645 = vsub.f32 %v549, 1.0
      %v646 = vsub.f32 %v551, 1.0
      %v647 = vsub.f32 %v553, 1.0
      %v648 = vsub.f32 %v555, 1.0
      %v649 = vsub.f32 %v557, 1.0
      %v650 = vsub.f32 %v559, 1.0
      %v651 = vsub.f32 %v561, 1.0
      %v652 = vsub.f32 %v563, 1.0
      %v653 = vsub.f32 %v565, 1.0
      %v654 = vsub.f32 %v567, 1.0
      %v655 = vsub.f32 %v569, 1.0
      %v656 = vsub.f32 %v571, 1.0
      %v657 = vsub.f32 %v573, 1.0
      %v658 = vsub.f32 %v575, 1.0
      %v659 = vsub.f32 %v577, 1.0
      %v660 = vsub.f32 %v579, 1.0
      %v661 = vsub.f32 %v581, 1.0
      %v662 = vsub.f32 %v583, 1.0
      %v663 = vsub.f32 %v585, 1.0
      %v664 = vsub.f32 %v587, 1.0
      %v665 = vsub.f32 %v589, 1.0
      %v666 = vsub.f32 %v591, 1.0
      %v667 = vsub.f32 %v593, 1.0
      %v668 = vsub.f32 %v595, 1.0
      %v669 = vsub.f32 %v597, 1.0
      %v670 = vsub.f32 %v599, 1.0
      %v671 = vsub.f32 %v601, 1.0
      %v672 = vsub.f32 %v603, 1.0
      %v673 = vsub.f32 %v605, 1.0
      %v674 = vsub.f32 %v607, 1.0
      %v675 = vsub.f32 %v609, 1.0
      %v676 = vsub.f32 %v611, 1.0
      %v677 = vsub.f32 %v613, 1.0
      %v678 = vsub.f32 %v615, 1.0
      %v679 = vsub.f32 %v617, 1.0
      %v680 = vsub.f32 %v619, 1.0
      %v681 = vsub.f32 %v621, 1.0
      %v682 = vsub.f32 %v623, 1.0
      %v683 = vsub.f32 %v625, 1.0
      %v684 = vsub.f32 %v627, 1.0
      %v685 = vsub.f32 %v629, 1.0
      %v686 = vsel %vm462, %v406, %v630
      %v687 = vsel %vm463, %v407, %v631
      %v688 = vsel %vm464, %v408, %v632
      %v689 = vsel %vm465, %v409, %v633
      %v690 = vsel %vm466, %v410, %v634
      %v691 = vsel %vm467, %v411, %v635
      %v692 = vsel %vm468, %v412, %v636
      %v693 = vsel %vm469, %v413, %v637
      %v694 = vsel %vm470, %v414, %v638
      %v695 = vsel %vm471, %v415, %v639
      %v696 = vsel %vm472, %v416, %v640
      %v697 = vsel %vm473, %v417, %v641
      %v698 = vsel %vm474, %v418, %v642
      %v699 = vsel %vm475, %v419, %v643
      %v700 = vsel %vm476, %v420, %v644
      %v701 = vsel %vm477, %v421, %v645
      %v702 = vsel %vm478, %v422, %v646
      %v703 = vsel %vm479, %v423, %v647
      %v704 = vsel %vm480, %v424, %v648
      %v705 = vsel %vm481, %v425, %v649
      %v706 = vsel %vm482, %v426, %v650
      %v707 = vsel %vm483, %v427, %v651
      %v708 = vsel %vm484, %v428, %v652
      %v709 = vsel %vm485, %v429, %v653
      %v710 = vsel %vm486, %v430, %v654
      %v711 = vsel %vm487, %v431, %v655
      %v712 = vsel %vm488, %v432, %v656
      %v713 = vsel %vm489, %v433, %v657
      %v714 = vsel %vm490, %v434, %v658
      %v715 = vsel %vm491, %v435, %v659
      %v716 = vsel %vm492, %v436, %v660
      %v717 = vsel %vm493, %v437, %v661
      %v718 = vsel %vm494, %v438, %v662
      %v719 = vsel %vm495, %v439, %v663
      %v720 = vsel %vm496, %v440, %v664
      %v721 = vsel %vm497, %v441, %v665
      %v722 = vsel %vm498, %v442, %v666
      %v723 = vsel %vm499, %v443, %v667
      %v724 = vsel %vm500, %v444, %v668
      %v725 = vsel %vm501, %v445, %v669
      %v726 = vsel %vm502, %v446, %v670
      %v727 = vsel %vm503, %v447, %v671
      %v728 = vsel %vm504, %v448, %v672
      %v729 = vsel %vm505, %v449, %v673
      %v730 = vsel %vm506, %v450, %v674
      %v731 = vsel %vm507, %v451, %v675
      %v732 = vsel %vm508, %v452, %v676
      %v733 = vsel %vm509, %v453, %v677
      %v734 = vsel %vm510, %v454, %v678
      %v735 = vsel %vm511, %v455, %v679
      %v736 = vsel %vm512, %v456, %v680
      %v737 = vsel %vm513, %v457, %v681
      %v738 = vsel %vm514, %v458, %v682
      %v739 = vsel %vm515, %v459, %v683
      %v740 = vsel %vm516, %v460, %v684
      %v741 = vsel %vm517, %v461, %v685
      %v742 = vld [vmem:[%s3] sm:$0xff]
      %v744 = vlaneseq
      %v745 = vshrl.u32 %v744, 7
      %v746 = vsub.s32 0, %v745
      %v747 = vrot.slane %v742, %v746
      %v748 = vlaneseq
      %v749 = vshrl.u32 %v748, 7
      %v750 = vsub.s32 1, %v749
      %v751 = vrot.slane %v742, %v750
      %v752 = vlaneseq
      %v753 = vshrl.u32 %v752, 7
      %v754 = vsub.s32 2, %v753
      %v755 = vrot.slane %v742, %v754
      %v756 = vlaneseq
      %v757 = vshrl.u32 %v756, 7
      %v758 = vsub.s32 3, %v757
      %v759 = vrot.slane %v742, %v758
      %v760 = vlaneseq
      %v761 = vshrl.u32 %v760, 7
      %v762 = vsub.s32 4, %v761
      %v763 = vrot.slane %v742, %v762
      %v764 = vlaneseq
      %v765 = vshrl.u32 %v764, 7
      %v766 = vsub.s32 5, %v765
      %v767 = vrot.slane %v742, %v766
      %v768 = vlaneseq
      %v769 = vshrl.u32 %v768, 7
      %v770 = vsub.s32 6, %v769
      %v771 = vrot.slane %v742, %v770
      %v779 = vmul.f32 %v686, %v747
      %v780 = vmul.f32 %v687, %v751
      %v781 = vmul.f32 %v688, %v755
      %v782 = vmul.f32 %v689, %v759
      %v783 = vmul.f32 %v690, %v763
      %v784 = vmul.f32 %v691, %v767
      %v785 = vmul.f32 %v692, %v771
      %v786 = vmul.f32 %v693, %v747
      %v787 = vmul.f32 %v694, %v751
      %v788 = vmul.f32 %v695, %v755
      %v789 = vmul.f32 %v696, %v759
      %v790 = vmul.f32 %v697, %v763
      %v791 = vmul.f32 %v698, %v767
      %v792 = vmul.f32 %v699, %v771
      %v793 = vmul.f32 %v700, %v747
      %v794 = vmul.f32 %v701, %v751
      %v795 = vmul.f32 %v702, %v755
      %v796 = vmul.f32 %v703, %v759
      %v797 = vmul.f32 %v704, %v763
      %v798 = vmul.f32 %v705, %v767
      %v799 = vmul.f32 %v706, %v771
      %v800 = vmul.f32 %v707, %v747
      %v801 = vmul.f32 %v708, %v751
      %v802 = vmul.f32 %v709, %v755
      %v803 = vmul.f32 %v710, %v759
      %v804 = vmul.f32 %v711, %v763
      %v805 = vmul.f32 %v712, %v767
      %v806 = vmul.f32 %v713, %v771
      %v807 = vmul.f32 %v714, %v747
      %v808 = vmul.f32 %v715, %v751
      %v809 = vmul.f32 %v716, %v755
      %v810 = vmul.f32 %v717, %v759
      %v811 = vmul.f32 %v718, %v763
      %v812 = vmul.f32 %v719, %v767
      %v813 = vmul.f32 %v720, %v771
      %v814 = vmul.f32 %v721, %v747
      %v815 = vmul.f32 %v722, %v751
      %v816 = vmul.f32 %v723, %v755
      %v817 = vmul.f32 %v724, %v759
      %v818 = vmul.f32 %v725, %v763
      %v819 = vmul.f32 %v726, %v767
      %v820 = vmul.f32 %v727, %v771
      %v821 = vmul.f32 %v728, %v747
      %v822 = vmul.f32 %v729, %v751
      %v823 = vmul.f32 %v730, %v755
      %v824 = vmul.f32 %v731, %v759
      %v825 = vmul.f32 %v732, %v763
      %v826 = vmul.f32 %v733, %v767
      %v827 = vmul.f32 %v734, %v771
      %v828 = vmul.f32 %v735, %v747
      %v829 = vmul.f32 %v736, %v751
      %v830 = vmul.f32 %v737, %v755
      %v831 = vmul.f32 %v738, %v759
      %v832 = vmul.f32 %v739, %v763
      %v833 = vmul.f32 %v740, %v767
      %v834 = vmul.f32 %v741, %v771
      %835 = vst [vmem:[%s197] sm:$0xff] 0.0
      %836 = vst [vmem:[%s197 + $0x8] sm:$0xff] %v779
      %837 = vst [vmem:[%s197 + $0x10] sm:$0xff] %v780
      %838 = vst [vmem:[%s197 + $0x18] sm:$0xff] %v781
      %839 = vst [vmem:[%s197 + $0x20] sm:$0xff] %v782
      %840 = vst [vmem:[%s197 + $0x28] sm:$0xff] %v783
      %841 = vst [vmem:[%s197 + $0x30] sm:$0xff] %v784
      %842 = vst [vmem:[%s197 + $0x38] sm:$0xff] %v785
      %843 = vst [vmem:[%s197 + $0x40] sm:$0xff] 0.0
      %844 = vst [vmem:[%s197 + $0x48] sm:$0xff] 0.0
      %845 = vst [vmem:[%s197 + $0x50] sm:$0xff] %v786
      %846 = vst [vmem:[%s197 + $0x58] sm:$0xff] %v787
      %847 = vst [vmem:[%s197 + $0x60] sm:$0xff] %v788
      %848 = vst [vmem:[%s197 + $0x68] sm:$0xff] %v789
      %849 = vst [vmem:[%s197 + $0x70] sm:$0xff] %v790
      %850 = vst [vmem:[%s197 + $0x78] sm:$0xff] %v791
      %851 = vst [vmem:[%s197 + $0x80] sm:$0xff] %v792
      %852 = vst [vmem:[%s197 + $0x88] sm:$0xff] 0.0
      %853 = vst [vmem:[%s197 + $0x90] sm:$0xff] 0.0
      %854 = vst [vmem:[%s197 + $0x98] sm:$0xff] %v793
      %855 = vst [vmem:[%s197 + $0xa0] sm:$0xff] %v794
      %856 = vst [vmem:[%s197 + $0xa8] sm:$0xff] %v795
      %857 = vst [vmem:[%s197 + $0xb0] sm:$0xff] %v796
      %858 = vst [vmem:[%s197 + $0xb8] sm:$0xff] %v797
      %859 = vst [vmem:[%s197 + $0xc0] sm:$0xff] %v798
      %860 = vst [vmem:[%s197 + $0xc8] sm:$0xff] %v799
      %861 = vst [vmem:[%s197 + $0xd0] sm:$0xff] 0.0
      %862 = vst [vmem:[%s197 + $0xd8] sm:$0xff] 0.0
      %863 = vst [vmem:[%s197 + $0xe0] sm:$0xff] %v800
      %864 = vst [vmem:[%s197 + $0xe8] sm:$0xff] %v801
      %865 = vst [vmem:[%s197 + $0xf0] sm:$0xff] %v802
      %866 = vst [vmem:[%s197 + $0xf8] sm:$0xff] %v803
      %867 = vst [vmem:[%s197 + $0x100] sm:$0xff] %v804
      %868 = vst [vmem:[%s197 + $0x108] sm:$0xff] %v805
      %869 = vst [vmem:[%s197 + $0x110] sm:$0xff] %v806
      %870 = vst [vmem:[%s197 + $0x118] sm:$0xff] 0.0
      %871 = vst [vmem:[%s197 + $0x120] sm:$0xff] 0.0
      %872 = vst [vmem:[%s197 + $0x128] sm:$0xff] %v807
      %873 = vst [vmem:[%s197 + $0x130] sm:$0xff] %v808
      %874 = vst [vmem:[%s197 + $0x138] sm:$0xff] %v809
      %875 = vst [vmem:[%s197 + $0x140] sm:$0xff] %v810
      %876 = vst [vmem:[%s197 + $0x148] sm:$0xff] %v811
      %877 = vst [vmem:[%s197 + $0x150] sm:$0xff] %v812
      %878 = vst [vmem:[%s197 + $0x158] sm:$0xff] %v813
      %879 = vst [vmem:[%s197 + $0x160] sm:$0xff] 0.0
      %880 = vst [vmem:[%s197 + $0x168] sm:$0xff] 0.0
      %881 = vst [vmem:[%s197 + $0x170] sm:$0xff] %v814
      %882 = vst [vmem:[%s197 + $0x178] sm:$0xff] %v815
      %883 = vst [vmem:[%s197 + $0x180] sm:$0xff] %v816
      %884 = vst [vmem:[%s197 + $0x188] sm:$0xff] %v817
      %885 = vst [vmem:[%s197 + $0x190] sm:$0xff] %v818
      %886 = vst [vmem:[%s197 + $0x198] sm:$0xff] %v819
      %887 = vst [vmem:[%s197 + $0x1a0] sm:$0xff] %v820
      %888 = vst [vmem:[%s197 + $0x1a8] sm:$0xff] 0.0
      %889 = vst [vmem:[%s197 + $0x1b0] sm:$0xff] 0.0
      %890 = vst [vmem:[%s197 + $0x1b8] sm:$0xff] %v821
      %891 = vst [vmem:[%s197 + $0x1c0] sm:$0xff] %v822
      %892 = vst [vmem:[%s197 + $0x1c8] sm:$0xff] %v823
      %893 = vst [vmem:[%s197 + $0x1d0] sm:$0xff] %v824
      %894 = vst [vmem:[%s197 + $0x1d8] sm:$0xff] %v825
      %895 = vst [vmem:[%s197 + $0x1e0] sm:$0xff] %v826
      %896 = vst [vmem:[%s197 + $0x1e8] sm:$0xff] %v827
      %897 = vst [vmem:[%s197 + $0x1f0] sm:$0xff] 0.0
      %898 = vst [vmem:[%s197 + $0x1f8] sm:$0xff] 0.0
      %899 = vst [vmem:[%s197 + $0x200] sm:$0xff] %v828
      %900 = vst [vmem:[%s197 + $0x208] sm:$0xff] %v829
      %901 = vst [vmem:[%s197 + $0x210] sm:$0xff] %v830
      %902 = vst [vmem:[%s197 + $0x218] sm:$0xff] %v831
      %903 = vst [vmem:[%s197 + $0x220] sm:$0xff] %v832
      %904 = vst [vmem:[%s197 + $0x228] sm:$0xff] %v833
      %905 = vst [vmem:[%s197 + $0x230] sm:$0xff] %v834
      %906 = vst [vmem:[%s197 + $0x238] sm:$0xff] 0.0
      %p907 = scmp.lt.s32.totalorder %s15, 1
      %s908 = scalar_select %p907, %s15, 1
      %s909 = smul.addr %s908, 72
      %s910 = smul.addr %s909, 8
      %s911 = scalar_lea.vmem %s4, %s910
      // Predicated region
      $region37: #{conv_layers_encoder_forward.7} parent=35 // pred_check
        %p912 = pneg %p122
      $region38: #{conv_layers_encoder_forward.7} parent=35 // pred_check_branch
        %914 = sbr.rel (%p912) target = $region40
      $region39: #{conv_layers_encoder_forward.7} parent=35 // pred_region
        _
      $region40: #{conv_layers_encoder_forward.7} parent=35 // pred_fallthru
        _
    $region36: #{conv_layers_encoder_forward.7} parent=5 // pred_fallthru
      _
    %p915 = scmp.le.s32.totalorder 2, %s10
    // Predicated region
    $region41: #{conv_layers_encoder_forward.7} parent=5 // pred_check
      %p916 = pneg %p915
    $region42: #{conv_layers_encoder_forward.7} parent=5 // pred_check_branch
      %918 = sbr.rel (%p916) target = $region44
    $region43: #{conv_layers_encoder_forward.7} parent=5 // pred_region
      %s919 = ssub.s32 %s10, 2
      // Predicated region
      $region45: #{conv_layers_encoder_forward.7} parent=43 // pred_check
        %p920 = pneg %p128
      $region46: #{conv_layers_encoder_forward.7} parent=43 // pred_check_branch
        %922 = sbr.rel (%p920) target = $region48
      $region47: #{conv_layers_encoder_forward.7} parent=43 // pred_region
        %p923 = scmp.lt.s32.totalorder %s16, 1
        %s924 = scalar_select %p923, %s16, 1
        %s925 = smul.addr %s924, 72
        %s926 = smul.addr %s925, 8
        %s927 = scalar_lea.vmem %s4, %s926
      $region48: #{conv_layers_encoder_forward.7} parent=43 // pred_fallthru
        _
    $region44: #{conv_layers_encoder_forward.7} parent=5 // pred_fallthru
      _
  $region6: #{conv_layers_encoder_forward.7} parent=0 // loop_footer
    %s14 = sadd.s32 1, %s10
  $region7: #{conv_layers_encoder_forward.7} parent=0 // loop_footer_branch
    %9 = sbr.rel target = $region3
  $region8: #{conv_layers_encoder_forward.7} parent=0 // loop_exit
    _

// kernel: conv_layers_encoder_forward.6
$region0: #{conv_layers_encoder_forward.6}
  #allocation0 [shape = 'u32[]', space=smem, size = 0x4, offset = 0x4, fixed_abs, tag = 'smem constant byte address 0x4 - core index']
  #allocation1 [shape = 'u32[144,128]{1,0:T(1,128)}', space=vmem, size = 0x12000, scoped, tag = 'internal scratch']
  %s0 = inlined_call_operand.vmem [shape: bf16[2,32,1152], index: 0, kind: input, shape index: {}]
  %s1 = inlined_call_operand.vmem [shape: bf16[64,864], index: 1, kind: input, shape index: {}]
  %s2 = inlined_call_operand.vmem [shape: f32[64,1], index: 2, kind: input, shape index: {}]
  %s3 = inlined_call_operand.vmem [shape: f32[1,896], index: 3, kind: input, shape index: {}]
  %s4 = inlined_call_operand.vmem [shape: f32[2,64,896], index: 4, kind: output, shape index: {0}]
  %s5 = inlined_call_operand.vmem [shape: f32[2,64,1], index: 5, kind: output, shape index: {1}]
  %s6 = inlined_call_operand.vmem [shape: f32[2,64,1], index: 6, kind: output, shape index: {2}]
  %7 = xla_tuple %s4, %s5, %s6
  %s8 = sld [smem:[#allocation0]]
  $region65: #{conv_layers_encoder_forward.6} parent=0
    _
  %s10 = ssub.s32 1, %s8
  %s11 = scalar_select 0, %s10, %s8
  loop: start=0, step=1, limit=4
  $region2: #{conv_layers_encoder_forward.6} parent=0 // loop_pre_header
    _
  $region3: #{conv_layers_encoder_forward.6} parent=0 // loop_header
    %s13 = sphi 0, %s17
    %p14 = scmp.ge.s32.totalorder %s13, 4
    %s23 = sphi 0, %s25
    %s26 = sphi 0, %s23
    %s27 = sphi 0, %s26
    %s43 = sphi 0, %s27
    %s47 = sphi 0, %s47
    %s49 = sphi 0, %s47
    %s50 = sphi 0, %s49
    %s64 = sphi 0, %s50
    %s68 = sphi 0, %s68
    %s70 = sphi 0, %s68
    %s71 = sphi 0, %s70
    %s85 = sphi 0, %s71
    %s89 = sphi 0, %s89
    %s91 = sphi 0, %s89
    %s92 = sphi 0, %s91
    %s106 = sphi 0, %s92
    %s112 = sphi 0, %s114
    %s115 = sphi 0, %s112
    %s116 = sphi 0, %s115
    %s132 = sphi 0, %s116
    %s138 = sphi 0, %s140
    %s141 = sphi 0, %s138
    %s142 = sphi 0, %s141
    %s158 = sphi 0, %s142
    %s164 = sphi 0, %s166
    %s167 = sphi 0, %s164
    %s168 = sphi 0, %s167
    %s184 = sphi 0, %s168
  $region4: #{conv_layers_encoder_forward.6} parent=0 // loop_header_branch
    %16 = sbr.rel (%p14) target = $region8
  $region5: #{conv_layers_encoder_forward.6} parent=0 // loop_body
    %s18 = ssub.s32 %s13, 1
    %s19 = ssub.s32 %s13, 2
    %s20 = sadd.s32 %s13, 1
    %s21 = ssub.s32 %s13, %s20
    %p22 = scmp.eq.s32.totalorder %s21, 0
    %s24 = sadd.s32 %s23, 1
    %s25 = scalar_select %p22, %s23, %s24
    %p28 = pneg %p22
    %p29 = scmp.eq.s32.totalorder %s13, 1
    %p30 = por %p28, %p29
    %p31 = scmp.ne.s32.totalorder %s23, %s26
    %p32 = scmp.eq.s32.totalorder %s13, 0
    %p33 = por %p31, %p32
    %p34 = scmp.ne.s32.totalorder %s23, %s26
    %p35 = scmp.eq.s32.totalorder %s18, 1
    %p36 = por %p34, %p35
    %p37 = scmp.ne.s32.totalorder %s26, %s27
    %p38 = scmp.eq.s32.totalorder %s18, 0
    %p39 = por %p37, %p38
    %p40 = scmp.ne.s32.totalorder %s26, %s27
    %p41 = scmp.eq.s32.totalorder %s19, 1
    %p42 = por %p40, %p41
    %p44 = scmp.ne.s32.totalorder %s27, %s43
    %p45 = scmp.eq.s32.totalorder %s19, 0
    %p46 = por %p44, %p45
    %s48 = sadd.s32 %s47, 1
    %p51 = scmp.eq.s32.totalorder %s13, 1
    %p52 = scmp.ne.s32.totalorder %s47, %s49
    %p53 = scmp.eq.s32.totalorder %s13, 0
    %p54 = por %p52, %p53
    %p55 = scmp.ne.s32.totalorder %s47, %s49
    %p56 = scmp.eq.s32.totalorder %s18, 1
    %p57 = por %p55, %p56
    %p58 = scmp.ne.s32.totalorder %s49, %s50
    %p59 = scmp.eq.s32.totalorder %s18, 0
    %p60 = por %p58, %p59
    %p61 = scmp.ne.s32.totalorder %s49, %s50
    %p62 = scmp.eq.s32.totalorder %s19, 1
    %p63 = por %p61, %p62
    %p65 = scmp.ne.s32.totalorder %s50, %s64
    %p66 = scmp.eq.s32.totalorder %s19, 0
    %p67 = por %p65, %p66
    %s69 = sadd.s32 %s68, 1
    %p72 = scmp.eq.s32.totalorder %s13, 1
    %p73 = scmp.ne.s32.totalorder %s68, %s70
    %p74 = scmp.eq.s32.totalorder %s13, 0
    %p75 = por %p73, %p74
    %p76 = scmp.ne.s32.totalorder %s68, %s70
    %p77 = scmp.eq.s32.totalorder %s18, 1
    %p78 = por %p76, %p77
    %p79 = scmp.ne.s32.totalorder %s70, %s71
    %p80 = scmp.eq.s32.totalorder %s18, 0
    %p81 = por %p79, %p80
    %p82 = scmp.ne.s32.totalorder %s70, %s71
    %p83 = scmp.eq.s32.totalorder %s19, 1
    %p84 = por %p82, %p83
    %p86 = scmp.ne.s32.totalorder %s71, %s85
    %p87 = scmp.eq.s32.totalorder %s19, 0
    %p88 = por %p86, %p87
    %s90 = sadd.s32 %s89, 1
    %p93 = scmp.eq.s32.totalorder %s13, 1
    %p94 = scmp.ne.s32.totalorder %s89, %s91
    %p95 = scmp.eq.s32.totalorder %s13, 0
    %p96 = por %p94, %p95
    %p97 = scmp.ne.s32.totalorder %s89, %s91
    %p98 = scmp.eq.s32.totalorder %s18, 1
    %p99 = por %p97, %p98
    %p100 = scmp.ne.s32.totalorder %s91, %s92
    %p101 = scmp.eq.s32.totalorder %s18, 0
    %p102 = por %p100, %p101
    %p103 = scmp.ne.s32.totalorder %s91, %s92
    %p104 = scmp.eq.s32.totalorder %s19, 1
    %p105 = por %p103, %p104
    %p107 = scmp.ne.s32.totalorder %s92, %s106
    %p108 = scmp.eq.s32.totalorder %s19, 0
    %p109 = por %p107, %p108
    %s110 = ssub.s32 %s13, %s20
    %p111 = scmp.eq.s32.totalorder %s110, 0
    %s113 = sadd.s32 %s112, 1
    %s114 = scalar_select %p111, %s112, %s113
    %p117 = pneg %p111
    %p118 = scmp.eq.s32.totalorder %s13, 1
    %p119 = por %p117, %p118
    %p120 = scmp.ne.s32.totalorder %s112, %s115
    %p121 = scmp.eq.s32.totalorder %s13, 0
    %p122 = por %p120, %p121
    %p123 = scmp.ne.s32.totalorder %s112, %s115
    %p124 = scmp.eq.s32.totalorder %s18, 1
    %p125 = por %p123, %p124
    %p126 = scmp.ne.s32.totalorder %s115, %s116
    %p127 = scmp.eq.s32.totalorder %s18, 0
    %p128 = por %p126, %p127
    %p129 = scmp.ne.s32.totalorder %s115, %s116
    %p130 = scmp.eq.s32.totalorder %s19, 1
    %p131 = por %p129, %p130
    %p133 = scmp.ne.s32.totalorder %s116, %s132
    %p134 = scmp.eq.s32.totalorder %s19, 0
    %p135 = por %p133, %p134
    %s136 = ssub.s32 %s13, %s20
    %p137 = scmp.eq.s32.totalorder %s136, 0
    %s139 = sadd.s32 %s138, 1
    %s140 = scalar_select %p137, %s138, %s139
    %p143 = pneg %p137
    %p144 = scmp.eq.s32.totalorder %s13, 1
    %p145 = por %p143, %p144
    %p146 = scmp.ne.s32.totalorder %s138, %s141
    %p147 = scmp.eq.s32.totalorder %s13, 0
    %p148 = por %p146, %p147
    %p149 = scmp.ne.s32.totalorder %s138, %s141
    %p150 = scmp.eq.s32.totalorder %s18, 1
    %p151 = por %p149, %p150
    %p152 = scmp.ne.s32.totalorder %s141, %s142
    %p153 = scmp.eq.s32.totalorder %s18, 0
    %p154 = por %p152, %p153
    %p155 = scmp.ne.s32.totalorder %s141, %s142
    %p156 = scmp.eq.s32.totalorder %s19, 1
    %p157 = por %p155, %p156
    %p159 = scmp.ne.s32.totalorder %s142, %s158
    %p160 = scmp.eq.s32.totalorder %s19, 0
    %p161 = por %p159, %p160
    %s162 = ssub.s32 %s13, %s20
    %p163 = scmp.eq.s32.totalorder %s162, 0
    %s165 = sadd.s32 %s164, 1
    %s166 = scalar_select %p163, %s164, %s165
    %p169 = pneg %p163
    %p170 = scmp.eq.s32.totalorder %s13, 1
    %p171 = por %p169, %p170
    %p172 = scmp.ne.s32.totalorder %s164, %s167
    %p173 = scmp.eq.s32.totalorder %s13, 0
    %p174 = por %p172, %p173
    %p175 = scmp.ne.s32.totalorder %s164, %s167
    %p176 = scmp.eq.s32.totalorder %s18, 1
    %p177 = por %p175, %p176
    %p178 = scmp.ne.s32.totalorder %s167, %s168
    %p179 = scmp.eq.s32.totalorder %s18, 0
    %p180 = por %p178, %p179
    %p181 = scmp.ne.s32.totalorder %s167, %s168
    %p182 = scmp.eq.s32.totalorder %s19, 1
    %p183 = por %p181, %p182
    %p185 = scmp.ne.s32.totalorder %s168, %s184
    %p186 = scmp.eq.s32.totalorder %s19, 0
    %p187 = por %p185, %p186
    %p188 = scmp.le.s32.totalorder 1, %s13
    %p189 = scmp.lt.s32.totalorder %s13, 3
    %p190 = pnand %p188, %p189
    %p191 = pneg %p190
    // Predicated region
    $region9: #{conv_layers_encoder_forward.6} parent=5 // pred_check
      _
    $region10: #{conv_layers_encoder_forward.6} parent=5 // pred_check_branch
      %193 = sbr.rel (%p190) target = $region12
    $region11: #{conv_layers_encoder_forward.6} parent=5 // pred_region
      %s194 = ssub.s32 %s13, 1
      // Predicated region
      $region13: #{conv_layers_encoder_forward.6} parent=11 // pred_check
        %p195 = pneg %p60
      $region14: #{conv_layers_encoder_forward.6} parent=11 // pred_check_branch
        %197 = sbr.rel (%p195) target = $region16
      $region15: #{conv_layers_encoder_forward.6} parent=11 // pred_region
        _
      $region16: #{conv_layers_encoder_forward.6} parent=11 // pred_fallthru
        _
      // Predicated region
      $region17: #{conv_layers_encoder_forward.6} parent=11 // pred_check
        %p198 = pneg %p81
      $region18: #{conv_layers_encoder_forward.6} parent=11 // pred_check_branch
        %200 = sbr.rel (%p198) target = $region20
      $region19: #{conv_layers_encoder_forward.6} parent=11 // pred_region
        _
      $region20: #{conv_layers_encoder_forward.6} parent=11 // pred_fallthru
        _
      // Predicated region
      $region21: #{conv_layers_encoder_forward.6} parent=11 // pred_check
        %p201 = pneg %p102
      $region22: #{conv_layers_encoder_forward.6} parent=11 // pred_check_branch
        %203 = sbr.rel (%p201) target = $region24
      $region23: #{conv_layers_encoder_forward.6} parent=11 // pred_region
        _
      $region24: #{conv_layers_encoder_forward.6} parent=11 // pred_fallthru
        _
    $region12: #{conv_layers_encoder_forward.6} parent=5 // pred_fallthru
      _
    %p204 = scmp.lt.s32.totalorder %s13, 2
    // Predicated region
    $region25: #{conv_layers_encoder_forward.6} parent=5 // pred_check
      %p205 = pneg %p204
    $region26: #{conv_layers_encoder_forward.6} parent=5 // pred_check_branch
      %207 = sbr.rel (%p205) target = $region28
    $region27: #{conv_layers_encoder_forward.6} parent=5 // pred_region
      // Predicated region
      $region29: #{conv_layers_encoder_forward.6} parent=27 // pred_check
        %p208 = pneg %p33
      $region30: #{conv_layers_encoder_forward.6} parent=27 // pred_check_branch
        %210 = sbr.rel (%p208) target = $region32
      $region31: #{conv_layers_encoder_forward.6} parent=27 // pred_region
        %p211 = scmp.lt.s32.totalorder %s13, 1
        %s212 = scalar_select %p211, %s13, 1
        %s213 = smul.addr %s212, 36
        %s214 = smul.addr %s213, 4
        %s215 = scalar_lea.vmem %s0, %s214
      $region32: #{conv_layers_encoder_forward.6} parent=27 // pred_fallthru
        _
    $region28: #{conv_layers_encoder_forward.6} parent=5 // pred_fallthru
      _
    %p216 = scmp.le.s32.totalorder 1, %s13
    %p217 = scmp.lt.s32.totalorder %s13, 3
    %p218 = pnand %p216, %p217
    %p219 = pneg %p218
    // Predicated region
    $region33: #{conv_layers_encoder_forward.6} parent=5 // pred_check
      _
    $region34: #{conv_layers_encoder_forward.6} parent=5 // pred_check_branch
      %221 = sbr.rel (%p218) target = $region36
    $region35: #{conv_layers_encoder_forward.6} parent=5 // pred_region
      %s222 = ssub.s32 %s13, 1
      %p223 = scmp.lt.s32.totalorder %s18, 1
      %s224 = scalar_select %p223, %s18, 1
      %s225 = smul.addr %s224, 36
      %s226 = smul.addr %s225, 4
      %s227 = scalar_lea.vmem %s0, %s226
      %p228 = pneg %p39
      %p229 = pneg %p36
      %p230 = pneg %p60
      %p231 = pneg %p57
      %p232 = pneg %p81
      %p233 = pneg %p78
      %p234 = pneg %p102
      %p235 = pneg %p99
      %p236 = pneg %p128
      %p237 = pneg %p125
      %p238 = scmp.lt.s32.totalorder %s18, 1
      %s239 = scalar_select %p238, %s18, 1
      %s240 = smul.addr %s239, 56
      %s241 = smul.addr %s240, 8
      %s242 = scalar_lea.vmem %s4, %s241
      %p243 = pneg %p154
      %p244 = pneg %p151
      %p245 = scmp.lt.s32.totalorder %s18, 1
      %s246 = scalar_select %p245, %s18, 1
      %s247 = smul.addr %s246, 8
      %s248 = smul.addr %s247, 8
      %s249 = scalar_lea.vmem %s5, %s248
      %p250 = pneg %p180
      %p251 = pneg %p177
      %p252 = scmp.lt.s32.totalorder %s18, 1
      %s253 = scalar_select %p252, %s18, 1
      %s254 = smul.addr %s253, 8
      %s255 = smul.addr %s254, 8
      %s256 = scalar_lea.vmem %s6, %s255
      %p257 = scmp.lt.s32.totalorder %s18, 1
      %s258 = scalar_select %p257, %s18, 1
      %s259 = smul.addr %s258, 36
      %s260 = smul.addr %s259, 4
      %s261 = scalar_lea.vmem %s0, %s260
      %p262 = scmp.lt.s32.totalorder %s18, 1
      %s263 = scalar_select %p262, %s18, 1
      %s264 = smul.addr %s263, 56
      %s265 = smul.addr %s264, 8
      %s266 = scalar_lea.vmem %s4, %s265
      %p267 = scmp.lt.s32.totalorder %s18, 1
      %s268 = scalar_select %p267, %s18, 1
      %s269 = smul.addr %s268, 8
      %s270 = smul.addr %s269, 8
      %s271 = scalar_lea.vmem %s5, %s270
      %p272 = scmp.lt.s32.totalorder %s18, 1
      %s273 = scalar_select %p272, %s18, 1
      %s274 = smul.addr %s273, 8
      %s275 = smul.addr %s274, 8
      %s276 = scalar_lea.vmem %s6, %s275
      %v278 = vld [vmem:[%s261] sm:$0xff]
      %v279 = vld [vmem:[%s261 + $0x8] sm:$0xff]
      %v280 = vld [vmem:[%s261 + $0x10] sm:$0xff]
      %v281 = vld [vmem:[%s261 + $0x18] sm:$0xff]
      %v282 = vld [vmem:[%s261 + $0x20] sm:$0xf]
      %v283 = vld [vmem:[%s261 + $0x24] sm:$0xff]
      %v284 = vld [vmem:[%s261 + $0x2c] sm:$0xff]
      %v285 = vld [vmem:[%s261 + $0x34] sm:$0xff]
      %v286 = vld [vmem:[%s261 + $0x3c] sm:$0xff]
      %v287 = vld [vmem:[%s261 + $0x44] sm:$0xf]
      %v288 = vld [vmem:[%s261 + $0x48] sm:$0xff]
      %v289 = vld [vmem:[%s261 + $0x50] sm:$0xff]
      %v290 = vld [vmem:[%s261 + $0x58] sm:$0xff]
      %v291 = vld [vmem:[%s261 + $0x60] sm:$0xff]
      %v292 = vld [vmem:[%s261 + $0x68] sm:$0xf]
      %v293 = vld [vmem:[%s261 + $0x6c] sm:$0xff]
      %v294 = vld [vmem:[%s261 + $0x74] sm:$0xff]
      %v295 = vld [vmem:[%s261 + $0x7c] sm:$0xff]
      %v296 = vld [vmem:[%s261 + $0x84] sm:$0xff]
      %v297 = vld [vmem:[%s261 + $0x8c] sm:$0xf]
      %v314 = vunpack.c.l.b16 %v278
      %v315 = vunpack.c.h.b16 %v278
      %v316 = vunpack.c.l.b16 %v279
      %v317 = vunpack.c.h.b16 %v279
      %v318 = vunpack.c.l.b16 %v280
      %v319 = vunpack.c.h.b16 %v280
      %v320 = vunpack.c.l.b16 %v281
      %v321 = vunpack.c.h.b16 %v281
      %v322 = vunpack.c.l.b16 %v283
      %v323 = vunpack.c.h.b16 %v283
      %v324 = vunpack.c.l.b16 %v284
      %v325 = vunpack.c.h.b16 %v284
      %v326 = vunpack.c.l.b16 %v285
      %v327 = vunpack.c.h.b16 %v285
      %v328 = vunpack.c.l.b16 %v286
      %v329 = vunpack.c.h.b16 %v286
      %v330 = vunpack.c.l.b16 %v288
      %v331 = vunpack.c.h.b16 %v288
      %v332 = vunpack.c.l.b16 %v289
      %v333 = vunpack.c.h.b16 %v289
      %v334 = vunpack.c.l.b16 %v290
      %v335 = vunpack.c.h.b16 %v290
      %v336 = vunpack.c.l.b16 %v291
      %v337 = vunpack.c.h.b16 %v291
      %v338 = vunpack.c.l.b16 %v293
      %v339 = vunpack.c.h.b16 %v293
      %v340 = vunpack.c.l.b16 %v294
      %v341 = vunpack.c.h.b16 %v294
      %v342 = vunpack.c.l.b16 %v295
      %v343 = vunpack.c.h.b16 %v295
      %v344 = vunpack.c.l.b16 %v296
      %v345 = vunpack.c.h.b16 %v296
      %v346 = vpack.c.b16 %v322, %v314
      %v347 = vpack.c.b16 %v323, %v315
      %v348 = vpack.c.b16 %v324, %v316
      %v349 = vpack.c.b16 %v325, %v317
      %v350 = vpack.c.b16 %v326, %v318
      %v351 = vpack.c.b16 %v327, %v319
      %v352 = vpack.c.b16 %v328, %v320
      %v353 = vpack.c.b16 %v329, %v321
      %v354 = vpack.c.b16 %v338, %v330
      %v355 = vpack.c.b16 %v339, %v331
      %v356 = vpack.c.b16 %v340, %v332
      %v357 = vpack.c.b16 %v341, %v333
      %v358 = vpack.c.b16 %v342, %v334
      %v359 = vpack.c.b16 %v343, %v335
      %v360 = vpack.c.b16 %v344, %v336
      %v361 = vpack.c.b16 %v345, %v337
      %362 = vrot.lane.b32.xlu0 %v346, 127
      %v363 = vpop.permute.xlu0 %362
      %364 = vrot.lane.b32.xlu0 %v347, 127
      %v365 = vpop.permute.xlu0 %364
      %366 = vrot.lane.b32.xlu0 %v348, 127
      %v367 = vpop.permute.xlu0 %366
      %368 = vrot.lane.b32.xlu0 %v349, 127
      %v369 = vpop.permute.xlu0 %368
      %370 = vrot.lane.b32.xlu0 %v350, 127
      %v371 = vpop.permute.xlu0 %370
      %372 = vrot.lane.b32.xlu0 %v351, 127
      %v373 = vpop.permute.xlu0 %372
      %374 = vrot.lane.b32.xlu0 %v352, 127
      %v375 = vpop.permute.xlu0 %374
      %376 = vrot.lane.b32.xlu0 %v353, 127
      %v377 = vpop.permute.xlu0 %376
      %378 = vrot.lane.b32.xlu0 %v354, 127
      %v379 = vpop.permute.xlu0 %378
      %380 = vrot.lane.b32.xlu0 %v355, 127
      %v381 = vpop.permute.xlu0 %380
      %382 = vrot.lane.b32.xlu0 %v356, 127
      %v383 = vpop.permute.xlu0 %382
      %384 = vrot.lane.b32.xlu0 %v357, 127
      %v385 = vpop.permute.xlu0 %384
      %386 = vrot.lane.b32.xlu0 %v358, 127
      %v387 = vpop.permute.xlu0 %386
      %388 = vrot.lane.b32.xlu0 %v359, 127
      %v389 = vpop.permute.xlu0 %388
      %390 = vrot.lane.b32.xlu0 %v360, 127
      %v391 = vpop.permute.xlu0 %390
      %392 = vrot.lane.b32.xlu0 %v361, 127
      %v393 = vpop.permute.xlu0 %392
      %vm394 = vcmask 1039360
      %v395 = vsel %vm394, %v363, %v365
      %v396 = vsel %vm394, %v365, %v367
      %v397 = vsel %vm394, %v367, %v369
      %v398 = vsel %vm394, %v369, %v371
      %v399 = vsel %vm394, %v371, %v373
      %v400 = vsel %vm394, %v373, %v375
      %v401 = vsel %vm394, %v375, %v377
      %v402 = vsel %vm394, %v379, %v381
      %v403 = vsel %vm394, %v381, %v383
      %v404 = vsel %vm394, %v383, %v385
      %v405 = vsel %vm394, %v385, %v387
      %v406 = vsel %vm394, %v387, %v389
      %v407 = vsel %vm394, %v389, %v391
      %v408 = vsel %vm394, %v391, %v393
      %409 = vrot.lane.b32.xlu0 %v346, 126
      %v410 = vpop.permute.xlu0 %409
      %411 = vrot.lane.b32.xlu0 %v347, 126
      %v412 = vpop.permute.xlu0 %411
      %413 = vrot.lane.b32.xlu0 %v348, 126
      %v414 = vpop.permute.xlu0 %413
      %415 = vrot.lane.b32.xlu0 %v349, 126
      %v416 = vpop.permute.xlu0 %415
      %417 = vrot.lane.b32.xlu0 %v350, 126
      %v418 = vpop.permute.xlu0 %417
      %419 = vrot.lane.b32.xlu0 %v351, 126
      %v420 = vpop.permute.xlu0 %419
      %421 = vrot.lane.b32.xlu0 %v352, 126
      %v422 = vpop.permute.xlu0 %421
      %423 = vrot.lane.b32.xlu0 %v353, 126
      %v424 = vpop.permute.xlu0 %423
      %425 = vrot.lane.b32.xlu0 %v354, 126
      %v426 = vpop.permute.xlu0 %425
      %427 = vrot.lane.b32.xlu0 %v355, 126
      %v428 = vpop.permute.xlu0 %427
      %429 = vrot.lane.b32.xlu0 %v356, 126
      %v430 = vpop.permute.xlu0 %429
      %431 = vrot.lane.b32.xlu0 %v357, 126
      %v432 = vpop.permute.xlu0 %431
      %433 = vrot.lane.b32.xlu0 %v358, 126
      %v434 = vpop.permute.xlu0 %433
      %435 = vrot.lane.b32.xlu0 %v359, 126
      %v436 = vpop.permute.xlu0 %435
      %437 = vrot.lane.b32.xlu0 %v360, 126
      %v438 = vpop.permute.xlu0 %437
      %439 = vrot.lane.b32.xlu0 %v361, 126
      %v440 = vpop.permute.xlu0 %439
      %vm441 = vcmask 1031168
      %v442 = vsel %vm441, %v410, %v412
      %v443 = vsel %vm441, %v412, %v414
      %v444 = vsel %vm441, %v414, %v416
      %v445 = vsel %vm441, %v416, %v418
      %v446 = vsel %vm441, %v418, %v420
      %v447 = vsel %vm441, %v420, %v422
      %v448 = vsel %vm441, %v422, %v424
      %v449 = vsel %vm441, %v426, %v428
      %v450 = vsel %vm441, %v428, %v430
      %v451 = vsel %vm441, %v430, %v432
      %v452 = vsel %vm441, %v432, %v434
      %v453 = vsel %vm441, %v434, %v436
      %v454 = vsel %vm441, %v436, %v438
      %v455 = vsel %vm441, %v438, %v440
      %456 = vrot.lane.b32.xlu0 %v346, 118
      %v457 = vpop.permute.xlu0 %456
      %458 = vrot.lane.b32.xlu0 %v347, 118
      %v459 = vpop.permute.xlu0 %458
      %460 = vrot.lane.b32.xlu0 %v348, 118
      %v461 = vpop.permute.xlu0 %460
      %462 = vrot.lane.b32.xlu0 %v349, 118
      %v463 = vpop.permute.xlu0 %462
      %464 = vrot.lane.b32.xlu0 %v350, 118
      %v465 = vpop.permute.xlu0 %464
      %466 = vrot.lane.b32.xlu0 %v351, 118
      %v467 = vpop.permute.xlu0 %466
      %468 = vrot.lane.b32.xlu0 %v352, 118
      %v469 = vpop.permute.xlu0 %468
      %470 = vrot.lane.b32.xlu0 %v353, 118
      %v471 = vpop.permute.xlu0 %470
      %472 = vrot.lane.b32.xlu0 %v354, 118
      %v473 = vpop.permute.xlu0 %472
      %474 = vrot.lane.b32.xlu0 %v355, 118
      %v475 = vpop.permute.xlu0 %474
      %476 = vrot.lane.b32.xlu0 %v356, 118
      %v477 = vpop.permute.xlu0 %476
      %478 = vrot.lane.b32.xlu0 %v357, 118
      %v479 = vpop.permute.xlu0 %478
      %480 = vrot.lane.b32.xlu0 %v358, 118
      %v481 = vpop.permute.xlu0 %480
      %482 = vrot.lane.b32.xlu0 %v359, 118
      %v483 = vpop.permute.xlu0 %482
      %484 = vrot.lane.b32.xlu0 %v360, 118
      %v485 = vpop.permute.xlu0 %484
      %486 = vrot.lane.b32.xlu0 %v361, 118
      %v487 = vpop.permute.xlu0 %486
      %vm488 = vcmask 965632
      %v489 = vsel %vm488, %v457, %v459
      %v490 = vsel %vm488, %v459, %v461
      %v491 = vsel %vm488, %v461, %v463
      %v492 = vsel %vm488, %v463, %v465
      %v493 = vsel %vm488, %v465, %v467
      %v494 = vsel %vm488, %v467, %v469
      %v495 = vsel %vm488, %v469, %v471
      %v496 = vsel %vm488, %v473, %v475
      %v497 = vsel %vm488, %v475, %v477
      %v498 = vsel %vm488, %v477, %v479
      %v499 = vsel %vm488, %v479, %v481
      %v500 = vsel %vm488, %v481, %v483
      %v501 = vsel %vm488, %v483, %v485
      %v502 = vsel %vm488, %v485, %v487
      %503 = vrot.lane.b32.xlu0 %v346, 117
      %v504 = vpop.permute.xlu0 %503
      %505 = vrot.lane.b32.xlu0 %v347, 117
      %v506 = vpop.permute.xlu0 %505
      %507 = vrot.lane.b32.xlu0 %v348, 117
      %v508 = vpop.permute.xlu0 %507
      %509 = vrot.lane.b32.xlu0 %v349, 117
      %v510 = vpop.permute.xlu0 %509
      %511 = vrot.lane.b32.xlu0 %v350, 117
      %v512 = vpop.permute.xlu0 %511
      %513 = vrot.lane.b32.xlu0 %v351, 117
      %v514 = vpop.permute.xlu0 %513
      %515 = vrot.lane.b32.xlu0 %v352, 117
      %v516 = vpop.permute.xlu0 %515
      %517 = vrot.lane.b32.xlu0 %v353, 117
      %v518 = vpop.permute.xlu0 %517
      %519 = vrot.lane.b32.xlu0 %v354, 117
      %v520 = vpop.permute.xlu0 %519
      %521 = vrot.lane.b32.xlu0 %v355, 117
      %v522 = vpop.permute.xlu0 %521
      %523 = vrot.lane.b32.xlu0 %v356, 117
      %v524 = vpop.permute.xlu0 %523
      %525 = vrot.lane.b32.xlu0 %v357, 117
      %v526 = vpop.permute.xlu0 %525
      %527 = vrot.lane.b32.xlu0 %v358, 117
      %v528 = vpop.permute.xlu0 %527
      %529 = vrot.lane.b32.xlu0 %v359, 117
      %v530 = vpop.permute.xlu0 %529
      %531 = vrot.lane.b32.xlu0 %v360, 117
      %v532 = vpop.permute.xlu0 %531
      %533 = vrot.lane.b32.xlu0 %v361, 117
      %v534 = vpop.permute.xlu0 %533
      %vm535 = vcmask 957440
      %v536 = vsel %vm535, %v504, %v506
      %v537 = vsel %vm535, %v506, %v508
      %v538 = vsel %vm535, %v508, %v510
      %v539 = vsel %vm535, %v510, %v512
      %v540 = vsel %vm535, %v512, %v514
      %v541 = vsel %vm535, %v514, %v516
      %v542 = vsel %vm535, %v516, %v518
      %v543 = vsel %vm535, %v520, %v522
      %v544 = vsel %vm535, %v522, %v524
      %v545 = vsel %vm535, %v524, %v526
      %v546 = vsel %vm535, %v526, %v528
      %v547 = vsel %vm535, %v528, %v530
      %v548 = vsel %vm535, %v530, %v532
      %v549 = vsel %vm535, %v532, %v534
      %550 = vrot.lane.b32.xlu0 %v346, 116
      %v551 = vpop.permute.xlu0 %550
      %552 = vrot.lane.b32.xlu0 %v347, 116
      %v553 = vpop.permute.xlu0 %552
      %554 = vrot.lane.b32.xlu0 %v348, 116
      %v555 = vpop.permute.xlu0 %554
      %556 = vrot.lane.b32.xlu0 %v349, 116
      %v557 = vpop.permute.xlu0 %556
      %558 = vrot.lane.b32.xlu0 %v350, 116
      %v559 = vpop.permute.xlu0 %558
      %560 = vrot.lane.b32.xlu0 %v351, 116
      %v561 = vpop.permute.xlu0 %560
      %562 = vrot.lane.b32.xlu0 %v352, 116
      %v563 = vpop.permute.xlu0 %562
      %564 = vrot.lane.b32.xlu0 %v353, 116
      %v565 = vpop.permute.xlu0 %564
      %566 = vrot.lane.b32.xlu0 %v354, 116
      %v567 = vpop.permute.xlu0 %566
      %568 = vrot.lane.b32.xlu0 %v355, 116
      %v569 = vpop.permute.xlu0 %568
      %570 = vrot.lane.b32.xlu0 %v356, 116
      %v571 = vpop.permute.xlu0 %570
      %572 = vrot.lane.b32.xlu0 %v357, 116
      %v573 = vpop.permute.xlu0 %572
      %574 = vrot.lane.b32.xlu0 %v358, 116
      %v575 = vpop.permute.xlu0 %574
      %576 = vrot.lane.b32.xlu0 %v359, 116
      %v577 = vpop.permute.xlu0 %576
      %578 = vrot.lane.b32.xlu0 %v360, 116
      %v579 = vpop.permute.xlu0 %578
      %580 = vrot.lane.b32.xlu0 %v361, 116
      %v581 = vpop.permute.xlu0 %580
      %vm582 = vcmask 949248
      %v583 = vsel %vm582, %v551, %v553
      %v584 = vsel %vm582, %v553, %v555
      %v585 = vsel %vm582, %v555, %v557
      %v586 = vsel %vm582, %v557, %v559
      %v587 = vsel %vm582, %v559, %v561
      %v588 = vsel %vm582, %v561, %v563
      %v589 = vsel %vm582, %v563, %v565
      %v590 = vsel %vm582, %v567, %v569
      %v591 = vsel %vm582, %v569, %v571
      %v592 = vsel %vm582, %v571, %v573
      %v593 = vsel %vm582, %v573, %v575
      %v594 = vsel %vm582, %v575, %v577
      %v595 = vsel %vm582, %v577, %v579
      %v596 = vsel %vm582, %v579, %v581
      %597 = vrot.lane.b32.xlu0 %v346, 108
      %v598 = vpop.permute.xlu0 %597
      %599 = vrot.lane.b32.xlu0 %v347, 108
      %v600 = vpop.permute.xlu0 %599
      %601 = vrot.lane.b32.xlu0 %v348, 108
      %v602 = vpop.permute.xlu0 %601
      %603 = vrot.lane.b32.xlu0 %v349, 108
      %v604 = vpop.permute.xlu0 %603
      %605 = vrot.lane.b32.xlu0 %v350, 108
      %v606 = vpop.permute.xlu0 %605
      %607 = vrot.lane.b32.xlu0 %v351, 108
      %v608 = vpop.permute.xlu0 %607
      %609 = vrot.lane.b32.xlu0 %v352, 108
      %v610 = vpop.permute.xlu0 %609
      %611 = vrot.lane.b32.xlu0 %v353, 108
      %v612 = vpop.permute.xlu0 %611
      %613 = vrot.lane.b32.xlu0 %v354, 108
      %v614 = vpop.permute.xlu0 %613
      %615 = vrot.lane.b32.xlu0 %v355, 108
      %v616 = vpop.permute.xlu0 %615
      %617 = vrot.lane.b32.xlu0 %v356, 108
      %v618 = vpop.permute.xlu0 %617
      %619 = vrot.lane.b32.xlu0 %v357, 108
      %v620 = vpop.permute.xlu0 %619
      %621 = vrot.lane.b32.xlu0 %v358, 108
      %v622 = vpop.permute.xlu0 %621
      %623 = vrot.lane.b32.xlu0 %v359, 108
      %v624 = vpop.permute.xlu0 %623
      %625 = vrot.lane.b32.xlu0 %v360, 108
      %v626 = vpop.permute.xlu0 %625
      %627 = vrot.lane.b32.xlu0 %v361, 108
      %v628 = vpop.permute.xlu0 %627
      %vm629 = vcmask 883712
      %v630 = vsel %vm629, %v598, %v600
      %v631 = vsel %vm629, %v600, %v602
      %v632 = vsel %vm629, %v602, %v604
      %v633 = vsel %vm629, %v604, %v606
      %v634 = vsel %vm629, %v606, %v608
      %v635 = vsel %vm629, %v608, %v610
      %v636 = vsel %vm629, %v610, %v612
      %v637 = vsel %vm629, %v614, %v616
      %v638 = vsel %vm629, %v616, %v618
      %v639 = vsel %vm629, %v618, %v620
      %v640 = vsel %vm629, %v620, %v622
      %v641 = vsel %vm629, %v622, %v624
      %v642 = vsel %vm629, %v624, %v626
      %v643 = vsel %vm629, %v626, %v628
      %644 = vrot.lane.b32.xlu0 %v346, 107
      %v645 = vpop.permute.xlu0 %644
      %646 = vrot.lane.b32.xlu0 %v347, 107
      %v647 = vpop.permute.xlu0 %646
      %648 = vrot.lane.b32.xlu0 %v348, 107
      %v649 = vpop.permute.xlu0 %648
      %650 = vrot.lane.b32.xlu0 %v349, 107
      %v651 = vpop.permute.xlu0 %650
      %652 = vrot.lane.b32.xlu0 %v350, 107
      %v653 = vpop.permute.xlu0 %652
      %654 = vrot.lane.b32.xlu0 %v351, 107
      %v655 = vpop.permute.xlu0 %654
      %656 = vrot.lane.b32.xlu0 %v352, 107
      %v657 = vpop.permute.xlu0 %656
      %658 = vrot.lane.b32.xlu0 %v353, 107
      %v659 = vpop.permute.xlu0 %658
      %660 = vrot.lane.b32.xlu0 %v354, 107
      %v661 = vpop.permute.xlu0 %660
      %662 = vrot.lane.b32.xlu0 %v355, 107
      %v663 = vpop.permute.xlu0 %662
      %664 = vrot.lane.b32.xlu0 %v356, 107
      %v665 = vpop.permute.xlu0 %664
      %666 = vrot.lane.b32.xlu0 %v357, 107
      %v667 = vpop.permute.xlu0 %666
      %668 = vrot.lane.b32.xlu0 %v358, 107
      %v669 = vpop.permute.xlu0 %668
      %670 = vrot.lane.b32.xlu0 %v359, 107
      %v671 = vpop.permute.xlu0 %670
      %672 = vrot.lane.b32.xlu0 %v360, 107
      %v673 = vpop.permute.xlu0 %672
      %674 = vrot.lane.b32.xlu0 %v361, 107
      %v675 = vpop.permute.xlu0 %674
      %vm676 = vcmask 875520
      %v677 = vsel %vm676, %v645, %v647
      %v678 = vsel %vm676, %v647, %v649
      %v679 = vsel %vm676, %v649, %v651
      %v680 = vsel %vm676, %v651, %v653
      %v681 = vsel %vm676, %v653, %v655
      %v682 = vsel %vm676, %v655, %v657
      %v683 = vsel %vm676, %v657, %v659
      %v684 = vsel %vm676, %v661, %v663
      %v685 = vsel %vm676, %v663, %v665
      %v686 = vsel %vm676, %v665, %v667
      %v687 = vsel %vm676, %v667, %v669
      %v688 = vsel %vm676, %v669, %v671
      %v689 = vsel %vm676, %v671, %v673
      %v690 = vsel %vm676, %v673, %v675
      %691 = vrot.lane.b32.xlu0 %v346, 106
      %v692 = vpop.permute.xlu0 %691
      %693 = vrot.lane.b32.xlu0 %v347, 106
      %v694 = vpop.permute.xlu0 %693
      %695 = vrot.lane.b32.xlu0 %v348, 106
      %v696 = vpop.permute.xlu0 %695
      %697 = vrot.lane.b32.xlu0 %v349, 106
      %v698 = vpop.permute.xlu0 %697
      %699 = vrot.lane.b32.xlu0 %v350, 106
      %v700 = vpop.permute.xlu0 %699
      %701 = vrot.lane.b32.xlu0 %v351, 106
      %v702 = vpop.permute.xlu0 %701
      %703 = vrot.lane.b32.xlu0 %v352, 106
      %v704 = vpop.permute.xlu0 %703
      %705 = vrot.lane.b32.xlu0 %v353, 106
      %v706 = vpop.permute.xlu0 %705
      %707 = vrot.lane.b32.xlu0 %v354, 106
      %v708 = vpop.permute.xlu0 %707
      %709 = vrot.lane.b32.xlu0 %v355, 106
      %v710 = vpop.permute.xlu0 %709
      %711 = vrot.lane.b32.xlu0 %v356, 106
      %v712 = vpop.permute.xlu0 %711
      %713 = vrot.lane.b32.xlu0 %v357, 106
      %v714 = vpop.permute.xlu0 %713
      %715 = vrot.lane.b32.xlu0 %v358, 106
      %v716 = vpop.permute.xlu0 %715
      %717 = vrot.lane.b32.xlu0 %v359, 106
      %v718 = vpop.permute.xlu0 %717
      %719 = vrot.lane.b32.xlu0 %v360, 106
      %v720 = vpop.permute.xlu0 %719
      %721 = vrot.lane.b32.xlu0 %v361, 106
      %v722 = vpop.permute.xlu0 %721
      %vm723 = vcmask 867328
      %v724 = vsel %vm723, %v692, %v694
      %v725 = vsel %vm723, %v694, %v696
      %v726 = vsel %vm723, %v696, %v698
      %v727 = vsel %vm723, %v698, %v700
      %v728 = vsel %vm723, %v700, %v702
      %v729 = vsel %vm723, %v702, %v704
      %v730 = vsel %vm723, %v704, %v706
      %v731 = vsel %vm723, %v708, %v710
      %v732 = vsel %vm723, %v710, %v712
      %v733 = vsel %vm723, %v712, %v714
      %v734 = vsel %vm723, %v714, %v716
      %v735 = vsel %vm723, %v716, %v718
      %v736 = vsel %vm723, %v718, %v720
      %v737 = vsel %vm723, %v720, %v722
      %738 = vrot.lane.b32.xlu0 %v346, 28
      %v739 = vpop.permute.xlu0 %738
      %740 = vrot.lane.b32.xlu0 %v347, 28
      %v741 = vpop.permute.xlu0 %740
      %742 = vrot.lane.b32.xlu0 %v348, 28
      %v743 = vpop.permute.xlu0 %742
      %744 = vrot.lane.b32.xlu0 %v349, 28
      %v745 = vpop.permute.xlu0 %744
      %746 = vrot.lane.b32.xlu0 %v350, 28
      %v747 = vpop.permute.xlu0 %746
      %748 = vrot.lane.b32.xlu0 %v351, 28
      %v749 = vpop.permute.xlu0 %748
      %750 = vrot.lane.b32.xlu0 %v352, 28
      %v751 = vpop.permute.xlu0 %750
      %752 = vrot.lane.b32.xlu0 %v353, 28
      %v753 = vpop.permute.xlu0 %752
      %754 = vrot.lane.b32.xlu0 %v354, 28
      %v755 = vpop.permute.xlu0 %754
      %756 = vrot.lane.b32.xlu0 %v355, 28
      %v757 = vpop.permute.xlu0 %756
      %758 = vrot.lane.b32.xlu0 %v356, 28
      %v759 = vpop.permute.xlu0 %758
      %760 = vrot.lane.b32.xlu0 %v357, 28
      %v761 = vpop.permute.xlu0 %760
      %762 = vrot.lane.b32.xlu0 %v358, 28
      %v763 = vpop.permute.xlu0 %762
      %764 = vrot.lane.b32.xlu0 %v359, 28
      %v765 = vpop.permute.xlu0 %764
      %766 = vrot.lane.b32.xlu0 %v360, 28
      %v767 = vpop.permute.xlu0 %766
      %768 = vrot.lane.b32.xlu0 %v361, 28
      %v769 = vpop.permute.xlu0 %768
      %vm770 = vcmask 228352
      %v771 = vsel %vm770, %v739, %v741
      %v772 = vsel %vm770, %v741, %v743
      %v773 = vsel %vm770, %v743, %v745
      %v774 = vsel %vm770, %v745, %v747
      %v775 = vsel %vm770, %v747, %v749
      %v776 = vsel %vm770, %v749, %v751
      %v777 = vsel %vm770, %v751, %v753
      %v778 = vsel %vm770, %v755, %v757
      %v779 = vsel %vm770, %v757, %v759
      %v780 = vsel %vm770, %v759, %v761
      %v781 = vsel %vm770, %v761, %v763
      %v782 = vsel %vm770, %v763, %v765
      %v783 = vsel %vm770, %v765, %v767
      %v784 = vsel %vm770, %v767, %v769
      %785 = vrot.lane.b32.xlu0 %v346, 27
      %v786 = vpop.permute.xlu0 %785
      %787 = vrot.lane.b32.xlu0 %v347, 27
      %v788 = vpop.permute.xlu0 %787
      %789 = vrot.lane.b32.xlu0 %v348, 27
      %v790 = vpop.permute.xlu0 %789
      %791 = vrot.lane.b32.xlu0 %v349, 27
      %v792 = vpop.permute.xlu0 %791
      %793 = vrot.lane.b32.xlu0 %v350, 27
      %v794 = vpop.permute.xlu0 %793
      %795 = vrot.lane.b32.xlu0 %v351, 27
      %v796 = vpop.permute.xlu0 %795
      %797 = vrot.lane.b32.xlu0 %v352, 27
      %v798 = vpop.permute.xlu0 %797
      %799 = vrot.lane.b32.xlu0 %v353, 27
      %v800 = vpop.permute.xlu0 %799
      %801 = vrot.lane.b32.xlu0 %v354, 27
      %v802 = vpop.permute.xlu0 %801
      %803 = vrot.lane.b32.xlu0 %v355, 27
      %v804 = vpop.permute.xlu0 %803
      %805 = vrot.lane.b32.xlu0 %v356, 27
      %v806 = vpop.permute.xlu0 %805
      %807 = vrot.lane.b32.xlu0 %v357, 27
      %v808 = vpop.permute.xlu0 %807
      %809 = vrot.lane.b32.xlu0 %v358, 27
      %v810 = vpop.permute.xlu0 %809
      %811 = vrot.lane.b32.xlu0 %v359, 27
      %v812 = vpop.permute.xlu0 %811
      %813 = vrot.lane.b32.xlu0 %v360, 27
      %v814 = vpop.permute.xlu0 %813
      %815 = vrot.lane.b32.xlu0 %v361, 27
      %v816 = vpop.permute.xlu0 %815
      %vm817 = vcmask 220160
      %v818 = vsel %vm817, %v786, %v788
      %v819 = vsel %vm817, %v788, %v790
      %v820 = vsel %vm817, %v790, %v792
      %v821 = vsel %vm817, %v792, %v794
      %v822 = vsel %vm817, %v794, %v796
      %v823 = vsel %vm817, %v796, %v798
      %v824 = vsel %vm817, %v798, %v800
      %v825 = vsel %vm817, %v802, %v804
      %v826 = vsel %vm817, %v804, %v806
      %v827 = vsel %vm817, %v806, %v808
      %v828 = vsel %vm817, %v808, %v810
      %v829 = vsel %vm817, %v810, %v812
      %v830 = vsel %vm817, %v812, %v814
      %v831 = vsel %vm817, %v814, %v816
      %832 = vrot.lane.b32.xlu0 %v346, 26
      %v833 = vpop.permute.xlu0 %832
      %834 = vrot.lane.b32.xlu0 %v347, 26
      %v835 = vpop.permute.xlu0 %834
      %836 = vrot.lane.b32.xlu0 %v348, 26
      %v837 = vpop.permute.xlu0 %836
      %838 = vrot.lane.b32.xlu0 %v349, 26
      %v839 = vpop.permute.xlu0 %838
      %840 = vrot.lane.b32.xlu0 %v350, 26
      %v841 = vpop.permute.xlu0 %840
      %842 = vrot.lane.b32.xlu0 %v351, 26
      %v843 = vpop.permute.xlu0 %842
      %844 = vrot.lane.b32.xlu0 %v352, 26
      %v845 = vpop.permute.xlu0 %844
      %846 = vrot.lane.b32.xlu0 %v353, 26
      %v847 = vpop.permute.xlu0 %846
      %848 = vrot.lane.b32.xlu0 %v354, 26
      %v849 = vpop.permute.xlu0 %848
      %850 = vrot.lane.b32.xlu0 %v355, 26
      %v851 = vpop.permute.xlu0 %850
      %852 = vrot.lane.b32.xlu0 %v356, 26
      %v853 = vpop.permute.xlu0 %852
      %854 = vrot.lane.b32.xlu0 %v357, 26
      %v855 = vpop.permute.xlu0 %854
      %856 = vrot.lane.b32.xlu0 %v358, 26
      %v857 = vpop.permute.xlu0 %856
      %858 = vrot.lane.b32.xlu0 %v359, 26
      %v859 = vpop.permute.xlu0 %858
      %860 = vrot.lane.b32.xlu0 %v360, 26
      %v861 = vpop.permute.xlu0 %860
      %862 = vrot.lane.b32.xlu0 %v361, 26
      %v863 = vpop.permute.xlu0 %862
      %vm864 = vcmask 211968
      %v865 = vsel %vm864, %v833, %v835
      %v866 = vsel %vm864, %v835, %v837
      %v867 = vsel %vm864, %v837, %v839
      %v868 = vsel %vm864, %v839, %v841
      %v869 = vsel %vm864, %v841, %v843
      %v870 = vsel %vm864, %v843, %v845
      %v871 = vsel %vm864, %v845, %v847
      %v872 = vsel %vm864, %v849, %v851
      %v873 = vsel %vm864, %v851, %v853
      %v874 = vsel %vm864, %v853, %v855
      %v875 = vsel %vm864, %v855, %v857
      %v876 = vsel %vm864, %v857, %v859
      %v877 = vsel %vm864, %v859, %v861
      %v878 = vsel %vm864, %v861, %v863
      %879 = vrot.lane.b32.xlu0 %v346, 18
      %v880 = vpop.permute.xlu0 %879
      %881 = vrot.lane.b32.xlu0 %v347, 18
      %v882 = vpop.permute.xlu0 %881
      %883 = vrot.lane.b32.xlu0 %v348, 18
      %v884 = vpop.permute.xlu0 %883
      %885 = vrot.lane.b32.xlu0 %v349, 18
      %v886 = vpop.permute.xlu0 %885
      %887 = vrot.lane.b32.xlu0 %v350, 18
      %v888 = vpop.permute.xlu0 %887
      %889 = vrot.lane.b32.xlu0 %v351, 18
      %v890 = vpop.permute.xlu0 %889
      %891 = vrot.lane.b32.xlu0 %v352, 18
      %v892 = vpop.permute.xlu0 %891
      %893 = vrot.lane.b32.xlu0 %v353, 18
      %v894 = vpop.permute.xlu0 %893
      %895 = vrot.lane.b32.xlu0 %v354, 18
      %v896 = vpop.permute.xlu0 %895
      %897 = vrot.lane.b32.xlu0 %v355, 18
      %v898 = vpop.permute.xlu0 %897
      %899 = vrot.lane.b32.xlu0 %v356, 18
      %v900 = vpop.permute.xlu0 %899
      %901 = vrot.lane.b32.xlu0 %v357, 18
      %v902 = vpop.permute.xlu0 %901
      %903 = vrot.lane.b32.xlu0 %v358, 18
      %v904 = vpop.permute.xlu0 %903
      %905 = vrot.lane.b32.xlu0 %v359, 18
      %v906 = vpop.permute.xlu0 %905
      %907 = vrot.lane.b32.xlu0 %v360, 18
      %v908 = vpop.permute.xlu0 %907
      %909 = vrot.lane.b32.xlu0 %v361, 18
      %v910 = vpop.permute.xlu0 %909
      %vm911 = vcmask 146432
      %v912 = vsel %vm911, %v880, %v882
      %v913 = vsel %vm911, %v882, %v884
      %v914 = vsel %vm911, %v884, %v886
      %v915 = vsel %vm911, %v886, %v888
      %v916 = vsel %vm911, %v888, %v890
      %v917 = vsel %vm911, %v890, %v892
      %v918 = vsel %vm911, %v892, %v894
      %v919 = vsel %vm911, %v896, %v898
      %v920 = vsel %vm911, %v898, %v900
      %v921 = vsel %vm911, %v900, %v902
      %v922 = vsel %vm911, %v902, %v904
      %v923 = vsel %vm911, %v904, %v906
      %v924 = vsel %vm911, %v906, %v908
      %v925 = vsel %vm911, %v908, %v910
      %926 = vrot.lane.b32.xlu0 %v347, 17
      %v927 = vpop.permute.xlu0 %926
      %928 = vrot.lane.b32.xlu0 %v348, 17
      %v929 = vpop.permute.xlu0 %928
      %930 = vrot.lane.b32.xlu0 %v349, 17
      %v931 = vpop.permute.xlu0 %930
      %932 = vrot.lane.b32.xlu0 %v350, 17
      %v933 = vpop.permute.xlu0 %932
      %934 = vrot.lane.b32.xlu0 %v351, 17
      %v935 = vpop.permute.xlu0 %934
      %936 = vrot.lane.b32.xlu0 %v352, 17
      %v937 = vpop.permute.xlu0 %936
      %938 = vrot.lane.b32.xlu0 %v353, 17
      %v939 = vpop.permute.xlu0 %938
      %940 = vrot.lane.b32.xlu0 %v355, 17
      %v941 = vpop.permute.xlu0 %940
      %942 = vrot.lane.b32.xlu0 %v356, 17
      %v943 = vpop.permute.xlu0 %942
      %944 = vrot.lane.b32.xlu0 %v357, 17
      %v945 = vpop.permute.xlu0 %944
      %946 = vrot.lane.b32.xlu0 %v358, 17
      %v947 = vpop.permute.xlu0 %946
      %948 = vrot.lane.b32.xlu0 %v359, 17
      %v949 = vpop.permute.xlu0 %948
      %950 = vrot.lane.b32.xlu0 %v360, 17
      %v951 = vpop.permute.xlu0 %950
      %952 = vrot.lane.b32.xlu0 %v361, 17
      %v953 = vpop.permute.xlu0 %952
      %vm954 = vcmask 138240
      %v955 = vsel %vm954, %v927, %v929
      %v956 = vsel %vm954, %v929, %v931
      %v957 = vsel %vm954, %v931, %v933
      %v958 = vsel %vm954, %v933, %v935
      %v959 = vsel %vm954, %v935, %v937
      %v960 = vsel %vm954, %v937, %v939
      %v961 = vsel %vm954, %v941, %v943
      %v962 = vsel %vm954, %v943, %v945
      %v963 = vsel %vm954, %v945, %v947
      %v964 = vsel %vm954, %v947, %v949
      %v965 = vsel %vm954, %v949, %v951
      %v966 = vsel %vm954, %v951, %v953
      %v971 = vunpack.c.l.b16 %v282
      %v972 = vunpack.c.l.b16 %v287
      %v973 = vunpack.c.l.b16 %v292
      %v974 = vunpack.c.l.b16 %v297
      %v975 = vpack.c.b16 %v972, %v971
      %v976 = vpack.c.b16 %v974, %v973
      %977 = vrot.lane.b32.xlu0 %v347, 16
      %v978 = vpop.permute.xlu0 %977
      %979 = vrot.lane.b32.xlu0 %v348, 16
      %v980 = vpop.permute.xlu0 %979
      %981 = vrot.lane.b32.xlu0 %v349, 16
      %v982 = vpop.permute.xlu0 %981
      %983 = vrot.lane.b32.xlu0 %v350, 16
      %v984 = vpop.permute.xlu0 %983
      %985 = vrot.lane.b32.xlu0 %v351, 16
      %v986 = vpop.permute.xlu0 %985
      %987 = vrot.lane.b32.xlu0 %v352, 16
      %v988 = vpop.permute.xlu0 %987
      %989 = vrot.lane.b32.xlu0 %v353, 16
      %v990 = vpop.permute.xlu0 %989
      %991 = vrot.lane.b32.xlu0 %v975, 16
      %v992 = vpop.permute.xlu0 %991
      %993 = vrot.lane.b32.xlu0 %v355, 16
      %v994 = vpop.permute.xlu0 %993
      %995 = vrot.lane.b32.xlu0 %v356, 16
      %v996 = vpop.permute.xlu0 %995
      %997 = vrot.lane.b32.xlu0 %v357, 16
      %v998 = vpop.permute.xlu0 %997
      %999 = vrot.lane.b32.xlu0 %v358, 16
      %v1000 = vpop.permute.xlu0 %999
      %1001 = vrot.lane.b32.xlu0 %v359, 16
      %v1002 = vpop.permute.xlu0 %1001
      %1003 = vrot.lane.b32.xlu0 %v360, 16
      %v1004 = vpop.permute.xlu0 %1003
      %1005 = vrot.lane.b32.xlu0 %v361, 16
      %v1006 = vpop.permute.xlu0 %1005
      %1007 = vrot.lane.b32.xlu0 %v976, 16
      %v1008 = vpop.permute.xlu0 %1007
      %vm1009 = vcmask 130048
      %v1010 = vsel %vm1009, %v978, %v980
      %v1011 = vsel %vm1009, %v980, %v982
      %v1012 = vsel %vm1009, %v982, %v984
      %v1013 = vsel %vm1009, %v984, %v986
      %v1014 = vsel %vm1009, %v986, %v988
      %v1015 = vsel %vm1009, %v988, %v990
      %v1016 = vsel %vm1009, %v990, %v992
      %v1017 = vsel %vm1009, %v994, %v996
      %v1018 = vsel %vm1009, %v996, %v998
      %v1019 = vsel %vm1009, %v998, %v1000
      %v1020 = vsel %vm1009, %v1000, %v1002
      %v1021 = vsel %vm1009, %v1002, %v1004
      %v1022 = vsel %vm1009, %v1004, %v1006
      %v1023 = vsel %vm1009, %v1006, %v1008
      %1024 = vrot.lane.b32.xlu0 %v347, 8
      %v1025 = vpop.permute.xlu0 %1024
      %1026 = vrot.lane.b32.xlu0 %v348, 8
      %v1027 = vpop.permute.xlu0 %1026
      %1028 = vrot.lane.b32.xlu0 %v349, 8
      %v1029 = vpop.permute.xlu0 %1028
      %1030 = vrot.lane.b32.xlu0 %v350, 8
      %v1031 = vpop.permute.xlu0 %1030
      %1032 = vrot.lane.b32.xlu0 %v351, 8
      %v1033 = vpop.permute.xlu0 %1032
      %1034 = vrot.lane.b32.xlu0 %v352, 8
      %v1035 = vpop.permute.xlu0 %1034
      %1036 = vrot.lane.b32.xlu0 %v353, 8
      %v1037 = vpop.permute.xlu0 %1036
      %1038 = vrot.lane.b32.xlu0 %v975, 8
      %v1039 = vpop.permute.xlu0 %1038
      %1040 = vrot.lane.b32.xlu0 %v355, 8
      %v1041 = vpop.permute.xlu0 %1040
      %1042 = vrot.lane.b32.xlu0 %v356, 8
      %v1043 = vpop.permute.xlu0 %1042
      %1044 = vrot.lane.b32.xlu0 %v357, 8
      %v1045 = vpop.permute.xlu0 %1044
      %1046 = vrot.lane.b32.xlu0 %v358, 8
      %v1047 = vpop.permute.xlu0 %1046
      %1048 = vrot.lane.b32.xlu0 %v359, 8
      %v1049 = vpop.permute.xlu0 %1048
      %1050 = vrot.lane.b32.xlu0 %v360, 8
      %v1051 = vpop.permute.xlu0 %1050
      %1052 = vrot.lane.b32.xlu0 %v361, 8
      %v1053 = vpop.permute.xlu0 %1052
      %1054 = vrot.lane.b32.xlu0 %v976, 8
      %v1055 = vpop.permute.xlu0 %1054
      %vm1056 = vcmask 64512
      %v1057 = vsel %vm1056, %v1025, %v1027
      %v1058 = vsel %vm1056, %v1027, %v1029
      %v1059 = vsel %vm1056, %v1029, %v1031
      %v1060 = vsel %vm1056, %v1031, %v1033
      %v1061 = vsel %vm1056, %v1033, %v1035
      %v1062 = vsel %vm1056, %v1035, %v1037
      %v1063 = vsel %vm1056, %v1037, %v1039
      %v1064 = vsel %vm1056, %v1041, %v1043
      %v1065 = vsel %vm1056, %v1043, %v1045
      %v1066 = vsel %vm1056, %v1045, %v1047
      %v1067 = vsel %vm1056, %v1047, %v1049
      %v1068 = vsel %vm1056, %v1049, %v1051
      %v1069 = vsel %vm1056, %v1051, %v1053
      %v1070 = vsel %vm1056, %v1053, %v1055
      %1071 = vrot.lane.b32.xlu0 %v975, 118
      %v1072 = vpop.permute.xlu0 %1071
      %1073 = vrot.lane.b32.xlu0 %v976, 118
      %v1074 = vpop.permute.xlu0 %1073
      %v1075 = vsel %vm488, %v471, %v1072
      %v1076 = vsel %vm488, %v487, %v1074
      %1077 = vrot.lane.b32.xlu0 %v975, 117
      %v1078 = vpop.permute.xlu0 %1077
      %1079 = vrot.lane.b32.xlu0 %v976, 117
      %v1080 = vpop.permute.xlu0 %1079
      %v1081 = vsel %vm535, %v518, %v1078
      %v1082 = vsel %vm535, %v534, %v1080
      %1083 = vrot.lane.b32.xlu0 %v347, 39
      %v1084 = vpop.permute.xlu0 %1083
      %1085 = vrot.lane.b32.xlu0 %v348, 39
      %v1086 = vpop.permute.xlu0 %1085
      %1087 = vrot.lane.b32.xlu0 %v349, 39
      %v1088 = vpop.permute.xlu0 %1087
      %1089 = vrot.lane.b32.xlu0 %v350, 39
      %v1090 = vpop.permute.xlu0 %1089
      %1091 = vrot.lane.b32.xlu0 %v351, 39
      %v1092 = vpop.permute.xlu0 %1091
      %1093 = vrot.lane.b32.xlu0 %v352, 39
      %v1094 = vpop.permute.xlu0 %1093
      %1095 = vrot.lane.b32.xlu0 %v353, 39
      %v1096 = vpop.permute.xlu0 %1095
      %1097 = vrot.lane.b32.xlu0 %v975, 39
      %v1098 = vpop.permute.xlu0 %1097
      %1099 = vrot.lane.b32.xlu0 %v355, 39
      %v1100 = vpop.permute.xlu0 %1099
      %1101 = vrot.lane.b32.xlu0 %v356, 39
      %v1102 = vpop.permute.xlu0 %1101
      %1103 = vrot.lane.b32.xlu0 %v357, 39
      %v1104 = vpop.permute.xlu0 %1103
      %1105 = vrot.lane.b32.xlu0 %v358, 39
      %v1106 = vpop.permute.xlu0 %1105
      %1107 = vrot.lane.b32.xlu0 %v359, 39
      %v1108 = vpop.permute.xlu0 %1107
      %1109 = vrot.lane.b32.xlu0 %v360, 39
      %v1110 = vpop.permute.xlu0 %1109
      %1111 = vrot.lane.b32.xlu0 %v361, 39
      %v1112 = vpop.permute.xlu0 %1111
      %1113 = vrot.lane.b32.xlu0 %v976, 39
      %v1114 = vpop.permute.xlu0 %1113
      %vm1115 = vcmask 318464
      %v1116 = vsel %vm1115, %v1084, %v1086
      %v1117 = vsel %vm1115, %v1086, %v1088
      %v1118 = vsel %vm1115, %v1088, %v1090
      %v1119 = vsel %vm1115, %v1090, %v1092
      %v1120 = vsel %vm1115, %v1092, %v1094
      %v1121 = vsel %vm1115, %v1094, %v1096
      %v1122 = vsel %vm1115, %v1096, %v1098
      %v1123 = vsel %vm1115, %v1100, %v1102
      %v1124 = vsel %vm1115, %v1102, %v1104
      %v1125 = vsel %vm1115, %v1104, %v1106
      %v1126 = vsel %vm1115, %v1106, %v1108
      %v1127 = vsel %vm1115, %v1108, %v1110
      %v1128 = vsel %vm1115, %v1110, %v1112
      %v1129 = vsel %vm1115, %v1112, %v1114
      %1130 = vrot.lane.b32.xlu0 %v347, 38
      %v1131 = vpop.permute.xlu0 %1130
      %1132 = vrot.lane.b32.xlu0 %v348, 38
      %v1133 = vpop.permute.xlu0 %1132
      %1134 = vrot.lane.b32.xlu0 %v349, 38
      %v1135 = vpop.permute.xlu0 %1134
      %1136 = vrot.lane.b32.xlu0 %v350, 38
      %v1137 = vpop.permute.xlu0 %1136
      %1138 = vrot.lane.b32.xlu0 %v351, 38
      %v1139 = vpop.permute.xlu0 %1138
      %1140 = vrot.lane.b32.xlu0 %v352, 38
      %v1141 = vpop.permute.xlu0 %1140
      %1142 = vrot.lane.b32.xlu0 %v353, 38
      %v1143 = vpop.permute.xlu0 %1142
      %1144 = vrot.lane.b32.xlu0 %v975, 38
      %v1145 = vpop.permute.xlu0 %1144
      %1146 = vrot.lane.b32.xlu0 %v355, 38
      %v1147 = vpop.permute.xlu0 %1146
      %1148 = vrot.lane.b32.xlu0 %v356, 38
      %v1149 = vpop.permute.xlu0 %1148
      %1150 = vrot.lane.b32.xlu0 %v357, 38
      %v1151 = vpop.permute.xlu0 %1150
      %1152 = vrot.lane.b32.xlu0 %v358, 38
      %v1153 = vpop.permute.xlu0 %1152
      %1154 = vrot.lane.b32.xlu0 %v359, 38
      %v1155 = vpop.permute.xlu0 %1154
      %1156 = vrot.lane.b32.xlu0 %v360, 38
      %v1157 = vpop.permute.xlu0 %1156
      %1158 = vrot.lane.b32.xlu0 %v361, 38
      %v1159 = vpop.permute.xlu0 %1158
      %1160 = vrot.lane.b32.xlu0 %v976, 38
      %v1161 = vpop.permute.xlu0 %1160
      %vm1162 = vcmask 310272
      %v1163 = vsel %vm1162, %v1131, %v1133
      %v1164 = vsel %vm1162, %v1133, %v1135
      %v1165 = vsel %vm1162, %v1135, %v1137
      %v1166 = vsel %vm1162, %v1137, %v1139
      %v1167 = vsel %vm1162, %v1139, %v1141
      %v1168 = vsel %vm1162, %v1141, %v1143
      %v1169 = vsel %vm1162, %v1143, %v1145
      %v1170 = vsel %vm1162, %v1147, %v1149
      %v1171 = vsel %vm1162, %v1149, %v1151
      %v1172 = vsel %vm1162, %v1151, %v1153
      %v1173 = vsel %vm1162, %v1153, %v1155
      %v1174 = vsel %vm1162, %v1155, %v1157
      %v1175 = vsel %vm1162, %v1157, %v1159
      %v1176 = vsel %vm1162, %v1159, %v1161
      %1177 = vrot.lane.b32.xlu0 %v347, 37
      %v1178 = vpop.permute.xlu0 %1177
      %1179 = vrot.lane.b32.xlu0 %v348, 37
      %v1180 = vpop.permute.xlu0 %1179
      %1181 = vrot.lane.b32.xlu0 %v349, 37
      %v1182 = vpop.permute.xlu0 %1181
      %1183 = vrot.lane.b32.xlu0 %v350, 37
      %v1184 = vpop.permute.xlu0 %1183
      %1185 = vrot.lane.b32.xlu0 %v351, 37
      %v1186 = vpop.permute.xlu0 %1185
      %1187 = vrot.lane.b32.xlu0 %v352, 37
      %v1188 = vpop.permute.xlu0 %1187
      %1189 = vrot.lane.b32.xlu0 %v353, 37
      %v1190 = vpop.permute.xlu0 %1189
      %1191 = vrot.lane.b32.xlu0 %v975, 37
      %v1192 = vpop.permute.xlu0 %1191
      %1193 = vrot.lane.b32.xlu0 %v355, 37
      %v1194 = vpop.permute.xlu0 %1193
      %1195 = vrot.lane.b32.xlu0 %v356, 37
      %v1196 = vpop.permute.xlu0 %1195
      %1197 = vrot.lane.b32.xlu0 %v357, 37
      %v1198 = vpop.permute.xlu0 %1197
      %1199 = vrot.lane.b32.xlu0 %v358, 37
      %v1200 = vpop.permute.xlu0 %1199
      %1201 = vrot.lane.b32.xlu0 %v359, 37
      %v1202 = vpop.permute.xlu0 %1201
      %1203 = vrot.lane.b32.xlu0 %v360, 37
      %v1204 = vpop.permute.xlu0 %1203
      %1205 = vrot.lane.b32.xlu0 %v361, 37
      %v1206 = vpop.permute.xlu0 %1205
      %1207 = vrot.lane.b32.xlu0 %v976, 37
      %v1208 = vpop.permute.xlu0 %1207
      %vm1209 = vcmask 302080
      %v1210 = vsel %vm1209, %v1178, %v1180
      %v1211 = vsel %vm1209, %v1180, %v1182
      %v1212 = vsel %vm1209, %v1182, %v1184
      %v1213 = vsel %vm1209, %v1184, %v1186
      %v1214 = vsel %vm1209, %v1186, %v1188
      %v1215 = vsel %vm1209, %v1188, %v1190
      %v1216 = vsel %vm1209, %v1190, %v1192
      %v1217 = vsel %vm1209, %v1194, %v1196
      %v1218 = vsel %vm1209, %v1196, %v1198
      %v1219 = vsel %vm1209, %v1198, %v1200
      %v1220 = vsel %vm1209, %v1200, %v1202
      %v1221 = vsel %vm1209, %v1202, %v1204
      %v1222 = vsel %vm1209, %v1204, %v1206
      %v1223 = vsel %vm1209, %v1206, %v1208
      %1224 = vrot.lane.b32.xlu0 %v347, 29
      %v1225 = vpop.permute.xlu0 %1224
      %1226 = vrot.lane.b32.xlu0 %v348, 29
      %v1227 = vpop.permute.xlu0 %1226
      %1228 = vrot.lane.b32.xlu0 %v349, 29
      %v1229 = vpop.permute.xlu0 %1228
      %1230 = vrot.lane.b32.xlu0 %v350, 29
      %v1231 = vpop.permute.xlu0 %1230
      %1232 = vrot.lane.b32.xlu0 %v351, 29
      %v1233 = vpop.permute.xlu0 %1232
      %1234 = vrot.lane.b32.xlu0 %v352, 29
      %v1235 = vpop.permute.xlu0 %1234
      %1236 = vrot.lane.b32.xlu0 %v353, 29
      %v1237 = vpop.permute.xlu0 %1236
      %1238 = vrot.lane.b32.xlu0 %v975, 29
      %v1239 = vpop.permute.xlu0 %1238
      %1240 = vrot.lane.b32.xlu0 %v355, 29
      %v1241 = vpop.permute.xlu0 %1240
      %1242 = vrot.lane.b32.xlu0 %v356, 29
      %v1243 = vpop.permute.xlu0 %1242
      %1244 = vrot.lane.b32.xlu0 %v357, 29
      %v1245 = vpop.permute.xlu0 %1244
      %1246 = vrot.lane.b32.xlu0 %v358, 29
      %v1247 = vpop.permute.xlu0 %1246
      %1248 = vrot.lane.b32.xlu0 %v359, 29
      %v1249 = vpop.permute.xlu0 %1248
      %1250 = vrot.lane.b32.xlu0 %v360, 29
      %v1251 = vpop.permute.xlu0 %1250
      %1252 = vrot.lane.b32.xlu0 %v361, 29
      %v1253 = vpop.permute.xlu0 %1252
      %1254 = vrot.lane.b32.xlu0 %v976, 29
      %v1255 = vpop.permute.xlu0 %1254
      %vm1256 = vcmask 236544
      %v1257 = vsel %vm1256, %v1225, %v1227
      %v1258 = vsel %vm1256, %v1227, %v1229
      %v1259 = vsel %vm1256, %v1229, %v1231
      %v1260 = vsel %vm1256, %v1231, %v1233
      %v1261 = vsel %vm1256, %v1233, %v1235
      %v1262 = vsel %vm1256, %v1235, %v1237
      %v1263 = vsel %vm1256, %v1237, %v1239
      %v1264 = vsel %vm1256, %v1241, %v1243
      %v1265 = vsel %vm1256, %v1243, %v1245
      %v1266 = vsel %vm1256, %v1245, %v1247
      %v1267 = vsel %vm1256, %v1247, %v1249
      %v1268 = vsel %vm1256, %v1249, %v1251
      %v1269 = vsel %vm1256, %v1251, %v1253
      %v1270 = vsel %vm1256, %v1253, %v1255
      %1271 = vrot.lane.b32.xlu0 %v975, 28
      %v1272 = vpop.permute.xlu0 %1271
      %1273 = vrot.lane.b32.xlu0 %v976, 28
      %v1274 = vpop.permute.xlu0 %1273
      %v1275 = vsel %vm770, %v753, %v1272
      %v1276 = vsel %vm770, %v769, %v1274
      %1277 = vrot.lane.b32.xlu0 %v975, 27
      %v1278 = vpop.permute.xlu0 %1277
      %1279 = vrot.lane.b32.xlu0 %v976, 27
      %v1280 = vpop.permute.xlu0 %1279
      %v1281 = vsel %vm817, %v800, %v1278
      %v1282 = vsel %vm817, %v816, %v1280
      %1283 = vrot.lane.b32.xlu0 %v347, 19
      %v1284 = vpop.permute.xlu0 %1283
      %1285 = vrot.lane.b32.xlu0 %v348, 19
      %v1286 = vpop.permute.xlu0 %1285
      %1287 = vrot.lane.b32.xlu0 %v349, 19
      %v1288 = vpop.permute.xlu0 %1287
      %1289 = vrot.lane.b32.xlu0 %v350, 19
      %v1290 = vpop.permute.xlu0 %1289
      %1291 = vrot.lane.b32.xlu0 %v351, 19
      %v1292 = vpop.permute.xlu0 %1291
      %1293 = vrot.lane.b32.xlu0 %v352, 19
      %v1294 = vpop.permute.xlu0 %1293
      %1295 = vrot.lane.b32.xlu0 %v353, 19
      %v1296 = vpop.permute.xlu0 %1295
      %1297 = vrot.lane.b32.xlu0 %v975, 19
      %v1298 = vpop.permute.xlu0 %1297
      %1299 = vrot.lane.b32.xlu0 %v355, 19
      %v1300 = vpop.permute.xlu0 %1299
      %1301 = vrot.lane.b32.xlu0 %v356, 19
      %v1302 = vpop.permute.xlu0 %1301
      %1303 = vrot.lane.b32.xlu0 %v357, 19
      %v1304 = vpop.permute.xlu0 %1303
      %1305 = vrot.lane.b32.xlu0 %v358, 19
      %v1306 = vpop.permute.xlu0 %1305
      %1307 = vrot.lane.b32.xlu0 %v359, 19
      %v1308 = vpop.permute.xlu0 %1307
      %1309 = vrot.lane.b32.xlu0 %v360, 19
      %v1310 = vpop.permute.xlu0 %1309
      %1311 = vrot.lane.b32.xlu0 %v361, 19
      %v1312 = vpop.permute.xlu0 %1311
      %1313 = vrot.lane.b32.xlu0 %v976, 19
      %v1314 = vpop.permute.xlu0 %1313
      %vm1315 = vcmask 154624
      %v1316 = vsel %vm1315, %v1284, %v1286
      %v1317 = vsel %vm1315, %v1286, %v1288
      %v1318 = vsel %vm1315, %v1288, %v1290
      %v1319 = vsel %vm1315, %v1290, %v1292
      %v1320 = vsel %vm1315, %v1292, %v1294
      %v1321 = vsel %vm1315, %v1294, %v1296
      %v1322 = vsel %vm1315, %v1296, %v1298
      %v1323 = vsel %vm1315, %v1300, %v1302
      %v1324 = vsel %vm1315, %v1302, %v1304
      %v1325 = vsel %vm1315, %v1304, %v1306
      %v1326 = vsel %vm1315, %v1306, %v1308
      %v1327 = vsel %vm1315, %v1308, %v1310
      %v1328 = vsel %vm1315, %v1310, %v1312
      %v1329 = vsel %vm1315, %v1312, %v1314
      %1330 = vrot.lane.b32.xlu0 %v975, 18
      %v1331 = vpop.permute.xlu0 %1330
      %1332 = vrot.lane.b32.xlu0 %v976, 18
      %v1333 = vpop.permute.xlu0 %1332
      %v1334 = vsel %vm911, %v894, %v1331
      %v1335 = vsel %vm911, %v910, %v1333
      %1336 = vrot.lane.b32.xlu0 %v975, 17
      %v1337 = vpop.permute.xlu0 %1336
      %1338 = vrot.lane.b32.xlu0 %v976, 17
      %v1339 = vpop.permute.xlu0 %1338
      %v1340 = vsel %vm954, %v939, %v1337
      %v1341 = vsel %vm954, %v953, %v1339
      %1342 = vrot.lane.b32.xlu0 %v490, 17
      %v1343 = vpop.permute.xlu0 %1342
      %1344 = vrot.lane.b32.xlu0 %v491, 17
      %v1345 = vpop.permute.xlu0 %1344
      %1346 = vrot.lane.b32.xlu0 %v492, 17
      %v1347 = vpop.permute.xlu0 %1346
      %1348 = vrot.lane.b32.xlu0 %v493, 17
      %v1349 = vpop.permute.xlu0 %1348
      %1350 = vrot.lane.b32.xlu0 %v494, 17
      %v1351 = vpop.permute.xlu0 %1350
      %1352 = vrot.lane.b32.xlu0 %v495, 17
      %v1353 = vpop.permute.xlu0 %1352
      %1354 = vrot.lane.b32.xlu0 %v1075, 17
      %v1355 = vpop.permute.xlu0 %1354
      %1356 = vrot.lane.b32.xlu0 %v497, 17
      %v1357 = vpop.permute.xlu0 %1356
      %1358 = vrot.lane.b32.xlu0 %v498, 17
      %v1359 = vpop.permute.xlu0 %1358
      %1360 = vrot.lane.b32.xlu0 %v499, 17
      %v1361 = vpop.permute.xlu0 %1360
      %1362 = vrot.lane.b32.xlu0 %v500, 17
      %v1363 = vpop.permute.xlu0 %1362
      %1364 = vrot.lane.b32.xlu0 %v501, 17
      %v1365 = vpop.permute.xlu0 %1364
      %1366 = vrot.lane.b32.xlu0 %v502, 17
      %v1367 = vpop.permute.xlu0 %1366
      %1368 = vrot.lane.b32.xlu0 %v1076, 17
      %v1369 = vpop.permute.xlu0 %1368
      %1370 = vrot.lane.b32.xlu0 %v537, 17
      %v1371 = vpop.permute.xlu0 %1370
      %1372 = vrot.lane.b32.xlu0 %v538, 17
      %v1373 = vpop.permute.xlu0 %1372
      %1374 = vrot.lane.b32.xlu0 %v539, 17
      %v1375 = vpop.permute.xlu0 %1374
      %1376 = vrot.lane.b32.xlu0 %v540, 17
      %v1377 = vpop.permute.xlu0 %1376
      %1378 = vrot.lane.b32.xlu0 %v541, 17
      %v1379 = vpop.permute.xlu0 %1378
      %1380 = vrot.lane.b32.xlu0 %v542, 17
      %v1381 = vpop.permute.xlu0 %1380
      %1382 = vrot.lane.b32.xlu0 %v1081, 17
      %v1383 = vpop.permute.xlu0 %1382
      %1384 = vrot.lane.b32.xlu0 %v544, 17
      %v1385 = vpop.permute.xlu0 %1384
      %1386 = vrot.lane.b32.xlu0 %v545, 17
      %v1387 = vpop.permute.xlu0 %1386
      %1388 = vrot.lane.b32.xlu0 %v546, 17
      %v1389 = vpop.permute.xlu0 %1388
      %1390 = vrot.lane.b32.xlu0 %v547, 17
      %v1391 = vpop.permute.xlu0 %1390
      %1392 = vrot.lane.b32.xlu0 %v548, 17
      %v1393 = vpop.permute.xlu0 %1392
      %1394 = vrot.lane.b32.xlu0 %v549, 17
      %v1395 = vpop.permute.xlu0 %1394
      %1396 = vrot.lane.b32.xlu0 %v1082, 17
      %v1397 = vpop.permute.xlu0 %1396
      %1398 = vrot.lane.b32.xlu0 %v1116, 17
      %v1399 = vpop.permute.xlu0 %1398
      %1400 = vrot.lane.b32.xlu0 %v1117, 17
      %v1401 = vpop.permute.xlu0 %1400
      %1402 = vrot.lane.b32.xlu0 %v1118, 17
      %v1403 = vpop.permute.xlu0 %1402
      %1404 = vrot.lane.b32.xlu0 %v1119, 17
      %v1405 = vpop.permute.xlu0 %1404
      %1406 = vrot.lane.b32.xlu0 %v1120, 17
      %v1407 = vpop.permute.xlu0 %1406
      %1408 = vrot.lane.b32.xlu0 %v1121, 17
      %v1409 = vpop.permute.xlu0 %1408
      %1410 = vrot.lane.b32.xlu0 %v1122, 17
      %v1411 = vpop.permute.xlu0 %1410
      %1412 = vrot.lane.b32.xlu0 %v1123, 17
      %v1413 = vpop.permute.xlu0 %1412
      %1414 = vrot.lane.b32.xlu0 %v1124, 17
      %v1415 = vpop.permute.xlu0 %1414
      %1416 = vrot.lane.b32.xlu0 %v1125, 17
      %v1417 = vpop.permute.xlu0 %1416
      %1418 = vrot.lane.b32.xlu0 %v1126, 17
      %v1419 = vpop.permute.xlu0 %1418
      %1420 = vrot.lane.b32.xlu0 %v1127, 17
      %v1421 = vpop.permute.xlu0 %1420
      %1422 = vrot.lane.b32.xlu0 %v1128, 17
      %v1423 = vpop.permute.xlu0 %1422
      %1424 = vrot.lane.b32.xlu0 %v1129, 17
      %v1425 = vpop.permute.xlu0 %1424
      %1426 = vrot.lane.b32.xlu0 %v1163, 17
      %v1427 = vpop.permute.xlu0 %1426
      %1428 = vrot.lane.b32.xlu0 %v1164, 17
      %v1429 = vpop.permute.xlu0 %1428
      %1430 = vrot.lane.b32.xlu0 %v1165, 17
      %v1431 = vpop.permute.xlu0 %1430
      %1432 = vrot.lane.b32.xlu0 %v1166, 17
      %v1433 = vpop.permute.xlu0 %1432
      %1434 = vrot.lane.b32.xlu0 %v1167, 17
      %v1435 = vpop.permute.xlu0 %1434
      %1436 = vrot.lane.b32.xlu0 %v1168, 17
      %v1437 = vpop.permute.xlu0 %1436
      %1438 = vrot.lane.b32.xlu0 %v1169, 17
      %v1439 = vpop.permute.xlu0 %1438
      %1440 = vrot.lane.b32.xlu0 %v1170, 17
      %v1441 = vpop.permute.xlu0 %1440
      %1442 = vrot.lane.b32.xlu0 %v1171, 17
      %v1443 = vpop.permute.xlu0 %1442
      %1444 = vrot.lane.b32.xlu0 %v1172, 17
      %v1445 = vpop.permute.xlu0 %1444
      %1446 = vrot.lane.b32.xlu0 %v1173, 17
      %v1447 = vpop.permute.xlu0 %1446
      %1448 = vrot.lane.b32.xlu0 %v1174, 17
      %v1449 = vpop.permute.xlu0 %1448
      %1450 = vrot.lane.b32.xlu0 %v1175, 17
      %v1451 = vpop.permute.xlu0 %1450
      %1452 = vrot.lane.b32.xlu0 %v1176, 17
      %v1453 = vpop.permute.xlu0 %1452
      %1454 = vrot.lane.b32.xlu0 %v1210, 17
      %v1455 = vpop.permute.xlu0 %1454
      %1456 = vrot.lane.b32.xlu0 %v1211, 17
      %v1457 = vpop.permute.xlu0 %1456
      %1458 = vrot.lane.b32.xlu0 %v1212, 17
      %v1459 = vpop.permute.xlu0 %1458
      %1460 = vrot.lane.b32.xlu0 %v1213, 17
      %v1461 = vpop.permute.xlu0 %1460
      %1462 = vrot.lane.b32.xlu0 %v1214, 17
      %v1463 = vpop.permute.xlu0 %1462
      %1464 = vrot.lane.b32.xlu0 %v1215, 17
      %v1465 = vpop.permute.xlu0 %1464
      %1466 = vrot.lane.b32.xlu0 %v1216, 17
      %v1467 = vpop.permute.xlu0 %1466
      %1468 = vrot.lane.b32.xlu0 %v1217, 17
      %v1469 = vpop.permute.xlu0 %1468
      %1470 = vrot.lane.b32.xlu0 %v1218, 17
      %v1471 = vpop.permute.xlu0 %1470
      %1472 = vrot.lane.b32.xlu0 %v1219, 17
      %v1473 = vpop.permute.xlu0 %1472
      %1474 = vrot.lane.b32.xlu0 %v1220, 17
      %v1475 = vpop.permute.xlu0 %1474
      %1476 = vrot.lane.b32.xlu0 %v1221, 17
      %v1477 = vpop.permute.xlu0 %1476
      %1478 = vrot.lane.b32.xlu0 %v1222, 17
      %v1479 = vpop.permute.xlu0 %1478
      %1480 = vrot.lane.b32.xlu0 %v1223, 17
      %v1481 = vpop.permute.xlu0 %1480
      %1482 = vrot.lane.b32.xlu0 %v1257, 17
      %v1483 = vpop.permute.xlu0 %1482
      %1484 = vrot.lane.b32.xlu0 %v1258, 17
      %v1485 = vpop.permute.xlu0 %1484
      %1486 = vrot.lane.b32.xlu0 %v1259, 17
      %v1487 = vpop.permute.xlu0 %1486
      %1488 = vrot.lane.b32.xlu0 %v1260, 17
      %v1489 = vpop.permute.xlu0 %1488
      %1490 = vrot.lane.b32.xlu0 %v1261, 17
      %v1491 = vpop.permute.xlu0 %1490
      %1492 = vrot.lane.b32.xlu0 %v1262, 17
      %v1493 = vpop.permute.xlu0 %1492
      %1494 = vrot.lane.b32.xlu0 %v1263, 17
      %v1495 = vpop.permute.xlu0 %1494
      %1496 = vrot.lane.b32.xlu0 %v1264, 17
      %v1497 = vpop.permute.xlu0 %1496
      %1498 = vrot.lane.b32.xlu0 %v1265, 17
      %v1499 = vpop.permute.xlu0 %1498
      %1500 = vrot.lane.b32.xlu0 %v1266, 17
      %v1501 = vpop.permute.xlu0 %1500
      %1502 = vrot.lane.b32.xlu0 %v1267, 17
      %v1503 = vpop.permute.xlu0 %1502
      %1504 = vrot.lane.b32.xlu0 %v1268, 17
      %v1505 = vpop.permute.xlu0 %1504
      %1506 = vrot.lane.b32.xlu0 %v1269, 17
      %v1507 = vpop.permute.xlu0 %1506
      %1508 = vrot.lane.b32.xlu0 %v1270, 17
      %v1509 = vpop.permute.xlu0 %1508
      %1510 = vrot.lane.b32.xlu0 %v772, 17
      %v1511 = vpop.permute.xlu0 %1510
      %1512 = vrot.lane.b32.xlu0 %v773, 17
      %v1513 = vpop.permute.xlu0 %1512
      %1514 = vrot.lane.b32.xlu0 %v774, 17
      %v1515 = vpop.permute.xlu0 %1514
      %1516 = vrot.lane.b32.xlu0 %v775, 17
      %v1517 = vpop.permute.xlu0 %1516
      %1518 = vrot.lane.b32.xlu0 %v776, 17
      %v1519 = vpop.permute.xlu0 %1518
      %1520 = vrot.lane.b32.xlu0 %v777, 17
      %v1521 = vpop.permute.xlu0 %1520
      %1522 = vrot.lane.b32.xlu0 %v1275, 17
      %v1523 = vpop.permute.xlu0 %1522
      %1524 = vrot.lane.b32.xlu0 %v779, 17
      %v1525 = vpop.permute.xlu0 %1524
      %1526 = vrot.lane.b32.xlu0 %v780, 17
      %v1527 = vpop.permute.xlu0 %1526
      %1528 = vrot.lane.b32.xlu0 %v781, 17
      %v1529 = vpop.permute.xlu0 %1528
      %1530 = vrot.lane.b32.xlu0 %v782, 17
      %v1531 = vpop.permute.xlu0 %1530
      %1532 = vrot.lane.b32.xlu0 %v783, 17
      %v1533 = vpop.permute.xlu0 %1532
      %1534 = vrot.lane.b32.xlu0 %v784, 17
      %v1535 = vpop.permute.xlu0 %1534
      %1536 = vrot.lane.b32.xlu0 %v1276, 17
      %v1537 = vpop.permute.xlu0 %1536
      %1538 = vrot.lane.b32.xlu0 %v819, 17
      %v1539 = vpop.permute.xlu0 %1538
      %1540 = vrot.lane.b32.xlu0 %v820, 17
      %v1541 = vpop.permute.xlu0 %1540
      %1542 = vrot.lane.b32.xlu0 %v821, 17
      %v1543 = vpop.permute.xlu0 %1542
      %1544 = vrot.lane.b32.xlu0 %v822, 17
      %v1545 = vpop.permute.xlu0 %1544
      %1546 = vrot.lane.b32.xlu0 %v823, 17
      %v1547 = vpop.permute.xlu0 %1546
      %1548 = vrot.lane.b32.xlu0 %v824, 17
      %v1549 = vpop.permute.xlu0 %1548
      %1550 = vrot.lane.b32.xlu0 %v1281, 17
      %v1551 = vpop.permute.xlu0 %1550
      %1552 = vrot.lane.b32.xlu0 %v826, 17
      %v1553 = vpop.permute.xlu0 %1552
      %1554 = vrot.lane.b32.xlu0 %v827, 17
      %v1555 = vpop.permute.xlu0 %1554
      %1556 = vrot.lane.b32.xlu0 %v828, 17
      %v1557 = vpop.permute.xlu0 %1556
      %1558 = vrot.lane.b32.xlu0 %v829, 17
      %v1559 = vpop.permute.xlu0 %1558
      %1560 = vrot.lane.b32.xlu0 %v830, 17
      %v1561 = vpop.permute.xlu0 %1560
      %1562 = vrot.lane.b32.xlu0 %v831, 17
      %v1563 = vpop.permute.xlu0 %1562
      %1564 = vrot.lane.b32.xlu0 %v1282, 17
      %v1565 = vpop.permute.xlu0 %1564
      %1566 = vrot.lane.b32.xlu0 %v1316, 17
      %v1567 = vpop.permute.xlu0 %1566
      %1568 = vrot.lane.b32.xlu0 %v1317, 17
      %v1569 = vpop.permute.xlu0 %1568
      %1570 = vrot.lane.b32.xlu0 %v1318, 17
      %v1571 = vpop.permute.xlu0 %1570
      %1572 = vrot.lane.b32.xlu0 %v1319, 17
      %v1573 = vpop.permute.xlu0 %1572
      %1574 = vrot.lane.b32.xlu0 %v1320, 17
      %v1575 = vpop.permute.xlu0 %1574
      %1576 = vrot.lane.b32.xlu0 %v1321, 17
      %v1577 = vpop.permute.xlu0 %1576
      %1578 = vrot.lane.b32.xlu0 %v1322, 17
      %v1579 = vpop.permute.xlu0 %1578
      %1580 = vrot.lane.b32.xlu0 %v1323, 17
      %v1581 = vpop.permute.xlu0 %1580
      %1582 = vrot.lane.b32.xlu0 %v1324, 17
      %v1583 = vpop.permute.xlu0 %1582
      %1584 = vrot.lane.b32.xlu0 %v1325, 17
      %v1585 = vpop.permute.xlu0 %1584
      %1586 = vrot.lane.b32.xlu0 %v1326, 17
      %v1587 = vpop.permute.xlu0 %1586
      %1588 = vrot.lane.b32.xlu0 %v1327, 17
      %v1589 = vpop.permute.xlu0 %1588
      %1590 = vrot.lane.b32.xlu0 %v1328, 17
      %v1591 = vpop.permute.xlu0 %1590
      %1592 = vrot.lane.b32.xlu0 %v1329, 17
      %v1593 = vpop.permute.xlu0 %1592
      %1594 = vrot.lane.b32.xlu0 %v913, 17
      %v1595 = vpop.permute.xlu0 %1594
      %1596 = vrot.lane.b32.xlu0 %v914, 17
      %v1597 = vpop.permute.xlu0 %1596
      %1598 = vrot.lane.b32.xlu0 %v915, 17
      %v1599 = vpop.permute.xlu0 %1598
      %1600 = vrot.lane.b32.xlu0 %v916, 17
      %v1601 = vpop.permute.xlu0 %1600
      %1602 = vrot.lane.b32.xlu0 %v917, 17
      %v1603 = vpop.permute.xlu0 %1602
      %1604 = vrot.lane.b32.xlu0 %v918, 17
      %v1605 = vpop.permute.xlu0 %1604
      %1606 = vrot.lane.b32.xlu0 %v1334, 17
      %v1607 = vpop.permute.xlu0 %1606
      %1608 = vrot.lane.b32.xlu0 %v920, 17
      %v1609 = vpop.permute.xlu0 %1608
      %1610 = vrot.lane.b32.xlu0 %v921, 17
      %v1611 = vpop.permute.xlu0 %1610
      %1612 = vrot.lane.b32.xlu0 %v922, 17
      %v1613 = vpop.permute.xlu0 %1612
      %1614 = vrot.lane.b32.xlu0 %v923, 17
      %v1615 = vpop.permute.xlu0 %1614
      %1616 = vrot.lane.b32.xlu0 %v924, 17
      %v1617 = vpop.permute.xlu0 %1616
      %1618 = vrot.lane.b32.xlu0 %v925, 17
      %v1619 = vpop.permute.xlu0 %1618
      %1620 = vrot.lane.b32.xlu0 %v1335, 17
      %v1621 = vpop.permute.xlu0 %1620
      %1622 = vrot.lane.b32.xlu0 %v955, 17
      %v1623 = vpop.permute.xlu0 %1622
      %1624 = vrot.lane.b32.xlu0 %v956, 17
      %v1625 = vpop.permute.xlu0 %1624
      %1626 = vrot.lane.b32.xlu0 %v957, 17
      %v1627 = vpop.permute.xlu0 %1626
      %1628 = vrot.lane.b32.xlu0 %v958, 17
      %v1629 = vpop.permute.xlu0 %1628
      %1630 = vrot.lane.b32.xlu0 %v959, 17
      %v1631 = vpop.permute.xlu0 %1630
      %1632 = vrot.lane.b32.xlu0 %v960, 17
      %v1633 = vpop.permute.xlu0 %1632
      %1634 = vrot.lane.b32.xlu0 %v1340, 17
      %v1635 = vpop.permute.xlu0 %1634
      %1636 = vrot.lane.b32.xlu0 %v961, 17
      %v1637 = vpop.permute.xlu0 %1636
      %1638 = vrot.lane.b32.xlu0 %v962, 17
      %v1639 = vpop.permute.xlu0 %1638
      %1640 = vrot.lane.b32.xlu0 %v963, 17
      %v1641 = vpop.permute.xlu0 %1640
      %1642 = vrot.lane.b32.xlu0 %v964, 17
      %v1643 = vpop.permute.xlu0 %1642
      %1644 = vrot.lane.b32.xlu0 %v965, 17
      %v1645 = vpop.permute.xlu0 %1644
      %1646 = vrot.lane.b32.xlu0 %v966, 17
      %v1647 = vpop.permute.xlu0 %1646
      %1648 = vrot.lane.b32.xlu0 %v1341, 17
      %v1649 = vpop.permute.xlu0 %1648
      %v1650 = vsel %vm954, %v1343, %v1345
      %v1651 = vsel %vm954, %v1345, %v1347
      %v1652 = vsel %vm954, %v1347, %v1349
      %v1653 = vsel %vm954, %v1349, %v1351
      %v1654 = vsel %vm954, %v1351, %v1353
      %v1655 = vsel %vm954, %v1353, %v1355
      %v1656 = vsel %vm954, %v1357, %v1359
      %v1657 = vsel %vm954, %v1359, %v1361
      %v1658 = vsel %vm954, %v1361, %v1363
      %v1659 = vsel %vm954, %v1363, %v1365
      %v1660 = vsel %vm954, %v1365, %v1367
      %v1661 = vsel %vm954, %v1367, %v1369
      %v1662 = vsel %vm954, %v1371, %v1373
      %v1663 = vsel %vm954, %v1373, %v1375
      %v1664 = vsel %vm954, %v1375, %v1377
      %v1665 = vsel %vm954, %v1377, %v1379
      %v1666 = vsel %vm954, %v1379, %v1381
      %v1667 = vsel %vm954, %v1381, %v1383
      %v1668 = vsel %vm954, %v1385, %v1387
      %v1669 = vsel %vm954, %v1387, %v1389
      %v1670 = vsel %vm954, %v1389, %v1391
      %v1671 = vsel %vm954, %v1391, %v1393
      %v1672 = vsel %vm954, %v1393, %v1395
      %v1673 = vsel %vm954, %v1395, %v1397
      %v1674 = vsel %vm954, %v1399, %v1401
      %v1675 = vsel %vm954, %v1401, %v1403
      %v1676 = vsel %vm954, %v1403, %v1405
      %v1677 = vsel %vm954, %v1405, %v1407
      %v1678 = vsel %vm954, %v1407, %v1409
      %v1679 = vsel %vm954, %v1409, %v1411
      %v1680 = vsel %vm954, %v1413, %v1415
      %v1681 = vsel %vm954, %v1415, %v1417
      %v1682 = vsel %vm954, %v1417, %v1419
      %v1683 = vsel %vm954, %v1419, %v1421
      %v1684 = vsel %vm954, %v1421, %v1423
      %v1685 = vsel %vm954, %v1423, %v1425
      %v1686 = vsel %vm954, %v1427, %v1429
      %v1687 = vsel %vm954, %v1429, %v1431
      %v1688 = vsel %vm954, %v1431, %v1433
      %v1689 = vsel %vm954, %v1433, %v1435
      %v1690 = vsel %vm954, %v1435, %v1437
      %v1691 = vsel %vm954, %v1437, %v1439
      %v1692 = vsel %vm954, %v1441, %v1443
      %v1693 = vsel %vm954, %v1443, %v1445
      %v1694 = vsel %vm954, %v1445, %v1447
      %v1695 = vsel %vm954, %v1447, %v1449
      %v1696 = vsel %vm954, %v1449, %v1451
      %v1697 = vsel %vm954, %v1451, %v1453
      %v1698 = vsel %vm954, %v1455, %v1457
      %v1699 = vsel %vm954, %v1457, %v1459
      %v1700 = vsel %vm954, %v1459, %v1461
      %v1701 = vsel %vm954, %v1461, %v1463
      %v1702 = vsel %vm954, %v1463, %v1465
      %v1703 = vsel %vm954, %v1465, %v1467
      %v1704 = vsel %vm954, %v1469, %v1471
      %v1705 = vsel %vm954, %v1471, %v1473
      %v1706 = vsel %vm954, %v1473, %v1475
      %v1707 = vsel %vm954, %v1475, %v1477
      %v1708 = vsel %vm954, %v1477, %v1479
      %v1709 = vsel %vm954, %v1479, %v1481
      %v1710 = vsel %vm954, %v1483, %v1485
      %v1711 = vsel %vm954, %v1485, %v1487
      %v1712 = vsel %vm954, %v1487, %v1489
      %v1713 = vsel %vm954, %v1489, %v1491
      %v1714 = vsel %vm954, %v1491, %v1493
      %v1715 = vsel %vm954, %v1493, %v1495
      %v1716 = vsel %vm954, %v1497, %v1499
      %v1717 = vsel %vm954, %v1499, %v1501
      %v1718 = vsel %vm954, %v1501, %v1503
      %v1719 = vsel %vm954, %v1503, %v1505
      %v1720 = vsel %vm954, %v1505, %v1507
      %v1721 = vsel %vm954, %v1507, %v1509
      %v1722 = vsel %vm954, %v1511, %v1513
      %v1723 = vsel %vm954, %v1513, %v1515
      %v1724 = vsel %vm954, %v1515, %v1517
      %v1725 = vsel %vm954, %v1517, %v1519
      %v1726 = vsel %vm954, %v1519, %v1521
      %v1727 = vsel %vm954, %v1521, %v1523
      %v1728 = vsel %vm954, %v1525, %v1527
      %v1729 = vsel %vm954, %v1527, %v1529
      %v1730 = vsel %vm954, %v1529, %v1531
      %v1731 = vsel %vm954, %v1531, %v1533
      %v1732 = vsel %vm954, %v1533, %v1535
      %v1733 = vsel %vm954, %v1535, %v1537
      %v1734 = vsel %vm954, %v1539, %v1541
      %v1735 = vsel %vm954, %v1541, %v1543
      %v1736 = vsel %vm954, %v1543, %v1545
      %v1737 = vsel %vm954, %v1545, %v1547
      %v1738 = vsel %vm954, %v1547, %v1549
      %v1739 = vsel %vm954, %v1549, %v1551
      %v1740 = vsel %vm954, %v1553, %v1555
      %v1741 = vsel %vm954, %v1555, %v1557
      %v1742 = vsel %vm954, %v1557, %v1559
      %v1743 = vsel %vm954, %v1559, %v1561
      %v1744 = vsel %vm954, %v1561, %v1563
      %v1745 = vsel %vm954, %v1563, %v1565
      %v1746 = vsel %vm954, %v1567, %v1569
      %v1747 = vsel %vm954, %v1569, %v1571
      %v1748 = vsel %vm954, %v1571, %v1573
      %v1749 = vsel %vm954, %v1573, %v1575
      %v1750 = vsel %vm954, %v1575, %v1577
      %v1751 = vsel %vm954, %v1577, %v1579
      %v1752 = vsel %vm954, %v1581, %v1583
      %v1753 = vsel %vm954, %v1583, %v1585
      %v1754 = vsel %vm954, %v1585, %v1587
      %v1755 = vsel %vm954, %v1587, %v1589
      %v1756 = vsel %vm954, %v1589, %v1591
      %v1757 = vsel %vm954, %v1591, %v1593
      %v1758 = vsel %vm954, %v1595, %v1597
      %v1759 = vsel %vm954, %v1597, %v1599
      %v1760 = vsel %vm954, %v1599, %v1601
      %v1761 = vsel %vm954, %v1601, %v1603
      %v1762 = vsel %vm954, %v1603, %v1605
      %v1763 = vsel %vm954, %v1605, %v1607
      %v1764 = vsel %vm954, %v1609, %v1611
      %v1765 = vsel %vm954, %v1611, %v1613
      %v1766 = vsel %vm954, %v1613, %v1615
      %v1767 = vsel %vm954, %v1615, %v1617
      %v1768 = vsel %vm954, %v1617, %v1619
      %v1769 = vsel %vm954, %v1619, %v1621
      %v1770 = vsel %vm954, %v1623, %v1625
      %v1771 = vsel %vm954, %v1625, %v1627
      %v1772 = vsel %vm954, %v1627, %v1629
      %v1773 = vsel %vm954, %v1629, %v1631
      %v1774 = vsel %vm954, %v1631, %v1633
      %v1775 = vsel %vm954, %v1633, %v1635
      %v1776 = vsel %vm954, %v1637, %v1639
      %v1777 = vsel %vm954, %v1639, %v1641
      %v1778 = vsel %vm954, %v1641, %v1643
      %v1779 = vsel %vm954, %v1643, %v1645
      %v1780 = vsel %vm954, %v1645, %v1647
      %v1781 = vsel %vm954, %v1647, %v1649
      %v1782 = vld [vmem:[%s1] sm:$0xff]
      %v1783 = vld [vmem:[%s1 + $0x8] sm:$0xff]
      %v1784 = vld [vmem:[%s1 + $0x10] sm:$0xff]
      %v1785 = vld [vmem:[%s1 + $0x18] sm:$0xf]
      %v1786 = vld [vmem:[%s1 + $0x1c] sm:$0xff]
      %v1787 = vld [vmem:[%s1 + $0x24] sm:$0xff]
      %v1788 = vld [vmem:[%s1 + $0x2c] sm:$0xff]
      %v1789 = vld [vmem:[%s1 + $0x34] sm:$0xf]
      %v1790 = vld [vmem:[%s1 + $0x38] sm:$0xff]
      %v1791 = vld [vmem:[%s1 + $0x40] sm:$0xff]
      %v1792 = vld [vmem:[%s1 + $0x48] sm:$0xff]
      %v1793 = vld [vmem:[%s1 + $0x50] sm:$0xf]
      %v1794 = vld [vmem:[%s1 + $0x54] sm:$0xff]
      %v1795 = vld [vmem:[%s1 + $0x5c] sm:$0xff]
      %v1796 = vld [vmem:[%s1 + $0x64] sm:$0xff]
      %v1797 = vld [vmem:[%s1 + $0x6c] sm:$0xf]
      %v1798 = vld [vmem:[%s1 + $0x70] sm:$0xff]
      %v1799 = vld [vmem:[%s1 + $0x78] sm:$0xff]
      %v1800 = vld [vmem:[%s1 + $0x80] sm:$0xff]
      %v1801 = vld [vmem:[%s1 + $0x88] sm:$0xf]
      %v1802 = vld [vmem:[%s1 + $0x8c] sm:$0xff]
      %v1803 = vld [vmem:[%s1 + $0x94] sm:$0xff]
      %v1804 = vld [vmem:[%s1 + $0x9c] sm:$0xff]
      %v1805 = vld [vmem:[%s1 + $0xa4] sm:$0xf]
      %v1806 = vld [vmem:[%s1 + $0xa8] sm:$0xff]
      %v1807 = vld [vmem:[%s1 + $0xb0] sm:$0xff]
      %v1808 = vld [vmem:[%s1 + $0xb8] sm:$0xff]
      %v1809 = vld [vmem:[%s1 + $0xc0] sm:$0xf]
      %v1810 = vld [vmem:[%s1 + $0xc4] sm:$0xff]
      %v1811 = vld [vmem:[%s1 + $0xcc] sm:$0xff]
      %v1812 = vld [vmem:[%s1 + $0xd4] sm:$0xff]
      %v1813 = vld [vmem:[%s1 + $0xdc] sm:$0xf]
      %v1814 = vld [vmem:[%s2] sm:$0xff]
      %v1815 = vld [vmem:[%s2 + $0x8] sm:$0xff]
      %v1816 = vld [vmem:[%s2 + $0x10] sm:$0xff]
      %v1817 = vld [vmem:[%s2 + $0x18] sm:$0xff]
      %v1818 = vld [vmem:[%s2 + $0x20] sm:$0xff]
      %v1819 = vld [vmem:[%s2 + $0x28] sm:$0xff]
      %v1820 = vld [vmem:[%s2 + $0x30] sm:$0xff]
      %v1821 = vld [vmem:[%s2 + $0x38] sm:$0xff]
      %1823 = vset.pattern.permute.xlu0 0
      %1824 = vperm.xlu0 %1823, %v1814
      %v1825 = vpop.permute.xlu0 %1824
      %1828 = vset.pattern.permute.xlu0 0
      %1829 = vperm.xlu0 %1828, %v1815
      %v1830 = vpop.permute.xlu0 %1829
      %1833 = vset.pattern.permute.xlu0 0
      %1834 = vperm.xlu0 %1833, %v1816
      %v1835 = vpop.permute.xlu0 %1834
      %1838 = vset.pattern.permute.xlu0 0
      %1839 = vperm.xlu0 %1838, %v1817
      %v1840 = vpop.permute.xlu0 %1839
      %1843 = vset.pattern.permute.xlu0 0
      %1844 = vperm.xlu0 %1843, %v1818
      %v1845 = vpop.permute.xlu0 %1844
      %1848 = vset.pattern.permute.xlu0 0
      %1849 = vperm.xlu0 %1848, %v1819
      %v1850 = vpop.permute.xlu0 %1849
      %1853 = vset.pattern.permute.xlu0 0
      %1854 = vperm.xlu0 %1853, %v1820
      %v1855 = vpop.permute.xlu0 %1854
      %1858 = vset.pattern.permute.xlu0 0
      %1859 = vperm.xlu0 %1858, %v1821
      %v1860 = vpop.permute.xlu0 %1859
      %v1894 = vunpack.c.l.b16 %v1782
      %v1895 = vunpack.c.h.b16 %v1782
      %v1896 = vunpack.c.l.b16 %v1783
      %v1897 = vunpack.c.h.b16 %v1783
      %v1898 = vunpack.c.l.b16 %v1784
      %v1899 = vunpack.c.h.b16 %v1784
      %v1900 = vunpack.c.l.b16 %v1785
      %v1901 = vunpack.c.l.b16 %v1786
      %v1902 = vunpack.c.h.b16 %v1786
      %v1903 = vunpack.c.l.b16 %v1787
      %v1904 = vunpack.c.h.b16 %v1787
      %v1905 = vunpack.c.l.b16 %v1788
      %v1906 = vunpack.c.h.b16 %v1788
      %v1907 = vunpack.c.l.b16 %v1789
      %v1908 = vunpack.c.l.b16 %v1790
      %v1909 = vunpack.c.h.b16 %v1790
      %v1910 = vunpack.c.l.b16 %v1791
      %v1911 = vunpack.c.h.b16 %v1791
      %v1912 = vunpack.c.l.b16 %v1792
      %v1913 = vunpack.c.h.b16 %v1792
      %v1914 = vunpack.c.l.b16 %v1793
      %v1915 = vunpack.c.l.b16 %v1794
      %v1916 = vunpack.c.h.b16 %v1794
      %v1917 = vunpack.c.l.b16 %v1795
      %v1918 = vunpack.c.h.b16 %v1795
      %v1919 = vunpack.c.l.b16 %v1796
      %v1920 = vunpack.c.h.b16 %v1796
      %v1921 = vunpack.c.l.b16 %v1797
      %v1922 = vunpack.c.l.b16 %v1798
      %v1923 = vunpack.c.h.b16 %v1798
      %v1924 = vunpack.c.l.b16 %v1799
      %v1925 = vunpack.c.h.b16 %v1799
      %v1926 = vunpack.c.l.b16 %v1800
      %v1927 = vunpack.c.h.b16 %v1800
      %v1928 = vunpack.c.l.b16 %v1801
      %v1929 = vunpack.c.l.b16 %v1802
      %v1930 = vunpack.c.h.b16 %v1802
      %v1931 = vunpack.c.l.b16 %v1803
      %v1932 = vunpack.c.h.b16 %v1803
      %v1933 = vunpack.c.l.b16 %v1804
      %v1934 = vunpack.c.h.b16 %v1804
      %v1935 = vunpack.c.l.b16 %v1805
      %v1936 = vunpack.c.l.b16 %v1806
      %v1937 = vunpack.c.h.b16 %v1806
      %v1938 = vunpack.c.l.b16 %v1807
      %v1939 = vunpack.c.h.b16 %v1807
      %v1940 = vunpack.c.l.b16 %v1808
      %v1941 = vunpack.c.h.b16 %v1808
      %v1942 = vunpack.c.l.b16 %v1809
      %v1943 = vunpack.c.l.b16 %v1810
      %v1944 = vunpack.c.h.b16 %v1810
      %v1945 = vunpack.c.l.b16 %v1811
      %v1946 = vunpack.c.h.b16 %v1811
      %v1947 = vunpack.c.l.b16 %v1812
      %v1948 = vunpack.c.h.b16 %v1812
      %v1949 = vunpack.c.l.b16 %v1813
      %v1950 = vpack.c.b16 %v1901, %v1894
      %v1951 = vpack.c.b16 %v1902, %v1895
      %v1952 = vpack.c.b16 %v1903, %v1896
      %v1953 = vpack.c.b16 %v1904, %v1897
      %v1954 = vpack.c.b16 %v1905, %v1898
      %v1955 = vpack.c.b16 %v1906, %v1899
      %v1956 = vpack.c.b16 %v1907, %v1900
      %v1957 = vpack.c.b16 %v1915, %v1908
      %v1958 = vpack.c.b16 %v1916, %v1909
      %v1959 = vpack.c.b16 %v1917, %v1910
      %v1960 = vpack.c.b16 %v1918, %v1911
      %v1961 = vpack.c.b16 %v1919, %v1912
      %v1962 = vpack.c.b16 %v1920, %v1913
      %v1963 = vpack.c.b16 %v1921, %v1914
      %v1964 = vpack.c.b16 %v1929, %v1922
      %v1965 = vpack.c.b16 %v1930, %v1923
      %v1966 = vpack.c.b16 %v1931, %v1924
      %v1967 = vpack.c.b16 %v1932, %v1925
      %v1968 = vpack.c.b16 %v1933, %v1926
      %v1969 = vpack.c.b16 %v1934, %v1927
      %v1970 = vpack.c.b16 %v1935, %v1928
      %v1971 = vpack.c.b16 %v1943, %v1936
      %v1972 = vpack.c.b16 %v1944, %v1937
      %v1973 = vpack.c.b16 %v1945, %v1938
      %v1974 = vpack.c.b16 %v1946, %v1939
      %v1975 = vpack.c.b16 %v1947, %v1940
      %v1976 = vpack.c.b16 %v1948, %v1941
      %v1977 = vpack.c.b16 %v1949, %v1942
      %2002 = vrot.lane.b32.xlu0 %v346, 111
      %v2003 = vpop.permute.xlu0 %2002
      %2004 = vrot.lane.b32.xlu0 %v347, 111
      %v2005 = vpop.permute.xlu0 %2004
      %2006 = vrot.lane.b32.xlu0 %v348, 111
      %v2007 = vpop.permute.xlu0 %2006
      %2008 = vrot.lane.b32.xlu0 %v349, 111
      %v2009 = vpop.permute.xlu0 %2008
      %2010 = vrot.lane.b32.xlu0 %v350, 111
      %v2011 = vpop.permute.xlu0 %2010
      %2012 = vrot.lane.b32.xlu0 %v351, 111
      %v2013 = vpop.permute.xlu0 %2012
      %2014 = vrot.lane.b32.xlu0 %v352, 111
      %v2015 = vpop.permute.xlu0 %2014
      %2016 = vrot.lane.b32.xlu0 %v353, 111
      %v2017 = vpop.permute.xlu0 %2016
      %2018 = vrot.lane.b32.xlu0 %v354, 111
      %v2019 = vpop.permute.xlu0 %2018
      %2020 = vrot.lane.b32.xlu0 %v355, 111
      %v2021 = vpop.permute.xlu0 %2020
      %2022 = vrot.lane.b32.xlu0 %v356, 111
      %v2023 = vpop.permute.xlu0 %2022
      %2024 = vrot.lane.b32.xlu0 %v357, 111
      %v2025 = vpop.permute.xlu0 %2024
      %2026 = vrot.lane.b32.xlu0 %v358, 111
      %v2027 = vpop.permute.xlu0 %2026
      %2028 = vrot.lane.b32.xlu0 %v359, 111
      %v2029 = vpop.permute.xlu0 %2028
      %2030 = vrot.lane.b32.xlu0 %v360, 111
      %v2031 = vpop.permute.xlu0 %2030
      %2032 = vrot.lane.b32.xlu0 %v361, 111
      %v2033 = vpop.permute.xlu0 %2032
      %2034 = vrot.lane.b32.xlu0 %v395, 111
      %v2035 = vpop.permute.xlu0 %2034
      %2036 = vrot.lane.b32.xlu0 %v396, 111
      %v2037 = vpop.permute.xlu0 %2036
      %2038 = vrot.lane.b32.xlu0 %v397, 111
      %v2039 = vpop.permute.xlu0 %2038
      %2040 = vrot.lane.b32.xlu0 %v398, 111
      %v2041 = vpop.permute.xlu0 %2040
      %2042 = vrot.lane.b32.xlu0 %v399, 111
      %v2043 = vpop.permute.xlu0 %2042
      %2044 = vrot.lane.b32.xlu0 %v400, 111
      %v2045 = vpop.permute.xlu0 %2044
      %2046 = vrot.lane.b32.xlu0 %v401, 111
      %v2047 = vpop.permute.xlu0 %2046
      %2048 = vrot.lane.b32.xlu0 %v377, 111
      %v2049 = vpop.permute.xlu0 %2048
      %2050 = vrot.lane.b32.xlu0 %v402, 111
      %v2051 = vpop.permute.xlu0 %2050
      %2052 = vrot.lane.b32.xlu0 %v403, 111
      %v2053 = vpop.permute.xlu0 %2052
      %2054 = vrot.lane.b32.xlu0 %v404, 111
      %v2055 = vpop.permute.xlu0 %2054
      %2056 = vrot.lane.b32.xlu0 %v405, 111
      %v2057 = vpop.permute.xlu0 %2056
      %2058 = vrot.lane.b32.xlu0 %v406, 111
      %v2059 = vpop.permute.xlu0 %2058
      %2060 = vrot.lane.b32.xlu0 %v407, 111
      %v2061 = vpop.permute.xlu0 %2060
      %2062 = vrot.lane.b32.xlu0 %v408, 111
      %v2063 = vpop.permute.xlu0 %2062
      %2064 = vrot.lane.b32.xlu0 %v393, 111
      %v2065 = vpop.permute.xlu0 %2064
      %2066 = vrot.lane.b32.xlu0 %v442, 111
      %v2067 = vpop.permute.xlu0 %2066
      %2068 = vrot.lane.b32.xlu0 %v443, 111
      %v2069 = vpop.permute.xlu0 %2068
      %2070 = vrot.lane.b32.xlu0 %v444, 111
      %v2071 = vpop.permute.xlu0 %2070
      %2072 = vrot.lane.b32.xlu0 %v445, 111
      %v2073 = vpop.permute.xlu0 %2072
      %2074 = vrot.lane.b32.xlu0 %v446, 111
      %v2075 = vpop.permute.xlu0 %2074
      %2076 = vrot.lane.b32.xlu0 %v447, 111
      %v2077 = vpop.permute.xlu0 %2076
      %2078 = vrot.lane.b32.xlu0 %v448, 111
      %v2079 = vpop.permute.xlu0 %2078
      %2080 = vrot.lane.b32.xlu0 %v424, 111
      %v2081 = vpop.permute.xlu0 %2080
      %2082 = vrot.lane.b32.xlu0 %v449, 111
      %v2083 = vpop.permute.xlu0 %2082
      %2084 = vrot.lane.b32.xlu0 %v450, 111
      %v2085 = vpop.permute.xlu0 %2084
      %2086 = vrot.lane.b32.xlu0 %v451, 111
      %v2087 = vpop.permute.xlu0 %2086
      %2088 = vrot.lane.b32.xlu0 %v452, 111
      %v2089 = vpop.permute.xlu0 %2088
      %2090 = vrot.lane.b32.xlu0 %v453, 111
      %v2091 = vpop.permute.xlu0 %2090
      %2092 = vrot.lane.b32.xlu0 %v454, 111
      %v2093 = vpop.permute.xlu0 %2092
      %2094 = vrot.lane.b32.xlu0 %v455, 111
      %v2095 = vpop.permute.xlu0 %2094
      %2096 = vrot.lane.b32.xlu0 %v440, 111
      %v2097 = vpop.permute.xlu0 %2096
      %2098 = vrot.lane.b32.xlu0 %v489, 111
      %v2099 = vpop.permute.xlu0 %2098
      %2100 = vrot.lane.b32.xlu0 %v490, 111
      %v2101 = vpop.permute.xlu0 %2100
      %2102 = vrot.lane.b32.xlu0 %v491, 111
      %v2103 = vpop.permute.xlu0 %2102
      %2104 = vrot.lane.b32.xlu0 %v492, 111
      %v2105 = vpop.permute.xlu0 %2104
      %2106 = vrot.lane.b32.xlu0 %v493, 111
      %v2107 = vpop.permute.xlu0 %2106
      %2108 = vrot.lane.b32.xlu0 %v494, 111
      %v2109 = vpop.permute.xlu0 %2108
      %2110 = vrot.lane.b32.xlu0 %v495, 111
      %v2111 = vpop.permute.xlu0 %2110
      %2112 = vrot.lane.b32.xlu0 %v471, 111
      %v2113 = vpop.permute.xlu0 %2112
      %2114 = vrot.lane.b32.xlu0 %v496, 111
      %v2115 = vpop.permute.xlu0 %2114
      %2116 = vrot.lane.b32.xlu0 %v497, 111
      %v2117 = vpop.permute.xlu0 %2116
      %2118 = vrot.lane.b32.xlu0 %v498, 111
      %v2119 = vpop.permute.xlu0 %2118
      %2120 = vrot.lane.b32.xlu0 %v499, 111
      %v2121 = vpop.permute.xlu0 %2120
      %2122 = vrot.lane.b32.xlu0 %v500, 111
      %v2123 = vpop.permute.xlu0 %2122
      %2124 = vrot.lane.b32.xlu0 %v501, 111
      %v2125 = vpop.permute.xlu0 %2124
      %2126 = vrot.lane.b32.xlu0 %v502, 111
      %v2127 = vpop.permute.xlu0 %2126
      %2128 = vrot.lane.b32.xlu0 %v487, 111
      %v2129 = vpop.permute.xlu0 %2128
      %2130 = vrot.lane.b32.xlu0 %v536, 111
      %v2131 = vpop.permute.xlu0 %2130
      %2132 = vrot.lane.b32.xlu0 %v537, 111
      %v2133 = vpop.permute.xlu0 %2132
      %2134 = vrot.lane.b32.xlu0 %v538, 111
      %v2135 = vpop.permute.xlu0 %2134
      %2136 = vrot.lane.b32.xlu0 %v539, 111
      %v2137 = vpop.permute.xlu0 %2136
      %2138 = vrot.lane.b32.xlu0 %v540, 111
      %v2139 = vpop.permute.xlu0 %2138
      %2140 = vrot.lane.b32.xlu0 %v541, 111
      %v2141 = vpop.permute.xlu0 %2140
      %2142 = vrot.lane.b32.xlu0 %v542, 111
      %v2143 = vpop.permute.xlu0 %2142
      %2144 = vrot.lane.b32.xlu0 %v518, 111
      %v2145 = vpop.permute.xlu0 %2144
      %2146 = vrot.lane.b32.xlu0 %v543, 111
      %v2147 = vpop.permute.xlu0 %2146
      %2148 = vrot.lane.b32.xlu0 %v544, 111
      %v2149 = vpop.permute.xlu0 %2148
      %2150 = vrot.lane.b32.xlu0 %v545, 111
      %v2151 = vpop.permute.xlu0 %2150
      %2152 = vrot.lane.b32.xlu0 %v546, 111
      %v2153 = vpop.permute.xlu0 %2152
      %2154 = vrot.lane.b32.xlu0 %v547, 111
      %v2155 = vpop.permute.xlu0 %2154
      %2156 = vrot.lane.b32.xlu0 %v548, 111
      %v2157 = vpop.permute.xlu0 %2156
      %2158 = vrot.lane.b32.xlu0 %v549, 111
      %v2159 = vpop.permute.xlu0 %2158
      %2160 = vrot.lane.b32.xlu0 %v534, 111
      %v2161 = vpop.permute.xlu0 %2160
      %2162 = vrot.lane.b32.xlu0 %v583, 111
      %v2163 = vpop.permute.xlu0 %2162
      %2164 = vrot.lane.b32.xlu0 %v584, 111
      %v2165 = vpop.permute.xlu0 %2164
      %2166 = vrot.lane.b32.xlu0 %v585, 111
      %v2167 = vpop.permute.xlu0 %2166
      %2168 = vrot.lane.b32.xlu0 %v586, 111
      %v2169 = vpop.permute.xlu0 %2168
      %2170 = vrot.lane.b32.xlu0 %v587, 111
      %v2171 = vpop.permute.xlu0 %2170
      %2172 = vrot.lane.b32.xlu0 %v588, 111
      %v2173 = vpop.permute.xlu0 %2172
      %2174 = vrot.lane.b32.xlu0 %v589, 111
      %v2175 = vpop.permute.xlu0 %2174
      %2176 = vrot.lane.b32.xlu0 %v565, 111
      %v2177 = vpop.permute.xlu0 %2176
      %2178 = vrot.lane.b32.xlu0 %v590, 111
      %v2179 = vpop.permute.xlu0 %2178
      %2180 = vrot.lane.b32.xlu0 %v591, 111
      %v2181 = vpop.permute.xlu0 %2180
      %2182 = vrot.lane.b32.xlu0 %v592, 111
      %v2183 = vpop.permute.xlu0 %2182
      %2184 = vrot.lane.b32.xlu0 %v593, 111
      %v2185 = vpop.permute.xlu0 %2184
      %2186 = vrot.lane.b32.xlu0 %v594, 111
      %v2187 = vpop.permute.xlu0 %2186
      %2188 = vrot.lane.b32.xlu0 %v595, 111
      %v2189 = vpop.permute.xlu0 %2188
      %2190 = vrot.lane.b32.xlu0 %v596, 111
      %v2191 = vpop.permute.xlu0 %2190
      %2192 = vrot.lane.b32.xlu0 %v581, 111
      %v2193 = vpop.permute.xlu0 %2192
      %2194 = vrot.lane.b32.xlu0 %v630, 111
      %v2195 = vpop.permute.xlu0 %2194
      %2196 = vrot.lane.b32.xlu0 %v631, 111
      %v2197 = vpop.permute.xlu0 %2196
      %2198 = vrot.lane.b32.xlu0 %v632, 111
      %v2199 = vpop.permute.xlu0 %2198
      %2200 = vrot.lane.b32.xlu0 %v633, 111
      %v2201 = vpop.permute.xlu0 %2200
      %2202 = vrot.lane.b32.xlu0 %v634, 111
      %v2203 = vpop.permute.xlu0 %2202
      %2204 = vrot.lane.b32.xlu0 %v635, 111
      %v2205 = vpop.permute.xlu0 %2204
      %2206 = vrot.lane.b32.xlu0 %v636, 111
      %v2207 = vpop.permute.xlu0 %2206
      %2208 = vrot.lane.b32.xlu0 %v612, 111
      %v2209 = vpop.permute.xlu0 %2208
      %2210 = vrot.lane.b32.xlu0 %v637, 111
      %v2211 = vpop.permute.xlu0 %2210
      %2212 = vrot.lane.b32.xlu0 %v638, 111
      %v2213 = vpop.permute.xlu0 %2212
      %2214 = vrot.lane.b32.xlu0 %v639, 111
      %v2215 = vpop.permute.xlu0 %2214
      %2216 = vrot.lane.b32.xlu0 %v640, 111
      %v2217 = vpop.permute.xlu0 %2216
      %2218 = vrot.lane.b32.xlu0 %v641, 111
      %v2219 = vpop.permute.xlu0 %2218
      %2220 = vrot.lane.b32.xlu0 %v642, 111
      %v2221 = vpop.permute.xlu0 %2220
      %2222 = vrot.lane.b32.xlu0 %v643, 111
      %v2223 = vpop.permute.xlu0 %2222
      %2224 = vrot.lane.b32.xlu0 %v628, 111
      %v2225 = vpop.permute.xlu0 %2224
      %2226 = vrot.lane.b32.xlu0 %v677, 111
      %v2227 = vpop.permute.xlu0 %2226
      %2228 = vrot.lane.b32.xlu0 %v678, 111
      %v2229 = vpop.permute.xlu0 %2228
      %2230 = vrot.lane.b32.xlu0 %v679, 111
      %v2231 = vpop.permute.xlu0 %2230
      %2232 = vrot.lane.b32.xlu0 %v680, 111
      %v2233 = vpop.permute.xlu0 %2232
      %2234 = vrot.lane.b32.xlu0 %v681, 111
      %v2235 = vpop.permute.xlu0 %2234
      %2236 = vrot.lane.b32.xlu0 %v682, 111
      %v2237 = vpop.permute.xlu0 %2236
      %2238 = vrot.lane.b32.xlu0 %v683, 111
      %v2239 = vpop.permute.xlu0 %2238
      %2240 = vrot.lane.b32.xlu0 %v659, 111
      %v2241 = vpop.permute.xlu0 %2240
      %2242 = vrot.lane.b32.xlu0 %v684, 111
      %v2243 = vpop.permute.xlu0 %2242
      %2244 = vrot.lane.b32.xlu0 %v685, 111
      %v2245 = vpop.permute.xlu0 %2244
      %2246 = vrot.lane.b32.xlu0 %v686, 111
      %v2247 = vpop.permute.xlu0 %2246
      %2248 = vrot.lane.b32.xlu0 %v687, 111
      %v2249 = vpop.permute.xlu0 %2248
      %2250 = vrot.lane.b32.xlu0 %v688, 111
      %v2251 = vpop.permute.xlu0 %2250
      %2252 = vrot.lane.b32.xlu0 %v689, 111
      %v2253 = vpop.permute.xlu0 %2252
      %2254 = vrot.lane.b32.xlu0 %v690, 111
      %v2255 = vpop.permute.xlu0 %2254
      %2256 = vrot.lane.b32.xlu0 %v675, 111
      %v2257 = vpop.permute.xlu0 %2256
      %2258 = vrot.lane.b32.xlu0 %v724, 111
      %v2259 = vpop.permute.xlu0 %2258
      %2260 = vrot.lane.b32.xlu0 %v725, 111
      %v2261 = vpop.permute.xlu0 %2260
      %2262 = vrot.lane.b32.xlu0 %v726, 111
      %v2263 = vpop.permute.xlu0 %2262
      %2264 = vrot.lane.b32.xlu0 %v727, 111
      %v2265 = vpop.permute.xlu0 %2264
      %2266 = vrot.lane.b32.xlu0 %v728, 111
      %v2267 = vpop.permute.xlu0 %2266
      %2268 = vrot.lane.b32.xlu0 %v729, 111
      %v2269 = vpop.permute.xlu0 %2268
      %2270 = vrot.lane.b32.xlu0 %v730, 111
      %v2271 = vpop.permute.xlu0 %2270
      %2272 = vrot.lane.b32.xlu0 %v706, 111
      %v2273 = vpop.permute.xlu0 %2272
      %2274 = vrot.lane.b32.xlu0 %v731, 111
      %v2275 = vpop.permute.xlu0 %2274
      %2276 = vrot.lane.b32.xlu0 %v732, 111
      %v2277 = vpop.permute.xlu0 %2276
      %2278 = vrot.lane.b32.xlu0 %v733, 111
      %v2279 = vpop.permute.xlu0 %2278
      %2280 = vrot.lane.b32.xlu0 %v734, 111
      %v2281 = vpop.permute.xlu0 %2280
      %2282 = vrot.lane.b32.xlu0 %v735, 111
      %v2283 = vpop.permute.xlu0 %2282
      %2284 = vrot.lane.b32.xlu0 %v736, 111
      %v2285 = vpop.permute.xlu0 %2284
      %2286 = vrot.lane.b32.xlu0 %v737, 111
      %v2287 = vpop.permute.xlu0 %2286
      %2288 = vrot.lane.b32.xlu0 %v722, 111
      %v2289 = vpop.permute.xlu0 %2288
      %2290 = vrot.lane.b32.xlu0 %v771, 111
      %v2291 = vpop.permute.xlu0 %2290
      %2292 = vrot.lane.b32.xlu0 %v772, 111
      %v2293 = vpop.permute.xlu0 %2292
      %2294 = vrot.lane.b32.xlu0 %v773, 111
      %v2295 = vpop.permute.xlu0 %2294
      %2296 = vrot.lane.b32.xlu0 %v774, 111
      %v2297 = vpop.permute.xlu0 %2296
      %2298 = vrot.lane.b32.xlu0 %v775, 111
      %v2299 = vpop.permute.xlu0 %2298
      %2300 = vrot.lane.b32.xlu0 %v776, 111
      %v2301 = vpop.permute.xlu0 %2300
      %2302 = vrot.lane.b32.xlu0 %v777, 111
      %v2303 = vpop.permute.xlu0 %2302
      %2304 = vrot.lane.b32.xlu0 %v753, 111
      %v2305 = vpop.permute.xlu0 %2304
      %2306 = vrot.lane.b32.xlu0 %v778, 111
      %v2307 = vpop.permute.xlu0 %2306
      %2308 = vrot.lane.b32.xlu0 %v779, 111
      %v2309 = vpop.permute.xlu0 %2308
      %2310 = vrot.lane.b32.xlu0 %v780, 111
      %v2311 = vpop.permute.xlu0 %2310
      %2312 = vrot.lane.b32.xlu0 %v781, 111
      %v2313 = vpop.permute.xlu0 %2312
      %2314 = vrot.lane.b32.xlu0 %v782, 111
      %v2315 = vpop.permute.xlu0 %2314
      %2316 = vrot.lane.b32.xlu0 %v783, 111
      %v2317 = vpop.permute.xlu0 %2316
      %2318 = vrot.lane.b32.xlu0 %v784, 111
      %v2319 = vpop.permute.xlu0 %2318
      %2320 = vrot.lane.b32.xlu0 %v769, 111
      %v2321 = vpop.permute.xlu0 %2320
      %2322 = vrot.lane.b32.xlu0 %v818, 111
      %v2323 = vpop.permute.xlu0 %2322
      %2324 = vrot.lane.b32.xlu0 %v819, 111
      %v2325 = vpop.permute.xlu0 %2324
      %2326 = vrot.lane.b32.xlu0 %v820, 111
      %v2327 = vpop.permute.xlu0 %2326
      %2328 = vrot.lane.b32.xlu0 %v821, 111
      %v2329 = vpop.permute.xlu0 %2328
      %2330 = vrot.lane.b32.xlu0 %v822, 111
      %v2331 = vpop.permute.xlu0 %2330
      %2332 = vrot.lane.b32.xlu0 %v823, 111
      %v2333 = vpop.permute.xlu0 %2332
      %2334 = vrot.lane.b32.xlu0 %v824, 111
      %v2335 = vpop.permute.xlu0 %2334
      %2336 = vrot.lane.b32.xlu0 %v800, 111
      %v2337 = vpop.permute.xlu0 %2336
      %2338 = vrot.lane.b32.xlu0 %v825, 111
      %v2339 = vpop.permute.xlu0 %2338
      %2340 = vrot.lane.b32.xlu0 %v826, 111
      %v2341 = vpop.permute.xlu0 %2340
      %2342 = vrot.lane.b32.xlu0 %v827, 111
      %v2343 = vpop.permute.xlu0 %2342
      %2344 = vrot.lane.b32.xlu0 %v828, 111
      %v2345 = vpop.permute.xlu0 %2344
      %2346 = vrot.lane.b32.xlu0 %v829, 111
      %v2347 = vpop.permute.xlu0 %2346
      %2348 = vrot.lane.b32.xlu0 %v830, 111
      %v2349 = vpop.permute.xlu0 %2348
      %2350 = vrot.lane.b32.xlu0 %v831, 111
      %v2351 = vpop.permute.xlu0 %2350
      %2352 = vrot.lane.b32.xlu0 %v816, 111
      %v2353 = vpop.permute.xlu0 %2352
      %2354 = vrot.lane.b32.xlu0 %v865, 111
      %v2355 = vpop.permute.xlu0 %2354
      %2356 = vrot.lane.b32.xlu0 %v866, 111
      %v2357 = vpop.permute.xlu0 %2356
      %2358 = vrot.lane.b32.xlu0 %v867, 111
      %v2359 = vpop.permute.xlu0 %2358
      %2360 = vrot.lane.b32.xlu0 %v868, 111
      %v2361 = vpop.permute.xlu0 %2360
      %2362 = vrot.lane.b32.xlu0 %v869, 111
      %v2363 = vpop.permute.xlu0 %2362
      %2364 = vrot.lane.b32.xlu0 %v870, 111
      %v2365 = vpop.permute.xlu0 %2364
      %2366 = vrot.lane.b32.xlu0 %v871, 111
      %v2367 = vpop.permute.xlu0 %2366
      %2368 = vrot.lane.b32.xlu0 %v847, 111
      %v2369 = vpop.permute.xlu0 %2368
      %2370 = vrot.lane.b32.xlu0 %v872, 111
      %v2371 = vpop.permute.xlu0 %2370
      %2372 = vrot.lane.b32.xlu0 %v873, 111
      %v2373 = vpop.permute.xlu0 %2372
      %2374 = vrot.lane.b32.xlu0 %v874, 111
      %v2375 = vpop.permute.xlu0 %2374
      %2376 = vrot.lane.b32.xlu0 %v875, 111
      %v2377 = vpop.permute.xlu0 %2376
      %2378 = vrot.lane.b32.xlu0 %v876, 111
      %v2379 = vpop.permute.xlu0 %2378
      %2380 = vrot.lane.b32.xlu0 %v877, 111
      %v2381 = vpop.permute.xlu0 %2380
      %2382 = vrot.lane.b32.xlu0 %v878, 111
      %v2383 = vpop.permute.xlu0 %2382
      %2384 = vrot.lane.b32.xlu0 %v863, 111
      %v2385 = vpop.permute.xlu0 %2384
      %2386 = vrot.lane.b32.xlu0 %v912, 111
      %v2387 = vpop.permute.xlu0 %2386
      %2388 = vrot.lane.b32.xlu0 %v913, 111
      %v2389 = vpop.permute.xlu0 %2388
      %2390 = vrot.lane.b32.xlu0 %v914, 111
      %v2391 = vpop.permute.xlu0 %2390
      %2392 = vrot.lane.b32.xlu0 %v915, 111
      %v2393 = vpop.permute.xlu0 %2392
      %2394 = vrot.lane.b32.xlu0 %v916, 111
      %v2395 = vpop.permute.xlu0 %2394
      %2396 = vrot.lane.b32.xlu0 %v917, 111
      %v2397 = vpop.permute.xlu0 %2396
      %2398 = vrot.lane.b32.xlu0 %v918, 111
      %v2399 = vpop.permute.xlu0 %2398
      %2400 = vrot.lane.b32.xlu0 %v894, 111
      %v2401 = vpop.permute.xlu0 %2400
      %2402 = vrot.lane.b32.xlu0 %v919, 111
      %v2403 = vpop.permute.xlu0 %2402
      %2404 = vrot.lane.b32.xlu0 %v920, 111
      %v2405 = vpop.permute.xlu0 %2404
      %2406 = vrot.lane.b32.xlu0 %v921, 111
      %v2407 = vpop.permute.xlu0 %2406
      %2408 = vrot.lane.b32.xlu0 %v922, 111
      %v2409 = vpop.permute.xlu0 %2408
      %2410 = vrot.lane.b32.xlu0 %v923, 111
      %v2411 = vpop.permute.xlu0 %2410
      %2412 = vrot.lane.b32.xlu0 %v924, 111
      %v2413 = vpop.permute.xlu0 %2412
      %2414 = vrot.lane.b32.xlu0 %v925, 111
      %v2415 = vpop.permute.xlu0 %2414
      %2416 = vrot.lane.b32.xlu0 %v910, 111
      %v2417 = vpop.permute.xlu0 %2416
      %2418 = vrot.lane.b32.xlu0 %v927, 111
      %v2419 = vpop.permute.xlu0 %2418
      %2420 = vrot.lane.b32.xlu0 %v955, 111
      %v2421 = vpop.permute.xlu0 %2420
      %2422 = vrot.lane.b32.xlu0 %v956, 111
      %v2423 = vpop.permute.xlu0 %2422
      %2424 = vrot.lane.b32.xlu0 %v957, 111
      %v2425 = vpop.permute.xlu0 %2424
      %2426 = vrot.lane.b32.xlu0 %v958, 111
      %v2427 = vpop.permute.xlu0 %2426
      %2428 = vrot.lane.b32.xlu0 %v959, 111
      %v2429 = vpop.permute.xlu0 %2428
      %2430 = vrot.lane.b32.xlu0 %v960, 111
      %v2431 = vpop.permute.xlu0 %2430
      %2432 = vrot.lane.b32.xlu0 %v939, 111
      %v2433 = vpop.permute.xlu0 %2432
      %2434 = vrot.lane.b32.xlu0 %v941, 111
      %v2435 = vpop.permute.xlu0 %2434
      %2436 = vrot.lane.b32.xlu0 %v961, 111
      %v2437 = vpop.permute.xlu0 %2436
      %2438 = vrot.lane.b32.xlu0 %v962, 111
      %v2439 = vpop.permute.xlu0 %2438
      %2440 = vrot.lane.b32.xlu0 %v963, 111
      %v2441 = vpop.permute.xlu0 %2440
      %2442 = vrot.lane.b32.xlu0 %v964, 111
      %v2443 = vpop.permute.xlu0 %2442
      %2444 = vrot.lane.b32.xlu0 %v965, 111
      %v2445 = vpop.permute.xlu0 %2444
      %2446 = vrot.lane.b32.xlu0 %v966, 111
      %v2447 = vpop.permute.xlu0 %2446
      %2448 = vrot.lane.b32.xlu0 %v953, 111
      %v2449 = vpop.permute.xlu0 %2448
      %2450 = vrot.lane.b32.xlu0 %v978, 111
      %v2451 = vpop.permute.xlu0 %2450
      %2452 = vrot.lane.b32.xlu0 %v1010, 111
      %v2453 = vpop.permute.xlu0 %2452
      %2454 = vrot.lane.b32.xlu0 %v1011, 111
      %v2455 = vpop.permute.xlu0 %2454
      %2456 = vrot.lane.b32.xlu0 %v1012, 111
      %v2457 = vpop.permute.xlu0 %2456
      %2458 = vrot.lane.b32.xlu0 %v1013, 111
      %v2459 = vpop.permute.xlu0 %2458
      %2460 = vrot.lane.b32.xlu0 %v1014, 111
      %v2461 = vpop.permute.xlu0 %2460
      %2462 = vrot.lane.b32.xlu0 %v1015, 111
      %v2463 = vpop.permute.xlu0 %2462
      %2464 = vrot.lane.b32.xlu0 %v1016, 111
      %v2465 = vpop.permute.xlu0 %2464
      %2466 = vrot.lane.b32.xlu0 %v994, 111
      %v2467 = vpop.permute.xlu0 %2466
      %2468 = vrot.lane.b32.xlu0 %v1017, 111
      %v2469 = vpop.permute.xlu0 %2468
      %2470 = vrot.lane.b32.xlu0 %v1018, 111
      %v2471 = vpop.permute.xlu0 %2470
      %2472 = vrot.lane.b32.xlu0 %v1019, 111
      %v2473 = vpop.permute.xlu0 %2472
      %2474 = vrot.lane.b32.xlu0 %v1020, 111
      %v2475 = vpop.permute.xlu0 %2474
      %2476 = vrot.lane.b32.xlu0 %v1021, 111
      %v2477 = vpop.permute.xlu0 %2476
      %2478 = vrot.lane.b32.xlu0 %v1022, 111
      %v2479 = vpop.permute.xlu0 %2478
      %2480 = vrot.lane.b32.xlu0 %v1023, 111
      %v2481 = vpop.permute.xlu0 %2480
      %2482 = vrot.lane.b32.xlu0 %v1025, 111
      %v2483 = vpop.permute.xlu0 %2482
      %2484 = vrot.lane.b32.xlu0 %v1057, 111
      %v2485 = vpop.permute.xlu0 %2484
      %2486 = vrot.lane.b32.xlu0 %v1058, 111
      %v2487 = vpop.permute.xlu0 %2486
      %2488 = vrot.lane.b32.xlu0 %v1059, 111
      %v2489 = vpop.permute.xlu0 %2488
      %2490 = vrot.lane.b32.xlu0 %v1060, 111
      %v2491 = vpop.permute.xlu0 %2490
      %2492 = vrot.lane.b32.xlu0 %v1061, 111
      %v2493 = vpop.permute.xlu0 %2492
      %2494 = vrot.lane.b32.xlu0 %v1062, 111
      %v2495 = vpop.permute.xlu0 %2494
      %2496 = vrot.lane.b32.xlu0 %v1063, 111
      %v2497 = vpop.permute.xlu0 %2496
      %2498 = vrot.lane.b32.xlu0 %v1041, 111
      %v2499 = vpop.permute.xlu0 %2498
      %2500 = vrot.lane.b32.xlu0 %v1064, 111
      %v2501 = vpop.permute.xlu0 %2500
      %2502 = vrot.lane.b32.xlu0 %v1065, 111
      %v2503 = vpop.permute.xlu0 %2502
      %2504 = vrot.lane.b32.xlu0 %v1066, 111
      %v2505 = vpop.permute.xlu0 %2504
      %2506 = vrot.lane.b32.xlu0 %v1067, 111
      %v2507 = vpop.permute.xlu0 %2506
      %2508 = vrot.lane.b32.xlu0 %v1068, 111
      %v2509 = vpop.permute.xlu0 %2508
      %2510 = vrot.lane.b32.xlu0 %v1069, 111
      %v2511 = vpop.permute.xlu0 %2510
      %2512 = vrot.lane.b32.xlu0 %v1070, 111
      %v2513 = vpop.permute.xlu0 %2512
      %2514 = vrot.lane.b32.xlu0 %v1343, 111
      %v2515 = vpop.permute.xlu0 %2514
      %2516 = vrot.lane.b32.xlu0 %v1650, 111
      %v2517 = vpop.permute.xlu0 %2516
      %2518 = vrot.lane.b32.xlu0 %v1651, 111
      %v2519 = vpop.permute.xlu0 %2518
      %2520 = vrot.lane.b32.xlu0 %v1652, 111
      %v2521 = vpop.permute.xlu0 %2520
      %2522 = vrot.lane.b32.xlu0 %v1653, 111
      %v2523 = vpop.permute.xlu0 %2522
      %2524 = vrot.lane.b32.xlu0 %v1654, 111
      %v2525 = vpop.permute.xlu0 %2524
      %2526 = vrot.lane.b32.xlu0 %v1655, 111
      %v2527 = vpop.permute.xlu0 %2526
      %2528 = vrot.lane.b32.xlu0 %v1355, 111
      %v2529 = vpop.permute.xlu0 %2528
      %2530 = vrot.lane.b32.xlu0 %v1357, 111
      %v2531 = vpop.permute.xlu0 %2530
      %2532 = vrot.lane.b32.xlu0 %v1656, 111
      %v2533 = vpop.permute.xlu0 %2532
      %2534 = vrot.lane.b32.xlu0 %v1657, 111
      %v2535 = vpop.permute.xlu0 %2534
      %2536 = vrot.lane.b32.xlu0 %v1658, 111
      %v2537 = vpop.permute.xlu0 %2536
      %2538 = vrot.lane.b32.xlu0 %v1659, 111
      %v2539 = vpop.permute.xlu0 %2538
      %2540 = vrot.lane.b32.xlu0 %v1660, 111
      %v2541 = vpop.permute.xlu0 %2540
      %2542 = vrot.lane.b32.xlu0 %v1661, 111
      %v2543 = vpop.permute.xlu0 %2542
      %2544 = vrot.lane.b32.xlu0 %v1369, 111
      %v2545 = vpop.permute.xlu0 %2544
      %2546 = vrot.lane.b32.xlu0 %v1371, 111
      %v2547 = vpop.permute.xlu0 %2546
      %2548 = vrot.lane.b32.xlu0 %v1662, 111
      %v2549 = vpop.permute.xlu0 %2548
      %2550 = vrot.lane.b32.xlu0 %v1663, 111
      %v2551 = vpop.permute.xlu0 %2550
      %2552 = vrot.lane.b32.xlu0 %v1664, 111
      %v2553 = vpop.permute.xlu0 %2552
      %2554 = vrot.lane.b32.xlu0 %v1665, 111
      %v2555 = vpop.permute.xlu0 %2554
      %2556 = vrot.lane.b32.xlu0 %v1666, 111
      %v2557 = vpop.permute.xlu0 %2556
      %2558 = vrot.lane.b32.xlu0 %v1667, 111
      %v2559 = vpop.permute.xlu0 %2558
      %2560 = vrot.lane.b32.xlu0 %v1383, 111
      %v2561 = vpop.permute.xlu0 %2560
      %2562 = vrot.lane.b32.xlu0 %v1385, 111
      %v2563 = vpop.permute.xlu0 %2562
      %2564 = vrot.lane.b32.xlu0 %v1668, 111
      %v2565 = vpop.permute.xlu0 %2564
      %2566 = vrot.lane.b32.xlu0 %v1669, 111
      %v2567 = vpop.permute.xlu0 %2566
      %2568 = vrot.lane.b32.xlu0 %v1670, 111
      %v2569 = vpop.permute.xlu0 %2568
      %2570 = vrot.lane.b32.xlu0 %v1671, 111
      %v2571 = vpop.permute.xlu0 %2570
      %2572 = vrot.lane.b32.xlu0 %v1672, 111
      %v2573 = vpop.permute.xlu0 %2572
      %2574 = vrot.lane.b32.xlu0 %v1673, 111
      %v2575 = vpop.permute.xlu0 %2574
      %2576 = vrot.lane.b32.xlu0 %v1397, 111
      %v2577 = vpop.permute.xlu0 %2576
      %2578 = vrot.lane.b32.xlu0 %v1399, 111
      %v2579 = vpop.permute.xlu0 %2578
      %2580 = vrot.lane.b32.xlu0 %v1674, 111
      %v2581 = vpop.permute.xlu0 %2580
      %2582 = vrot.lane.b32.xlu0 %v1675, 111
      %v2583 = vpop.permute.xlu0 %2582
      %2584 = vrot.lane.b32.xlu0 %v1676, 111
      %v2585 = vpop.permute.xlu0 %2584
      %2586 = vrot.lane.b32.xlu0 %v1677, 111
      %v2587 = vpop.permute.xlu0 %2586
      %2588 = vrot.lane.b32.xlu0 %v1678, 111
      %v2589 = vpop.permute.xlu0 %2588
      %2590 = vrot.lane.b32.xlu0 %v1679, 111
      %v2591 = vpop.permute.xlu0 %2590
      %2592 = vrot.lane.b32.xlu0 %v1411, 111
      %v2593 = vpop.permute.xlu0 %2592
      %2594 = vrot.lane.b32.xlu0 %v1413, 111
      %v2595 = vpop.permute.xlu0 %2594
      %2596 = vrot.lane.b32.xlu0 %v1680, 111
      %v2597 = vpop.permute.xlu0 %2596
      %2598 = vrot.lane.b32.xlu0 %v1681, 111
      %v2599 = vpop.permute.xlu0 %2598
      %2600 = vrot.lane.b32.xlu0 %v1682, 111
      %v2601 = vpop.permute.xlu0 %2600
      %2602 = vrot.lane.b32.xlu0 %v1683, 111
      %v2603 = vpop.permute.xlu0 %2602
      %2604 = vrot.lane.b32.xlu0 %v1684, 111
      %v2605 = vpop.permute.xlu0 %2604
      %2606 = vrot.lane.b32.xlu0 %v1685, 111
      %v2607 = vpop.permute.xlu0 %2606
      %2608 = vrot.lane.b32.xlu0 %v1425, 111
      %v2609 = vpop.permute.xlu0 %2608
      %2610 = vrot.lane.b32.xlu0 %v1427, 111
      %v2611 = vpop.permute.xlu0 %2610
      %2612 = vrot.lane.b32.xlu0 %v1686, 111
      %v2613 = vpop.permute.xlu0 %2612
      %2614 = vrot.lane.b32.xlu0 %v1687, 111
      %v2615 = vpop.permute.xlu0 %2614
      %2616 = vrot.lane.b32.xlu0 %v1688, 111
      %v2617 = vpop.permute.xlu0 %2616
      %2618 = vrot.lane.b32.xlu0 %v1689, 111
      %v2619 = vpop.permute.xlu0 %2618
      %2620 = vrot.lane.b32.xlu0 %v1690, 111
      %v2621 = vpop.permute.xlu0 %2620
      %2622 = vrot.lane.b32.xlu0 %v1691, 111
      %v2623 = vpop.permute.xlu0 %2622
      %2624 = vrot.lane.b32.xlu0 %v1439, 111
      %v2625 = vpop.permute.xlu0 %2624
      %2626 = vrot.lane.b32.xlu0 %v1441, 111
      %v2627 = vpop.permute.xlu0 %2626
      %2628 = vrot.lane.b32.xlu0 %v1692, 111
      %v2629 = vpop.permute.xlu0 %2628
      %2630 = vrot.lane.b32.xlu0 %v1693, 111
      %v2631 = vpop.permute.xlu0 %2630
      %2632 = vrot.lane.b32.xlu0 %v1694, 111
      %v2633 = vpop.permute.xlu0 %2632
      %2634 = vrot.lane.b32.xlu0 %v1695, 111
      %v2635 = vpop.permute.xlu0 %2634
      %2636 = vrot.lane.b32.xlu0 %v1696, 111
      %v2637 = vpop.permute.xlu0 %2636
      %2638 = vrot.lane.b32.xlu0 %v1697, 111
      %v2639 = vpop.permute.xlu0 %2638
      %2640 = vrot.lane.b32.xlu0 %v1453, 111
      %v2641 = vpop.permute.xlu0 %2640
      %2642 = vrot.lane.b32.xlu0 %v1455, 111
      %v2643 = vpop.permute.xlu0 %2642
      %2644 = vrot.lane.b32.xlu0 %v1698, 111
      %v2645 = vpop.permute.xlu0 %2644
      %2646 = vrot.lane.b32.xlu0 %v1699, 111
      %v2647 = vpop.permute.xlu0 %2646
      %2648 = vrot.lane.b32.xlu0 %v1700, 111
      %v2649 = vpop.permute.xlu0 %2648
      %2650 = vrot.lane.b32.xlu0 %v1701, 111
      %v2651 = vpop.permute.xlu0 %2650
      %2652 = vrot.lane.b32.xlu0 %v1702, 111
      %v2653 = vpop.permute.xlu0 %2652
      %2654 = vrot.lane.b32.xlu0 %v1703, 111
      %v2655 = vpop.permute.xlu0 %2654
      %2656 = vrot.lane.b32.xlu0 %v1467, 111
      %v2657 = vpop.permute.xlu0 %2656
      %2658 = vrot.lane.b32.xlu0 %v1469, 111
      %v2659 = vpop.permute.xlu0 %2658
      %2660 = vrot.lane.b32.xlu0 %v1704, 111
      %v2661 = vpop.permute.xlu0 %2660
      %2662 = vrot.lane.b32.xlu0 %v1705, 111
      %v2663 = vpop.permute.xlu0 %2662
      %2664 = vrot.lane.b32.xlu0 %v1706, 111
      %v2665 = vpop.permute.xlu0 %2664
      %2666 = vrot.lane.b32.xlu0 %v1707, 111
      %v2667 = vpop.permute.xlu0 %2666
      %2668 = vrot.lane.b32.xlu0 %v1708, 111
      %v2669 = vpop.permute.xlu0 %2668
      %2670 = vrot.lane.b32.xlu0 %v1709, 111
      %v2671 = vpop.permute.xlu0 %2670
      %2672 = vrot.lane.b32.xlu0 %v1481, 111
      %v2673 = vpop.permute.xlu0 %2672
      %2674 = vrot.lane.b32.xlu0 %v1483, 111
      %v2675 = vpop.permute.xlu0 %2674
      %2676 = vrot.lane.b32.xlu0 %v1710, 111
      %v2677 = vpop.permute.xlu0 %2676
      %2678 = vrot.lane.b32.xlu0 %v1711, 111
      %v2679 = vpop.permute.xlu0 %2678
      %2680 = vrot.lane.b32.xlu0 %v1712, 111
      %v2681 = vpop.permute.xlu0 %2680
      %2682 = vrot.lane.b32.xlu0 %v1713, 111
      %v2683 = vpop.permute.xlu0 %2682
      %2684 = vrot.lane.b32.xlu0 %v1714, 111
      %v2685 = vpop.permute.xlu0 %2684
      %2686 = vrot.lane.b32.xlu0 %v1715, 111
      %v2687 = vpop.permute.xlu0 %2686
      %2688 = vrot.lane.b32.xlu0 %v1495, 111
      %v2689 = vpop.permute.xlu0 %2688
      %2690 = vrot.lane.b32.xlu0 %v1497, 111
      %v2691 = vpop.permute.xlu0 %2690
      %2692 = vrot.lane.b32.xlu0 %v1716, 111
      %v2693 = vpop.permute.xlu0 %2692
      %2694 = vrot.lane.b32.xlu0 %v1717, 111
      %v2695 = vpop.permute.xlu0 %2694
      %2696 = vrot.lane.b32.xlu0 %v1718, 111
      %v2697 = vpop.permute.xlu0 %2696
      %2698 = vrot.lane.b32.xlu0 %v1719, 111
      %v2699 = vpop.permute.xlu0 %2698
      %2700 = vrot.lane.b32.xlu0 %v1720, 111
      %v2701 = vpop.permute.xlu0 %2700
      %2702 = vrot.lane.b32.xlu0 %v1721, 111
      %v2703 = vpop.permute.xlu0 %2702
      %2704 = vrot.lane.b32.xlu0 %v1509, 111
      %v2705 = vpop.permute.xlu0 %2704
      %2706 = vrot.lane.b32.xlu0 %v1511, 111
      %v2707 = vpop.permute.xlu0 %2706
      %2708 = vrot.lane.b32.xlu0 %v1722, 111
      %v2709 = vpop.permute.xlu0 %2708
      %2710 = vrot.lane.b32.xlu0 %v1723, 111
      %v2711 = vpop.permute.xlu0 %2710
      %2712 = vrot.lane.b32.xlu0 %v1724, 111
      %v2713 = vpop.permute.xlu0 %2712
      %2714 = vrot.lane.b32.xlu0 %v1725, 111
      %v2715 = vpop.permute.xlu0 %2714
      %2716 = vrot.lane.b32.xlu0 %v1726, 111
      %v2717 = vpop.permute.xlu0 %2716
      %2718 = vrot.lane.b32.xlu0 %v1727, 111
      %v2719 = vpop.permute.xlu0 %2718
      %2720 = vrot.lane.b32.xlu0 %v1523, 111
      %v2721 = vpop.permute.xlu0 %2720
      %2722 = vrot.lane.b32.xlu0 %v1525, 111
      %v2723 = vpop.permute.xlu0 %2722
      %2724 = vrot.lane.b32.xlu0 %v1728, 111
      %v2725 = vpop.permute.xlu0 %2724
      %2726 = vrot.lane.b32.xlu0 %v1729, 111
      %v2727 = vpop.permute.xlu0 %2726
      %2728 = vrot.lane.b32.xlu0 %v1730, 111
      %v2729 = vpop.permute.xlu0 %2728
      %2730 = vrot.lane.b32.xlu0 %v1731, 111
      %v2731 = vpop.permute.xlu0 %2730
      %2732 = vrot.lane.b32.xlu0 %v1732, 111
      %v2733 = vpop.permute.xlu0 %2732
      %2734 = vrot.lane.b32.xlu0 %v1733, 111
      %v2735 = vpop.permute.xlu0 %2734
      %2736 = vrot.lane.b32.xlu0 %v1537, 111
      %v2737 = vpop.permute.xlu0 %2736
      %2738 = vrot.lane.b32.xlu0 %v1539, 111
      %v2739 = vpop.permute.xlu0 %2738
      %2740 = vrot.lane.b32.xlu0 %v1734, 111
      %v2741 = vpop.permute.xlu0 %2740
      %2742 = vrot.lane.b32.xlu0 %v1735, 111
      %v2743 = vpop.permute.xlu0 %2742
      %2744 = vrot.lane.b32.xlu0 %v1736, 111
      %v2745 = vpop.permute.xlu0 %2744
      %2746 = vrot.lane.b32.xlu0 %v1737, 111
      %v2747 = vpop.permute.xlu0 %2746
      %2748 = vrot.lane.b32.xlu0 %v1738, 111
      %v2749 = vpop.permute.xlu0 %2748
      %2750 = vrot.lane.b32.xlu0 %v1739, 111
      %v2751 = vpop.permute.xlu0 %2750
      %2752 = vrot.lane.b32.xlu0 %v1551, 111
      %v2753 = vpop.permute.xlu0 %2752
      %2754 = vrot.lane.b32.xlu0 %v1553, 111
      %v2755 = vpop.permute.xlu0 %2754
      %2756 = vrot.lane.b32.xlu0 %v1740, 111
      %v2757 = vpop.permute.xlu0 %2756
      %2758 = vrot.lane.b32.xlu0 %v1741, 111
      %v2759 = vpop.permute.xlu0 %2758
      %2760 = vrot.lane.b32.xlu0 %v1742, 111
      %v2761 = vpop.permute.xlu0 %2760
      %2762 = vrot.lane.b32.xlu0 %v1743, 111
      %v2763 = vpop.permute.xlu0 %2762
      %2764 = vrot.lane.b32.xlu0 %v1744, 111
      %v2765 = vpop.permute.xlu0 %2764
      %2766 = vrot.lane.b32.xlu0 %v1745, 111
      %v2767 = vpop.permute.xlu0 %2766
      %2768 = vrot.lane.b32.xlu0 %v1565, 111
      %v2769 = vpop.permute.xlu0 %2768
      %2770 = vrot.lane.b32.xlu0 %v1567, 111
      %v2771 = vpop.permute.xlu0 %2770
      %2772 = vrot.lane.b32.xlu0 %v1746, 111
      %v2773 = vpop.permute.xlu0 %2772
      %2774 = vrot.lane.b32.xlu0 %v1747, 111
      %v2775 = vpop.permute.xlu0 %2774
      %2776 = vrot.lane.b32.xlu0 %v1748, 111
      %v2777 = vpop.permute.xlu0 %2776
      %2778 = vrot.lane.b32.xlu0 %v1749, 111
      %v2779 = vpop.permute.xlu0 %2778
      %2780 = vrot.lane.b32.xlu0 %v1750, 111
      %v2781 = vpop.permute.xlu0 %2780
      %2782 = vrot.lane.b32.xlu0 %v1751, 111
      %v2783 = vpop.permute.xlu0 %2782
      %2784 = vrot.lane.b32.xlu0 %v1579, 111
      %v2785 = vpop.permute.xlu0 %2784
      %2786 = vrot.lane.b32.xlu0 %v1581, 111
      %v2787 = vpop.permute.xlu0 %2786
      %2788 = vrot.lane.b32.xlu0 %v1752, 111
      %v2789 = vpop.permute.xlu0 %2788
      %2790 = vrot.lane.b32.xlu0 %v1753, 111
      %v2791 = vpop.permute.xlu0 %2790
      %2792 = vrot.lane.b32.xlu0 %v1754, 111
      %v2793 = vpop.permute.xlu0 %2792
      %2794 = vrot.lane.b32.xlu0 %v1755, 111
      %v2795 = vpop.permute.xlu0 %2794
      %2796 = vrot.lane.b32.xlu0 %v1756, 111
      %v2797 = vpop.permute.xlu0 %2796
      %2798 = vrot.lane.b32.xlu0 %v1757, 111
      %v2799 = vpop.permute.xlu0 %2798
      %2800 = vrot.lane.b32.xlu0 %v1593, 111
      %v2801 = vpop.permute.xlu0 %2800
      %2802 = vrot.lane.b32.xlu0 %v1595, 111
      %v2803 = vpop.permute.xlu0 %2802
      %2804 = vrot.lane.b32.xlu0 %v1758, 111
      %v2805 = vpop.permute.xlu0 %2804
      %2806 = vrot.lane.b32.xlu0 %v1759, 111
      %v2807 = vpop.permute.xlu0 %2806
      %2808 = vrot.lane.b32.xlu0 %v1760, 111
      %v2809 = vpop.permute.xlu0 %2808
      %2810 = vrot.lane.b32.xlu0 %v1761, 111
      %v2811 = vpop.permute.xlu0 %2810
      %2812 = vrot.lane.b32.xlu0 %v1762, 111
      %v2813 = vpop.permute.xlu0 %2812
      %2814 = vrot.lane.b32.xlu0 %v1763, 111
      %v2815 = vpop.permute.xlu0 %2814
      %2816 = vrot.lane.b32.xlu0 %v1607, 111
      %v2817 = vpop.permute.xlu0 %2816
      %2818 = vrot.lane.b32.xlu0 %v1609, 111
      %v2819 = vpop.permute.xlu0 %2818
      %2820 = vrot.lane.b32.xlu0 %v1764, 111
      %v2821 = vpop.permute.xlu0 %2820
      %2822 = vrot.lane.b32.xlu0 %v1765, 111
      %v2823 = vpop.permute.xlu0 %2822
      %2824 = vrot.lane.b32.xlu0 %v1766, 111
      %v2825 = vpop.permute.xlu0 %2824
      %2826 = vrot.lane.b32.xlu0 %v1767, 111
      %v2827 = vpop.permute.xlu0 %2826
      %2828 = vrot.lane.b32.xlu0 %v1768, 111
      %v2829 = vpop.permute.xlu0 %2828
      %2830 = vrot.lane.b32.xlu0 %v1769, 111
      %v2831 = vpop.permute.xlu0 %2830
      %2832 = vrot.lane.b32.xlu0 %v1621, 111
      %v2833 = vpop.permute.xlu0 %2832
      %2834 = vrot.lane.b32.xlu0 %v1623, 111
      %v2835 = vpop.permute.xlu0 %2834
      %2836 = vrot.lane.b32.xlu0 %v1770, 111
      %v2837 = vpop.permute.xlu0 %2836
      %2838 = vrot.lane.b32.xlu0 %v1771, 111
      %v2839 = vpop.permute.xlu0 %2838
      %2840 = vrot.lane.b32.xlu0 %v1772, 111
      %v2841 = vpop.permute.xlu0 %2840
      %2842 = vrot.lane.b32.xlu0 %v1773, 111
      %v2843 = vpop.permute.xlu0 %2842
      %2844 = vrot.lane.b32.xlu0 %v1774, 111
      %v2845 = vpop.permute.xlu0 %2844
      %2846 = vrot.lane.b32.xlu0 %v1775, 111
      %v2847 = vpop.permute.xlu0 %2846
      %2848 = vrot.lane.b32.xlu0 %v1635, 111
      %v2849 = vpop.permute.xlu0 %2848
      %2850 = vrot.lane.b32.xlu0 %v1637, 111
      %v2851 = vpop.permute.xlu0 %2850
      %2852 = vrot.lane.b32.xlu0 %v1776, 111
      %v2853 = vpop.permute.xlu0 %2852
      %2854 = vrot.lane.b32.xlu0 %v1777, 111
      %v2855 = vpop.permute.xlu0 %2854
      %2856 = vrot.lane.b32.xlu0 %v1778, 111
      %v2857 = vpop.permute.xlu0 %2856
      %2858 = vrot.lane.b32.xlu0 %v1779, 111
      %v2859 = vpop.permute.xlu0 %2858
      %2860 = vrot.lane.b32.xlu0 %v1780, 111
      %v2861 = vpop.permute.xlu0 %2860
      %2862 = vrot.lane.b32.xlu0 %v1781, 111
      %v2863 = vpop.permute.xlu0 %2862
      %2864 = vrot.lane.b32.xlu0 %v1649, 111
      %v2865 = vpop.permute.xlu0 %2864
      %vm2866 = vcmask 908288
      %v2867 = vsel %vm2866, %v2003, %v2005
      %v2868 = vsel %vm2866, %v2005, %v2007
      %v2869 = vsel %vm2866, %v2007, %v2009
      %v2870 = vsel %vm2866, %v2009, %v2011
      %v2871 = vsel %vm2866, %v2011, %v2013
      %v2872 = vsel %vm2866, %v2013, %v2015
      %v2873 = vsel %vm2866, %v2015, %v2017
      %v2874 = vsel %vm2866, %v2019, %v2021
      %v2875 = vsel %vm2866, %v2021, %v2023
      %v2876 = vsel %vm2866, %v2023, %v2025
      %v2877 = vsel %vm2866, %v2025, %v2027
      %v2878 = vsel %vm2866, %v2027, %v2029
      %v2879 = vsel %vm2866, %v2029, %v2031
      %v2880 = vsel %vm2866, %v2031, %v2033
      %v2881 = vsel %vm2866, %v2035, %v2037
      %v2882 = vsel %vm2866, %v2037, %v2039
      %v2883 = vsel %vm2866, %v2039, %v2041
      %v2884 = vsel %vm2866, %v2041, %v2043
      %v2885 = vsel %vm2866, %v2043, %v2045
      %v2886 = vsel %vm2866, %v2045, %v2047
      %v2887 = vsel %vm2866, %v2047, %v2049
      %v2888 = vsel %vm2866, %v2051, %v2053
      %v2889 = vsel %vm2866, %v2053, %v2055
      %v2890 = vsel %vm2866, %v2055, %v2057
      %v2891 = vsel %vm2866, %v2057, %v2059
      %v2892 = vsel %vm2866, %v2059, %v2061
      %v2893 = vsel %vm2866, %v2061, %v2063
      %v2894 = vsel %vm2866, %v2063, %v2065
      %v2895 = vsel %vm2866, %v2067, %v2069
      %v2896 = vsel %vm2866, %v2069, %v2071
      %v2897 = vsel %vm2866, %v2071, %v2073
      %v2898 = vsel %vm2866, %v2073, %v2075
      %v2899 = vsel %vm2866, %v2075, %v2077
      %v2900 = vsel %vm2866, %v2077, %v2079
      %v2901 = vsel %vm2866, %v2079, %v2081
      %v2902 = vsel %vm2866, %v2083, %v2085
      %v2903 = vsel %vm2866, %v2085, %v2087
      %v2904 = vsel %vm2866, %v2087, %v2089
      %v2905 = vsel %vm2866, %v2089, %v2091
      %v2906 = vsel %vm2866, %v2091, %v2093
      %v2907 = vsel %vm2866, %v2093, %v2095
      %v2908 = vsel %vm2866, %v2095, %v2097
      %v2909 = vsel %vm2866, %v2099, %v2101
      %v2910 = vsel %vm2866, %v2101, %v2103
      %v2911 = vsel %vm2866, %v2103, %v2105
      %v2912 = vsel %vm2866, %v2105, %v2107
      %v2913 = vsel %vm2866, %v2107, %v2109
      %v2914 = vsel %vm2866, %v2109, %v2111
      %v2915 = vsel %vm2866, %v2111, %v2113
      %v2916 = vsel %vm2866, %v2115, %v2117
      %v2917 = vsel %vm2866, %v2117, %v2119
      %v2918 = vsel %vm2866, %v2119, %v2121
      %v2919 = vsel %vm2866, %v2121, %v2123
      %v2920 = vsel %vm2866, %v2123, %v2125
      %v2921 = vsel %vm2866, %v2125, %v2127
      %v2922 = vsel %vm2866, %v2127, %v2129
      %v2923 = vsel %vm2866, %v2131, %v2133
      %v2924 = vsel %vm2866, %v2133, %v2135
      %v2925 = vsel %vm2866, %v2135, %v2137
      %v2926 = vsel %vm2866, %v2137, %v2139
      %v2927 = vsel %vm2866, %v2139, %v2141
      %v2928 = vsel %vm2866, %v2141, %v2143
      %v2929 = vsel %vm2866, %v2143, %v2145
      %v2930 = vsel %vm2866, %v2147, %v2149
      %v2931 = vsel %vm2866, %v2149, %v2151
      %v2932 = vsel %vm2866, %v2151, %v2153
      %v2933 = vsel %vm2866, %v2153, %v2155
      %v2934 = vsel %vm2866, %v2155, %v2157
      %v2935 = vsel %vm2866, %v2157, %v2159
      %v2936 = vsel %vm2866, %v2159, %v2161
      %v2937 = vsel %vm2866, %v2163, %v2165
      %v2938 = vsel %vm2866, %v2165, %v2167
      %v2939 = vsel %vm2866, %v2167, %v2169
      %v2940 = vsel %vm2866, %v2169, %v2171
      %v2941 = vsel %vm2866, %v2171, %v2173
      %v2942 = vsel %vm2866, %v2173, %v2175
      %v2943 = vsel %vm2866, %v2175, %v2177
      %v2944 = vsel %vm2866, %v2179, %v2181
      %v2945 = vsel %vm2866, %v2181, %v2183
      %v2946 = vsel %vm2866, %v2183, %v2185
      %v2947 = vsel %vm2866, %v2185, %v2187
      %v2948 = vsel %vm2866, %v2187, %v2189
      %v2949 = vsel %vm2866, %v2189, %v2191
      %v2950 = vsel %vm2866, %v2191, %v2193
      %v2951 = vsel %vm2866, %v2195, %v2197
      %v2952 = vsel %vm2866, %v2197, %v2199
      %v2953 = vsel %vm2866, %v2199, %v2201
      %v2954 = vsel %vm2866, %v2201, %v2203
      %v2955 = vsel %vm2866, %v2203, %v2205
      %v2956 = vsel %vm2866, %v2205, %v2207
      %v2957 = vsel %vm2866, %v2207, %v2209
      %v2958 = vsel %vm2866, %v2211, %v2213
      %v2959 = vsel %vm2866, %v2213, %v2215
      %v2960 = vsel %vm2866, %v2215, %v2217
      %v2961 = vsel %vm2866, %v2217, %v2219
      %v2962 = vsel %vm2866, %v2219, %v2221
      %v2963 = vsel %vm2866, %v2221, %v2223
      %v2964 = vsel %vm2866, %v2223, %v2225
      %v2965 = vsel %vm2866, %v2227, %v2229
      %v2966 = vsel %vm2866, %v2229, %v2231
      %v2967 = vsel %vm2866, %v2231, %v2233
      %v2968 = vsel %vm2866, %v2233, %v2235
      %v2969 = vsel %vm2866, %v2235, %v2237
      %v2970 = vsel %vm2866, %v2237, %v2239
      %v2971 = vsel %vm2866, %v2239, %v2241
      %v2972 = vsel %vm2866, %v2243, %v2245
      %v2973 = vsel %vm2866, %v2245, %v2247
      %v2974 = vsel %vm2866, %v2247, %v2249
      %v2975 = vsel %vm2866, %v2249, %v2251
      %v2976 = vsel %vm2866, %v2251, %v2253
      %v2977 = vsel %vm2866, %v2253, %v2255
      %v2978 = vsel %vm2866, %v2255, %v2257
      %v2979 = vsel %vm2866, %v2259, %v2261
      %v2980 = vsel %vm2866, %v2261, %v2263
      %v2981 = vsel %vm2866, %v2263, %v2265
      %v2982 = vsel %vm2866, %v2265, %v2267
      %v2983 = vsel %vm2866, %v2267, %v2269
      %v2984 = vsel %vm2866, %v2269, %v2271
      %v2985 = vsel %vm2866, %v2271, %v2273
      %v2986 = vsel %vm2866, %v2275, %v2277
      %v2987 = vsel %vm2866, %v2277, %v2279
      %v2988 = vsel %vm2866, %v2279, %v2281
      %v2989 = vsel %vm2866, %v2281, %v2283
      %v2990 = vsel %vm2866, %v2283, %v2285
      %v2991 = vsel %vm2866, %v2285, %v2287
      %v2992 = vsel %vm2866, %v2287, %v2289
      %v2993 = vsel %vm2866, %v2291, %v2293
      %v2994 = vsel %vm2866, %v2293, %v2295
      %v2995 = vsel %vm2866, %v2295, %v2297
      %v2996 = vsel %vm2866, %v2297, %v2299
      %v2997 = vsel %vm2866, %v2299, %v2301
      %v2998 = vsel %vm2866, %v2301, %v2303
      %v2999 = vsel %vm2866, %v2303, %v2305
      %v3000 = vsel %vm2866, %v2307, %v2309
      %v3001 = vsel %vm2866, %v2309, %v2311
      %v3002 = vsel %vm2866, %v2311, %v2313
      %v3003 = vsel %vm2866, %v2313, %v2315
      %v3004 = vsel %vm2866, %v2315, %v2317
      %v3005 = vsel %vm2866, %v2317, %v2319
      %v3006 = vsel %vm2866, %v2319, %v2321
      %v3007 = vsel %vm2866, %v2323, %v2325
      %v3008 = vsel %vm2866, %v2325, %v2327
      %v3009 = vsel %vm2866, %v2327, %v2329
      %v3010 = vsel %vm2866, %v2329, %v2331
      %v3011 = vsel %vm2866, %v2331, %v2333
      %v3012 = vsel %vm2866, %v2333, %v2335
      %v3013 = vsel %vm2866, %v2335, %v2337
      %v3014 = vsel %vm2866, %v2339, %v2341
      %v3015 = vsel %vm2866, %v2341, %v2343
      %v3016 = vsel %vm2866, %v2343, %v2345
      %v3017 = vsel %vm2866, %v2345, %v2347
      %v3018 = vsel %vm2866, %v2347, %v2349
      %v3019 = vsel %vm2866, %v2349, %v2351
      %v3020 = vsel %vm2866, %v2351, %v2353
      %v3021 = vsel %vm2866, %v2355, %v2357
      %v3022 = vsel %vm2866, %v2357, %v2359
      %v3023 = vsel %vm2866, %v2359, %v2361
      %v3024 = vsel %vm2866, %v2361, %v2363
      %v3025 = vsel %vm2866, %v2363, %v2365
      %v3026 = vsel %vm2866, %v2365, %v2367
      %v3027 = vsel %vm2866, %v2367, %v2369
      %v3028 = vsel %vm2866, %v2371, %v2373
      %v3029 = vsel %vm2866, %v2373, %v2375
      %v3030 = vsel %vm2866, %v2375, %v2377
      %v3031 = vsel %vm2866, %v2377, %v2379
      %v3032 = vsel %vm2866, %v2379, %v2381
      %v3033 = vsel %vm2866, %v2381, %v2383
      %v3034 = vsel %vm2866, %v2383, %v2385
      %v3035 = vsel %vm2866, %v2387, %v2389
      %v3036 = vsel %vm2866, %v2389, %v2391
      %v3037 = vsel %vm2866, %v2391, %v2393
      %v3038 = vsel %vm2866, %v2393, %v2395
      %v3039 = vsel %vm2866, %v2395, %v2397
      %v3040 = vsel %vm2866, %v2397, %v2399
      %v3041 = vsel %vm2866, %v2399, %v2401
      %v3042 = vsel %vm2866, %v2403, %v2405
      %v3043 = vsel %vm2866, %v2405, %v2407
      %v3044 = vsel %vm2866, %v2407, %v2409
      %v3045 = vsel %vm2866, %v2409, %v2411
      %v3046 = vsel %vm2866, %v2411, %v2413
      %v3047 = vsel %vm2866, %v2413, %v2415
      %v3048 = vsel %vm2866, %v2415, %v2417
      %v3049 = vsel %vm2866, %v2419, %v2421
      %v3050 = vsel %vm2866, %v2421, %v2423
      %v3051 = vsel %vm2866, %v2423, %v2425
      %v3052 = vsel %vm2866, %v2425, %v2427
      %v3053 = vsel %vm2866, %v2427, %v2429
      %v3054 = vsel %vm2866, %v2429, %v2431
      %v3055 = vsel %vm2866, %v2431, %v2433
      %v3056 = vsel %vm2866, %v2435, %v2437
      %v3057 = vsel %vm2866, %v2437, %v2439
      %v3058 = vsel %vm2866, %v2439, %v2441
      %v3059 = vsel %vm2866, %v2441, %v2443
      %v3060 = vsel %vm2866, %v2443, %v2445
      %v3061 = vsel %vm2866, %v2445, %v2447
      %v3062 = vsel %vm2866, %v2447, %v2449
      %v3063 = vsel %vm2866, %v2451, %v2453
      %v3064 = vsel %vm2866, %v2453, %v2455
      %v3065 = vsel %vm2866, %v2455, %v2457
      %v3066 = vsel %vm2866, %v2457, %v2459
      %v3067 = vsel %vm2866, %v2459, %v2461
      %v3068 = vsel %vm2866, %v2461, %v2463
      %v3069 = vsel %vm2866, %v2463, %v2465
      %v3070 = vsel %vm2866, %v2467, %v2469
      %v3071 = vsel %vm2866, %v2469, %v2471
      %v3072 = vsel %vm2866, %v2471, %v2473
      %v3073 = vsel %vm2866, %v2473, %v2475
      %v3074 = vsel %vm2866, %v2475, %v2477
      %v3075 = vsel %vm2866, %v2477, %v2479
      %v3076 = vsel %vm2866, %v2479, %v2481
      %v3077 = vsel %vm2866, %v2483, %v2485
      %v3078 = vsel %vm2866, %v2485, %v2487
      %v3079 = vsel %vm2866, %v2487, %v2489
      %v3080 = vsel %vm2866, %v2489, %v2491
      %v3081 = vsel %vm2866, %v2491, %v2493
      %v3082 = vsel %vm2866, %v2493, %v2495
      %v3083 = vsel %vm2866, %v2495, %v2497
      %v3084 = vsel %vm2866, %v2499, %v2501
      %v3085 = vsel %vm2866, %v2501, %v2503
      %v3086 = vsel %vm2866, %v2503, %v2505
      %v3087 = vsel %vm2866, %v2505, %v2507
      %v3088 = vsel %vm2866, %v2507, %v2509
      %v3089 = vsel %vm2866, %v2509, %v2511
      %v3090 = vsel %vm2866, %v2511, %v2513
      %v3091 = vsel %vm2866, %v2515, %v2517
      %v3092 = vsel %vm2866, %v2517, %v2519
      %v3093 = vsel %vm2866, %v2519, %v2521
      %v3094 = vsel %vm2866, %v2521, %v2523
      %v3095 = vsel %vm2866, %v2523, %v2525
      %v3096 = vsel %vm2866, %v2525, %v2527
      %v3097 = vsel %vm2866, %v2527, %v2529
      %v3098 = vsel %vm2866, %v2531, %v2533
      %v3099 = vsel %vm2866, %v2533, %v2535
      %v3100 = vsel %vm2866, %v2535, %v2537
      %v3101 = vsel %vm2866, %v2537, %v2539
      %v3102 = vsel %vm2866, %v2539, %v2541
      %v3103 = vsel %vm2866, %v2541, %v2543
      %v3104 = vsel %vm2866, %v2543, %v2545
      %v3105 = vsel %vm2866, %v2547, %v2549
      %v3106 = vsel %vm2866, %v2549, %v2551
      %v3107 = vsel %vm2866, %v2551, %v2553
      %v3108 = vsel %vm2866, %v2553, %v2555
      %v3109 = vsel %vm2866, %v2555, %v2557
      %v3110 = vsel %vm2866, %v2557, %v2559
      %v3111 = vsel %vm2866, %v2559, %v2561
      %v3112 = vsel %vm2866, %v2563, %v2565
      %v3113 = vsel %vm2866, %v2565, %v2567
      %v3114 = vsel %vm2866, %v2567, %v2569
      %v3115 = vsel %vm2866, %v2569, %v2571
      %v3116 = vsel %vm2866, %v2571, %v2573
      %v3117 = vsel %vm2866, %v2573, %v2575
      %v3118 = vsel %vm2866, %v2575, %v2577
      %v3119 = vsel %vm2866, %v2579, %v2581
      %v3120 = vsel %vm2866, %v2581, %v2583
      %v3121 = vsel %vm2866, %v2583, %v2585
      %v3122 = vsel %vm2866, %v2585, %v2587
      %v3123 = vsel %vm2866, %v2587, %v2589
      %v3124 = vsel %vm2866, %v2589, %v2591
      %v3125 = vsel %vm2866, %v2591, %v2593
      %v3126 = vsel %vm2866, %v2595, %v2597
      %v3127 = vsel %vm2866, %v2597, %v2599
      %v3128 = vsel %vm2866, %v2599, %v2601
      %v3129 = vsel %vm2866, %v2601, %v2603
      %v3130 = vsel %vm2866, %v2603, %v2605
      %v3131 = vsel %vm2866, %v2605, %v2607
      %v3132 = vsel %vm2866, %v2607, %v2609
      %v3133 = vsel %vm2866, %v2611, %v2613
      %v3134 = vsel %vm2866, %v2613, %v2615
      %v3135 = vsel %vm2866, %v2615, %v2617
      %v3136 = vsel %vm2866, %v2617, %v2619
      %v3137 = vsel %vm2866, %v2619, %v2621
      %v3138 = vsel %vm2866, %v2621, %v2623
      %v3139 = vsel %vm2866, %v2623, %v2625
      %v3140 = vsel %vm2866, %v2627, %v2629
      %v3141 = vsel %vm2866, %v2629, %v2631
      %v3142 = vsel %vm2866, %v2631, %v2633
      %v3143 = vsel %vm2866, %v2633, %v2635
      %v3144 = vsel %vm2866, %v2635, %v2637
      %v3145 = vsel %vm2866, %v2637, %v2639
      %v3146 = vsel %vm2866, %v2639, %v2641
      %v3147 = vsel %vm2866, %v2643, %v2645
      %v3148 = vsel %vm2866, %v2645, %v2647
      %v3149 = vsel %vm2866, %v2647, %v2649
      %v3150 = vsel %vm2866, %v2649, %v2651
      %v3151 = vsel %vm2866, %v2651, %v2653
      %v3152 = vsel %vm2866, %v2653, %v2655
      %v3153 = vsel %vm2866, %v2655, %v2657
      %v3154 = vsel %vm2866, %v2659, %v2661
      %v3155 = vsel %vm2866, %v2661, %v2663
      %v3156 = vsel %vm2866, %v2663, %v2665
      %v3157 = vsel %vm2866, %v2665, %v2667
      %v3158 = vsel %vm2866, %v2667, %v2669
      %v3159 = vsel %vm2866, %v2669, %v2671
      %v3160 = vsel %vm2866, %v2671, %v2673
      %v3161 = vsel %vm2866, %v2675, %v2677
      %v3162 = vsel %vm2866, %v2677, %v2679
      %v3163 = vsel %vm2866, %v2679, %v2681
      %v3164 = vsel %vm2866, %v2681, %v2683
      %v3165 = vsel %vm2866, %v2683, %v2685
      %v3166 = vsel %vm2866, %v2685, %v2687
      %v3167 = vsel %vm2866, %v2687, %v2689
      %v3168 = vsel %vm2866, %v2691, %v2693
      %v3169 = vsel %vm2866, %v2693, %v2695
      %v3170 = vsel %vm2866, %v2695, %v2697
      %v3171 = vsel %vm2866, %v2697, %v2699
      %v3172 = vsel %vm2866, %v2699, %v2701
      %v3173 = vsel %vm2866, %v2701, %v2703
      %v3174 = vsel %vm2866, %v2703, %v2705
      %v3175 = vsel %vm2866, %v2707, %v2709
      %v3176 = vsel %vm2866, %v2709, %v2711
      %v3177 = vsel %vm2866, %v2711, %v2713
      %v3178 = vsel %vm2866, %v2713, %v2715
      %v3179 = vsel %vm2866, %v2715, %v2717
      %v3180 = vsel %vm2866, %v2717, %v2719
      %v3181 = vsel %vm2866, %v2719, %v2721
      %v3182 = vsel %vm2866, %v2723, %v2725
      %v3183 = vsel %vm2866, %v2725, %v2727
      %v3184 = vsel %vm2866, %v2727, %v2729
      %v3185 = vsel %vm2866, %v2729, %v2731
      %v3186 = vsel %vm2866, %v2731, %v2733
      %v3187 = vsel %vm2866, %v2733, %v2735
      %v3188 = vsel %vm2866, %v2735, %v2737
      %v3189 = vsel %vm2866, %v2739, %v2741
      %v3190 = vsel %vm2866, %v2741, %v2743
      %v3191 = vsel %vm2866, %v2743, %v2745
      %v3192 = vsel %vm2866, %v2745, %v2747
      %v3193 = vsel %vm2866, %v2747, %v2749
      %v3194 = vsel %vm2866, %v2749, %v2751
      %v3195 = vsel %vm2866, %v2751, %v2753
      %v3196 = vsel %vm2866, %v2755, %v2757
      %v3197 = vsel %vm2866, %v2757, %v2759
      %v3198 = vsel %vm2866, %v2759, %v2761
      %v3199 = vsel %vm2866, %v2761, %v2763
      %v3200 = vsel %vm2866, %v2763, %v2765
      %v3201 = vsel %vm2866, %v2765, %v2767
      %v3202 = vsel %vm2866, %v2767, %v2769
      %v3203 = vsel %vm2866, %v2771, %v2773
      %v3204 = vsel %vm2866, %v2773, %v2775
      %v3205 = vsel %vm2866, %v2775, %v2777
      %v3206 = vsel %vm2866, %v2777, %v2779
      %v3207 = vsel %vm2866, %v2779, %v2781
      %v3208 = vsel %vm2866, %v2781, %v2783
      %v3209 = vsel %vm2866, %v2783, %v2785
      %v3210 = vsel %vm2866, %v2787, %v2789
      %v3211 = vsel %vm2866, %v2789, %v2791
      %v3212 = vsel %vm2866, %v2791, %v2793
      %v3213 = vsel %vm2866, %v2793, %v2795
      %v3214 = vsel %vm2866, %v2795, %v2797
      %v3215 = vsel %vm2866, %v2797, %v2799
      %v3216 = vsel %vm2866, %v2799, %v2801
      %v3217 = vsel %vm2866, %v2803, %v2805
      %v3218 = vsel %vm2866, %v2805, %v2807
      %v3219 = vsel %vm2866, %v2807, %v2809
      %v3220 = vsel %vm2866, %v2809, %v2811
      %v3221 = vsel %vm2866, %v2811, %v2813
      %v3222 = vsel %vm2866, %v2813, %v2815
      %v3223 = vsel %vm2866, %v2815, %v2817
      %v3224 = vsel %vm2866, %v2819, %v2821
      %v3225 = vsel %vm2866, %v2821, %v2823
      %v3226 = vsel %vm2866, %v2823, %v2825
      %v3227 = vsel %vm2866, %v2825, %v2827
      %v3228 = vsel %vm2866, %v2827, %v2829
      %v3229 = vsel %vm2866, %v2829, %v2831
      %v3230 = vsel %vm2866, %v2831, %v2833
      %v3231 = vsel %vm2866, %v2835, %v2837
      %v3232 = vsel %vm2866, %v2837, %v2839
      %v3233 = vsel %vm2866, %v2839, %v2841
      %v3234 = vsel %vm2866, %v2841, %v2843
      %v3235 = vsel %vm2866, %v2843, %v2845
      %v3236 = vsel %vm2866, %v2845, %v2847
      %v3237 = vsel %vm2866, %v2847, %v2849
      %v3238 = vsel %vm2866, %v2851, %v2853
      %v3239 = vsel %vm2866, %v2853, %v2855
      %v3240 = vsel %vm2866, %v2855, %v2857
      %v3241 = vsel %vm2866, %v2857, %v2859
      %v3242 = vsel %vm2866, %v2859, %v2861
      %v3243 = vsel %vm2866, %v2861, %v2863
      %v3244 = vsel %vm2866, %v2863, %v2865
      %vm3623 = vcmask 785408
      %v3625 = vsel %vm3623, %v1956, 0
      %v3628 = vsel %vm3623, %v1963, 0
      %v3631 = vsel %vm3623, %v1970, 0
      %v3634 = vsel %vm3623, %v1977, 0
      %3636 = vmatprep.subr.bf16.mxu0 %v2868
      %3637 = vmatpush1.bf16.msra.mxu0 %v2867
      %3638 = vmatprep.subr.bf16.mxu0 %v2875
      %3639 = vmatpush1.bf16.msra.mxu0 %v2874
      %3640 = vmatprep.subr.bf16.mxu0 %v2882
      %3641 = vmatpush1.bf16.msra.mxu0 %v2881
      %3642 = vmatprep.subr.bf16.mxu0 %v2889
      %3643 = vmatpush1.bf16.msra.mxu0 %v2888
      %3644 = vmatprep.subr.bf16.mxu0 %v2896
      %3645 = vmatpush1.bf16.msra.mxu0 %v2895
      %3646 = vmatprep.subr.bf16.mxu0 %v2903
      %3647 = vmatpush1.bf16.msra.mxu0 %v2902
      %3648 = vmatprep.subr.bf16.mxu0 %v2910
      %3649 = vmatpush1.bf16.msra.mxu0 %v2909
      %3650 = vmatprep.subr.bf16.mxu0 %v2917
      %3651 = vmatpush1.bf16.msra.mxu0 %v2916
      %3652 = vmatprep.subr.bf16.mxu0 %v2924
      %3653 = vmatpush1.bf16.msra.mxu0 %v2923
      %3654 = vmatprep.subr.bf16.mxu0 %v2931
      %3655 = vmatpush1.bf16.msra.mxu0 %v2930
      %3656 = vmatprep.subr.bf16.mxu0 %v2938
      %3657 = vmatpush1.bf16.msra.mxu0 %v2937
      %3658 = vmatprep.subr.bf16.mxu0 %v2945
      %3659 = vmatpush1.bf16.msra.mxu0 %v2944
      %3660 = vmatprep.subr.bf16.mxu0 %v2952
      %3661 = vmatpush1.bf16.msra.mxu0 %v2951
      %3662 = vmatprep.subr.bf16.mxu0 %v2959
      %3663 = vmatpush1.bf16.msra.mxu0 %v2958
      %3664 = vmatprep.subr.bf16.mxu0 %v2966
      %3665 = vmatpush1.bf16.msra.mxu0 %v2965
      %3666 = vmatprep.subr.bf16.mxu0 %v2973
      %3667 = vmatpush1.bf16.msra.mxu0 %v2972
      %3668 = vmatprep.mubr.bf16.mxu0 %v1951
      %3669 = vmatmul.mubr.bf16.gmra.mrb[0].mxu0 %v1950
      %v3670 = vpop.f32.mrb[0].mxu0
      %v3671 = vadd.f32 %v1825, %v3670
      %v3672 = vpop.f32.mrb[0].mxu0
      %v3673 = vadd.f32 %v1825, %v3672
      %v3674 = vpop.f32.mrb[0].mxu0
      %v3675 = vadd.f32 %v1830, %v3674
      %v3676 = vpop.f32.mrb[0].mxu0
      %v3677 = vadd.f32 %v1830, %v3676
      %3678 = vmatprep.mubr.bf16.mxu0 %v1958
      %3679 = vmatmul.mubr.bf16.gmra.mrb[0].mxu0 %v1957
      %v3680 = vpop.f32.mrb[0].mxu0
      %v3681 = vadd.f32 %v1835, %v3680
      %v3682 = vpop.f32.mrb[0].mxu0
      %v3683 = vadd.f32 %v1835, %v3682
      %v3684 = vpop.f32.mrb[0].mxu0
      %v3685 = vadd.f32 %v1840, %v3684
      %v3686 = vpop.f32.mrb[0].mxu0
      %v3687 = vadd.f32 %v1840, %v3686
      %3688 = vmatprep.mubr.bf16.mxu0 %v1965
      %3689 = vmatmul.mubr.bf16.gmra.mrb[0].mxu0 %v1964
      %v3690 = vpop.f32.mrb[0].mxu0
      %v3691 = vadd.f32 %v1845, %v3690
      %v3692 = vpop.f32.mrb[0].mxu0
      %v3693 = vadd.f32 %v1845, %v3692
      %v3694 = vpop.f32.mrb[0].mxu0
      %v3695 = vadd.f32 %v1850, %v3694
      %v3696 = vpop.f32.mrb[0].mxu0
      %v3697 = vadd.f32 %v1850, %v3696
      %3698 = vmatprep.mubr.bf16.mxu0 %v1972
      %3699 = vmatmul.mubr.bf16.gmra.mrb[0].mxu0 %v1971
      %v3700 = vpop.f32.mrb[0].mxu0
      %v3701 = vadd.f32 %v1855, %v3700
      %v3702 = vpop.f32.mrb[0].mxu0
      %v3703 = vadd.f32 %v1855, %v3702
      %v3704 = vpop.f32.mrb[0].mxu0
      %v3705 = vadd.f32 %v1860, %v3704
      %v3706 = vpop.f32.mrb[0].mxu0
      %v3707 = vadd.f32 %v1860, %v3706
      %3708 = vdwg.mxu0
      %3709 = vmatprep.subr.bf16.mxu0 %v2980
      %3710 = vmatpush1.bf16.msra.mxu0 %v2979
      %3711 = vmatprep.subr.bf16.mxu0 %v2987
      %3712 = vmatpush1.bf16.msra.mxu0 %v2986
      %3713 = vmatprep.subr.bf16.mxu0 %v2994
      %3714 = vmatpush1.bf16.msra.mxu0 %v2993
      %3715 = vmatprep.subr.bf16.mxu0 %v3001
      %3716 = vmatpush1.bf16.msra.mxu0 %v3000
      %3717 = vmatprep.subr.bf16.mxu0 %v3008
      %3718 = vmatpush1.bf16.msra.mxu0 %v3007
      %3719 = vmatprep.subr.bf16.mxu0 %v3015
      %3720 = vmatpush1.bf16.msra.mxu0 %v3014
      %3721 = vmatprep.subr.bf16.mxu0 %v3022
      %3722 = vmatpush1.bf16.msra.mxu0 %v3021
      %3723 = vmatprep.subr.bf16.mxu0 %v3029
      %3724 = vmatpush1.bf16.msra.mxu0 %v3028
      %3725 = vmatprep.subr.bf16.mxu0 %v3036
      %3726 = vmatpush1.bf16.msra.mxu0 %v3035
      %3727 = vmatprep.subr.bf16.mxu0 %v3043
      %3728 = vmatpush1.bf16.msra.mxu0 %v3042
      %3729 = vmatprep.subr.bf16.mxu0 %v3050
      %3730 = vmatpush1.bf16.msra.mxu0 %v3049
      %3731 = vmatprep.subr.bf16.mxu0 %v3057
      %3732 = vmatpush1.bf16.msra.mxu0 %v3056
      %3733 = vmatprep.subr.bf16.mxu0 %v3064
      %3734 = vmatpush1.bf16.msra.mxu0 %v3063
      %3735 = vmatprep.subr.bf16.mxu0 %v3071
      %3736 = vmatpush1.bf16.msra.mxu0 %v3070
      %3737 = vmatprep.subr.bf16.mxu0 %v3078
      %3738 = vmatpush1.bf16.msra.mxu0 %v3077
      %3739 = vmatprep.subr.bf16.mxu0 %v3085
      %3740 = vmatpush1.bf16.msra.mxu0 %v3084
      %3741 = vmatprep.mubr.bf16.mxu0 %v1953
      %3742 = vmatmul.mubr.bf16.gmra.mrb[0].mxu0 %v1952
      %v3743 = vpop.f32.mrb[0].mxu0
      %v3744 = vadd.f32 %v3671, %v3743
      %v3745 = vpop.f32.mrb[0].mxu0
      %v3746 = vadd.f32 %v3673, %v3745
      %v3747 = vpop.f32.mrb[0].mxu0
      %v3748 = vadd.f32 %v3675, %v3747
      %v3749 = vpop.f32.mrb[0].mxu0
      %v3750 = vadd.f32 %v3677, %v3749
      %3751 = vmatprep.mubr.bf16.mxu0 %v1960
      %3752 = vmatmul.mubr.bf16.gmra.mrb[0].mxu0 %v1959
      %v3753 = vpop.f32.mrb[0].mxu0
      %v3754 = vadd.f32 %v3681, %v3753
      %v3755 = vpop.f32.mrb[0].mxu0
      %v3756 = vadd.f32 %v3683, %v3755
      %v3757 = vpop.f32.mrb[0].mxu0
      %v3758 = vadd.f32 %v3685, %v3757
      %v3759 = vpop.f32.mrb[0].mxu0
      %v3760 = vadd.f32 %v3687, %v3759
      %3761 = vmatprep.mubr.bf16.mxu0 %v1967
      %3762 = vmatmul.mubr.bf16.gmra.mrb[0].mxu0 %v1966
      %v3763 = vpop.f32.mrb[0].mxu0
      %v3764 = vadd.f32 %v3691, %v3763
      %v3765 = vpop.f32.mrb[0].mxu0
      %v3766 = vadd.f32 %v3693, %v3765
      %v3767 = vpop.f32.mrb[0].mxu0
      %v3768 = vadd.f32 %v3695, %v3767
      %v3769 = vpop.f32.mrb[0].mxu0
      %v3770 = vadd.f32 %v3697, %v3769
      %3771 = vmatprep.mubr.bf16.mxu0 %v1974
      %3772 = vmatmul.mubr.bf16.gmra.mrb[0].mxu0 %v1973
      %v3773 = vpop.f32.mrb[0].mxu0
      %v3774 = vadd.f32 %v3701, %v3773
      %v3775 = vpop.f32.mrb[0].mxu0
      %v3776 = vadd.f32 %v3703, %v3775
      %v3777 = vpop.f32.mrb[0].mxu0
      %v3778 = vadd.f32 %v3705, %v3777
      %v3779 = vpop.f32.mrb[0].mxu0
      %v3780 = vadd.f32 %v3707, %v3779
      %3781 = vdwg.mxu0
      %3782 = vmatprep.subr.bf16.mxu0 %v3092
      %3783 = vmatpush1.bf16.msra.mxu0 %v3091
      %3784 = vmatprep.subr.bf16.mxu0 %v3099
      %3785 = vmatpush1.bf16.msra.mxu0 %v3098
      %3786 = vmatprep.subr.bf16.mxu0 %v3106
      %3787 = vmatpush1.bf16.msra.mxu0 %v3105
      %3788 = vmatprep.subr.bf16.mxu0 %v3113
      %3789 = vmatpush1.bf16.msra.mxu0 %v3112
      %3790 = vmatprep.subr.bf16.mxu0 %v3120
      %3791 = vmatpush1.bf16.msra.mxu0 %v3119
      %3792 = vmatprep.subr.bf16.mxu0 %v3127
      %3793 = vmatpush1.bf16.msra.mxu0 %v3126
      %3794 = vmatprep.subr.bf16.mxu0 %v3134
      %3795 = vmatpush1.bf16.msra.mxu0 %v3133
      %3796 = vmatprep.subr.bf16.mxu0 %v3141
      %3797 = vmatpush1.bf16.msra.mxu0 %v3140
      %3798 = vmatprep.subr.bf16.mxu0 %v3148
      %3799 = vmatpush1.bf16.msra.mxu0 %v3147
      %3800 = vmatprep.subr.bf16.mxu0 %v3155
      %3801 = vmatpush1.bf16.msra.mxu0 %v3154
      %3802 = vmatprep.subr.bf16.mxu0 %v3162
      %3803 = vmatpush1.bf16.msra.mxu0 %v3161
      %3804 = vmatprep.subr.bf16.mxu0 %v3169
      %3805 = vmatpush1.bf16.msra.mxu0 %v3168
      %3806 = vmatprep.subr.bf16.mxu0 %v3176
      %3807 = vmatpush1.bf16.msra.mxu0 %v3175
      %3808 = vmatprep.subr.bf16.mxu0 %v3183
      %3809 = vmatpush1.bf16.msra.mxu0 %v3182
      %3810 = vmatprep.subr.bf16.mxu0 %v3190
      %3811 = vmatpush1.bf16.msra.mxu0 %v3189
      %3812 = vmatprep.subr.bf16.mxu0 %v3197
      %3813 = vmatpush1.bf16.msra.mxu0 %v3196
      %3814 = vmatprep.mubr.bf16.mxu0 %v1955
      %3815 = vmatmul.mubr.bf16.gmra.mrb[0].mxu0 %v1954
      %v3816 = vpop.f32.mrb[0].mxu0
      %v3817 = vadd.f32 %v3744, %v3816
      %v3818 = vpop.f32.mrb[0].mxu0
      %v3819 = vadd.f32 %v3746, %v3818
      %v3820 = vpop.f32.mrb[0].mxu0
      %v3821 = vadd.f32 %v3748, %v3820
      %v3822 = vpop.f32.mrb[0].mxu0
      %v3823 = vadd.f32 %v3750, %v3822
      %3824 = vmatprep.mubr.bf16.mxu0 %v1962
      %3825 = vmatmul.mubr.bf16.gmra.mrb[0].mxu0 %v1961
      %v3826 = vpop.f32.mrb[0].mxu0
      %v3827 = vadd.f32 %v3754, %v3826
      %v3828 = vpop.f32.mrb[0].mxu0
      %v3829 = vadd.f32 %v3756, %v3828
      %v3830 = vpop.f32.mrb[0].mxu0
      %v3831 = vadd.f32 %v3758, %v3830
      %v3832 = vpop.f32.mrb[0].mxu0
      %v3833 = vadd.f32 %v3760, %v3832
      %3834 = vmatprep.mubr.bf16.mxu0 %v1969
      %3835 = vmatmul.mubr.bf16.gmra.mrb[0].mxu0 %v1968
      %v3836 = vpop.f32.mrb[0].mxu0
      %v3837 = vadd.f32 %v3764, %v3836
      %v3838 = vpop.f32.mrb[0].mxu0
      %v3839 = vadd.f32 %v3766, %v3838
      %v3840 = vpop.f32.mrb[0].mxu0
      %v3841 = vadd.f32 %v3768, %v3840
      %v3842 = vpop.f32.mrb[0].mxu0
      %v3843 = vadd.f32 %v3770, %v3842
      %3844 = vmatprep.mubr.bf16.mxu0 %v1976
      %3845 = vmatmul.mubr.bf16.gmra.mrb[0].mxu0 %v1975
      %v3846 = vpop.f32.mrb[0].mxu0
      %v3847 = vadd.f32 %v3774, %v3846
      %v3848 = vpop.f32.mrb[0].mxu0
      %v3849 = vadd.f32 %v3776, %v3848
      %v3850 = vpop.f32.mrb[0].mxu0
      %v3851 = vadd.f32 %v3778, %v3850
      %v3852 = vpop.f32.mrb[0].mxu0
      %v3853 = vadd.f32 %v3780, %v3852
      %3854 = vdwg.mxu0
      %3855 = vmatprep.subr.bf16.mxu0 %v3204
      %3856 = vmatpush1.bf16.msra.mxu0 %v3203
      %3857 = vmatprep.subr.bf16.mxu0 %v3211
      %3858 = vmatpush1.bf16.msra.mxu0 %v3210
      %3859 = vmatprep.subr.bf16.mxu0 %v3218
      %3860 = vmatpush1.bf16.msra.mxu0 %v3217
      %3861 = vmatprep.subr.bf16.mxu0 %v3225
      %3862 = vmatpush1.bf16.msra.mxu0 %v3224
      %3863 = vmatprep.subr.bf16.mxu0 %v3232
      %3864 = vmatpush1.bf16.msra.mxu0 %v3231
      %3865 = vmatprep.subr.bf16.mxu0 %v3239
      %3866 = vmatpush1.bf16.msra.mxu0 %v3238
      %3867 = vmatprep.subr.bf16.mxu0 0
      %3868 = vmatpush1.bf16.msra.mxu0 0
      %3869 = vmatprep.subr.bf16.mxu0 0
      %3870 = vmatpush1.bf16.msra.mxu0 0
      %3871 = vmatprep.subr.bf16.mxu0 0
      %3872 = vmatpush1.bf16.msra.mxu0 0
      %3873 = vmatprep.subr.bf16.mxu0 0
      %3874 = vmatpush1.bf16.msra.mxu0 0
      %3875 = vmatprep.subr.bf16.mxu0 0
      %3876 = vmatpush1.bf16.msra.mxu0 0
      %3877 = vmatprep.subr.bf16.mxu0 0
      %3878 = vmatpush1.bf16.msra.mxu0 0
      %3879 = vmatprep.subr.bf16.mxu0 0
      %3880 = vmatpush1.bf16.msra.mxu0 0
      %3881 = vmatprep.subr.bf16.mxu0 0
      %3882 = vmatpush1.bf16.msra.mxu0 0
      %3883 = vmatprep.subr.bf16.mxu0 0
      %3884 = vmatpush1.bf16.msra.mxu0 0
      %3885 = vmatprep.subr.bf16.mxu0 0
      %3886 = vmatpush1.bf16.msra.mxu0 0
      %3887 = vmatprep.mubr.bf16.mxu0 0
      %3888 = vmatmul.mubr.bf16.gmra.mrb[0].mxu0 %v3625
      %v3889 = vpop.f32.mrb[0].mxu0
      %v3890 = vadd.f32 %v3817, %v3889
      %v3891 = vpop.f32.mrb[0].mxu0
      %v3892 = vadd.f32 %v3819, %v3891
      %v3893 = vpop.f32.mrb[0].mxu0
      %v3894 = vadd.f32 %v3821, %v3893
      %v3895 = vpop.f32.mrb[0].mxu0
      %v3896 = vadd.f32 %v3823, %v3895
      %3897 = vmatprep.mubr.bf16.mxu0 0
      %3898 = vmatmul.mubr.bf16.gmra.mrb[0].mxu0 %v3628
      %v3899 = vpop.f32.mrb[0].mxu0
      %v3900 = vadd.f32 %v3827, %v3899
      %v3901 = vpop.f32.mrb[0].mxu0
      %v3902 = vadd.f32 %v3829, %v3901
      %v3903 = vpop.f32.mrb[0].mxu0
      %v3904 = vadd.f32 %v3831, %v3903
      %v3905 = vpop.f32.mrb[0].mxu0
      %v3906 = vadd.f32 %v3833, %v3905
      %3907 = vmatprep.mubr.bf16.mxu0 0
      %3908 = vmatmul.mubr.bf16.gmra.mrb[0].mxu0 %v3631
      %v3909 = vpop.f32.mrb[0].mxu0
      %v3910 = vadd.f32 %v3837, %v3909
      %v3911 = vpop.f32.mrb[0].mxu0
      %v3912 = vadd.f32 %v3839, %v3911
      %v3913 = vpop.f32.mrb[0].mxu0
      %v3914 = vadd.f32 %v3841, %v3913
      %v3915 = vpop.f32.mrb[0].mxu0
      %v3916 = vadd.f32 %v3843, %v3915
      %3917 = vmatprep.mubr.bf16.mxu0 0
      %3918 = vmatmul.mubr.bf16.gmra.mrb[0].mxu0 %v3634
      %v3919 = vpop.f32.mrb[0].mxu0
      %v3920 = vadd.f32 %v3847, %v3919
      %v3921 = vpop.f32.mrb[0].mxu0
      %v3922 = vadd.f32 %v3849, %v3921
      %v3923 = vpop.f32.mrb[0].mxu0
      %v3924 = vadd.f32 %v3851, %v3923
      %v3925 = vpop.f32.mrb[0].mxu0
      %v3926 = vadd.f32 %v3853, %v3925
      %3927 = vdwg.mxu0
      %3928 = vmatprep.subr.bf16.mxu0 %v2870
      %3929 = vmatpush1.bf16.msra.mxu0 %v2869
      %3930 = vmatprep.subr.bf16.mxu0 %v2877
      %3931 = vmatpush1.bf16.msra.mxu0 %v2876
      %3932 = vmatprep.subr.bf16.mxu0 %v2884
      %3933 = vmatpush1.bf16.msra.mxu0 %v2883
      %3934 = vmatprep.subr.bf16.mxu0 %v2891
      %3935 = vmatpush1.bf16.msra.mxu0 %v2890
      %3936 = vmatprep.subr.bf16.mxu0 %v2898
      %3937 = vmatpush1.bf16.msra.mxu0 %v2897
      %3938 = vmatprep.subr.bf16.mxu0 %v2905
      %3939 = vmatpush1.bf16.msra.mxu0 %v2904
      %3940 = vmatprep.subr.bf16.mxu0 %v2912
      %3941 = vmatpush1.bf16.msra.mxu0 %v2911
      %3942 = vmatprep.subr.bf16.mxu0 %v2919
      %3943 = vmatpush1.bf16.msra.mxu0 %v2918
      %3944 = vmatprep.subr.bf16.mxu0 %v2926
      %3945 = vmatpush1.bf16.msra.mxu0 %v2925
      %3946 = vmatprep.subr.bf16.mxu0 %v2933
      %3947 = vmatpush1.bf16.msra.mxu0 %v2932
      %3948 = vmatprep.subr.bf16.mxu0 %v2940
      %3949 = vmatpush1.bf16.msra.mxu0 %v2939
      %3950 = vmatprep.subr.bf16.mxu0 %v2947
      %3951 = vmatpush1.bf16.msra.mxu0 %v2946
      %3952 = vmatprep.subr.bf16.mxu0 %v2954
      %3953 = vmatpush1.bf16.msra.mxu0 %v2953
      %3954 = vmatprep.subr.bf16.mxu0 %v2961
      %3955 = vmatpush1.bf16.msra.mxu0 %v2960
      %3956 = vmatprep.subr.bf16.mxu0 %v2968
      %3957 = vmatpush1.bf16.msra.mxu0 %v2967
      %3958 = vmatprep.subr.bf16.mxu0 %v2975
      %3959 = vmatpush1.bf16.msra.mxu0 %v2974
      %3960 = vmatprep.mubr.bf16.mxu0 %v1951
      %3961 = vmatmul.mubr.bf16.gmra.mrb[0].mxu0 %v1950
      %v3962 = vpop.f32.mrb[0].mxu0
      %v3963 = vadd.f32 %v1825, %v3962
      %v3964 = vpop.f32.mrb[0].mxu0
      %v3965 = vadd.f32 %v1825, %v3964
      %v3966 = vpop.f32.mrb[0].mxu0
      %v3967 = vadd.f32 %v1830, %v3966
      %v3968 = vpop.f32.mrb[0].mxu0
      %v3969 = vadd.f32 %v1830, %v3968
      %3970 = vmatprep.mubr.bf16.mxu0 %v1958
      %3971 = vmatmul.mubr.bf16.gmra.mrb[0].mxu0 %v1957
      %v3972 = vpop.f32.mrb[0].mxu0
      %v3973 = vadd.f32 %v1835, %v3972
      %v3974 = vpop.f32.mrb[0].mxu0
      %v3975 = vadd.f32 %v1835, %v3974
      %v3976 = vpop.f32.mrb[0].mxu0
      %v3977 = vadd.f32 %v1840, %v3976
      %v3978 = vpop.f32.mrb[0].mxu0
      %v3979 = vadd.f32 %v1840, %v3978
      %3980 = vmatprep.mubr.bf16.mxu0 %v1965
      %3981 = vmatmul.mubr.bf16.gmra.mrb[0].mxu0 %v1964
      %v3982 = vpop.f32.mrb[0].mxu0
      %v3983 = vadd.f32 %v1845, %v3982
      %v3984 = vpop.f32.mrb[0].mxu0
      %v3985 = vadd.f32 %v1845, %v3984
      %v3986 = vpop.f32.mrb[0].mxu0
      %v3987 = vadd.f32 %v1850, %v3986
      %v3988 = vpop.f32.mrb[0].mxu0
      %v3989 = vadd.f32 %v1850, %v3988
      %3990 = vmatprep.mubr.bf16.mxu0 %v1972
      %3991 = vmatmul.mubr.bf16.gmra.mrb[0].mxu0 %v1971
      %v3992 = vpop.f32.mrb[0].mxu0
      %v3993 = vadd.f32 %v1855, %v3992
      %v3994 = vpop.f32.mrb[0].mxu0
      %v3995 = vadd.f32 %v1855, %v3994
      %v3996 = vpop.f32.mrb[0].mxu0
      %v3997 = vadd.f32 %v1860, %v3996
      %v3998 = vpop.f32.mrb[0].mxu0
      %v3999 = vadd.f32 %v1860, %v3998
      %4000 = vdwg.mxu0
      %4001 = vmatprep.subr.bf16.mxu0 %v2982
      %4002 = vmatpush1.bf16.msra.mxu0 %v2981
      %4003 = vmatprep.subr.bf16.mxu0 %v2989
      %4004 = vmatpush1.bf16.msra.mxu0 %v2988
      %4005 = vmatprep.subr.bf16.mxu0 %v2996
      %4006 = vmatpush1.bf16.msra.mxu0 %v2995
      %4007 = vmatprep.subr.bf16.mxu0 %v3003
      %4008 = vmatpush1.bf16.msra.mxu0 %v3002
      %4009 = vmatprep.subr.bf16.mxu0 %v3010
      %4010 = vmatpush1.bf16.msra.mxu0 %v3009
      %4011 = vmatprep.subr.bf16.mxu0 %v3017
      %4012 = vmatpush1.bf16.msra.mxu0 %v3016
      %4013 = vmatprep.subr.bf16.mxu0 %v3024
      %4014 = vmatpush1.bf16.msra.mxu0 %v3023
      %4015 = vmatprep.subr.bf16.mxu0 %v3031
      %4016 = vmatpush1.bf16.msra.mxu0 %v3030
      %4017 = vmatprep.subr.bf16.mxu0 %v3038
      %4018 = vmatpush1.bf16.msra.mxu0 %v3037
      %4019 = vmatprep.subr.bf16.mxu0 %v3045
      %4020 = vmatpush1.bf16.msra.mxu0 %v3044
      %4021 = vmatprep.subr.bf16.mxu0 %v3052
      %4022 = vmatpush1.bf16.msra.mxu0 %v3051
      %4023 = vmatprep.subr.bf16.mxu0 %v3059
      %4024 = vmatpush1.bf16.msra.mxu0 %v3058
      %4025 = vmatprep.subr.bf16.mxu0 %v3066
      %4026 = vmatpush1.bf16.msra.mxu0 %v3065
      %4027 = vmatprep.subr.bf16.mxu0 %v3073
      %4028 = vmatpush1.bf16.msra.mxu0 %v3072
      %4029 = vmatprep.subr.bf16.mxu0 %v3080
      %4030 = vmatpush1.bf16.msra.mxu0 %v3079
      %4031 = vmatprep.subr.bf16.mxu0 %v3087
      %4032 = vmatpush1.bf16.msra.mxu0 %v3086
      %4033 = vmatprep.mubr.bf16.mxu0 %v1953
      %4034 = vmatmul.mubr.bf16.gmra.mrb[0].mxu0 %v1952
      %v4035 = vpop.f32.mrb[0].mxu0
      %v4036 = vadd.f32 %v3963, %v4035
      %v4037 = vpop.f32.mrb[0].mxu0
      %v4038 = vadd.f32 %v3965, %v4037
      %v4039 = vpop.f32.mrb[0].mxu0
      %v4040 = vadd.f32 %v3967, %v4039
      %v4041 = vpop.f32.mrb[0].mxu0
      %v4042 = vadd.f32 %v3969, %v4041
      %4043 = vmatprep.mubr.bf16.mxu0 %v1960
      %4044 = vmatmul.mubr.bf16.gmra.mrb[0].mxu0 %v1959
      %v4045 = vpop.f32.mrb[0].mxu0
      %v4046 = vadd.f32 %v3973, %v4045
      %v4047 = vpop.f32.mrb[0].mxu0
      %v4048 = vadd.f32 %v3975, %v4047
      %v4049 = vpop.f32.mrb[0].mxu0
      %v4050 = vadd.f32 %v3977, %v4049
      %v4051 = vpop.f32.mrb[0].mxu0
      %v4052 = vadd.f32 %v3979, %v4051
      %4053 = vmatprep.mubr.bf16.mxu0 %v1967
      %4054 = vmatmul.mubr.bf16.gmra.mrb[0].mxu0 %v1966
      %v4055 = vpop.f32.mrb[0].mxu0
      %v4056 = vadd.f32 %v3983, %v4055
      %v4057 = vpop.f32.mrb[0].mxu0
      %v4058 = vadd.f32 %v3985, %v4057
      %v4059 = vpop.f32.mrb[0].mxu0
      %v4060 = vadd.f32 %v3987, %v4059
      %v4061 = vpop.f32.mrb[0].mxu0
      %v4062 = vadd.f32 %v3989, %v4061
      %4063 = vmatprep.mubr.bf16.mxu0 %v1974
      %4064 = vmatmul.mubr.bf16.gmra.mrb[0].mxu0 %v1973
      %v4065 = vpop.f32.mrb[0].mxu0
      %v4066 = vadd.f32 %v3993, %v4065
      %v4067 = vpop.f32.mrb[0].mxu0
      %v4068 = vadd.f32 %v3995, %v4067
      %v4069 = vpop.f32.mrb[0].mxu0
      %v4070 = vadd.f32 %v3997, %v4069
      %v4071 = vpop.f32.mrb[0].mxu0
      %v4072 = vadd.f32 %v3999, %v4071
      %4073 = vdwg.mxu0
      %4074 = vmatprep.subr.bf16.mxu0 %v3094
      %4075 = vmatpush1.bf16.msra.mxu0 %v3093
      %4076 = vmatprep.subr.bf16.mxu0 %v3101
      %4077 = vmatpush1.bf16.msra.mxu0 %v3100
      %4078 = vmatprep.subr.bf16.mxu0 %v3108
      %4079 = vmatpush1.bf16.msra.mxu0 %v3107
      %4080 = vmatprep.subr.bf16.mxu0 %v3115
      %4081 = vmatpush1.bf16.msra.mxu0 %v3114
      %4082 = vmatprep.subr.bf16.mxu0 %v3122
      %4083 = vmatpush1.bf16.msra.mxu0 %v3121
      %4084 = vmatprep.subr.bf16.mxu0 %v3129
      %4085 = vmatpush1.bf16.msra.mxu0 %v3128
      %4086 = vmatprep.subr.bf16.mxu0 %v3136
      %4087 = vmatpush1.bf16.msra.mxu0 %v3135
      %4088 = vmatprep.subr.bf16.mxu0 %v3143
      %4089 = vmatpush1.bf16.msra.mxu0 %v3142
      %4090 = vmatprep.subr.bf16.mxu0 %v3150
      %4091 = vmatpush1.bf16.msra.mxu0 %v3149
      %4092 = vmatprep.subr.bf16.mxu0 %v3157
      %4093 = vmatpush1.bf16.msra.mxu0 %v3156
      %4094 = vmatprep.subr.bf16.mxu0 %v3164
      %4095 = vmatpush1.bf16.msra.mxu0 %v3163
      %4096 = vmatprep.subr.bf16.mxu0 %v3171
      %4097 = vmatpush1.bf16.msra.mxu0 %v3170
      %4098 = vmatprep.subr.bf16.mxu0 %v3178
      %4099 = vmatpush1.bf16.msra.mxu0 %v3177
      %4100 = vmatprep.subr.bf16.mxu0 %v3185
      %4101 = vmatpush1.bf16.msra.mxu0 %v3184
      %4102 = vmatprep.subr.bf16.mxu0 %v3192
      %4103 = vmatpush1.bf16.msra.mxu0 %v3191
      %4104 = vmatprep.subr.bf16.mxu0 %v3199
      %4105 = vmatpush1.bf16.msra.mxu0 %v3198
      %4106 = vmatprep.mubr.bf16.mxu0 %v1955
      %4107 = vmatmul.mubr.bf16.gmra.mrb[0].mxu0 %v1954
      %v4108 = vpop.f32.mrb[0].mxu0
      %v4109 = vadd.f32 %v4036, %v4108
      %v4110 = vpop.f32.mrb[0].mxu0
      %v4111 = vadd.f32 %v4038, %v4110
      %v4112 = vpop.f32.mrb[0].mxu0
      %v4113 = vadd.f32 %v4040, %v4112
      %v4114 = vpop.f32.mrb[0].mxu0
      %v4115 = vadd.f32 %v4042, %v4114
      %4116 = vmatprep.mubr.bf16.mxu0 %v1962
      %4117 = vmatmul.mubr.bf16.gmra.mrb[0].mxu0 %v1961
      %v4118 = vpop.f32.mrb[0].mxu0
      %v4119 = vadd.f32 %v4046, %v4118
      %v4120 = vpop.f32.mrb[0].mxu0
      %v4121 = vadd.f32 %v4048, %v4120
      %v4122 = vpop.f32.mrb[0].mxu0
      %v4123 = vadd.f32 %v4050, %v4122
      %v4124 = vpop.f32.mrb[0].mxu0
      %v4125 = vadd.f32 %v4052, %v4124
      %4126 = vmatprep.mubr.bf16.mxu0 %v1969
      %4127 = vmatmul.mubr.bf16.gmra.mrb[0].mxu0 %v1968
      %v4128 = vpop.f32.mrb[0].mxu0
      %v4129 = vadd.f32 %v4056, %v4128
      %v4130 = vpop.f32.mrb[0].mxu0
      %v4131 = vadd.f32 %v4058, %v4130
      %v4132 = vpop.f32.mrb[0].mxu0
      %v4133 = vadd.f32 %v4060, %v4132
      %v4134 = vpop.f32.mrb[0].mxu0
      %v4135 = vadd.f32 %v4062, %v4134
      %4136 = vmatprep.mubr.bf16.mxu0 %v1976
      %4137 = vmatmul.mubr.bf16.gmra.mrb[0].mxu0 %v1975
      %v4138 = vpop.f32.mrb[0].mxu0
      %v4139 = vadd.f32 %v4066, %v4138
      %v4140 = vpop.f32.mrb[0].mxu0
      %v4141 = vadd.f32 %v4068, %v4140
      %v4142 = vpop.f32.mrb[0].mxu0
      %v4143 = vadd.f32 %v4070, %v4142
      %v4144 = vpop.f32.mrb[0].mxu0
      %v4145 = vadd.f32 %v4072, %v4144
      %4146 = vdwg.mxu0
      %4147 = vmatprep.subr.bf16.mxu0 %v3206
      %4148 = vmatpush1.bf16.msra.mxu0 %v3205
      %4149 = vmatprep.subr.bf16.mxu0 %v3213
      %4150 = vmatpush1.bf16.msra.mxu0 %v3212
      %4151 = vmatprep.subr.bf16.mxu0 %v3220
      %4152 = vmatpush1.bf16.msra.mxu0 %v3219
      %4153 = vmatprep.subr.bf16.mxu0 %v3227
      %4154 = vmatpush1.bf16.msra.mxu0 %v3226
      %4155 = vmatprep.subr.bf16.mxu0 %v3234
      %4156 = vmatpush1.bf16.msra.mxu0 %v3233
      %4157 = vmatprep.subr.bf16.mxu0 %v3241
      %4158 = vmatpush1.bf16.msra.mxu0 %v3240
      %4159 = vmatprep.subr.bf16.mxu0 0
      %4160 = vmatpush1.bf16.msra.mxu0 0
      %4161 = vmatprep.subr.bf16.mxu0 0
      %4162 = vmatpush1.bf16.msra.mxu0 0
      %4163 = vmatprep.subr.bf16.mxu0 0
      %4164 = vmatpush1.bf16.msra.mxu0 0
      %4165 = vmatprep.subr.bf16.mxu0 0
      %4166 = vmatpush1.bf16.msra.mxu0 0
      %4167 = vmatprep.subr.bf16.mxu0 0
      %4168 = vmatpush1.bf16.msra.mxu0 0
      %4169 = vmatprep.subr.bf16.mxu0 0
      %4170 = vmatpush1.bf16.msra.mxu0 0
      %4171 = vmatprep.subr.bf16.mxu0 0
      %4172 = vmatpush1.bf16.msra.mxu0 0
      %4173 = vmatprep.subr.bf16.mxu0 0
      %4174 = vmatpush1.bf16.msra.mxu0 0
      %4175 = vmatprep.subr.bf16.mxu0 0
      %4176 = vmatpush1.bf16.msra.mxu0 0
      %4177 = vmatprep.subr.bf16.mxu0 0
      %4178 = vmatpush1.bf16.msra.mxu0 0
      %4179 = vmatprep.mubr.bf16.mxu0 0
      %4180 = vmatmul.mubr.bf16.gmra.mrb[0].mxu0 %v3625
      %v4181 = vpop.f32.mrb[0].mxu0
      %v4182 = vadd.f32 %v4109, %v4181
      %v4183 = vpop.f32.mrb[0].mxu0
      %v4184 = vadd.f32 %v4111, %v4183
      %v4185 = vpop.f32.mrb[0].mxu0
      %v4186 = vadd.f32 %v4113, %v4185
      %v4187 = vpop.f32.mrb[0].mxu0
      %v4188 = vadd.f32 %v4115, %v4187
      %4189 = vmatprep.mubr.bf16.mxu0 0
      %4190 = vmatmul.mubr.bf16.gmra.mrb[0].mxu0 %v3628
      %v4191 = vpop.f32.mrb[0].mxu0
      %v4192 = vadd.f32 %v4119, %v4191
      %v4193 = vpop.f32.mrb[0].mxu0
      %v4194 = vadd.f32 %v4121, %v4193
      %v4195 = vpop.f32.mrb[0].mxu0
      %v4196 = vadd.f32 %v4123, %v4195
      %v4197 = vpop.f32.mrb[0].mxu0
      %v4198 = vadd.f32 %v4125, %v4197
      %4199 = vmatprep.mubr.bf16.mxu0 0
      %4200 = vmatmul.mubr.bf16.gmra.mrb[0].mxu0 %v3631
      %v4201 = vpop.f32.mrb[0].mxu0
      %v4202 = vadd.f32 %v4129, %v4201
      %v4203 = vpop.f32.mrb[0].mxu0
      %v4204 = vadd.f32 %v4131, %v4203
      %v4205 = vpop.f32.mrb[0].mxu0
      %v4206 = vadd.f32 %v4133, %v4205
      %v4207 = vpop.f32.mrb[0].mxu0
      %v4208 = vadd.f32 %v4135, %v4207
      %4209 = vmatprep.mubr.bf16.mxu0 0
      %4210 = vmatmul.mubr.bf16.gmra.mrb[0].mxu0 %v3634
      %v4211 = vpop.f32.mrb[0].mxu0
      %v4212 = vadd.f32 %v4139, %v4211
      %v4213 = vpop.f32.mrb[0].mxu0
      %v4214 = vadd.f32 %v4141, %v4213
      %v4215 = vpop.f32.mrb[0].mxu0
      %v4216 = vadd.f32 %v4143, %v4215
      %v4217 = vpop.f32.mrb[0].mxu0
      %v4218 = vadd.f32 %v4145, %v4217
      %4219 = vdwg.mxu0
      %4220 = vmatprep.subr.bf16.mxu0 %v2872
      %4221 = vmatpush1.bf16.msra.mxu0 %v2871
      %4222 = vmatprep.subr.bf16.mxu0 %v2879
      %4223 = vmatpush1.bf16.msra.mxu0 %v2878
      %4224 = vmatprep.subr.bf16.mxu0 %v2886
      %4225 = vmatpush1.bf16.msra.mxu0 %v2885
      %4226 = vmatprep.subr.bf16.mxu0 %v2893
      %4227 = vmatpush1.bf16.msra.mxu0 %v2892
      %4228 = vmatprep.subr.bf16.mxu0 %v2900
      %4229 = vmatpush1.bf16.msra.mxu0 %v2899
      %4230 = vmatprep.subr.bf16.mxu0 %v2907
      %4231 = vmatpush1.bf16.msra.mxu0 %v2906
      %4232 = vmatprep.subr.bf16.mxu0 %v2914
      %4233 = vmatpush1.bf16.msra.mxu0 %v2913
      %4234 = vmatprep.subr.bf16.mxu0 %v2921
      %4235 = vmatpush1.bf16.msra.mxu0 %v2920
      %4236 = vmatprep.subr.bf16.mxu0 %v2928
      %4237 = vmatpush1.bf16.msra.mxu0 %v2927
      %4238 = vmatprep.subr.bf16.mxu0 %v2935
      %4239 = vmatpush1.bf16.msra.mxu0 %v2934
      %4240 = vmatprep.subr.bf16.mxu0 %v2942
      %4241 = vmatpush1.bf16.msra.mxu0 %v2941
      %4242 = vmatprep.subr.bf16.mxu0 %v2949
      %4243 = vmatpush1.bf16.msra.mxu0 %v2948
      %4244 = vmatprep.subr.bf16.mxu0 %v2956
      %4245 = vmatpush1.bf16.msra.mxu0 %v2955
      %4246 = vmatprep.subr.bf16.mxu0 %v2963
      %4247 = vmatpush1.bf16.msra.mxu0 %v2962
      %4248 = vmatprep.subr.bf16.mxu0 %v2970
      %4249 = vmatpush1.bf16.msra.mxu0 %v2969
      %4250 = vmatprep.subr.bf16.mxu0 %v2977
      %4251 = vmatpush1.bf16.msra.mxu0 %v2976
      %4252 = vmatprep.mubr.bf16.mxu0 %v1951
      %4253 = vmatmul.mubr.bf16.gmra.mrb[0].mxu0 %v1950
      %v4254 = vpop.f32.mrb[0].mxu0
      %v4255 = vadd.f32 %v1825, %v4254
      %v4256 = vpop.f32.mrb[0].mxu0
      %v4257 = vadd.f32 %v1825, %v4256
      %v4258 = vpop.f32.mrb[0].mxu0
      %v4259 = vadd.f32 %v1830, %v4258
      %v4260 = vpop.f32.mrb[0].mxu0
      %v4261 = vadd.f32 %v1830, %v4260
      %4262 = vmatprep.mubr.bf16.mxu0 %v1958
      %4263 = vmatmul.mubr.bf16.gmra.mrb[0].mxu0 %v1957
      %v4264 = vpop.f32.mrb[0].mxu0
      %v4265 = vadd.f32 %v1835, %v4264
      %v4266 = vpop.f32.mrb[0].mxu0
      %v4267 = vadd.f32 %v1835, %v4266
      %v4268 = vpop.f32.mrb[0].mxu0
      %v4269 = vadd.f32 %v1840, %v4268
      %v4270 = vpop.f32.mrb[0].mxu0
      %v4271 = vadd.f32 %v1840, %v4270
      %4272 = vmatprep.mubr.bf16.mxu0 %v1965
      %4273 = vmatmul.mubr.bf16.gmra.mrb[0].mxu0 %v1964
      %v4274 = vpop.f32.mrb[0].mxu0
      %v4275 = vadd.f32 %v1845, %v4274
      %v4276 = vpop.f32.mrb[0].mxu0
      %v4277 = vadd.f32 %v1845, %v4276
      %v4278 = vpop.f32.mrb[0].mxu0
      %v4279 = vadd.f32 %v1850, %v4278
      %v4280 = vpop.f32.mrb[0].mxu0
      %v4281 = vadd.f32 %v1850, %v4280
      %4282 = vmatprep.mubr.bf16.mxu0 %v1972
      %4283 = vmatmul.mubr.bf16.gmra.mrb[0].mxu0 %v1971
      %v4284 = vpop.f32.mrb[0].mxu0
      %v4285 = vadd.f32 %v1855, %v4284
      %v4286 = vpop.f32.mrb[0].mxu0
      %v4287 = vadd.f32 %v1855, %v4286
      %v4288 = vpop.f32.mrb[0].mxu0
      %v4289 = vadd.f32 %v1860, %v4288
      %v4290 = vpop.f32.mrb[0].mxu0
      %v4291 = vadd.f32 %v1860, %v4290
      %4292 = vdwg.mxu0
      %4293 = vmatprep.subr.bf16.mxu0 %v2984
      %4294 = vmatpush1.bf16.msra.mxu0 %v2983
      %4295 = vmatprep.subr.bf16.mxu0 %v2991
      %4296 = vmatpush1.bf16.msra.mxu0 %v2990
      %4297 = vmatprep.subr.bf16.mxu0 %v2998
      %4298 = vmatpush1.bf16.msra.mxu0 %v2997
      %4299 = vmatprep.subr.bf16.mxu0 %v3005
      %4300 = vmatpush1.bf16.msra.mxu0 %v3004
      %4301 = vmatprep.subr.bf16.mxu0 %v3012
      %4302 = vmatpush1.bf16.msra.mxu0 %v3011
      %4303 = vmatprep.subr.bf16.mxu0 %v3019
      %4304 = vmatpush1.bf16.msra.mxu0 %v3018
      %4305 = vmatprep.subr.bf16.mxu0 %v3026
      %4306 = vmatpush1.bf16.msra.mxu0 %v3025
      %4307 = vmatprep.subr.bf16.mxu0 %v3033
      %4308 = vmatpush1.bf16.msra.mxu0 %v3032
      %4309 = vmatprep.subr.bf16.mxu0 %v3040
      %4310 = vmatpush1.bf16.msra.mxu0 %v3039
      %4311 = vmatprep.subr.bf16.mxu0 %v3047
      %4312 = vmatpush1.bf16.msra.mxu0 %v3046
      %4313 = vmatprep.subr.bf16.mxu0 %v3054
      %4314 = vmatpush1.bf16.msra.mxu0 %v3053
      %4315 = vmatprep.subr.bf16.mxu0 %v3061
      %4316 = vmatpush1.bf16.msra.mxu0 %v3060
      %4317 = vmatprep.subr.bf16.mxu0 %v3068
      %4318 = vmatpush1.bf16.msra.mxu0 %v3067
      %4319 = vmatprep.subr.bf16.mxu0 %v3075
      %4320 = vmatpush1.bf16.msra.mxu0 %v3074
      %4321 = vmatprep.subr.bf16.mxu0 %v3082
      %4322 = vmatpush1.bf16.msra.mxu0 %v3081
      %4323 = vmatprep.subr.bf16.mxu0 %v3089
      %4324 = vmatpush1.bf16.msra.mxu0 %v3088
      %4325 = vmatprep.mubr.bf16.mxu0 %v1953
      %4326 = vmatmul.mubr.bf16.gmra.mrb[0].mxu0 %v1952
      %v4327 = vpop.f32.mrb[0].mxu0
      %v4328 = vadd.f32 %v4255, %v4327
      %v4329 = vpop.f32.mrb[0].mxu0
      %v4330 = vadd.f32 %v4257, %v4329
      %v4331 = vpop.f32.mrb[0].mxu0
      %v4332 = vadd.f32 %v4259, %v4331
      %v4333 = vpop.f32.mrb[0].mxu0
      %v4334 = vadd.f32 %v4261, %v4333
      %4335 = vmatprep.mubr.bf16.mxu0 %v1960
      %4336 = vmatmul.mubr.bf16.gmra.mrb[0].mxu0 %v1959
      %v4337 = vpop.f32.mrb[0].mxu0
      %v4338 = vadd.f32 %v4265, %v4337
      %v4339 = vpop.f32.mrb[0].mxu0
      %v4340 = vadd.f32 %v4267, %v4339
      %v4341 = vpop.f32.mrb[0].mxu0
      %v4342 = vadd.f32 %v4269, %v4341
      %v4343 = vpop.f32.mrb[0].mxu0
      %v4344 = vadd.f32 %v4271, %v4343
      %4345 = vmatprep.mubr.bf16.mxu0 %v1967
      %4346 = vmatmul.mubr.bf16.gmra.mrb[0].mxu0 %v1966
      %v4347 = vpop.f32.mrb[0].mxu0
      %v4348 = vadd.f32 %v4275, %v4347
      %v4349 = vpop.f32.mrb[0].mxu0
      %v4350 = vadd.f32 %v4277, %v4349
      %v4351 = vpop.f32.mrb[0].mxu0
      %v4352 = vadd.f32 %v4279, %v4351
      %v4353 = vpop.f32.mrb[0].mxu0
      %v4354 = vadd.f32 %v4281, %v4353
      %4355 = vmatprep.mubr.bf16.mxu0 %v1974
      %4356 = vmatmul.mubr.bf16.gmra.mrb[0].mxu0 %v1973
      %v4357 = vpop.f32.mrb[0].mxu0
      %v4358 = vadd.f32 %v4285, %v4357
      %v4359 = vpop.f32.mrb[0].mxu0
      %v4360 = vadd.f32 %v4287, %v4359
      %v4361 = vpop.f32.mrb[0].mxu0
      %v4362 = vadd.f32 %v4289, %v4361
      %v4363 = vpop.f32.mrb[0].mxu0
      %v4364 = vadd.f32 %v4291, %v4363
      %4365 = vdwg.mxu0
      %4366 = vmatprep.subr.bf16.mxu0 %v3096
      %4367 = vmatpush1.bf16.msra.mxu0 %v3095
      %4368 = vmatprep.subr.bf16.mxu0 %v3103
      %4369 = vmatpush1.bf16.msra.mxu0 %v3102
      %4370 = vmatprep.subr.bf16.mxu0 %v3110
      %4371 = vmatpush1.bf16.msra.mxu0 %v3109
      %4372 = vmatprep.subr.bf16.mxu0 %v3117
      %4373 = vmatpush1.bf16.msra.mxu0 %v3116
      %4374 = vmatprep.subr.bf16.mxu0 %v3124
      %4375 = vmatpush1.bf16.msra.mxu0 %v3123
      %4376 = vmatprep.subr.bf16.mxu0 %v3131
      %4377 = vmatpush1.bf16.msra.mxu0 %v3130
      %4378 = vmatprep.subr.bf16.mxu0 %v3138
      %4379 = vmatpush1.bf16.msra.mxu0 %v3137
      %4380 = vmatprep.subr.bf16.mxu0 %v3145
      %4381 = vmatpush1.bf16.msra.mxu0 %v3144
      %4382 = vmatprep.subr.bf16.mxu0 %v3152
      %4383 = vmatpush1.bf16.msra.mxu0 %v3151
      %4384 = vmatprep.subr.bf16.mxu0 %v3159
      %4385 = vmatpush1.bf16.msra.mxu0 %v3158
      %4386 = vmatprep.subr.bf16.mxu0 %v3166
      %4387 = vmatpush1.bf16.msra.mxu0 %v3165
      %4388 = vmatprep.subr.bf16.mxu0 %v3173
      %4389 = vmatpush1.bf16.msra.mxu0 %v3172
      %4390 = vmatprep.subr.bf16.mxu0 %v3180
      %4391 = vmatpush1.bf16.msra.mxu0 %v3179
      %4392 = vmatprep.subr.bf16.mxu0 %v3187
      %4393 = vmatpush1.bf16.msra.mxu0 %v3186
      %4394 = vmatprep.subr.bf16.mxu0 %v3194
      %4395 = vmatpush1.bf16.msra.mxu0 %v3193
      %4396 = vmatprep.subr.bf16.mxu0 %v3201
      %4397 = vmatpush1.bf16.msra.mxu0 %v3200
      %4398 = vmatprep.mubr.bf16.mxu0 %v1955
      %4399 = vmatmul.mubr.bf16.gmra.mrb[0].mxu0 %v1954
      %v4400 = vpop.f32.mrb[0].mxu0
      %v4401 = vadd.f32 %v4328, %v4400
      %v4402 = vpop.f32.mrb[0].mxu0
      %v4403 = vadd.f32 %v4330, %v4402
      %v4404 = vpop.f32.mrb[0].mxu0
      %v4405 = vadd.f32 %v4332, %v4404
      %v4406 = vpop.f32.mrb[0].mxu0
      %v4407 = vadd.f32 %v4334, %v4406
      %4408 = vmatprep.mubr.bf16.mxu0 %v1962
      %4409 = vmatmul.mubr.bf16.gmra.mrb[0].mxu0 %v1961
      %v4410 = vpop.f32.mrb[0].mxu0
      %v4411 = vadd.f32 %v4338, %v4410
      %v4412 = vpop.f32.mrb[0].mxu0
      %v4413 = vadd.f32 %v4340, %v4412
      %v4414 = vpop.f32.mrb[0].mxu0
      %v4415 = vadd.f32 %v4342, %v4414
      %v4416 = vpop.f32.mrb[0].mxu0
      %v4417 = vadd.f32 %v4344, %v4416
      %4418 = vmatprep.mubr.bf16.mxu0 %v1969
      %4419 = vmatmul.mubr.bf16.gmra.mrb[0].mxu0 %v1968
      %v4420 = vpop.f32.mrb[0].mxu0
      %v4421 = vadd.f32 %v4348, %v4420
      %v4422 = vpop.f32.mrb[0].mxu0
      %v4423 = vadd.f32 %v4350, %v4422
      %v4424 = vpop.f32.mrb[0].mxu0
      %v4425 = vadd.f32 %v4352, %v4424
      %v4426 = vpop.f32.mrb[0].mxu0
      %v4427 = vadd.f32 %v4354, %v4426
      %4428 = vmatprep.mubr.bf16.mxu0 %v1976
      %4429 = vmatmul.mubr.bf16.gmra.mrb[0].mxu0 %v1975
      %v4430 = vpop.f32.mrb[0].mxu0
      %v4431 = vadd.f32 %v4358, %v4430
      %v4432 = vpop.f32.mrb[0].mxu0
      %v4433 = vadd.f32 %v4360, %v4432
      %v4434 = vpop.f32.mrb[0].mxu0
      %v4435 = vadd.f32 %v4362, %v4434
      %v4436 = vpop.f32.mrb[0].mxu0
      %v4437 = vadd.f32 %v4364, %v4436
      %4438 = vdwg.mxu0
      %4439 = vmatprep.subr.bf16.mxu0 %v3208
      %4440 = vmatpush1.bf16.msra.mxu0 %v3207
      %4441 = vmatprep.subr.bf16.mxu0 %v3215
      %4442 = vmatpush1.bf16.msra.mxu0 %v3214
      %4443 = vmatprep.subr.bf16.mxu0 %v3222
      %4444 = vmatpush1.bf16.msra.mxu0 %v3221
      %4445 = vmatprep.subr.bf16.mxu0 %v3229
      %4446 = vmatpush1.bf16.msra.mxu0 %v3228
      %4447 = vmatprep.subr.bf16.mxu0 %v3236
      %4448 = vmatpush1.bf16.msra.mxu0 %v3235
      %4449 = vmatprep.subr.bf16.mxu0 %v3243
      %4450 = vmatpush1.bf16.msra.mxu0 %v3242
      %4451 = vmatprep.subr.bf16.mxu0 0
      %4452 = vmatpush1.bf16.msra.mxu0 0
      %4453 = vmatprep.subr.bf16.mxu0 0
      %4454 = vmatpush1.bf16.msra.mxu0 0
      %4455 = vmatprep.subr.bf16.mxu0 0
      %4456 = vmatpush1.bf16.msra.mxu0 0
      %4457 = vmatprep.subr.bf16.mxu0 0
      %4458 = vmatpush1.bf16.msra.mxu0 0
      %4459 = vmatprep.subr.bf16.mxu0 0
      %4460 = vmatpush1.bf16.msra.mxu0 0
      %4461 = vmatprep.subr.bf16.mxu0 0
      %4462 = vmatpush1.bf16.msra.mxu0 0
      %4463 = vmatprep.subr.bf16.mxu0 0
      %4464 = vmatpush1.bf16.msra.mxu0 0
      %4465 = vmatprep.subr.bf16.mxu0 0
      %4466 = vmatpush1.bf16.msra.mxu0 0
      %4467 = vmatprep.subr.bf16.mxu0 0
      %4468 = vmatpush1.bf16.msra.mxu0 0
      %4469 = vmatprep.subr.bf16.mxu0 0
      %4470 = vmatpush1.bf16.msra.mxu0 0
      %4471 = vmatprep.mubr.bf16.mxu0 0
      %4472 = vmatmul.mubr.bf16.gmra.mrb[0].mxu0 %v3625
      %v4473 = vpop.f32.mrb[0].mxu0
      %v4474 = vadd.f32 %v4401, %v4473
      %v4475 = vpop.f32.mrb[0].mxu0
      %v4476 = vadd.f32 %v4403, %v4475
      %v4477 = vpop.f32.mrb[0].mxu0
      %v4478 = vadd.f32 %v4405, %v4477
      %v4479 = vpop.f32.mrb[0].mxu0
      %v4480 = vadd.f32 %v4407, %v4479
      %4481 = vmatprep.mubr.bf16.mxu0 0
      %4482 = vmatmul.mubr.bf16.gmra.mrb[0].mxu0 %v3628
      %v4483 = vpop.f32.mrb[0].mxu0
      %v4484 = vadd.f32 %v4411, %v4483
      %v4485 = vpop.f32.mrb[0].mxu0
      %v4486 = vadd.f32 %v4413, %v4485
      %v4487 = vpop.f32.mrb[0].mxu0
      %v4488 = vadd.f32 %v4415, %v4487
      %v4489 = vpop.f32.mrb[0].mxu0
      %v4490 = vadd.f32 %v4417, %v4489
      %4491 = vmatprep.mubr.bf16.mxu0 0
      %4492 = vmatmul.mubr.bf16.gmra.mrb[0].mxu0 %v3631
      %v4493 = vpop.f32.mrb[0].mxu0
      %v4494 = vadd.f32 %v4421, %v4493
      %v4495 = vpop.f32.mrb[0].mxu0
      %v4496 = vadd.f32 %v4423, %v4495
      %v4497 = vpop.f32.mrb[0].mxu0
      %v4498 = vadd.f32 %v4425, %v4497
      %v4499 = vpop.f32.mrb[0].mxu0
      %v4500 = vadd.f32 %v4427, %v4499
      %4501 = vmatprep.mubr.bf16.mxu0 0
      %4502 = vmatmul.mubr.bf16.gmra.mrb[0].mxu0 %v3634
      %v4503 = vpop.f32.mrb[0].mxu0
      %v4504 = vadd.f32 %v4431, %v4503
      %v4505 = vpop.f32.mrb[0].mxu0
      %v4506 = vadd.f32 %v4433, %v4505
      %v4507 = vpop.f32.mrb[0].mxu0
      %v4508 = vadd.f32 %v4435, %v4507
      %v4509 = vpop.f32.mrb[0].mxu0
      %v4510 = vadd.f32 %v4437, %v4509
      %4511 = vdwg.mxu0
      %4512 = vmatprep.subr.bf16.mxu0 0
      %4513 = vmatpush1.bf16.msra.mxu0 %v2873
      %4514 = vmatprep.subr.bf16.mxu0 0
      %4515 = vmatpush1.bf16.msra.mxu0 %v2880
      %4516 = vmatprep.subr.bf16.mxu0 0
      %4517 = vmatpush1.bf16.msra.mxu0 %v2887
      %4518 = vmatprep.subr.bf16.mxu0 0
      %4519 = vmatpush1.bf16.msra.mxu0 %v2894
      %4520 = vmatprep.subr.bf16.mxu0 0
      %4521 = vmatpush1.bf16.msra.mxu0 %v2901
      %4522 = vmatprep.subr.bf16.mxu0 0
      %4523 = vmatpush1.bf16.msra.mxu0 %v2908
      %4524 = vmatprep.subr.bf16.mxu0 0
      %4525 = vmatpush1.bf16.msra.mxu0 %v2915
      %4526 = vmatprep.subr.bf16.mxu0 0
      %4527 = vmatpush1.bf16.msra.mxu0 %v2922
      %4528 = vmatprep.subr.bf16.mxu0 0
      %4529 = vmatpush1.bf16.msra.mxu0 %v2929
      %4530 = vmatprep.subr.bf16.mxu0 0
      %4531 = vmatpush1.bf16.msra.mxu0 %v2936
      %4532 = vmatprep.subr.bf16.mxu0 0
      %4533 = vmatpush1.bf16.msra.mxu0 %v2943
      %4534 = vmatprep.subr.bf16.mxu0 0
      %4535 = vmatpush1.bf16.msra.mxu0 %v2950
      %4536 = vmatprep.subr.bf16.mxu0 0
      %4537 = vmatpush1.bf16.msra.mxu0 %v2957
      %4538 = vmatprep.subr.bf16.mxu0 0
      %4539 = vmatpush1.bf16.msra.mxu0 %v2964
      %4540 = vmatprep.subr.bf16.mxu0 0
      %4541 = vmatpush1.bf16.msra.mxu0 %v2971
      %4542 = vmatprep.subr.bf16.mxu0 0
      %4543 = vmatpush1.bf16.msra.mxu0 %v2978
      %4544 = vmatprep.mubr.bf16.mxu0 %v1951
      %4545 = vmatmul.mubr.bf16.gmra.mrb[0].mxu0 %v1950
      %v4546 = vpop.f32.mrb[0].mxu0
      %v4547 = vadd.f32 %v1825, %v4546
      %v4548 = vpop.f32.mrb[0].mxu0
      %v4549 = vpop.f32.mrb[0].mxu0
      %v4550 = vadd.f32 %v1830, %v4549
      %v4551 = vpop.f32.mrb[0].mxu0
      %4552 = vmatprep.mubr.bf16.mxu0 %v1958
      %4553 = vmatmul.mubr.bf16.gmra.mrb[0].mxu0 %v1957
      %v4554 = vpop.f32.mrb[0].mxu0
      %v4555 = vadd.f32 %v1835, %v4554
      %v4556 = vpop.f32.mrb[0].mxu0
      %v4557 = vpop.f32.mrb[0].mxu0
      %v4558 = vadd.f32 %v1840, %v4557
      %v4559 = vpop.f32.mrb[0].mxu0
      %4560 = vmatprep.mubr.bf16.mxu0 %v1965
      %4561 = vmatmul.mubr.bf16.gmra.mrb[0].mxu0 %v1964
      %v4562 = vpop.f32.mrb[0].mxu0
      %v4563 = vadd.f32 %v1845, %v4562
      %v4564 = vpop.f32.mrb[0].mxu0
      %v4565 = vpop.f32.mrb[0].mxu0
      %v4566 = vadd.f32 %v1850, %v4565
      %v4567 = vpop.f32.mrb[0].mxu0
      %4568 = vmatprep.mubr.bf16.mxu0 %v1972
      %4569 = vmatmul.mubr.bf16.gmra.mrb[0].mxu0 %v1971
      %v4570 = vpop.f32.mrb[0].mxu0
      %v4571 = vadd.f32 %v1855, %v4570
      %v4572 = vpop.f32.mrb[0].mxu0
      %v4573 = vpop.f32.mrb[0].mxu0
      %v4574 = vadd.f32 %v1860, %v4573
      %v4575 = vpop.f32.mrb[0].mxu0
      %4576 = vdwg.mxu0
      %4577 = vmatprep.subr.bf16.mxu0 0
      %4578 = vmatpush1.bf16.msra.mxu0 %v2985
      %4579 = vmatprep.subr.bf16.mxu0 0
      %4580 = vmatpush1.bf16.msra.mxu0 %v2992
      %4581 = vmatprep.subr.bf16.mxu0 0
      %4582 = vmatpush1.bf16.msra.mxu0 %v2999
      %4583 = vmatprep.subr.bf16.mxu0 0
      %4584 = vmatpush1.bf16.msra.mxu0 %v3006
      %4585 = vmatprep.subr.bf16.mxu0 0
      %4586 = vmatpush1.bf16.msra.mxu0 %v3013
      %4587 = vmatprep.subr.bf16.mxu0 0
      %4588 = vmatpush1.bf16.msra.mxu0 %v3020
      %4589 = vmatprep.subr.bf16.mxu0 0
      %4590 = vmatpush1.bf16.msra.mxu0 %v3027
      %4591 = vmatprep.subr.bf16.mxu0 0
      %4592 = vmatpush1.bf16.msra.mxu0 %v3034
      %4593 = vmatprep.subr.bf16.mxu0 0
      %4594 = vmatpush1.bf16.msra.mxu0 %v3041
      %4595 = vmatprep.subr.bf16.mxu0 0
      %4596 = vmatpush1.bf16.msra.mxu0 %v3048
      %4597 = vmatprep.subr.bf16.mxu0 0
      %4598 = vmatpush1.bf16.msra.mxu0 %v3055
      %4599 = vmatprep.subr.bf16.mxu0 0
      %4600 = vmatpush1.bf16.msra.mxu0 %v3062
      %4601 = vmatprep.subr.bf16.mxu0 0
      %4602 = vmatpush1.bf16.msra.mxu0 %v3069
      %4603 = vmatprep.subr.bf16.mxu0 0
      %4604 = vmatpush1.bf16.msra.mxu0 %v3076
      %4605 = vmatprep.subr.bf16.mxu0 0
      %4606 = vmatpush1.bf16.msra.mxu0 %v3083
      %4607 = vmatprep.subr.bf16.mxu0 0
      %4608 = vmatpush1.bf16.msra.mxu0 %v3090
      %4609 = vmatprep.mubr.bf16.mxu0 %v1953
      %4610 = vmatmul.mubr.bf16.gmra.mrb[0].mxu0 %v1952
      %v4611 = vpop.f32.mrb[0].mxu0
      %v4612 = vadd.f32 %v4547, %v4611
      %v4613 = vpop.f32.mrb[0].mxu0
      %v4614 = vpop.f32.mrb[0].mxu0
      %v4615 = vadd.f32 %v4550, %v4614
      %v4616 = vpop.f32.mrb[0].mxu0
      %4617 = vmatprep.mubr.bf16.mxu0 %v1960
      %4618 = vmatmul.mubr.bf16.gmra.mrb[0].mxu0 %v1959
      %v4619 = vpop.f32.mrb[0].mxu0
      %v4620 = vadd.f32 %v4555, %v4619
      %v4621 = vpop.f32.mrb[0].mxu0
      %v4622 = vpop.f32.mrb[0].mxu0
      %v4623 = vadd.f32 %v4558, %v4622
      %v4624 = vpop.f32.mrb[0].mxu0
      %4625 = vmatprep.mubr.bf16.mxu0 %v1967
      %4626 = vmatmul.mubr.bf16.gmra.mrb[0].mxu0 %v1966
      %v4627 = vpop.f32.mrb[0].mxu0
      %v4628 = vadd.f32 %v4563, %v4627
      %v4629 = vpop.f32.mrb[0].mxu0
      %v4630 = vpop.f32.mrb[0].mxu0
      %v4631 = vadd.f32 %v4566, %v4630
      %v4632 = vpop.f32.mrb[0].mxu0
      %4633 = vmatprep.mubr.bf16.mxu0 %v1974
      %4634 = vmatmul.mubr.bf16.gmra.mrb[0].mxu0 %v1973
      %v4635 = vpop.f32.mrb[0].mxu0
      %v4636 = vadd.f32 %v4571, %v4635
      %v4637 = vpop.f32.mrb[0].mxu0
      %v4638 = vpop.f32.mrb[0].mxu0
      %v4639 = vadd.f32 %v4574, %v4638
      %v4640 = vpop.f32.mrb[0].mxu0
      %4641 = vdwg.mxu0
      %4642 = vmatprep.subr.bf16.mxu0 0
      %4643 = vmatpush1.bf16.msra.mxu0 %v3097
      %4644 = vmatprep.subr.bf16.mxu0 0
      %4645 = vmatpush1.bf16.msra.mxu0 %v3104
      %4646 = vmatprep.subr.bf16.mxu0 0
      %4647 = vmatpush1.bf16.msra.mxu0 %v3111
      %4648 = vmatprep.subr.bf16.mxu0 0
      %4649 = vmatpush1.bf16.msra.mxu0 %v3118
      %4650 = vmatprep.subr.bf16.mxu0 0
      %4651 = vmatpush1.bf16.msra.mxu0 %v3125
      %4652 = vmatprep.subr.bf16.mxu0 0
      %4653 = vmatpush1.bf16.msra.mxu0 %v3132
      %4654 = vmatprep.subr.bf16.mxu0 0
      %4655 = vmatpush1.bf16.msra.mxu0 %v3139
      %4656 = vmatprep.subr.bf16.mxu0 0
      %4657 = vmatpush1.bf16.msra.mxu0 %v3146
      %4658 = vmatprep.subr.bf16.mxu0 0
      %4659 = vmatpush1.bf16.msra.mxu0 %v3153
      %4660 = vmatprep.subr.bf16.mxu0 0
      %4661 = vmatpush1.bf16.msra.mxu0 %v3160
      %4662 = vmatprep.subr.bf16.mxu0 0
      %4663 = vmatpush1.bf16.msra.mxu0 %v3167
      %4664 = vmatprep.subr.bf16.mxu0 0
      %4665 = vmatpush1.bf16.msra.mxu0 %v3174
      %4666 = vmatprep.subr.bf16.mxu0 0
      %4667 = vmatpush1.bf16.msra.mxu0 %v3181
      %4668 = vmatprep.subr.bf16.mxu0 0
      %4669 = vmatpush1.bf16.msra.mxu0 %v3188
      %4670 = vmatprep.subr.bf16.mxu0 0
      %4671 = vmatpush1.bf16.msra.mxu0 %v3195
      %4672 = vmatprep.subr.bf16.mxu0 0
      %4673 = vmatpush1.bf16.msra.mxu0 %v3202
      %4674 = vmatprep.mubr.bf16.mxu0 %v1955
      %4675 = vmatmul.mubr.bf16.gmra.mrb[0].mxu0 %v1954
      %v4676 = vpop.f32.mrb[0].mxu0
      %v4677 = vadd.f32 %v4612, %v4676
      %v4678 = vpop.f32.mrb[0].mxu0
      %v4679 = vpop.f32.mrb[0].mxu0
      %v4680 = vadd.f32 %v4615, %v4679
      %v4681 = vpop.f32.mrb[0].mxu0
      %4682 = vmatprep.mubr.bf16.mxu0 %v1962
      %4683 = vmatmul.mubr.bf16.gmra.mrb[0].mxu0 %v1961
      %v4684 = vpop.f32.mrb[0].mxu0
      %v4685 = vadd.f32 %v4620, %v4684
      %v4686 = vpop.f32.mrb[0].mxu0
      %v4687 = vpop.f32.mrb[0].mxu0
      %v4688 = vadd.f32 %v4623, %v4687
      %v4689 = vpop.f32.mrb[0].mxu0
      %4690 = vmatprep.mubr.bf16.mxu0 %v1969
      %4691 = vmatmul.mubr.bf16.gmra.mrb[0].mxu0 %v1968
      %v4692 = vpop.f32.mrb[0].mxu0
      %v4693 = vadd.f32 %v4628, %v4692
      %v4694 = vpop.f32.mrb[0].mxu0
      %v4695 = vpop.f32.mrb[0].mxu0
      %v4696 = vadd.f32 %v4631, %v4695
      %v4697 = vpop.f32.mrb[0].mxu0
      %4698 = vmatprep.mubr.bf16.mxu0 %v1976
      %4699 = vmatmul.mubr.bf16.gmra.mrb[0].mxu0 %v1975
      %v4700 = vpop.f32.mrb[0].mxu0
      %v4701 = vadd.f32 %v4636, %v4700
      %v4702 = vpop.f32.mrb[0].mxu0
      %v4703 = vpop.f32.mrb[0].mxu0
      %v4704 = vadd.f32 %v4639, %v4703
      %v4705 = vpop.f32.mrb[0].mxu0
      %4706 = vdwg.mxu0
      %4707 = vmatprep.subr.bf16.mxu0 0
      %4708 = vmatpush1.bf16.msra.mxu0 %v3209
      %4709 = vmatprep.subr.bf16.mxu0 0
      %4710 = vmatpush1.bf16.msra.mxu0 %v3216
      %4711 = vmatprep.subr.bf16.mxu0 0
      %4712 = vmatpush1.bf16.msra.mxu0 %v3223
      %4713 = vmatprep.subr.bf16.mxu0 0
      %4714 = vmatpush1.bf16.msra.mxu0 %v3230
      %4715 = vmatprep.subr.bf16.mxu0 0
      %4716 = vmatpush1.bf16.msra.mxu0 %v3237
      %4717 = vmatprep.subr.bf16.mxu0 0
      %4718 = vmatpush1.bf16.msra.mxu0 %v3244
      %4719 = vmatprep.subr.bf16.mxu0 0
      %4720 = vmatpush1.bf16.msra.mxu0 0
      %4721 = vmatprep.subr.bf16.mxu0 0
      %4722 = vmatpush1.bf16.msra.mxu0 0
      %4723 = vmatprep.subr.bf16.mxu0 0
      %4724 = vmatpush1.bf16.msra.mxu0 0
      %4725 = vmatprep.subr.bf16.mxu0 0
      %4726 = vmatpush1.bf16.msra.mxu0 0
      %4727 = vmatprep.subr.bf16.mxu0 0
      %4728 = vmatpush1.bf16.msra.mxu0 0
      %4729 = vmatprep.subr.bf16.mxu0 0
      %4730 = vmatpush1.bf16.msra.mxu0 0
      %4731 = vmatprep.subr.bf16.mxu0 0
      %4732 = vmatpush1.bf16.msra.mxu0 0
      %4733 = vmatprep.subr.bf16.mxu0 0
      %4734 = vmatpush1.bf16.msra.mxu0 0
      %4735 = vmatprep.subr.bf16.mxu0 0
      %4736 = vmatpush1.bf16.msra.mxu0 0
      %4737 = vmatprep.subr.bf16.mxu0 0
      %4738 = vmatpush1.bf16.msra.mxu0 0
      %4739 = vmatprep.mubr.bf16.mxu0 0
      %4740 = vmatmul.mubr.bf16.gmra.mrb[0].mxu0 %v3625
      %v4741 = vpop.f32.mrb[0].mxu0
      %v4742 = vadd.f32 %v4677, %v4741
      %v4743 = vpop.f32.mrb[0].mxu0
      %v4744 = vpop.f32.mrb[0].mxu0
      %v4745 = vadd.f32 %v4680, %v4744
      %v4746 = vpop.f32.mrb[0].mxu0
      %4747 = vmatprep.mubr.bf16.mxu0 0
      %4748 = vmatmul.mubr.bf16.gmra.mrb[0].mxu0 %v3628
      %v4749 = vpop.f32.mrb[0].mxu0
      %v4750 = vadd.f32 %v4685, %v4749
      %v4751 = vpop.f32.mrb[0].mxu0
      %v4752 = vpop.f32.mrb[0].mxu0
      %v4753 = vadd.f32 %v4688, %v4752
      %v4754 = vpop.f32.mrb[0].mxu0
      %4755 = vmatprep.mubr.bf16.mxu0 0
      %4756 = vmatmul.mubr.bf16.gmra.mrb[0].mxu0 %v3631
      %v4757 = vpop.f32.mrb[0].mxu0
      %v4758 = vadd.f32 %v4693, %v4757
      %v4759 = vpop.f32.mrb[0].mxu0
      %v4760 = vpop.f32.mrb[0].mxu0
      %v4761 = vadd.f32 %v4696, %v4760
      %v4762 = vpop.f32.mrb[0].mxu0
      %4763 = vmatprep.mubr.bf16.mxu0 0
      %4764 = vmatmul.mubr.bf16.gmra.mrb[0].mxu0 %v3634
      %v4765 = vpop.f32.mrb[0].mxu0
      %v4766 = vadd.f32 %v4701, %v4765
      %v4767 = vpop.f32.mrb[0].mxu0
      %v4768 = vpop.f32.mrb[0].mxu0
      %v4769 = vadd.f32 %v4704, %v4768
      %v4770 = vpop.f32.mrb[0].mxu0
      %4771 = vdwg.mxu0
      %4772 = vst [vmem:[%s266] sm:$0xff] %v3890
      %4773 = vst [vmem:[%s266 + $0x8] sm:$0xff] %v3892
      %4774 = vst [vmem:[%s266 + $0x10] sm:$0xff] %v4182
      %4775 = vst [vmem:[%s266 + $0x18] sm:$0xff] %v4184
      %4776 = vst [vmem:[%s266 + $0x20] sm:$0xff] %v4474
      %4777 = vst [vmem:[%s266 + $0x28] sm:$0xff] %v4476
      %4778 = vst [vmem:[%s266 + $0x30] sm:$0xff] %v4742
      %4779 = vst [vmem:[%s266 + $0x38] sm:$0xff] %v3894
      %4780 = vst [vmem:[%s266 + $0x40] sm:$0xff] %v3896
      %4781 = vst [vmem:[%s266 + $0x48] sm:$0xff] %v4186
      %4782 = vst [vmem:[%s266 + $0x50] sm:$0xff] %v4188
      %4783 = vst [vmem:[%s266 + $0x58] sm:$0xff] %v4478
      %4784 = vst [vmem:[%s266 + $0x60] sm:$0xff] %v4480
      %4785 = vst [vmem:[%s266 + $0x68] sm:$0xff] %v4745
      %4786 = vst [vmem:[%s266 + $0x70] sm:$0xff] %v3900
      %4787 = vst [vmem:[%s266 + $0x78] sm:$0xff] %v3902
      %4788 = vst [vmem:[%s266 + $0x80] sm:$0xff] %v4192
      %4789 = vst [vmem:[%s266 + $0x88] sm:$0xff] %v4194
      %4790 = vst [vmem:[%s266 + $0x90] sm:$0xff] %v4484
      %4791 = vst [vmem:[%s266 + $0x98] sm:$0xff] %v4486
      %4792 = vst [vmem:[%s266 + $0xa0] sm:$0xff] %v4750
      %4793 = vst [vmem:[%s266 + $0xa8] sm:$0xff] %v3904
      %4794 = vst [vmem:[%s266 + $0xb0] sm:$0xff] %v3906
      %4795 = vst [vmem:[%s266 + $0xb8] sm:$0xff] %v4196
      %4796 = vst [vmem:[%s266 + $0xc0] sm:$0xff] %v4198
      %4797 = vst [vmem:[%s266 + $0xc8] sm:$0xff] %v4488
      %4798 = vst [vmem:[%s266 + $0xd0] sm:$0xff] %v4490
      %4799 = vst [vmem:[%s266 + $0xd8] sm:$0xff] %v4753
      %4800 = vst [vmem:[%s266 + $0xe0] sm:$0xff] %v3910
      %4801 = vst [vmem:[%s266 + $0xe8] sm:$0xff] %v3912
      %4802 = vst [vmem:[%s266 + $0xf0] sm:$0xff] %v4202
      %4803 = vst [vmem:[%s266 + $0xf8] sm:$0xff] %v4204
      %4804 = vst [vmem:[%s266 + $0x100] sm:$0xff] %v4494
      %4805 = vst [vmem:[%s266 + $0x108] sm:$0xff] %v4496
      %4806 = vst [vmem:[%s266 + $0x110] sm:$0xff] %v4758
      %4807 = vst [vmem:[%s266 + $0x118] sm:$0xff] %v3914
      %4808 = vst [vmem:[%s266 + $0x120] sm:$0xff] %v3916
      %4809 = vst [vmem:[%s266 + $0x128] sm:$0xff] %v4206
      %4810 = vst [vmem:[%s266 + $0x130] sm:$0xff] %v4208
      %4811 = vst [vmem:[%s266 + $0x138] sm:$0xff] %v4498
      %4812 = vst [vmem:[%s266 + $0x140] sm:$0xff] %v4500
      %4813 = vst [vmem:[%s266 + $0x148] sm:$0xff] %v4761
      %4814 = vst [vmem:[%s266 + $0x150] sm:$0xff] %v3920
      %4815 = vst [vmem:[%s266 + $0x158] sm:$0xff] %v3922
      %4816 = vst [vmem:[%s266 + $0x160] sm:$0xff] %v4212
      %4817 = vst [vmem:[%s266 + $0x168] sm:$0xff] %v4214
      %4818 = vst [vmem:[%s266 + $0x170] sm:$0xff] %v4504
      %4819 = vst [vmem:[%s266 + $0x178] sm:$0xff] %v4506
      %4820 = vst [vmem:[%s266 + $0x180] sm:$0xff] %v4766
      %4821 = vst [vmem:[%s266 + $0x188] sm:$0xff] %v3924
      %4822 = vst [vmem:[%s266 + $0x190] sm:$0xff] %v3926
      %4823 = vst [vmem:[%s266 + $0x198] sm:$0xff] %v4216
      %4824 = vst [vmem:[%s266 + $0x1a0] sm:$0xff] %v4218
      %4825 = vst [vmem:[%s266 + $0x1a8] sm:$0xff] %v4508
      %4826 = vst [vmem:[%s266 + $0x1b0] sm:$0xff] %v4510
      %4827 = vst [vmem:[%s266 + $0x1b8] sm:$0xff] %v4769
      %v4828 = vld [vmem:[%s3] sm:$0xff]
      %v4830 = vlaneseq
      %v4831 = vshrl.u32 %v4830, 7
      %v4832 = vsub.s32 0, %v4831
      %v4833 = vrot.slane %v4828, %v4832
      %v4834 = vlaneseq
      %v4835 = vshrl.u32 %v4834, 7
      %v4836 = vsub.s32 1, %v4835
      %v4837 = vrot.slane %v4828, %v4836
      %v4838 = vlaneseq
      %v4839 = vshrl.u32 %v4838, 7
      %v4840 = vsub.s32 2, %v4839
      %v4841 = vrot.slane %v4828, %v4840
      %v4842 = vlaneseq
      %v4843 = vshrl.u32 %v4842, 7
      %v4844 = vsub.s32 3, %v4843
      %v4845 = vrot.slane %v4828, %v4844
      %v4846 = vlaneseq
      %v4847 = vshrl.u32 %v4846, 7
      %v4848 = vsub.s32 4, %v4847
      %v4849 = vrot.slane %v4828, %v4848
      %v4850 = vlaneseq
      %v4851 = vshrl.u32 %v4850, 7
      %v4852 = vsub.s32 5, %v4851
      %v4853 = vrot.slane %v4828, %v4852
      %v4854 = vlaneseq
      %v4855 = vshrl.u32 %v4854, 7
      %v4856 = vsub.s32 6, %v4855
      %v4857 = vrot.slane %v4828, %v4856
      %v4865 = vmul.f32 %v3890, %v4833
      %v4866 = vmul.f32 %v3892, %v4837
      %v4867 = vmul.f32 %v4182, %v4841
      %v4868 = vmul.f32 %v4184, %v4845
      %v4869 = vmul.f32 %v4474, %v4849
      %v4870 = vmul.f32 %v4476, %v4853
      %v4871 = vmul.f32 %v4742, %v4857
      %v4872 = vmul.f32 %v3894, %v4833
      %v4873 = vmul.f32 %v3896, %v4837
      %v4874 = vmul.f32 %v4186, %v4841
      %v4875 = vmul.f32 %v4188, %v4845
      %v4876 = vmul.f32 %v4478, %v4849
      %v4877 = vmul.f32 %v4480, %v4853
      %v4878 = vmul.f32 %v4745, %v4857
      %v4879 = vmul.f32 %v3900, %v4833
      %v4880 = vmul.f32 %v3902, %v4837
      %v4881 = vmul.f32 %v4192, %v4841
      %v4882 = vmul.f32 %v4194, %v4845
      %v4883 = vmul.f32 %v4484, %v4849
      %v4884 = vmul.f32 %v4486, %v4853
      %v4885 = vmul.f32 %v4750, %v4857
      %v4886 = vmul.f32 %v3904, %v4833
      %v4887 = vmul.f32 %v3906, %v4837
      %v4888 = vmul.f32 %v4196, %v4841
      %v4889 = vmul.f32 %v4198, %v4845
      %v4890 = vmul.f32 %v4488, %v4849
      %v4891 = vmul.f32 %v4490, %v4853
      %v4892 = vmul.f32 %v4753, %v4857
      %v4893 = vmul.f32 %v3910, %v4833
      %v4894 = vmul.f32 %v3912, %v4837
      %v4895 = vmul.f32 %v4202, %v4841
      %v4896 = vmul.f32 %v4204, %v4845
      %v4897 = vmul.f32 %v4494, %v4849
      %v4898 = vmul.f32 %v4496, %v4853
      %v4899 = vmul.f32 %v4758, %v4857
      %v4900 = vmul.f32 %v3914, %v4833
      %v4901 = vmul.f32 %v3916, %v4837
      %v4902 = vmul.f32 %v4206, %v4841
      %v4903 = vmul.f32 %v4208, %v4845
      %v4904 = vmul.f32 %v4498, %v4849
      %v4905 = vmul.f32 %v4500, %v4853
      %v4906 = vmul.f32 %v4761, %v4857
      %v4907 = vmul.f32 %v3920, %v4833
      %v4908 = vmul.f32 %v3922, %v4837
      %v4909 = vmul.f32 %v4212, %v4841
      %v4910 = vmul.f32 %v4214, %v4845
      %v4911 = vmul.f32 %v4504, %v4849
      %v4912 = vmul.f32 %v4506, %v4853
      %v4913 = vmul.f32 %v4766, %v4857
      %v4914 = vmul.f32 %v3924, %v4833
      %v4915 = vmul.f32 %v3926, %v4837
      %v4916 = vmul.f32 %v4216, %v4841
      %v4917 = vmul.f32 %v4218, %v4845
      %v4918 = vmul.f32 %v4508, %v4849
      %v4919 = vmul.f32 %v4510, %v4853
      %v4920 = vmul.f32 %v4769, %v4857
      %v4921 = vadd.f32 %v4865, %v4866
      %v4922 = vadd.f32 %v4921, %v4867
      %v4923 = vadd.f32 %v4922, %v4868
      %v4924 = vadd.f32 %v4923, %v4869
      %v4925 = vadd.f32 %v4924, %v4870
      %v4926 = vadd.f32 %v4925, %v4871
      %4927 = vadd.xlane.f32.xlu0 %v4926
      %v4928 = vpop.xlane.xlu0 %4927
      %v4929 = vadd.f32 %v4872, %v4873
      %v4930 = vadd.f32 %v4929, %v4874
      %v4931 = vadd.f32 %v4930, %v4875
      %v4932 = vadd.f32 %v4931, %v4876
      %v4933 = vadd.f32 %v4932, %v4877
      %v4934 = vadd.f32 %v4933, %v4878
      %4935 = vadd.xlane.f32.xlu0 %v4934
      %v4936 = vpop.xlane.xlu0 %4935
      %v4937 = vadd.f32 %v4879, %v4880
      %v4938 = vadd.f32 %v4937, %v4881
      %v4939 = vadd.f32 %v4938, %v4882
      %v4940 = vadd.f32 %v4939, %v4883
      %v4941 = vadd.f32 %v4940, %v4884
      %v4942 = vadd.f32 %v4941, %v4885
      %4943 = vadd.xlane.f32.xlu0 %v4942
      %v4944 = vpop.xlane.xlu0 %4943
      %v4945 = vadd.f32 %v4886, %v4887
      %v4946 = vadd.f32 %v4945, %v4888
      %v4947 = vadd.f32 %v4946, %v4889
      %v4948 = vadd.f32 %v4947, %v4890
      %v4949 = vadd.f32 %v4948, %v4891
      %v4950 = vadd.f32 %v4949, %v4892
      %4951 = vadd.xlane.f32.xlu0 %v4950
      %v4952 = vpop.xlane.xlu0 %4951
      %v4953 = vadd.f32 %v4893, %v4894
      %v4954 = vadd.f32 %v4953, %v4895
      %v4955 = vadd.f32 %v4954, %v4896
      %v4956 = vadd.f32 %v4955, %v4897
      %v4957 = vadd.f32 %v4956, %v4898
      %v4958 = vadd.f32 %v4957, %v4899
      %4959 = vadd.xlane.f32.xlu0 %v4958
      %v4960 = vpop.xlane.xlu0 %4959
      %v4961 = vadd.f32 %v4900, %v4901
      %v4962 = vadd.f32 %v4961, %v4902
      %v4963 = vadd.f32 %v4962, %v4903
      %v4964 = vadd.f32 %v4963, %v4904
      %v4965 = vadd.f32 %v4964, %v4905
      %v4966 = vadd.f32 %v4965, %v4906
      %4967 = vadd.xlane.f32.xlu0 %v4966
      %v4968 = vpop.xlane.xlu0 %4967
      %v4969 = vadd.f32 %v4907, %v4908
      %v4970 = vadd.f32 %v4969, %v4909
      %v4971 = vadd.f32 %v4970, %v4910
      %v4972 = vadd.f32 %v4971, %v4911
      %v4973 = vadd.f32 %v4972, %v4912
      %v4974 = vadd.f32 %v4973, %v4913
      %4975 = vadd.xlane.f32.xlu0 %v4974
      %v4976 = vpop.xlane.xlu0 %4975
      %v4977 = vadd.f32 %v4914, %v4915
      %v4978 = vadd.f32 %v4977, %v4916
      %v4979 = vadd.f32 %v4978, %v4917
      %v4980 = vadd.f32 %v4979, %v4918
      %v4981 = vadd.f32 %v4980, %v4919
      %v4982 = vadd.f32 %v4981, %v4920
      %4983 = vadd.xlane.f32.xlu0 %v4982
      %v4984 = vpop.xlane.xlu0 %4983
      %vm4985 = vcmask 7168
      %4986 = vst.msk [vmem:[%s271] sm:$0xff] %vm4985, %v4928
      %4987 = vst.msk [vmem:[%s271 + $0x8] sm:$0xff] %vm4985, %v4936
      %4988 = vst.msk [vmem:[%s271 + $0x10] sm:$0xff] %vm4985, %v4944
      %4989 = vst.msk [vmem:[%s271 + $0x18] sm:$0xff] %vm4985, %v4952
      %4990 = vst.msk [vmem:[%s271 + $0x20] sm:$0xff] %vm4985, %v4960
      %4991 = vst.msk [vmem:[%s271 + $0x28] sm:$0xff] %vm4985, %v4968
      %4992 = vst.msk [vmem:[%s271 + $0x30] sm:$0xff] %vm4985, %v4976
      %4993 = vst.msk [vmem:[%s271 + $0x38] sm:$0xff] %vm4985, %v4984
      %v4994 = vmul.f32 %v4865, %v3890
      %v4995 = vmul.f32 %v4866, %v3892
      %v4996 = vmul.f32 %v4867, %v4182
      %v4997 = vmul.f32 %v4868, %v4184
      %v4998 = vmul.f32 %v4869, %v4474
      %v4999 = vmul.f32 %v4870, %v4476
      %v5000 = vmul.f32 %v4871, %v4742
      %v5001 = vmul.f32 %v4872, %v3894
      %v5002 = vmul.f32 %v4873, %v3896
      %v5003 = vmul.f32 %v4874, %v4186
      %v5004 = vmul.f32 %v4875, %v4188
      %v5005 = vmul.f32 %v4876, %v4478
      %v5006 = vmul.f32 %v4877, %v4480
      %v5007 = vmul.f32 %v4878, %v4745
      %v5008 = vmul.f32 %v4879, %v3900
      %v5009 = vmul.f32 %v4880, %v3902
      %v5010 = vmul.f32 %v4881, %v4192
      %v5011 = vmul.f32 %v4882, %v4194
      %v5012 = vmul.f32 %v4883, %v4484
      %v5013 = vmul.f32 %v4884, %v4486
      %v5014 = vmul.f32 %v4885, %v4750
      %v5015 = vmul.f32 %v4886, %v3904
      %v5016 = vmul.f32 %v4887, %v3906
      %v5017 = vmul.f32 %v4888, %v4196
      %v5018 = vmul.f32 %v4889, %v4198
      %v5019 = vmul.f32 %v4890, %v4488
      %v5020 = vmul.f32 %v4891, %v4490
      %v5021 = vmul.f32 %v4892, %v4753
      %v5022 = vmul.f32 %v4893, %v3910
      %v5023 = vmul.f32 %v4894, %v3912
      %v5024 = vmul.f32 %v4895, %v4202
      %v5025 = vmul.f32 %v4896, %v4204
      %v5026 = vmul.f32 %v4897, %v4494
      %v5027 = vmul.f32 %v4898, %v4496
      %v5028 = vmul.f32 %v4899, %v4758
      %v5029 = vmul.f32 %v4900, %v3914
      %v5030 = vmul.f32 %v4901, %v3916
      %v5031 = vmul.f32 %v4902, %v4206
      %v5032 = vmul.f32 %v4903, %v4208
      %v5033 = vmul.f32 %v4904, %v4498
      %v5034 = vmul.f32 %v4905, %v4500
      %v5035 = vmul.f32 %v4906, %v4761
      %v5036 = vmul.f32 %v4907, %v3920
      %v5037 = vmul.f32 %v4908, %v3922
      %v5038 = vmul.f32 %v4909, %v4212
      %v5039 = vmul.f32 %v4910, %v4214
      %v5040 = vmul.f32 %v4911, %v4504
      %v5041 = vmul.f32 %v4912, %v4506
      %v5042 = vmul.f32 %v4913, %v4766
      %v5043 = vmul.f32 %v4914, %v3924
      %v5044 = vmul.f32 %v4915, %v3926
      %v5045 = vmul.f32 %v4916, %v4216
      %v5046 = vmul.f32 %v4917, %v4218
      %v5047 = vmul.f32 %v4918, %v4508
      %v5048 = vmul.f32 %v4919, %v4510
      %v5049 = vmul.f32 %v4920, %v4769
      %v5050 = vadd.f32 %v4994, %v4995
      %v5051 = vadd.f32 %v5050, %v4996
      %v5052 = vadd.f32 %v5051, %v4997
      %v5053 = vadd.f32 %v5052, %v4998
      %v5054 = vadd.f32 %v5053, %v4999
      %v5055 = vadd.f32 %v5054, %v5000
      %5056 = vadd.xlane.f32.xlu0 %v5055
      %v5057 = vpop.xlane.xlu0 %5056
      %v5058 = vadd.f32 %v5001, %v5002
      %v5059 = vadd.f32 %v5058, %v5003
      %v5060 = vadd.f32 %v5059, %v5004
      %v5061 = vadd.f32 %v5060, %v5005
      %v5062 = vadd.f32 %v5061, %v5006
      %v5063 = vadd.f32 %v5062, %v5007
      %5064 = vadd.xlane.f32.xlu0 %v5063
      %v5065 = vpop.xlane.xlu0 %5064
      %v5066 = vadd.f32 %v5008, %v5009
      %v5067 = vadd.f32 %v5066, %v5010
      %v5068 = vadd.f32 %v5067, %v5011
      %v5069 = vadd.f32 %v5068, %v5012
      %v5070 = vadd.f32 %v5069, %v5013
      %v5071 = vadd.f32 %v5070, %v5014
      %5072 = vadd.xlane.f32.xlu0 %v5071
      %v5073 = vpop.xlane.xlu0 %5072
      %v5074 = vadd.f32 %v5015, %v5016
      %v5075 = vadd.f32 %v5074, %v5017
      %v5076 = vadd.f32 %v5075, %v5018
      %v5077 = vadd.f32 %v5076, %v5019
      %v5078 = vadd.f32 %v5077, %v5020
      %v5079 = vadd.f32 %v5078, %v5021
      %5080 = vadd.xlane.f32.xlu0 %v5079
      %v5081 = vpop.xlane.xlu0 %5080
      %v5082 = vadd.f32 %v5022, %v5023
      %v5083 = vadd.f32 %v5082, %v5024
      %v5084 = vadd.f32 %v5083, %v5025
      %v5085 = vadd.f32 %v5084, %v5026
      %v5086 = vadd.f32 %v5085, %v5027
      %v5087 = vadd.f32 %v5086, %v5028
      %5088 = vadd.xlane.f32.xlu0 %v5087
      %v5089 = vpop.xlane.xlu0 %5088
      %v5090 = vadd.f32 %v5029, %v5030
      %v5091 = vadd.f32 %v5090, %v5031
      %v5092 = vadd.f32 %v5091, %v5032
      %v5093 = vadd.f32 %v5092, %v5033
      %v5094 = vadd.f32 %v5093, %v5034
      %v5095 = vadd.f32 %v5094, %v5035
      %5096 = vadd.xlane.f32.xlu0 %v5095
      %v5097 = vpop.xlane.xlu0 %5096
      %v5098 = vadd.f32 %v5036, %v5037
      %v5099 = vadd.f32 %v5098, %v5038
      %v5100 = vadd.f32 %v5099, %v5039
      %v5101 = vadd.f32 %v5100, %v5040
      %v5102 = vadd.f32 %v5101, %v5041
      %v5103 = vadd.f32 %v5102, %v5042
      %5104 = vadd.xlane.f32.xlu0 %v5103
      %v5105 = vpop.xlane.xlu0 %5104
      %v5106 = vadd.f32 %v5043, %v5044
      %v5107 = vadd.f32 %v5106, %v5045
      %v5108 = vadd.f32 %v5107, %v5046
      %v5109 = vadd.f32 %v5108, %v5047
      %v5110 = vadd.f32 %v5109, %v5048
      %v5111 = vadd.f32 %v5110, %v5049
      %5112 = vadd.xlane.f32.xlu0 %v5111
      %v5113 = vpop.xlane.xlu0 %5112
      %5114 = vst.msk [vmem:[%s276] sm:$0xff] %vm4985, %v5057
      %5115 = vst.msk [vmem:[%s276 + $0x8] sm:$0xff] %vm4985, %v5065
      %5116 = vst.msk [vmem:[%s276 + $0x10] sm:$0xff] %vm4985, %v5073
      %5117 = vst.msk [vmem:[%s276 + $0x18] sm:$0xff] %vm4985, %v5081
      %5118 = vst.msk [vmem:[%s276 + $0x20] sm:$0xff] %vm4985, %v5089
      %5119 = vst.msk [vmem:[%s276 + $0x28] sm:$0xff] %vm4985, %v5097
      %5120 = vst.msk [vmem:[%s276 + $0x30] sm:$0xff] %vm4985, %v5105
      %5121 = vst.msk [vmem:[%s276 + $0x38] sm:$0xff] %vm4985, %v5113
      %p5122 = scmp.lt.s32.totalorder %s18, 1
      %s5123 = scalar_select %p5122, %s18, 1
      %s5124 = smul.addr %s5123, 56
      %s5125 = smul.addr %s5124, 8
      %s5126 = scalar_lea.vmem %s4, %s5125
      %p5127 = scmp.lt.s32.totalorder %s18, 1
      %s5128 = scalar_select %p5127, %s18, 1
      %s5129 = smul.addr %s5128, 8
      %s5130 = smul.addr %s5129, 8
      %s5131 = scalar_lea.vmem %s5, %s5130
      %p5132 = scmp.lt.s32.totalorder %s18, 1
      %s5133 = scalar_select %p5132, %s18, 1
      %s5134 = smul.addr %s5133, 8
      %s5135 = smul.addr %s5134, 8
      %s5136 = scalar_lea.vmem %s6, %s5135
      // Predicated region
      $region37: #{conv_layers_encoder_forward.6} parent=35 // pred_check
        %p5137 = pneg %p125
      $region38: #{conv_layers_encoder_forward.6} parent=35 // pred_check_branch
        %5139 = sbr.rel (%p5137) target = $region40
      $region39: #{conv_layers_encoder_forward.6} parent=35 // pred_region
        _
      $region40: #{conv_layers_encoder_forward.6} parent=35 // pred_fallthru
        _
      // Predicated region
      $region41: #{conv_layers_encoder_forward.6} parent=35 // pred_check
        %p5140 = pneg %p151
      $region42: #{conv_layers_encoder_forward.6} parent=35 // pred_check_branch
        %5142 = sbr.rel (%p5140) target = $region44
      $region43: #{conv_layers_encoder_forward.6} parent=35 // pred_region
        _
      $region44: #{conv_layers_encoder_forward.6} parent=35 // pred_fallthru
        _
      // Predicated region
      $region45: #{conv_layers_encoder_forward.6} parent=35 // pred_check
        %p5143 = pneg %p177
      $region46: #{conv_layers_encoder_forward.6} parent=35 // pred_check_branch
        %5145 = sbr.rel (%p5143) target = $region48
      $region47: #{conv_layers_encoder_forward.6} parent=35 // pred_region
        _
      $region48: #{conv_layers_encoder_forward.6} parent=35 // pred_fallthru
        _
    $region36: #{conv_layers_encoder_forward.6} parent=5 // pred_fallthru
      _
    %p5146 = scmp.le.s32.totalorder 2, %s13
    // Predicated region
    $region49: #{conv_layers_encoder_forward.6} parent=5 // pred_check
      %p5147 = pneg %p5146
    $region50: #{conv_layers_encoder_forward.6} parent=5 // pred_check_branch
      %5149 = sbr.rel (%p5147) target = $region52
    $region51: #{conv_layers_encoder_forward.6} parent=5 // pred_region
      %s5150 = ssub.s32 %s13, 2
      // Predicated region
      $region53: #{conv_layers_encoder_forward.6} parent=51 // pred_check
        %p5151 = pneg %p131
      $region54: #{conv_layers_encoder_forward.6} parent=51 // pred_check_branch
        %5153 = sbr.rel (%p5151) target = $region56
      $region55: #{conv_layers_encoder_forward.6} parent=51 // pred_region
        %p5154 = scmp.lt.s32.totalorder %s19, 1
        %s5155 = scalar_select %p5154, %s19, 1
        %s5156 = smul.addr %s5155, 56
        %s5157 = smul.addr %s5156, 8
        %s5158 = scalar_lea.vmem %s4, %s5157
      $region56: #{conv_layers_encoder_forward.6} parent=51 // pred_fallthru
        _
      // Predicated region
      $region57: #{conv_layers_encoder_forward.6} parent=51 // pred_check
        %p5159 = pneg %p157
      $region58: #{conv_layers_encoder_forward.6} parent=51 // pred_check_branch
        %5161 = sbr.rel (%p5159) target = $region60
      $region59: #{conv_layers_encoder_forward.6} parent=51 // pred_region
        %p5162 = scmp.lt.s32.totalorder %s19, 1
        %s5163 = scalar_select %p5162, %s19, 1
        %s5164 = smul.addr %s5163, 8
        %s5165 = smul.addr %s5164, 8
        %s5166 = scalar_lea.vmem %s5, %s5165
      $region60: #{conv_layers_encoder_forward.6} parent=51 // pred_fallthru
        _
      // Predicated region
      $region61: #{conv_layers_encoder_forward.6} parent=51 // pred_check
        %p5167 = pneg %p183
      $region62: #{conv_layers_encoder_forward.6} parent=51 // pred_check_branch
        %5169 = sbr.rel (%p5167) target = $region64
      $region63: #{conv_layers_encoder_forward.6} parent=51 // pred_region
        %p5170 = scmp.lt.s32.totalorder %s19, 1
        %s5171 = scalar_select %p5170, %s19, 1
        %s5172 = smul.addr %s5171, 8
        %s5173 = smul.addr %s5172, 8
        %s5174 = scalar_lea.vmem %s6, %s5173
      $region64: #{conv_layers_encoder_forward.6} parent=51 // pred_fallthru
        _
    $region52: #{conv_layers_encoder_forward.6} parent=5 // pred_fallthru
      _
  $region6: #{conv_layers_encoder_forward.6} parent=0 // loop_footer
    %s17 = sadd.s32 1, %s13
  $region7: #{conv_layers_encoder_forward.6} parent=0 // loop_footer_branch
    %12 = sbr.rel target = $region3
  $region8: #{conv_layers_encoder_forward.6} parent=0 // loop_exit
    _

</llo_original>
